<compile_context>
chip_gen: v7x
topology: tpu7x:2x2x1
jax: 0.10.0
libtpu: 0.0.40
codegen_flags: <defaults>
</compile_context>

<pallas_src>
import functools

import jax
import jax.numpy as jnp
from jax.experimental import pallas as pl
from jax.experimental.pallas import tpu as pltpu


def _qst_encoder_kernel(num_layers, seq_len, batch, hidden, *refs):
    # refs layout:
    #   x_ref                                    (seq_len*batch, word_embed)  time-major rows
    #   per layer l: w_ih_l (in_dim, 4H),
    #                w_hh_i, w_hh_f, w_hh_g, w_hh_o   (H, H each, per-gate blocks),
    #                b_l (1, 4H)                 (= b_ih + b_hh)
    #   fc_w (2*L*H, embed), fc_b (1, embed)
    #   out_ref (batch, embed)
    H = hidden
    B = batch
    x_ref = refs[0]
    layer_refs = refs[1:1 + 6 * num_layers]
    fcw_ref = refs[1 + 6 * num_layers]
    fcb_ref = refs[2 + 6 * num_layers]
    out_ref = refs[3 + 6 * num_layers]

    # tanh applied to the whole embedded block at once (hoisted off the chain).
    inp = jnp.tanh(x_ref[...])                      # (seq*batch, word_embed)

    feats = []
    hs_prev = None                                  # previous layer's per-step hiddens
    for layer in range(num_layers):
        wih = layer_refs[6 * layer + 0][...]        # (in_dim, 4H)
        whh = [layer_refs[6 * layer + 1 + k][...] for k in range(4)]   # 4 x (H, H)
        b = layer_refs[6 * layer + 5][...]          # (1, 4H)

        if layer == 0:
            # Hoisted input-to-hidden GEMM + bias for the entire sequence:
            # one MXU call, gate splits done once, all off the serial chain.
            pre = jnp.dot(inp, wih, preferred_element_type=jnp.float32) + b  # (S*B, 4H)
            pre_i = pre[:, 0 * H:1 * H]
            pre_f = pre[:, 1 * H:2 * H]
            pre_g = pre[:, 2 * H:3 * H]
            pre_o = pre[:, 3 * H:4 * H]
            pre_steps = [(pre_i[t * B:(t + 1) * B],
                          pre_f[t * B:(t + 1) * B],
                          pre_g[t * B:(t + 1) * B],
                          pre_o[t * B:(t + 1) * B]) for t in range(seq_len)]
        else:
            # Per-timestep input GEMMs: they depend only on the previous layer's
            # h_t (not on this layer's h/c), so they sit off this layer's
            # recurrence chain and can be pipelined under it.
            pre_steps = []
            for t in range(seq_len):
                p = jnp.dot(hs_prev[t], wih, preferred_element_type=jnp.float32) + b
                pre_steps.append((p[:, 0 * H:1 * H], p[:, 1 * H:2 * H],
                                  p[:, 2 * H:3 * H], p[:, 3 * H:4 * H]))

        h = jnp.zeros((B, H), jnp.float32)
        c = jnp.zeros((B, H), jnp.float32)
        hs = []
        # Fully unrolled time loop: only h @ W_hh_gate + VPU/EUP gate math stays
        # on the serial dependence chain; h/c never touch VMEM.
        for t in range(seq_len):
            p_i, p_f, p_g, p_o = pre_steps[t]
            i_g = jax.nn.sigmoid(p_i + jnp.dot(h, whh[0],
                                               preferred_element_type=jnp.float32))
            f_g = jax.nn.sigmoid(p_f + jnp.dot(h, whh[1],
                                               preferred_element_type=jnp.float32))
            g_g = jnp.tanh(p_g + jnp.dot(h, whh[2],
                                         preferred_element_type=jnp.float32))
            o_g = jax.nn.sigmoid(p_o + jnp.dot(h, whh[3],
                                               preferred_element_type=jnp.float32))
            c = f_g * c + i_g * g_g
            h = o_g * jnp.tanh(c)
            if layer < num_layers - 1:          # last layer: no sequence handoff
                hs.append(h)

        feats.append(h)
        feats.append(c)
        hs_prev = hs

    # torch.cat((hidden, cell), 2).transpose(0,1).reshape(B, -1)
    #   => per batch row: [h_0, c_0, h_1, c_1, ...]
    feat = jnp.tanh(jnp.concatenate(feats, axis=-1))        # (batch, 2*L*H)
    out_ref[...] = (jnp.dot(feat, fcw_ref[...], preferred_element_type=jnp.float32)
                    + fcb_ref[...])


def qst_encoder_forward(question, params, *, num_layers, hidden_size, embed_size):
    """question: (batch, seq_len) int32 token ids."""
    emb = params["embedding"]
    x = jnp.take(emb, question, axis=0)                       # (batch, seq, word_embed)
    batch, seq_len, word_embed = x.shape
    # time-major, flattened: row t*batch + b  <->  (t, b)
    x = jnp.transpose(x, (1, 0, 2)).reshape(seq_len * batch, word_embed)
    x = x.astype(jnp.float32)

    H = hidden_size
    flat_args = [x]
    for l in range(num_layers):
        whh = params[f"w_hh_{l}"]                              # (H, 4H)
        flat_args.append(params[f"w_ih_{l}"])                  # (in_dim, 4H)
        # Per-gate recurrent blocks, so each gate lands whole at lane 0.
        flat_args += [whh[:, k * H:(k + 1) * H] for k in range(4)]
        flat_args.append(params[f"b_{l}"])                     # (1, 4H)
    flat_args += [params["fc_w"], params["fc_b"]]

    kernel = functools.partial(_qst_encoder_kernel, num_layers, seq_len, batch, H)
    vmem = pltpu.MemorySpace.VMEM
    # TODO(synk): at production sizes (large batch, H>=256) add a "parallel"
    # batch grid axis (2 TCs on v7x) and size VMEM against the 64 MiB budget.
    return pl.pallas_call(
        kernel,
        out_shape=jax.ShapeDtypeStruct((batch, embed_size), jnp.float32),
        in_specs=[pl.BlockSpec(memory_space=vmem)] * len(flat_args),
        out_specs=pl.BlockSpec(memory_space=vmem),
    )(*flat_args)


def init_params(key, vocab, word_embed, embed_size, num_layers, hidden):
    keys = jax.random.split(key, 3 + 4 * num_layers)
    params = {}
    params["embedding"] = 0.1 * jax.random.normal(keys[0], (vocab, word_embed), jnp.float32)
    ki = 1
    for l in range(num_layers):
        in_dim = word_embed if l == 0 else hidden
        w_ih = 0.1 * jax.random.normal(keys[ki], (4 * hidden, in_dim), jnp.float32); ki += 1
        w_hh = 0.1 * jax.random.normal(keys[ki], (4 * hidden, hidden), jnp.float32); ki += 1
        b_ih = 0.1 * jax.random.normal(keys[ki], (4 * hidden,), jnp.float32); ki += 1
        b_hh = 0.1 * jax.random.normal(keys[ki], (4 * hidden,), jnp.float32); ki += 1
        params[f"w_ih_{l}"] = jnp.transpose(w_ih)                  # (in_dim, 4H)
        params[f"w_hh_{l}"] = jnp.transpose(w_hh)                  # (H, 4H)
        params[f"b_{l}"] = (b_ih + b_hh).reshape(1, 4 * hidden)    # (1, 4H)
    fc_w = 0.1 * jax.random.normal(keys[ki], (embed_size, 2 * num_layers * hidden), jnp.float32); ki += 1
    fc_b = 0.1 * jax.random.normal(keys[ki], (embed_size,), jnp.float32)
    params["fc_w"] = jnp.transpose(fc_w)                           # (2LH, embed)
    params["fc_b"] = fc_b.reshape(1, embed_size)
    return params


def reference_forward(question, params, *, num_layers, hidden_size, embed_size):
    """Pure-JAX reference with identical semantics (for sanity checking)."""
    x = jnp.take(params["embedding"], question, axis=0)
    x = jnp.tanh(x)
    x = jnp.transpose(x, (1, 0, 2))                    # (seq, batch, word_embed)
    seq_len, batch, _ = x.shape
    H = hidden_size
    feats = []
    inp = x
    for l in range(num_layers):
        wih, whh, b = params[f"w_ih_{l}"], params[f"w_hh_{l}"], params[f"b_{l}"]
        h = jnp.zeros((batch, H), jnp.float32)
        c = jnp.zeros((batch, H), jnp.float32)
        outs = []
        for t in range(seq_len):
            gates = inp[t] @ wih + h @ whh + b
            i_g = jax.nn.sigmoid(gates[:, 0 * H:1 * H])
            f_g = jax.nn.sigmoid(gates[:, 1 * H:2 * H])
            g_g = jnp.tanh(gates[:, 2 * H:3 * H])
            o_g = jax.nn.sigmoid(gates[:, 3 * H:4 * H])
            c = f_g * c + i_g * g_g
            h = o_g * jnp.tanh(c)
            outs.append(h)
        inp = jnp.stack(outs, axis=0)
        feats += [h, c]
    feat = jnp.tanh(jnp.concatenate(feats, axis=-1))
    return feat @ params["fc_w"] + params["fc_b"]


if __name__ == "__main__":
    # QstEncoder(vocab=50, word_embed=32, embed=16, num_layers=2, hidden=32);
    # question batch=2, seq_len=8.
    vocab, word_embed, embed_size, num_layers, hidden = 50, 32, 16, 2, 32
    batch, seq_len = 2, 8

    key = jax.random.PRNGKey(0)
    pkey, qkey = jax.random.split(key)
    params = init_params(pkey, vocab, word_embed, embed_size, num_layers, hidden)
    question = jax.random.randint(qkey, (batch, seq_len), 0, vocab, dtype=jnp.int32)

    out = qst_encoder_forward(question, params, num_layers=num_layers,
                              hidden_size=hidden, embed_size=embed_size)
    out = jax.block_until_ready(out)

    ref = reference_forward(question, params, num_layers=num_layers,
                            hidden_size=hidden, embed_size=embed_size)
    assert out.shape == (batch, embed_size)
    assert bool(jnp.allclose(out, ref, atol=5e-3, rtol=5e-3)), "mismatch vs reference"
    print("KERNEL_OK")
</pallas_src>

<mosaic_0001>
module attributes {stable_mosaic.version = 11 : i64} {
  func.func @_qst_encoder_kernel(%arg0: memref<16x32xf32, #tpu.memory_space<vmem>>, %arg1: memref<32x128xf32, #tpu.memory_space<vmem>>, %arg2: memref<32x32xf32, #tpu.memory_space<vmem>>, %arg3: memref<32x32xf32, #tpu.memory_space<vmem>>, %arg4: memref<32x32xf32, #tpu.memory_space<vmem>>, %arg5: memref<32x32xf32, #tpu.memory_space<vmem>>, %arg6: memref<1x128xf32, #tpu.memory_space<vmem>>, %arg7: memref<32x128xf32, #tpu.memory_space<vmem>>, %arg8: memref<32x32xf32, #tpu.memory_space<vmem>>, %arg9: memref<32x32xf32, #tpu.memory_space<vmem>>, %arg10: memref<32x32xf32, #tpu.memory_space<vmem>>, %arg11: memref<32x32xf32, #tpu.memory_space<vmem>>, %arg12: memref<1x128xf32, #tpu.memory_space<vmem>>, %arg13: memref<128x16xf32, #tpu.memory_space<vmem>>, %arg14: memref<1x16xf32, #tpu.memory_space<vmem>>, %arg15: memref<2x16xf32, #tpu.memory_space<vmem>>) attributes {dimension_semantics = [], scalar_prefetch = 0 : i64, scratch_operands = 0 : i64, tpu.core_type = #tpu.core_type<tc>} {
    %c0 = arith.constant 0 : index
    %c0_0 = arith.constant 0 : index
    %0 = vector.load %arg0[%c0, %c0_0] : memref<16x32xf32, #tpu.memory_space<vmem>>, vector<16x32xf32>
    %1 = math.tanh %0 : vector<16x32xf32>
    %c0_1 = arith.constant 0 : index
    %c0_2 = arith.constant 0 : index
    %2 = vector.load %arg1[%c0_1, %c0_2] : memref<32x128xf32, #tpu.memory_space<vmem>>, vector<32x128xf32>
    %c0_3 = arith.constant 0 : index
    %c0_4 = arith.constant 0 : index
    %3 = vector.load %arg2[%c0_3, %c0_4] : memref<32x32xf32, #tpu.memory_space<vmem>>, vector<32x32xf32>
    %c0_5 = arith.constant 0 : index
    %c0_6 = arith.constant 0 : index
    %4 = vector.load %arg3[%c0_5, %c0_6] : memref<32x32xf32, #tpu.memory_space<vmem>>, vector<32x32xf32>
    %c0_7 = arith.constant 0 : index
    %c0_8 = arith.constant 0 : index
    %5 = vector.load %arg4[%c0_7, %c0_8] : memref<32x32xf32, #tpu.memory_space<vmem>>, vector<32x32xf32>
    %c0_9 = arith.constant 0 : index
    %c0_10 = arith.constant 0 : index
    %6 = vector.load %arg5[%c0_9, %c0_10] : memref<32x32xf32, #tpu.memory_space<vmem>>, vector<32x32xf32>
    %c0_11 = arith.constant 0 : index
    %c0_12 = arith.constant 0 : index
    %7 = vector.load %arg6[%c0_11, %c0_12] : memref<1x128xf32, #tpu.memory_space<vmem>>, vector<1x128xf32>
    %cst = arith.constant dense<0.000000e+00> : vector<16x128xf32>
    %8 = tpu.matmul %1, %2, %cst {dimension_numbers = #tpu.dot_dimension_numbers<[1], [0], [0], [1], [0, 0, 1, 1], [], []>} : vector<16x32xf32>, vector<32x128xf32>, vector<16x128xf32> -> vector<16x128xf32>
    %9 = vector.broadcast %7 : vector<1x128xf32> to vector<16x128xf32>
    %10 = arith.addf %8, %9 : vector<16x128xf32>
    %11 = vector.extract_strided_slice %10 {offsets = [0, 0], sizes = [16, 32], strides = [1, 1]} : vector<16x128xf32> to vector<16x32xf32>
    %12 = vector.extract_strided_slice %10 {offsets = [0, 32], sizes = [16, 32], strides = [1, 1]} : vector<16x128xf32> to vector<16x32xf32>
    %13 = vector.extract_strided_slice %10 {offsets = [0, 64], sizes = [16, 32], strides = [1, 1]} : vector<16x128xf32> to vector<16x32xf32>
    %14 = vector.extract_strided_slice %10 {offsets = [0, 96], sizes = [16, 32], strides = [1, 1]} : vector<16x128xf32> to vector<16x32xf32>
    %15 = vector.extract_strided_slice %11 {offsets = [0, 0], sizes = [2, 32], strides = [1, 1]} : vector<16x32xf32> to vector<2x32xf32>
    %16 = vector.extract_strided_slice %12 {offsets = [0, 0], sizes = [2, 32], strides = [1, 1]} : vector<16x32xf32> to vector<2x32xf32>
    %17 = vector.extract_strided_slice %13 {offsets = [0, 0], sizes = [2, 32], strides = [1, 1]} : vector<16x32xf32> to vector<2x32xf32>
    %18 = vector.extract_strided_slice %14 {offsets = [0, 0], sizes = [2, 32], strides = [1, 1]} : vector<16x32xf32> to vector<2x32xf32>
    %19 = vector.extract_strided_slice %11 {offsets = [2, 0], sizes = [2, 32], strides = [1, 1]} : vector<16x32xf32> to vector<2x32xf32>
    %20 = vector.extract_strided_slice %12 {offsets = [2, 0], sizes = [2, 32], strides = [1, 1]} : vector<16x32xf32> to vector<2x32xf32>
    %21 = vector.extract_strided_slice %13 {offsets = [2, 0], sizes = [2, 32], strides = [1, 1]} : vector<16x32xf32> to vector<2x32xf32>
    %22 = vector.extract_strided_slice %14 {offsets = [2, 0], sizes = [2, 32], strides = [1, 1]} : vector<16x32xf32> to vector<2x32xf32>
    %23 = vector.extract_strided_slice %11 {offsets = [4, 0], sizes = [2, 32], strides = [1, 1]} : vector<16x32xf32> to vector<2x32xf32>
    %24 = vector.extract_strided_slice %12 {offsets = [4, 0], sizes = [2, 32], strides = [1, 1]} : vector<16x32xf32> to vector<2x32xf32>
    %25 = vector.extract_strided_slice %13 {offsets = [4, 0], sizes = [2, 32], strides = [1, 1]} : vector<16x32xf32> to vector<2x32xf32>
    %26 = vector.extract_strided_slice %14 {offsets = [4, 0], sizes = [2, 32], strides = [1, 1]} : vector<16x32xf32> to vector<2x32xf32>
    %27 = vector.extract_strided_slice %11 {offsets = [6, 0], sizes = [2, 32], strides = [1, 1]} : vector<16x32xf32> to vector<2x32xf32>
    %28 = vector.extract_strided_slice %12 {offsets = [6, 0], sizes = [2, 32], strides = [1, 1]} : vector<16x32xf32> to vector<2x32xf32>
    %29 = vector.extract_strided_slice %13 {offsets = [6, 0], sizes = [2, 32], strides = [1, 1]} : vector<16x32xf32> to vector<2x32xf32>
    %30 = vector.extract_strided_slice %14 {offsets = [6, 0], sizes = [2, 32], strides = [1, 1]} : vector<16x32xf32> to vector<2x32xf32>
    %31 = vector.extract_strided_slice %11 {offsets = [8, 0], sizes = [2, 32], strides = [1, 1]} : vector<16x32xf32> to vector<2x32xf32>
    %32 = vector.extract_strided_slice %12 {offsets = [8, 0], sizes = [2, 32], strides = [1, 1]} : vector<16x32xf32> to vector<2x32xf32>
    %33 = vector.extract_strided_slice %13 {offsets = [8, 0], sizes = [2, 32], strides = [1, 1]} : vector<16x32xf32> to vector<2x32xf32>
    %34 = vector.extract_strided_slice %14 {offsets = [8, 0], sizes = [2, 32], strides = [1, 1]} : vector<16x32xf32> to vector<2x32xf32>
    %35 = vector.extract_strided_slice %11 {offsets = [10, 0], sizes = [2, 32], strides = [1, 1]} : vector<16x32xf32> to vector<2x32xf32>
    %36 = vector.extract_strided_slice %12 {offsets = [10, 0], sizes = [2, 32], strides = [1, 1]} : vector<16x32xf32> to vector<2x32xf32>
    %37 = vector.extract_strided_slice %13 {offsets = [10, 0], sizes = [2, 32], strides = [1, 1]} : vector<16x32xf32> to vector<2x32xf32>
    %38 = vector.extract_strided_slice %14 {offsets = [10, 0], sizes = [2, 32], strides = [1, 1]} : vector<16x32xf32> to vector<2x32xf32>
    %39 = vector.extract_strided_slice %11 {offsets = [12, 0], sizes = [2, 32], strides = [1, 1]} : vector<16x32xf32> to vector<2x32xf32>
    %40 = vector.extract_strided_slice %12 {offsets = [12, 0], sizes = [2, 32], strides = [1, 1]} : vector<16x32xf32> to vector<2x32xf32>
    %41 = vector.extract_strided_slice %13 {offsets = [12, 0], sizes = [2, 32], strides = [1, 1]} : vector<16x32xf32> to vector<2x32xf32>
    %42 = vector.extract_strided_slice %14 {offsets = [12, 0], sizes = [2, 32], strides = [1, 1]} : vector<16x32xf32> to vector<2x32xf32>
    %43 = vector.extract_strided_slice %11 {offsets = [14, 0], sizes = [2, 32], strides = [1, 1]} : vector<16x32xf32> to vector<2x32xf32>
    %44 = vector.extract_strided_slice %12 {offsets = [14, 0], sizes = [2, 32], strides = [1, 1]} : vector<16x32xf32> to vector<2x32xf32>
    %45 = vector.extract_strided_slice %13 {offsets = [14, 0], sizes = [2, 32], strides = [1, 1]} : vector<16x32xf32> to vector<2x32xf32>
    %46 = vector.extract_strided_slice %14 {offsets = [14, 0], sizes = [2, 32], strides = [1, 1]} : vector<16x32xf32> to vector<2x32xf32>
    %cst_13 = arith.constant 0.000000e+00 : f32
    %47 = vector.broadcast %cst_13 : f32 to vector<2x32xf32>
    %cst_14 = arith.constant 0.000000e+00 : f32
    %48 = vector.broadcast %cst_14 : f32 to vector<2x32xf32>
    %cst_15 = arith.constant dense<0.000000e+00> : vector<2x32xf32>
    %49 = tpu.matmul %47, %3, %cst_15 {dimension_numbers = #tpu.dot_dimension_numbers<[1], [0], [0], [1], [0, 0, 1, 1], [], []>} : vector<2x32xf32>, vector<32x32xf32>, vector<2x32xf32> -> vector<2x32xf32>
    %50 = arith.addf %15, %49 : vector<2x32xf32>
    %51 = arith.negf %50 : vector<2x32xf32>
    %52 = math.exp %51 : vector<2x32xf32>
    %cst_16 = arith.constant 1.000000e+00 : f32
    %53 = vector.broadcast %cst_16 : f32 to vector<2x32xf32>
    %54 = arith.addf %53, %52 : vector<2x32xf32>
    %55 = arith.divf %53, %54 : vector<2x32xf32>
    %cst_17 = arith.constant dense<0.000000e+00> : vector<2x32xf32>
    %56 = tpu.matmul %47, %4, %cst_17 {dimension_numbers = #tpu.dot_dimension_numbers<[1], [0], [0], [1], [0, 0, 1, 1], [], []>} : vector<2x32xf32>, vector<32x32xf32>, vector<2x32xf32> -> vector<2x32xf32>
    %57 = arith.addf %16, %56 : vector<2x32xf32>
    %58 = arith.negf %57 : vector<2x32xf32>
    %59 = math.exp %58 : vector<2x32xf32>
    %cst_18 = arith.constant 1.000000e+00 : f32
    %60 = vector.broadcast %cst_18 : f32 to vector<2x32xf32>
    %61 = arith.addf %60, %59 : vector<2x32xf32>
    %62 = arith.divf %60, %61 : vector<2x32xf32>
    %cst_19 = arith.constant dense<0.000000e+00> : vector<2x32xf32>
    %63 = tpu.matmul %47, %5, %cst_19 {dimension_numbers = #tpu.dot_dimension_numbers<[1], [0], [0], [1], [0, 0, 1, 1], [], []>} : vector<2x32xf32>, vector<32x32xf32>, vector<2x32xf32> -> vector<2x32xf32>
    %64 = arith.addf %17, %63 : vector<2x32xf32>
    %65 = math.tanh %64 : vector<2x32xf32>
    %cst_20 = arith.constant dense<0.000000e+00> : vector<2x32xf32>
    %66 = tpu.matmul %47, %6, %cst_20 {dimension_numbers = #tpu.dot_dimension_numbers<[1], [0], [0], [1], [0, 0, 1, 1], [], []>} : vector<2x32xf32>, vector<32x32xf32>, vector<2x32xf32> -> vector<2x32xf32>
    %67 = arith.addf %18, %66 : vector<2x32xf32>
    %68 = arith.negf %67 : vector<2x32xf32>
    %69 = math.exp %68 : vector<2x32xf32>
    %cst_21 = arith.constant 1.000000e+00 : f32
    %70 = vector.broadcast %cst_21 : f32 to vector<2x32xf32>
    %71 = arith.addf %70, %69 : vector<2x32xf32>
    %72 = arith.divf %70, %71 : vector<2x32xf32>
    %73 = arith.mulf %62, %48 : vector<2x32xf32>
    %74 = arith.mulf %55, %65 : vector<2x32xf32>
    %75 = arith.addf %73, %74 : vector<2x32xf32>
    %76 = math.tanh %75 : vector<2x32xf32>
    %77 = arith.mulf %72, %76 : vector<2x32xf32>
    %cst_22 = arith.constant dense<0.000000e+00> : vector<2x32xf32>
    %78 = tpu.matmul %77, %3, %cst_22 {dimension_numbers = #tpu.dot_dimension_numbers<[1], [0], [0], [1], [0, 0, 1, 1], [], []>} : vector<2x32xf32>, vector<32x32xf32>, vector<2x32xf32> -> vector<2x32xf32>
    %79 = arith.addf %19, %78 : vector<2x32xf32>
    %80 = arith.negf %79 : vector<2x32xf32>
    %81 = math.exp %80 : vector<2x32xf32>
    %cst_23 = arith.constant 1.000000e+00 : f32
    %82 = vector.broadcast %cst_23 : f32 to vector<2x32xf32>
    %83 = arith.addf %82, %81 : vector<2x32xf32>
    %84 = arith.divf %82, %83 : vector<2x32xf32>
    %cst_24 = arith.constant dense<0.000000e+00> : vector<2x32xf32>
    %85 = tpu.matmul %77, %4, %cst_24 {dimension_numbers = #tpu.dot_dimension_numbers<[1], [0], [0], [1], [0, 0, 1, 1], [], []>} : vector<2x32xf32>, vector<32x32xf32>, vector<2x32xf32> -> vector<2x32xf32>
    %86 = arith.addf %20, %85 : vector<2x32xf32>
    %87 = arith.negf %86 : vector<2x32xf32>
    %88 = math.exp %87 : vector<2x32xf32>
    %cst_25 = arith.constant 1.000000e+00 : f32
    %89 = vector.broadcast %cst_25 : f32 to vector<2x32xf32>
    %90 = arith.addf %89, %88 : vector<2x32xf32>
    %91 = arith.divf %89, %90 : vector<2x32xf32>
    %cst_26 = arith.constant dense<0.000000e+00> : vector<2x32xf32>
    %92 = tpu.matmul %77, %5, %cst_26 {dimension_numbers = #tpu.dot_dimension_numbers<[1], [0], [0], [1], [0, 0, 1, 1], [], []>} : vector<2x32xf32>, vector<32x32xf32>, vector<2x32xf32> -> vector<2x32xf32>
    %93 = arith.addf %21, %92 : vector<2x32xf32>
    %94 = math.tanh %93 : vector<2x32xf32>
    %cst_27 = arith.constant dense<0.000000e+00> : vector<2x32xf32>
    %95 = tpu.matmul %77, %6, %cst_27 {dimension_numbers = #tpu.dot_dimension_numbers<[1], [0], [0], [1], [0, 0, 1, 1], [], []>} : vector<2x32xf32>, vector<32x32xf32>, vector<2x32xf32> -> vector<2x32xf32>
    %96 = arith.addf %22, %95 : vector<2x32xf32>
    %97 = arith.negf %96 : vector<2x32xf32>
    %98 = math.exp %97 : vector<2x32xf32>
    %cst_28 = arith.constant 1.000000e+00 : f32
    %99 = vector.broadcast %cst_28 : f32 to vector<2x32xf32>
    %100 = arith.addf %99, %98 : vector<2x32xf32>
    %101 = arith.divf %99, %100 : vector<2x32xf32>
    %102 = arith.mulf %91, %75 : vector<2x32xf32>
    %103 = arith.mulf %84, %94 : vector<2x32xf32>
    %104 = arith.addf %102, %103 : vector<2x32xf32>
    %105 = math.tanh %104 : vector<2x32xf32>
    %106 = arith.mulf %101, %105 : vector<2x32xf32>
    %cst_29 = arith.constant dense<0.000000e+00> : vector<2x32xf32>
    %107 = tpu.matmul %106, %3, %cst_29 {dimension_numbers = #tpu.dot_dimension_numbers<[1], [0], [0], [1], [0, 0, 1, 1], [], []>} : vector<2x32xf32>, vector<32x32xf32>, vector<2x32xf32> -> vector<2x32xf32>
    %108 = arith.addf %23, %107 : vector<2x32xf32>
    %109 = arith.negf %108 : vector<2x32xf32>
    %110 = math.exp %109 : vector<2x32xf32>
    %cst_30 = arith.constant 1.000000e+00 : f32
    %111 = vector.broadcast %cst_30 : f32 to vector<2x32xf32>
    %112 = arith.addf %111, %110 : vector<2x32xf32>
    %113 = arith.divf %111, %112 : vector<2x32xf32>
    %cst_31 = arith.constant dense<0.000000e+00> : vector<2x32xf32>
    %114 = tpu.matmul %106, %4, %cst_31 {dimension_numbers = #tpu.dot_dimension_numbers<[1], [0], [0], [1], [0, 0, 1, 1], [], []>} : vector<2x32xf32>, vector<32x32xf32>, vector<2x32xf32> -> vector<2x32xf32>
    %115 = arith.addf %24, %114 : vector<2x32xf32>
    %116 = arith.negf %115 : vector<2x32xf32>
    %117 = math.exp %116 : vector<2x32xf32>
    %cst_32 = arith.constant 1.000000e+00 : f32
    %118 = vector.broadcast %cst_32 : f32 to vector<2x32xf32>
    %119 = arith.addf %118, %117 : vector<2x32xf32>
    %120 = arith.divf %118, %119 : vector<2x32xf32>
    %cst_33 = arith.constant dense<0.000000e+00> : vector<2x32xf32>
    %121 = tpu.matmul %106, %5, %cst_33 {dimension_numbers = #tpu.dot_dimension_numbers<[1], [0], [0], [1], [0, 0, 1, 1], [], []>} : vector<2x32xf32>, vector<32x32xf32>, vector<2x32xf32> -> vector<2x32xf32>
    %122 = arith.addf %25, %121 : vector<2x32xf32>
    %123 = math.tanh %122 : vector<2x32xf32>
    %cst_34 = arith.constant dense<0.000000e+00> : vector<2x32xf32>
    %124 = tpu.matmul %106, %6, %cst_34 {dimension_numbers = #tpu.dot_dimension_numbers<[1], [0], [0], [1], [0, 0, 1, 1], [], []>} : vector<2x32xf32>, vector<32x32xf32>, vector<2x32xf32> -> vector<2x32xf32>
    %125 = arith.addf %26, %124 : vector<2x32xf32>
    %126 = arith.negf %125 : vector<2x32xf32>
    %127 = math.exp %126 : vector<2x32xf32>
    %cst_35 = arith.constant 1.000000e+00 : f32
    %128 = vector.broadcast %cst_35 : f32 to vector<2x32xf32>
    %129 = arith.addf %128, %127 : vector<2x32xf32>
    %130 = arith.divf %128, %129 : vector<2x32xf32>
    %131 = arith.mulf %120, %104 : vector<2x32xf32>
    %132 = arith.mulf %113, %123 : vector<2x32xf32>
    %133 = arith.addf %131, %132 : vector<2x32xf32>
    %134 = math.tanh %133 : vector<2x32xf32>
    %135 = arith.mulf %130, %134 : vector<2x32xf32>
    %cst_36 = arith.constant dense<0.000000e+00> : vector<2x32xf32>
    %136 = tpu.matmul %135, %3, %cst_36 {dimension_numbers = #tpu.dot_dimension_numbers<[1], [0], [0], [1], [0, 0, 1, 1], [], []>} : vector<2x32xf32>, vector<32x32xf32>, vector<2x32xf32> -> vector<2x32xf32>
    %137 = arith.addf %27, %136 : vector<2x32xf32>
    %138 = arith.negf %137 : vector<2x32xf32>
    %139 = math.exp %138 : vector<2x32xf32>
    %cst_37 = arith.constant 1.000000e+00 : f32
    %140 = vector.broadcast %cst_37 : f32 to vector<2x32xf32>
    %141 = arith.addf %140, %139 : vector<2x32xf32>
    %142 = arith.divf %140, %141 : vector<2x32xf32>
    %cst_38 = arith.constant dense<0.000000e+00> : vector<2x32xf32>
    %143 = tpu.matmul %135, %4, %cst_38 {dimension_numbers = #tpu.dot_dimension_numbers<[1], [0], [0], [1], [0, 0, 1, 1], [], []>} : vector<2x32xf32>, vector<32x32xf32>, vector<2x32xf32> -> vector<2x32xf32>
    %144 = arith.addf %28, %143 : vector<2x32xf32>
    %145 = arith.negf %144 : vector<2x32xf32>
    %146 = math.exp %145 : vector<2x32xf32>
    %cst_39 = arith.constant 1.000000e+00 : f32
    %147 = vector.broadcast %cst_39 : f32 to vector<2x32xf32>
    %148 = arith.addf %147, %146 : vector<2x32xf32>
    %149 = arith.divf %147, %148 : vector<2x32xf32>
    %cst_40 = arith.constant dense<0.000000e+00> : vector<2x32xf32>
    %150 = tpu.matmul %135, %5, %cst_40 {dimension_numbers = #tpu.dot_dimension_numbers<[1], [0], [0], [1], [0, 0, 1, 1], [], []>} : vector<2x32xf32>, vector<32x32xf32>, vector<2x32xf32> -> vector<2x32xf32>
    %151 = arith.addf %29, %150 : vector<2x32xf32>
    %152 = math.tanh %151 : vector<2x32xf32>
    %cst_41 = arith.constant dense<0.000000e+00> : vector<2x32xf32>
    %153 = tpu.matmul %135, %6, %cst_41 {dimension_numbers = #tpu.dot_dimension_numbers<[1], [0], [0], [1], [0, 0, 1, 1], [], []>} : vector<2x32xf32>, vector<32x32xf32>, vector<2x32xf32> -> vector<2x32xf32>
    %154 = arith.addf %30, %153 : vector<2x32xf32>
    %155 = arith.negf %154 : vector<2x32xf32>
    %156 = math.exp %155 : vector<2x32xf32>
    %cst_42 = arith.constant 1.000000e+00 : f32
    %157 = vector.broadcast %cst_42 : f32 to vector<2x32xf32>
    %158 = arith.addf %157, %156 : vector<2x32xf32>
    %159 = arith.divf %157, %158 : vector<2x32xf32>
    %160 = arith.mulf %149, %133 : vector<2x32xf32>
    %161 = arith.mulf %142, %152 : vector<2x32xf32>
    %162 = arith.addf %160, %161 : vector<2x32xf32>
    %163 = math.tanh %162 : vector<2x32xf32>
    %164 = arith.mulf %159, %163 : vector<2x32xf32>
    %cst_43 = arith.constant dense<0.000000e+00> : vector<2x32xf32>
    %165 = tpu.matmul %164, %3, %cst_43 {dimension_numbers = #tpu.dot_dimension_numbers<[1], [0], [0], [1], [0, 0, 1, 1], [], []>} : vector<2x32xf32>, vector<32x32xf32>, vector<2x32xf32> -> vector<2x32xf32>
    %166 = arith.addf %31, %165 : vector<2x32xf32>
    %167 = arith.negf %166 : vector<2x32xf32>
    %168 = math.exp %167 : vector<2x32xf32>
    %cst_44 = arith.constant 1.000000e+00 : f32
    %169 = vector.broadcast %cst_44 : f32 to vector<2x32xf32>
    %170 = arith.addf %169, %168 : vector<2x32xf32>
    %171 = arith.divf %169, %170 : vector<2x32xf32>
    %cst_45 = arith.constant dense<0.000000e+00> : vector<2x32xf32>
    %172 = tpu.matmul %164, %4, %cst_45 {dimension_numbers = #tpu.dot_dimension_numbers<[1], [0], [0], [1], [0, 0, 1, 1], [], []>} : vector<2x32xf32>, vector<32x32xf32>, vector<2x32xf32> -> vector<2x32xf32>
    %173 = arith.addf %32, %172 : vector<2x32xf32>
    %174 = arith.negf %173 : vector<2x32xf32>
    %175 = math.exp %174 : vector<2x32xf32>
    %cst_46 = arith.constant 1.000000e+00 : f32
    %176 = vector.broadcast %cst_46 : f32 to vector<2x32xf32>
    %177 = arith.addf %176, %175 : vector<2x32xf32>
    %178 = arith.divf %176, %177 : vector<2x32xf32>
    %cst_47 = arith.constant dense<0.000000e+00> : vector<2x32xf32>
    %179 = tpu.matmul %164, %5, %cst_47 {dimension_numbers = #tpu.dot_dimension_numbers<[1], [0], [0], [1], [0, 0, 1, 1], [], []>} : vector<2x32xf32>, vector<32x32xf32>, vector<2x32xf32> -> vector<2x32xf32>
    %180 = arith.addf %33, %179 : vector<2x32xf32>
    %181 = math.tanh %180 : vector<2x32xf32>
    %cst_48 = arith.constant dense<0.000000e+00> : vector<2x32xf32>
    %182 = tpu.matmul %164, %6, %cst_48 {dimension_numbers = #tpu.dot_dimension_numbers<[1], [0], [0], [1], [0, 0, 1, 1], [], []>} : vector<2x32xf32>, vector<32x32xf32>, vector<2x32xf32> -> vector<2x32xf32>
    %183 = arith.addf %34, %182 : vector<2x32xf32>
    %184 = arith.negf %183 : vector<2x32xf32>
    %185 = math.exp %184 : vector<2x32xf32>
    %cst_49 = arith.constant 1.000000e+00 : f32
    %186 = vector.broadcast %cst_49 : f32 to vector<2x32xf32>
    %187 = arith.addf %186, %185 : vector<2x32xf32>
    %188 = arith.divf %186, %187 : vector<2x32xf32>
    %189 = arith.mulf %178, %162 : vector<2x32xf32>
    %190 = arith.mulf %171, %181 : vector<2x32xf32>
    %191 = arith.addf %189, %190 : vector<2x32xf32>
    %192 = math.tanh %191 : vector<2x32xf32>
    %193 = arith.mulf %188, %192 : vector<2x32xf32>
    %cst_50 = arith.constant dense<0.000000e+00> : vector<2x32xf32>
    %194 = tpu.matmul %193, %3, %cst_50 {dimension_numbers = #tpu.dot_dimension_numbers<[1], [0], [0], [1], [0, 0, 1, 1], [], []>} : vector<2x32xf32>, vector<32x32xf32>, vector<2x32xf32> -> vector<2x32xf32>
    %195 = arith.addf %35, %194 : vector<2x32xf32>
    %196 = arith.negf %195 : vector<2x32xf32>
    %197 = math.exp %196 : vector<2x32xf32>
    %cst_51 = arith.constant 1.000000e+00 : f32
    %198 = vector.broadcast %cst_51 : f32 to vector<2x32xf32>
    %199 = arith.addf %198, %197 : vector<2x32xf32>
    %200 = arith.divf %198, %199 : vector<2x32xf32>
    %cst_52 = arith.constant dense<0.000000e+00> : vector<2x32xf32>
    %201 = tpu.matmul %193, %4, %cst_52 {dimension_numbers = #tpu.dot_dimension_numbers<[1], [0], [0], [1], [0, 0, 1, 1], [], []>} : vector<2x32xf32>, vector<32x32xf32>, vector<2x32xf32> -> vector<2x32xf32>
    %202 = arith.addf %36, %201 : vector<2x32xf32>
    %203 = arith.negf %202 : vector<2x32xf32>
    %204 = math.exp %203 : vector<2x32xf32>
    %cst_53 = arith.constant 1.000000e+00 : f32
    %205 = vector.broadcast %cst_53 : f32 to vector<2x32xf32>
    %206 = arith.addf %205, %204 : vector<2x32xf32>
    %207 = arith.divf %205, %206 : vector<2x32xf32>
    %cst_54 = arith.constant dense<0.000000e+00> : vector<2x32xf32>
    %208 = tpu.matmul %193, %5, %cst_54 {dimension_numbers = #tpu.dot_dimension_numbers<[1], [0], [0], [1], [0, 0, 1, 1], [], []>} : vector<2x32xf32>, vector<32x32xf32>, vector<2x32xf32> -> vector<2x32xf32>
    %209 = arith.addf %37, %208 : vector<2x32xf32>
    %210 = math.tanh %209 : vector<2x32xf32>
    %cst_55 = arith.constant dense<0.000000e+00> : vector<2x32xf32>
    %211 = tpu.matmul %193, %6, %cst_55 {dimension_numbers = #tpu.dot_dimension_numbers<[1], [0], [0], [1], [0, 0, 1, 1], [], []>} : vector<2x32xf32>, vector<32x32xf32>, vector<2x32xf32> -> vector<2x32xf32>
    %212 = arith.addf %38, %211 : vector<2x32xf32>
    %213 = arith.negf %212 : vector<2x32xf32>
    %214 = math.exp %213 : vector<2x32xf32>
    %cst_56 = arith.constant 1.000000e+00 : f32
    %215 = vector.broadcast %cst_56 : f32 to vector<2x32xf32>
    %216 = arith.addf %215, %214 : vector<2x32xf32>
    %217 = arith.divf %215, %216 : vector<2x32xf32>
    %218 = arith.mulf %207, %191 : vector<2x32xf32>
    %219 = arith.mulf %200, %210 : vector<2x32xf32>
    %220 = arith.addf %218, %219 : vector<2x32xf32>
    %221 = math.tanh %220 : vector<2x32xf32>
    %222 = arith.mulf %217, %221 : vector<2x32xf32>
    %cst_57 = arith.constant dense<0.000000e+00> : vector<2x32xf32>
    %223 = tpu.matmul %222, %3, %cst_57 {dimension_numbers = #tpu.dot_dimension_numbers<[1], [0], [0], [1], [0, 0, 1, 1], [], []>} : vector<2x32xf32>, vector<32x32xf32>, vector<2x32xf32> -> vector<2x32xf32>
    %224 = arith.addf %39, %223 : vector<2x32xf32>
    %225 = arith.negf %224 : vector<2x32xf32>
    %226 = math.exp %225 : vector<2x32xf32>
    %cst_58 = arith.constant 1.000000e+00 : f32
    %227 = vector.broadcast %cst_58 : f32 to vector<2x32xf32>
    %228 = arith.addf %227, %226 : vector<2x32xf32>
    %229 = arith.divf %227, %228 : vector<2x32xf32>
    %cst_59 = arith.constant dense<0.000000e+00> : vector<2x32xf32>
    %230 = tpu.matmul %222, %4, %cst_59 {dimension_numbers = #tpu.dot_dimension_numbers<[1], [0], [0], [1], [0, 0, 1, 1], [], []>} : vector<2x32xf32>, vector<32x32xf32>, vector<2x32xf32> -> vector<2x32xf32>
    %231 = arith.addf %40, %230 : vector<2x32xf32>
    %232 = arith.negf %231 : vector<2x32xf32>
    %233 = math.exp %232 : vector<2x32xf32>
    %cst_60 = arith.constant 1.000000e+00 : f32
    %234 = vector.broadcast %cst_60 : f32 to vector<2x32xf32>
    %235 = arith.addf %234, %233 : vector<2x32xf32>
    %236 = arith.divf %234, %235 : vector<2x32xf32>
    %cst_61 = arith.constant dense<0.000000e+00> : vector<2x32xf32>
    %237 = tpu.matmul %222, %5, %cst_61 {dimension_numbers = #tpu.dot_dimension_numbers<[1], [0], [0], [1], [0, 0, 1, 1], [], []>} : vector<2x32xf32>, vector<32x32xf32>, vector<2x32xf32> -> vector<2x32xf32>
    %238 = arith.addf %41, %237 : vector<2x32xf32>
    %239 = math.tanh %238 : vector<2x32xf32>
    %cst_62 = arith.constant dense<0.000000e+00> : vector<2x32xf32>
    %240 = tpu.matmul %222, %6, %cst_62 {dimension_numbers = #tpu.dot_dimension_numbers<[1], [0], [0], [1], [0, 0, 1, 1], [], []>} : vector<2x32xf32>, vector<32x32xf32>, vector<2x32xf32> -> vector<2x32xf32>
    %241 = arith.addf %42, %240 : vector<2x32xf32>
    %242 = arith.negf %241 : vector<2x32xf32>
    %243 = math.exp %242 : vector<2x32xf32>
    %cst_63 = arith.constant 1.000000e+00 : f32
    %244 = vector.broadcast %cst_63 : f32 to vector<2x32xf32>
    %245 = arith.addf %244, %243 : vector<2x32xf32>
    %246 = arith.divf %244, %245 : vector<2x32xf32>
    %247 = arith.mulf %236, %220 : vector<2x32xf32>
    %248 = arith.mulf %229, %239 : vector<2x32xf32>
    %249 = arith.addf %247, %248 : vector<2x32xf32>
    %250 = math.tanh %249 : vector<2x32xf32>
    %251 = arith.mulf %246, %250 : vector<2x32xf32>
    %cst_64 = arith.constant dense<0.000000e+00> : vector<2x32xf32>
    %252 = tpu.matmul %251, %3, %cst_64 {dimension_numbers = #tpu.dot_dimension_numbers<[1], [0], [0], [1], [0, 0, 1, 1], [], []>} : vector<2x32xf32>, vector<32x32xf32>, vector<2x32xf32> -> vector<2x32xf32>
    %253 = arith.addf %43, %252 : vector<2x32xf32>
    %254 = arith.negf %253 : vector<2x32xf32>
    %255 = math.exp %254 : vector<2x32xf32>
    %cst_65 = arith.constant 1.000000e+00 : f32
    %256 = vector.broadcast %cst_65 : f32 to vector<2x32xf32>
    %257 = arith.addf %256, %255 : vector<2x32xf32>
    %258 = arith.divf %256, %257 : vector<2x32xf32>
    %cst_66 = arith.constant dense<0.000000e+00> : vector<2x32xf32>
    %259 = tpu.matmul %251, %4, %cst_66 {dimension_numbers = #tpu.dot_dimension_numbers<[1], [0], [0], [1], [0, 0, 1, 1], [], []>} : vector<2x32xf32>, vector<32x32xf32>, vector<2x32xf32> -> vector<2x32xf32>
    %260 = arith.addf %44, %259 : vector<2x32xf32>
    %261 = arith.negf %260 : vector<2x32xf32>
    %262 = math.exp %261 : vector<2x32xf32>
    %cst_67 = arith.constant 1.000000e+00 : f32
    %263 = vector.broadcast %cst_67 : f32 to vector<2x32xf32>
    %264 = arith.addf %263, %262 : vector<2x32xf32>
    %265 = arith.divf %263, %264 : vector<2x32xf32>
    %cst_68 = arith.constant dense<0.000000e+00> : vector<2x32xf32>
    %266 = tpu.matmul %251, %5, %cst_68 {dimension_numbers = #tpu.dot_dimension_numbers<[1], [0], [0], [1], [0, 0, 1, 1], [], []>} : vector<2x32xf32>, vector<32x32xf32>, vector<2x32xf32> -> vector<2x32xf32>
    %267 = arith.addf %45, %266 : vector<2x32xf32>
    %268 = math.tanh %267 : vector<2x32xf32>
    %cst_69 = arith.constant dense<0.000000e+00> : vector<2x32xf32>
    %269 = tpu.matmul %251, %6, %cst_69 {dimension_numbers = #tpu.dot_dimension_numbers<[1], [0], [0], [1], [0, 0, 1, 1], [], []>} : vector<2x32xf32>, vector<32x32xf32>, vector<2x32xf32> -> vector<2x32xf32>
    %270 = arith.addf %46, %269 : vector<2x32xf32>
    %271 = arith.negf %270 : vector<2x32xf32>
    %272 = math.exp %271 : vector<2x32xf32>
    %cst_70 = arith.constant 1.000000e+00 : f32
    %273 = vector.broadcast %cst_70 : f32 to vector<2x32xf32>
    %274 = arith.addf %273, %272 : vector<2x32xf32>
    %275 = arith.divf %273, %274 : vector<2x32xf32>
    %276 = arith.mulf %265, %249 : vector<2x32xf32>
    %277 = arith.mulf %258, %268 : vector<2x32xf32>
    %278 = arith.addf %276, %277 : vector<2x32xf32>
    %279 = math.tanh %278 : vector<2x32xf32>
    %280 = arith.mulf %275, %279 : vector<2x32xf32>
    %c0_71 = arith.constant 0 : index
    %c0_72 = arith.constant 0 : index
    %281 = vector.load %arg7[%c0_71, %c0_72] : memref<32x128xf32, #tpu.memory_space<vmem>>, vector<32x128xf32>
    %c0_73 = arith.constant 0 : index
    %c0_74 = arith.constant 0 : index
    %282 = vector.load %arg8[%c0_73, %c0_74] : memref<32x32xf32, #tpu.memory_space<vmem>>, vector<32x32xf32>
    %c0_75 = arith.constant 0 : index
    %c0_76 = arith.constant 0 : index
    %283 = vector.load %arg9[%c0_75, %c0_76] : memref<32x32xf32, #tpu.memory_space<vmem>>, vector<32x32xf32>
    %c0_77 = arith.constant 0 : index
    %c0_78 = arith.constant 0 : index
    %284 = vector.load %arg10[%c0_77, %c0_78] : memref<32x32xf32, #tpu.memory_space<vmem>>, vector<32x32xf32>
    %c0_79 = arith.constant 0 : index
    %c0_80 = arith.constant 0 : index
    %285 = vector.load %arg11[%c0_79, %c0_80] : memref<32x32xf32, #tpu.memory_space<vmem>>, vector<32x32xf32>
    %c0_81 = arith.constant 0 : index
    %c0_82 = arith.constant 0 : index
    %286 = vector.load %arg12[%c0_81, %c0_82] : memref<1x128xf32, #tpu.memory_space<vmem>>, vector<1x128xf32>
    %cst_83 = arith.constant dense<0.000000e+00> : vector<2x128xf32>
    %287 = tpu.matmul %77, %281, %cst_83 {dimension_numbers = #tpu.dot_dimension_numbers<[1], [0], [0], [1], [0, 0, 1, 1], [], []>} : vector<2x32xf32>, vector<32x128xf32>, vector<2x128xf32> -> vector<2x128xf32>
    %288 = vector.broadcast %286 : vector<1x128xf32> to vector<2x128xf32>
    %289 = arith.addf %287, %288 : vector<2x128xf32>
    %290 = vector.extract_strided_slice %289 {offsets = [0, 0], sizes = [2, 32], strides = [1, 1]} : vector<2x128xf32> to vector<2x32xf32>
    %291 = vector.extract_strided_slice %289 {offsets = [0, 32], sizes = [2, 32], strides = [1, 1]} : vector<2x128xf32> to vector<2x32xf32>
    %292 = vector.extract_strided_slice %289 {offsets = [0, 64], sizes = [2, 32], strides = [1, 1]} : vector<2x128xf32> to vector<2x32xf32>
    %293 = vector.extract_strided_slice %289 {offsets = [0, 96], sizes = [2, 32], strides = [1, 1]} : vector<2x128xf32> to vector<2x32xf32>
    %cst_84 = arith.constant dense<0.000000e+00> : vector<2x128xf32>
    %294 = tpu.matmul %106, %281, %cst_84 {dimension_numbers = #tpu.dot_dimension_numbers<[1], [0], [0], [1], [0, 0, 1, 1], [], []>} : vector<2x32xf32>, vector<32x128xf32>, vector<2x128xf32> -> vector<2x128xf32>
    %295 = vector.broadcast %286 : vector<1x128xf32> to vector<2x128xf32>
    %296 = arith.addf %294, %295 : vector<2x128xf32>
    %297 = vector.extract_strided_slice %296 {offsets = [0, 0], sizes = [2, 32], strides = [1, 1]} : vector<2x128xf32> to vector<2x32xf32>
    %298 = vector.extract_strided_slice %296 {offsets = [0, 32], sizes = [2, 32], strides = [1, 1]} : vector<2x128xf32> to vector<2x32xf32>
    %299 = vector.extract_strided_slice %296 {offsets = [0, 64], sizes = [2, 32], strides = [1, 1]} : vector<2x128xf32> to vector<2x32xf32>
    %300 = vector.extract_strided_slice %296 {offsets = [0, 96], sizes = [2, 32], strides = [1, 1]} : vector<2x128xf32> to vector<2x32xf32>
    %cst_85 = arith.constant dense<0.000000e+00> : vector<2x128xf32>
    %301 = tpu.matmul %135, %281, %cst_85 {dimension_numbers = #tpu.dot_dimension_numbers<[1], [0], [0], [1], [0, 0, 1, 1], [], []>} : vector<2x32xf32>, vector<32x128xf32>, vector<2x128xf32> -> vector<2x128xf32>
    %302 = vector.broadcast %286 : vector<1x128xf32> to vector<2x128xf32>
    %303 = arith.addf %301, %302 : vector<2x128xf32>
    %304 = vector.extract_strided_slice %303 {offsets = [0, 0], sizes = [2, 32], strides = [1, 1]} : vector<2x128xf32> to vector<2x32xf32>
    %305 = vector.extract_strided_slice %303 {offsets = [0, 32], sizes = [2, 32], strides = [1, 1]} : vector<2x128xf32> to vector<2x32xf32>
    %306 = vector.extract_strided_slice %303 {offsets = [0, 64], sizes = [2, 32], strides = [1, 1]} : vector<2x128xf32> to vector<2x32xf32>
    %307 = vector.extract_strided_slice %303 {offsets = [0, 96], sizes = [2, 32], strides = [1, 1]} : vector<2x128xf32> to vector<2x32xf32>
    %cst_86 = arith.constant dense<0.000000e+00> : vector<2x128xf32>
    %308 = tpu.matmul %164, %281, %cst_86 {dimension_numbers = #tpu.dot_dimension_numbers<[1], [0], [0], [1], [0, 0, 1, 1], [], []>} : vector<2x32xf32>, vector<32x128xf32>, vector<2x128xf32> -> vector<2x128xf32>
    %309 = vector.broadcast %286 : vector<1x128xf32> to vector<2x128xf32>
    %310 = arith.addf %308, %309 : vector<2x128xf32>
    %311 = vector.extract_strided_slice %310 {offsets = [0, 0], sizes = [2, 32], strides = [1, 1]} : vector<2x128xf32> to vector<2x32xf32>
    %312 = vector.extract_strided_slice %310 {offsets = [0, 32], sizes = [2, 32], strides = [1, 1]} : vector<2x128xf32> to vector<2x32xf32>
    %313 = vector.extract_strided_slice %310 {offsets = [0, 64], sizes = [2, 32], strides = [1, 1]} : vector<2x128xf32> to vector<2x32xf32>
    %314 = vector.extract_strided_slice %310 {offsets = [0, 96], sizes = [2, 32], strides = [1, 1]} : vector<2x128xf32> to vector<2x32xf32>
    %cst_87 = arith.constant dense<0.000000e+00> : vector<2x128xf32>
    %315 = tpu.matmul %193, %281, %cst_87 {dimension_numbers = #tpu.dot_dimension_numbers<[1], [0], [0], [1], [0, 0, 1, 1], [], []>} : vector<2x32xf32>, vector<32x128xf32>, vector<2x128xf32> -> vector<2x128xf32>
    %316 = vector.broadcast %286 : vector<1x128xf32> to vector<2x128xf32>
    %317 = arith.addf %315, %316 : vector<2x128xf32>
    %318 = vector.extract_strided_slice %317 {offsets = [0, 0], sizes = [2, 32], strides = [1, 1]} : vector<2x128xf32> to vector<2x32xf32>
    %319 = vector.extract_strided_slice %317 {offsets = [0, 32], sizes = [2, 32], strides = [1, 1]} : vector<2x128xf32> to vector<2x32xf32>
    %320 = vector.extract_strided_slice %317 {offsets = [0, 64], sizes = [2, 32], strides = [1, 1]} : vector<2x128xf32> to vector<2x32xf32>
    %321 = vector.extract_strided_slice %317 {offsets = [0, 96], sizes = [2, 32], strides = [1, 1]} : vector<2x128xf32> to vector<2x32xf32>
    %cst_88 = arith.constant dense<0.000000e+00> : vector<2x128xf32>
    %322 = tpu.matmul %222, %281, %cst_88 {dimension_numbers = #tpu.dot_dimension_numbers<[1], [0], [0], [1], [0, 0, 1, 1], [], []>} : vector<2x32xf32>, vector<32x128xf32>, vector<2x128xf32> -> vector<2x128xf32>
    %323 = vector.broadcast %286 : vector<1x128xf32> to vector<2x128xf32>
    %324 = arith.addf %322, %323 : vector<2x128xf32>
    %325 = vector.extract_strided_slice %324 {offsets = [0, 0], sizes = [2, 32], strides = [1, 1]} : vector<2x128xf32> to vector<2x32xf32>
    %326 = vector.extract_strided_slice %324 {offsets = [0, 32], sizes = [2, 32], strides = [1, 1]} : vector<2x128xf32> to vector<2x32xf32>
    %327 = vector.extract_strided_slice %324 {offsets = [0, 64], sizes = [2, 32], strides = [1, 1]} : vector<2x128xf32> to vector<2x32xf32>
    %328 = vector.extract_strided_slice %324 {offsets = [0, 96], sizes = [2, 32], strides = [1, 1]} : vector<2x128xf32> to vector<2x32xf32>
    %cst_89 = arith.constant dense<0.000000e+00> : vector<2x128xf32>
    %329 = tpu.matmul %251, %281, %cst_89 {dimension_numbers = #tpu.dot_dimension_numbers<[1], [0], [0], [1], [0, 0, 1, 1], [], []>} : vector<2x32xf32>, vector<32x128xf32>, vector<2x128xf32> -> vector<2x128xf32>
    %330 = vector.broadcast %286 : vector<1x128xf32> to vector<2x128xf32>
    %331 = arith.addf %329, %330 : vector<2x128xf32>
    %332 = vector.extract_strided_slice %331 {offsets = [0, 0], sizes = [2, 32], strides = [1, 1]} : vector<2x128xf32> to vector<2x32xf32>
    %333 = vector.extract_strided_slice %331 {offsets = [0, 32], sizes = [2, 32], strides = [1, 1]} : vector<2x128xf32> to vector<2x32xf32>
    %334 = vector.extract_strided_slice %331 {offsets = [0, 64], sizes = [2, 32], strides = [1, 1]} : vector<2x128xf32> to vector<2x32xf32>
    %335 = vector.extract_strided_slice %331 {offsets = [0, 96], sizes = [2, 32], strides = [1, 1]} : vector<2x128xf32> to vector<2x32xf32>
    %cst_90 = arith.constant dense<0.000000e+00> : vector<2x128xf32>
    %336 = tpu.matmul %280, %281, %cst_90 {dimension_numbers = #tpu.dot_dimension_numbers<[1], [0], [0], [1], [0, 0, 1, 1], [], []>} : vector<2x32xf32>, vector<32x128xf32>, vector<2x128xf32> -> vector<2x128xf32>
    %337 = vector.broadcast %286 : vector<1x128xf32> to vector<2x128xf32>
    %338 = arith.addf %336, %337 : vector<2x128xf32>
    %339 = vector.extract_strided_slice %338 {offsets = [0, 0], sizes = [2, 32], strides = [1, 1]} : vector<2x128xf32> to vector<2x32xf32>
    %340 = vector.extract_strided_slice %338 {offsets = [0, 32], sizes = [2, 32], strides = [1, 1]} : vector<2x128xf32> to vector<2x32xf32>
    %341 = vector.extract_strided_slice %338 {offsets = [0, 64], sizes = [2, 32], strides = [1, 1]} : vector<2x128xf32> to vector<2x32xf32>
    %342 = vector.extract_strided_slice %338 {offsets = [0, 96], sizes = [2, 32], strides = [1, 1]} : vector<2x128xf32> to vector<2x32xf32>
    %cst_91 = arith.constant 0.000000e+00 : f32
    %343 = vector.broadcast %cst_91 : f32 to vector<2x32xf32>
    %cst_92 = arith.constant 0.000000e+00 : f32
    %344 = vector.broadcast %cst_92 : f32 to vector<2x32xf32>
    %cst_93 = arith.constant dense<0.000000e+00> : vector<2x32xf32>
    %345 = tpu.matmul %343, %282, %cst_93 {dimension_numbers = #tpu.dot_dimension_numbers<[1], [0], [0], [1], [0, 0, 1, 1], [], []>} : vector<2x32xf32>, vector<32x32xf32>, vector<2x32xf32> -> vector<2x32xf32>
    %346 = arith.addf %290, %345 : vector<2x32xf32>
    %347 = arith.negf %346 : vector<2x32xf32>
    %348 = math.exp %347 : vector<2x32xf32>
    %cst_94 = arith.constant 1.000000e+00 : f32
    %349 = vector.broadcast %cst_94 : f32 to vector<2x32xf32>
    %350 = arith.addf %349, %348 : vector<2x32xf32>
    %351 = arith.divf %349, %350 : vector<2x32xf32>
    %cst_95 = arith.constant dense<0.000000e+00> : vector<2x32xf32>
    %352 = tpu.matmul %343, %283, %cst_95 {dimension_numbers = #tpu.dot_dimension_numbers<[1], [0], [0], [1], [0, 0, 1, 1], [], []>} : vector<2x32xf32>, vector<32x32xf32>, vector<2x32xf32> -> vector<2x32xf32>
    %353 = arith.addf %291, %352 : vector<2x32xf32>
    %354 = arith.negf %353 : vector<2x32xf32>
    %355 = math.exp %354 : vector<2x32xf32>
    %cst_96 = arith.constant 1.000000e+00 : f32
    %356 = vector.broadcast %cst_96 : f32 to vector<2x32xf32>
    %357 = arith.addf %356, %355 : vector<2x32xf32>
    %358 = arith.divf %356, %357 : vector<2x32xf32>
    %cst_97 = arith.constant dense<0.000000e+00> : vector<2x32xf32>
    %359 = tpu.matmul %343, %284, %cst_97 {dimension_numbers = #tpu.dot_dimension_numbers<[1], [0], [0], [1], [0, 0, 1, 1], [], []>} : vector<2x32xf32>, vector<32x32xf32>, vector<2x32xf32> -> vector<2x32xf32>
    %360 = arith.addf %292, %359 : vector<2x32xf32>
    %361 = math.tanh %360 : vector<2x32xf32>
    %cst_98 = arith.constant dense<0.000000e+00> : vector<2x32xf32>
    %362 = tpu.matmul %343, %285, %cst_98 {dimension_numbers = #tpu.dot_dimension_numbers<[1], [0], [0], [1], [0, 0, 1, 1], [], []>} : vector<2x32xf32>, vector<32x32xf32>, vector<2x32xf32> -> vector<2x32xf32>
    %363 = arith.addf %293, %362 : vector<2x32xf32>
    %364 = arith.negf %363 : vector<2x32xf32>
    %365 = math.exp %364 : vector<2x32xf32>
    %cst_99 = arith.constant 1.000000e+00 : f32
    %366 = vector.broadcast %cst_99 : f32 to vector<2x32xf32>
    %367 = arith.addf %366, %365 : vector<2x32xf32>
    %368 = arith.divf %366, %367 : vector<2x32xf32>
    %369 = arith.mulf %358, %344 : vector<2x32xf32>
    %370 = arith.mulf %351, %361 : vector<2x32xf32>
    %371 = arith.addf %369, %370 : vector<2x32xf32>
    %372 = math.tanh %371 : vector<2x32xf32>
    %373 = arith.mulf %368, %372 : vector<2x32xf32>
    %cst_100 = arith.constant dense<0.000000e+00> : vector<2x32xf32>
    %374 = tpu.matmul %373, %282, %cst_100 {dimension_numbers = #tpu.dot_dimension_numbers<[1], [0], [0], [1], [0, 0, 1, 1], [], []>} : vector<2x32xf32>, vector<32x32xf32>, vector<2x32xf32> -> vector<2x32xf32>
    %375 = arith.addf %297, %374 : vector<2x32xf32>
    %376 = arith.negf %375 : vector<2x32xf32>
    %377 = math.exp %376 : vector<2x32xf32>
    %cst_101 = arith.constant 1.000000e+00 : f32
    %378 = vector.broadcast %cst_101 : f32 to vector<2x32xf32>
    %379 = arith.addf %378, %377 : vector<2x32xf32>
    %380 = arith.divf %378, %379 : vector<2x32xf32>
    %cst_102 = arith.constant dense<0.000000e+00> : vector<2x32xf32>
    %381 = tpu.matmul %373, %283, %cst_102 {dimension_numbers = #tpu.dot_dimension_numbers<[1], [0], [0], [1], [0, 0, 1, 1], [], []>} : vector<2x32xf32>, vector<32x32xf32>, vector<2x32xf32> -> vector<2x32xf32>
    %382 = arith.addf %298, %381 : vector<2x32xf32>
    %383 = arith.negf %382 : vector<2x32xf32>
    %384 = math.exp %383 : vector<2x32xf32>
    %cst_103 = arith.constant 1.000000e+00 : f32
    %385 = vector.broadcast %cst_103 : f32 to vector<2x32xf32>
    %386 = arith.addf %385, %384 : vector<2x32xf32>
    %387 = arith.divf %385, %386 : vector<2x32xf32>
    %cst_104 = arith.constant dense<0.000000e+00> : vector<2x32xf32>
    %388 = tpu.matmul %373, %284, %cst_104 {dimension_numbers = #tpu.dot_dimension_numbers<[1], [0], [0], [1], [0, 0, 1, 1], [], []>} : vector<2x32xf32>, vector<32x32xf32>, vector<2x32xf32> -> vector<2x32xf32>
    %389 = arith.addf %299, %388 : vector<2x32xf32>
    %390 = math.tanh %389 : vector<2x32xf32>
    %cst_105 = arith.constant dense<0.000000e+00> : vector<2x32xf32>
    %391 = tpu.matmul %373, %285, %cst_105 {dimension_numbers = #tpu.dot_dimension_numbers<[1], [0], [0], [1], [0, 0, 1, 1], [], []>} : vector<2x32xf32>, vector<32x32xf32>, vector<2x32xf32> -> vector<2x32xf32>
    %392 = arith.addf %300, %391 : vector<2x32xf32>
    %393 = arith.negf %392 : vector<2x32xf32>
    %394 = math.exp %393 : vector<2x32xf32>
    %cst_106 = arith.constant 1.000000e+00 : f32
    %395 = vector.broadcast %cst_106 : f32 to vector<2x32xf32>
    %396 = arith.addf %395, %394 : vector<2x32xf32>
    %397 = arith.divf %395, %396 : vector<2x32xf32>
    %398 = arith.mulf %387, %371 : vector<2x32xf32>
    %399 = arith.mulf %380, %390 : vector<2x32xf32>
    %400 = arith.addf %398, %399 : vector<2x32xf32>
    %401 = math.tanh %400 : vector<2x32xf32>
    %402 = arith.mulf %397, %401 : vector<2x32xf32>
    %cst_107 = arith.constant dense<0.000000e+00> : vector<2x32xf32>
    %403 = tpu.matmul %402, %282, %cst_107 {dimension_numbers = #tpu.dot_dimension_numbers<[1], [0], [0], [1], [0, 0, 1, 1], [], []>} : vector<2x32xf32>, vector<32x32xf32>, vector<2x32xf32> -> vector<2x32xf32>
    %404 = arith.addf %304, %403 : vector<2x32xf32>
    %405 = arith.negf %404 : vector<2x32xf32>
    %406 = math.exp %405 : vector<2x32xf32>
    %cst_108 = arith.constant 1.000000e+00 : f32
    %407 = vector.broadcast %cst_108 : f32 to vector<2x32xf32>
    %408 = arith.addf %407, %406 : vector<2x32xf32>
    %409 = arith.divf %407, %408 : vector<2x32xf32>
    %cst_109 = arith.constant dense<0.000000e+00> : vector<2x32xf32>
    %410 = tpu.matmul %402, %283, %cst_109 {dimension_numbers = #tpu.dot_dimension_numbers<[1], [0], [0], [1], [0, 0, 1, 1], [], []>} : vector<2x32xf32>, vector<32x32xf32>, vector<2x32xf32> -> vector<2x32xf32>
    %411 = arith.addf %305, %410 : vector<2x32xf32>
    %412 = arith.negf %411 : vector<2x32xf32>
    %413 = math.exp %412 : vector<2x32xf32>
    %cst_110 = arith.constant 1.000000e+00 : f32
    %414 = vector.broadcast %cst_110 : f32 to vector<2x32xf32>
    %415 = arith.addf %414, %413 : vector<2x32xf32>
    %416 = arith.divf %414, %415 : vector<2x32xf32>
    %cst_111 = arith.constant dense<0.000000e+00> : vector<2x32xf32>
    %417 = tpu.matmul %402, %284, %cst_111 {dimension_numbers = #tpu.dot_dimension_numbers<[1], [0], [0], [1], [0, 0, 1, 1], [], []>} : vector<2x32xf32>, vector<32x32xf32>, vector<2x32xf32> -> vector<2x32xf32>
    %418 = arith.addf %306, %417 : vector<2x32xf32>
    %419 = math.tanh %418 : vector<2x32xf32>
    %cst_112 = arith.constant dense<0.000000e+00> : vector<2x32xf32>
    %420 = tpu.matmul %402, %285, %cst_112 {dimension_numbers = #tpu.dot_dimension_numbers<[1], [0], [0], [1], [0, 0, 1, 1], [], []>} : vector<2x32xf32>, vector<32x32xf32>, vector<2x32xf32> -> vector<2x32xf32>
    %421 = arith.addf %307, %420 : vector<2x32xf32>
    %422 = arith.negf %421 : vector<2x32xf32>
    %423 = math.exp %422 : vector<2x32xf32>
    %cst_113 = arith.constant 1.000000e+00 : f32
    %424 = vector.broadcast %cst_113 : f32 to vector<2x32xf32>
    %425 = arith.addf %424, %423 : vector<2x32xf32>
    %426 = arith.divf %424, %425 : vector<2x32xf32>
    %427 = arith.mulf %416, %400 : vector<2x32xf32>
    %428 = arith.mulf %409, %419 : vector<2x32xf32>
    %429 = arith.addf %427, %428 : vector<2x32xf32>
    %430 = math.tanh %429 : vector<2x32xf32>
    %431 = arith.mulf %426, %430 : vector<2x32xf32>
    %cst_114 = arith.constant dense<0.000000e+00> : vector<2x32xf32>
    %432 = tpu.matmul %431, %282, %cst_114 {dimension_numbers = #tpu.dot_dimension_numbers<[1], [0], [0], [1], [0, 0, 1, 1], [], []>} : vector<2x32xf32>, vector<32x32xf32>, vector<2x32xf32> -> vector<2x32xf32>
    %433 = arith.addf %311, %432 : vector<2x32xf32>
    %434 = arith.negf %433 : vector<2x32xf32>
    %435 = math.exp %434 : vector<2x32xf32>
    %cst_115 = arith.constant 1.000000e+00 : f32
    %436 = vector.broadcast %cst_115 : f32 to vector<2x32xf32>
    %437 = arith.addf %436, %435 : vector<2x32xf32>
    %438 = arith.divf %436, %437 : vector<2x32xf32>
    %cst_116 = arith.constant dense<0.000000e+00> : vector<2x32xf32>
    %439 = tpu.matmul %431, %283, %cst_116 {dimension_numbers = #tpu.dot_dimension_numbers<[1], [0], [0], [1], [0, 0, 1, 1], [], []>} : vector<2x32xf32>, vector<32x32xf32>, vector<2x32xf32> -> vector<2x32xf32>
    %440 = arith.addf %312, %439 : vector<2x32xf32>
    %441 = arith.negf %440 : vector<2x32xf32>
    %442 = math.exp %441 : vector<2x32xf32>
    %cst_117 = arith.constant 1.000000e+00 : f32
    %443 = vector.broadcast %cst_117 : f32 to vector<2x32xf32>
    %444 = arith.addf %443, %442 : vector<2x32xf32>
    %445 = arith.divf %443, %444 : vector<2x32xf32>
    %cst_118 = arith.constant dense<0.000000e+00> : vector<2x32xf32>
    %446 = tpu.matmul %431, %284, %cst_118 {dimension_numbers = #tpu.dot_dimension_numbers<[1], [0], [0], [1], [0, 0, 1, 1], [], []>} : vector<2x32xf32>, vector<32x32xf32>, vector<2x32xf32> -> vector<2x32xf32>
    %447 = arith.addf %313, %446 : vector<2x32xf32>
    %448 = math.tanh %447 : vector<2x32xf32>
    %cst_119 = arith.constant dense<0.000000e+00> : vector<2x32xf32>
    %449 = tpu.matmul %431, %285, %cst_119 {dimension_numbers = #tpu.dot_dimension_numbers<[1], [0], [0], [1], [0, 0, 1, 1], [], []>} : vector<2x32xf32>, vector<32x32xf32>, vector<2x32xf32> -> vector<2x32xf32>
    %450 = arith.addf %314, %449 : vector<2x32xf32>
    %451 = arith.negf %450 : vector<2x32xf32>
    %452 = math.exp %451 : vector<2x32xf32>
    %cst_120 = arith.constant 1.000000e+00 : f32
    %453 = vector.broadcast %cst_120 : f32 to vector<2x32xf32>
    %454 = arith.addf %453, %452 : vector<2x32xf32>
    %455 = arith.divf %453, %454 : vector<2x32xf32>
    %456 = arith.mulf %445, %429 : vector<2x32xf32>
    %457 = arith.mulf %438, %448 : vector<2x32xf32>
    %458 = arith.addf %456, %457 : vector<2x32xf32>
    %459 = math.tanh %458 : vector<2x32xf32>
    %460 = arith.mulf %455, %459 : vector<2x32xf32>
    %cst_121 = arith.constant dense<0.000000e+00> : vector<2x32xf32>
    %461 = tpu.matmul %460, %282, %cst_121 {dimension_numbers = #tpu.dot_dimension_numbers<[1], [0], [0], [1], [0, 0, 1, 1], [], []>} : vector<2x32xf32>, vector<32x32xf32>, vector<2x32xf32> -> vector<2x32xf32>
    %462 = arith.addf %318, %461 : vector<2x32xf32>
    %463 = arith.negf %462 : vector<2x32xf32>
    %464 = math.exp %463 : vector<2x32xf32>
    %cst_122 = arith.constant 1.000000e+00 : f32
    %465 = vector.broadcast %cst_122 : f32 to vector<2x32xf32>
    %466 = arith.addf %465, %464 : vector<2x32xf32>
    %467 = arith.divf %465, %466 : vector<2x32xf32>
    %cst_123 = arith.constant dense<0.000000e+00> : vector<2x32xf32>
    %468 = tpu.matmul %460, %283, %cst_123 {dimension_numbers = #tpu.dot_dimension_numbers<[1], [0], [0], [1], [0, 0, 1, 1], [], []>} : vector<2x32xf32>, vector<32x32xf32>, vector<2x32xf32> -> vector<2x32xf32>
    %469 = arith.addf %319, %468 : vector<2x32xf32>
    %470 = arith.negf %469 : vector<2x32xf32>
    %471 = math.exp %470 : vector<2x32xf32>
    %cst_124 = arith.constant 1.000000e+00 : f32
    %472 = vector.broadcast %cst_124 : f32 to vector<2x32xf32>
    %473 = arith.addf %472, %471 : vector<2x32xf32>
    %474 = arith.divf %472, %473 : vector<2x32xf32>
    %cst_125 = arith.constant dense<0.000000e+00> : vector<2x32xf32>
    %475 = tpu.matmul %460, %284, %cst_125 {dimension_numbers = #tpu.dot_dimension_numbers<[1], [0], [0], [1], [0, 0, 1, 1], [], []>} : vector<2x32xf32>, vector<32x32xf32>, vector<2x32xf32> -> vector<2x32xf32>
    %476 = arith.addf %320, %475 : vector<2x32xf32>
    %477 = math.tanh %476 : vector<2x32xf32>
    %cst_126 = arith.constant dense<0.000000e+00> : vector<2x32xf32>
    %478 = tpu.matmul %460, %285, %cst_126 {dimension_numbers = #tpu.dot_dimension_numbers<[1], [0], [0], [1], [0, 0, 1, 1], [], []>} : vector<2x32xf32>, vector<32x32xf32>, vector<2x32xf32> -> vector<2x32xf32>
    %479 = arith.addf %321, %478 : vector<2x32xf32>
    %480 = arith.negf %479 : vector<2x32xf32>
    %481 = math.exp %480 : vector<2x32xf32>
    %cst_127 = arith.constant 1.000000e+00 : f32
    %482 = vector.broadcast %cst_127 : f32 to vector<2x32xf32>
    %483 = arith.addf %482, %481 : vector<2x32xf32>
    %484 = arith.divf %482, %483 : vector<2x32xf32>
    %485 = arith.mulf %474, %458 : vector<2x32xf32>
    %486 = arith.mulf %467, %477 : vector<2x32xf32>
    %487 = arith.addf %485, %486 : vector<2x32xf32>
    %488 = math.tanh %487 : vector<2x32xf32>
    %489 = arith.mulf %484, %488 : vector<2x32xf32>
    %cst_128 = arith.constant dense<0.000000e+00> : vector<2x32xf32>
    %490 = tpu.matmul %489, %282, %cst_128 {dimension_numbers = #tpu.dot_dimension_numbers<[1], [0], [0], [1], [0, 0, 1, 1], [], []>} : vector<2x32xf32>, vector<32x32xf32>, vector<2x32xf32> -> vector<2x32xf32>
    %491 = arith.addf %325, %490 : vector<2x32xf32>
    %492 = arith.negf %491 : vector<2x32xf32>
    %493 = math.exp %492 : vector<2x32xf32>
    %cst_129 = arith.constant 1.000000e+00 : f32
    %494 = vector.broadcast %cst_129 : f32 to vector<2x32xf32>
    %495 = arith.addf %494, %493 : vector<2x32xf32>
    %496 = arith.divf %494, %495 : vector<2x32xf32>
    %cst_130 = arith.constant dense<0.000000e+00> : vector<2x32xf32>
    %497 = tpu.matmul %489, %283, %cst_130 {dimension_numbers = #tpu.dot_dimension_numbers<[1], [0], [0], [1], [0, 0, 1, 1], [], []>} : vector<2x32xf32>, vector<32x32xf32>, vector<2x32xf32> -> vector<2x32xf32>
    %498 = arith.addf %326, %497 : vector<2x32xf32>
    %499 = arith.negf %498 : vector<2x32xf32>
    %500 = math.exp %499 : vector<2x32xf32>
    %cst_131 = arith.constant 1.000000e+00 : f32
    %501 = vector.broadcast %cst_131 : f32 to vector<2x32xf32>
    %502 = arith.addf %501, %500 : vector<2x32xf32>
    %503 = arith.divf %501, %502 : vector<2x32xf32>
    %cst_132 = arith.constant dense<0.000000e+00> : vector<2x32xf32>
    %504 = tpu.matmul %489, %284, %cst_132 {dimension_numbers = #tpu.dot_dimension_numbers<[1], [0], [0], [1], [0, 0, 1, 1], [], []>} : vector<2x32xf32>, vector<32x32xf32>, vector<2x32xf32> -> vector<2x32xf32>
    %505 = arith.addf %327, %504 : vector<2x32xf32>
    %506 = math.tanh %505 : vector<2x32xf32>
    %cst_133 = arith.constant dense<0.000000e+00> : vector<2x32xf32>
    %507 = tpu.matmul %489, %285, %cst_133 {dimension_numbers = #tpu.dot_dimension_numbers<[1], [0], [0], [1], [0, 0, 1, 1], [], []>} : vector<2x32xf32>, vector<32x32xf32>, vector<2x32xf32> -> vector<2x32xf32>
    %508 = arith.addf %328, %507 : vector<2x32xf32>
    %509 = arith.negf %508 : vector<2x32xf32>
    %510 = math.exp %509 : vector<2x32xf32>
    %cst_134 = arith.constant 1.000000e+00 : f32
    %511 = vector.broadcast %cst_134 : f32 to vector<2x32xf32>
    %512 = arith.addf %511, %510 : vector<2x32xf32>
    %513 = arith.divf %511, %512 : vector<2x32xf32>
    %514 = arith.mulf %503, %487 : vector<2x32xf32>
    %515 = arith.mulf %496, %506 : vector<2x32xf32>
    %516 = arith.addf %514, %515 : vector<2x32xf32>
    %517 = math.tanh %516 : vector<2x32xf32>
    %518 = arith.mulf %513, %517 : vector<2x32xf32>
    %cst_135 = arith.constant dense<0.000000e+00> : vector<2x32xf32>
    %519 = tpu.matmul %518, %282, %cst_135 {dimension_numbers = #tpu.dot_dimension_numbers<[1], [0], [0], [1], [0, 0, 1, 1], [], []>} : vector<2x32xf32>, vector<32x32xf32>, vector<2x32xf32> -> vector<2x32xf32>
    %520 = arith.addf %332, %519 : vector<2x32xf32>
    %521 = arith.negf %520 : vector<2x32xf32>
    %522 = math.exp %521 : vector<2x32xf32>
    %cst_136 = arith.constant 1.000000e+00 : f32
    %523 = vector.broadcast %cst_136 : f32 to vector<2x32xf32>
    %524 = arith.addf %523, %522 : vector<2x32xf32>
    %525 = arith.divf %523, %524 : vector<2x32xf32>
    %cst_137 = arith.constant dense<0.000000e+00> : vector<2x32xf32>
    %526 = tpu.matmul %518, %283, %cst_137 {dimension_numbers = #tpu.dot_dimension_numbers<[1], [0], [0], [1], [0, 0, 1, 1], [], []>} : vector<2x32xf32>, vector<32x32xf32>, vector<2x32xf32> -> vector<2x32xf32>
    %527 = arith.addf %333, %526 : vector<2x32xf32>
    %528 = arith.negf %527 : vector<2x32xf32>
    %529 = math.exp %528 : vector<2x32xf32>
    %cst_138 = arith.constant 1.000000e+00 : f32
    %530 = vector.broadcast %cst_138 : f32 to vector<2x32xf32>
    %531 = arith.addf %530, %529 : vector<2x32xf32>
    %532 = arith.divf %530, %531 : vector<2x32xf32>
    %cst_139 = arith.constant dense<0.000000e+00> : vector<2x32xf32>
    %533 = tpu.matmul %518, %284, %cst_139 {dimension_numbers = #tpu.dot_dimension_numbers<[1], [0], [0], [1], [0, 0, 1, 1], [], []>} : vector<2x32xf32>, vector<32x32xf32>, vector<2x32xf32> -> vector<2x32xf32>
    %534 = arith.addf %334, %533 : vector<2x32xf32>
    %535 = math.tanh %534 : vector<2x32xf32>
    %cst_140 = arith.constant dense<0.000000e+00> : vector<2x32xf32>
    %536 = tpu.matmul %518, %285, %cst_140 {dimension_numbers = #tpu.dot_dimension_numbers<[1], [0], [0], [1], [0, 0, 1, 1], [], []>} : vector<2x32xf32>, vector<32x32xf32>, vector<2x32xf32> -> vector<2x32xf32>
    %537 = arith.addf %335, %536 : vector<2x32xf32>
    %538 = arith.negf %537 : vector<2x32xf32>
    %539 = math.exp %538 : vector<2x32xf32>
    %cst_141 = arith.constant 1.000000e+00 : f32
    %540 = vector.broadcast %cst_141 : f32 to vector<2x32xf32>
    %541 = arith.addf %540, %539 : vector<2x32xf32>
    %542 = arith.divf %540, %541 : vector<2x32xf32>
    %543 = arith.mulf %532, %516 : vector<2x32xf32>
    %544 = arith.mulf %525, %535 : vector<2x32xf32>
    %545 = arith.addf %543, %544 : vector<2x32xf32>
    %546 = math.tanh %545 : vector<2x32xf32>
    %547 = arith.mulf %542, %546 : vector<2x32xf32>
    %cst_142 = arith.constant dense<0.000000e+00> : vector<2x32xf32>
    %548 = tpu.matmul %547, %282, %cst_142 {dimension_numbers = #tpu.dot_dimension_numbers<[1], [0], [0], [1], [0, 0, 1, 1], [], []>} : vector<2x32xf32>, vector<32x32xf32>, vector<2x32xf32> -> vector<2x32xf32>
    %549 = arith.addf %339, %548 : vector<2x32xf32>
    %550 = arith.negf %549 : vector<2x32xf32>
    %551 = math.exp %550 : vector<2x32xf32>
    %cst_143 = arith.constant 1.000000e+00 : f32
    %552 = vector.broadcast %cst_143 : f32 to vector<2x32xf32>
    %553 = arith.addf %552, %551 : vector<2x32xf32>
    %554 = arith.divf %552, %553 : vector<2x32xf32>
    %cst_144 = arith.constant dense<0.000000e+00> : vector<2x32xf32>
    %555 = tpu.matmul %547, %283, %cst_144 {dimension_numbers = #tpu.dot_dimension_numbers<[1], [0], [0], [1], [0, 0, 1, 1], [], []>} : vector<2x32xf32>, vector<32x32xf32>, vector<2x32xf32> -> vector<2x32xf32>
    %556 = arith.addf %340, %555 : vector<2x32xf32>
    %557 = arith.negf %556 : vector<2x32xf32>
    %558 = math.exp %557 : vector<2x32xf32>
    %cst_145 = arith.constant 1.000000e+00 : f32
    %559 = vector.broadcast %cst_145 : f32 to vector<2x32xf32>
    %560 = arith.addf %559, %558 : vector<2x32xf32>
    %561 = arith.divf %559, %560 : vector<2x32xf32>
    %cst_146 = arith.constant dense<0.000000e+00> : vector<2x32xf32>
    %562 = tpu.matmul %547, %284, %cst_146 {dimension_numbers = #tpu.dot_dimension_numbers<[1], [0], [0], [1], [0, 0, 1, 1], [], []>} : vector<2x32xf32>, vector<32x32xf32>, vector<2x32xf32> -> vector<2x32xf32>
    %563 = arith.addf %341, %562 : vector<2x32xf32>
    %564 = math.tanh %563 : vector<2x32xf32>
    %cst_147 = arith.constant dense<0.000000e+00> : vector<2x32xf32>
    %565 = tpu.matmul %547, %285, %cst_147 {dimension_numbers = #tpu.dot_dimension_numbers<[1], [0], [0], [1], [0, 0, 1, 1], [], []>} : vector<2x32xf32>, vector<32x32xf32>, vector<2x32xf32> -> vector<2x32xf32>
    %566 = arith.addf %342, %565 : vector<2x32xf32>
    %567 = arith.negf %566 : vector<2x32xf32>
    %568 = math.exp %567 : vector<2x32xf32>
    %cst_148 = arith.constant 1.000000e+00 : f32
    %569 = vector.broadcast %cst_148 : f32 to vector<2x32xf32>
    %570 = arith.addf %569, %568 : vector<2x32xf32>
    %571 = arith.divf %569, %570 : vector<2x32xf32>
    %572 = arith.mulf %561, %545 : vector<2x32xf32>
    %573 = arith.mulf %554, %564 : vector<2x32xf32>
    %574 = arith.addf %572, %573 : vector<2x32xf32>
    %575 = math.tanh %574 : vector<2x32xf32>
    %576 = arith.mulf %571, %575 : vector<2x32xf32>
    %577 = tpu.concatenate %280, %278, %576, %574 in 1 : vector<2x32xf32>, vector<2x32xf32>, vector<2x32xf32>, vector<2x32xf32> -> vector<2x128xf32>
    %578 = math.tanh %577 : vector<2x128xf32>
    %c0_149 = arith.constant 0 : index
    %c0_150 = arith.constant 0 : index
    %579 = vector.load %arg13[%c0_149, %c0_150] : memref<128x16xf32, #tpu.memory_space<vmem>>, vector<128x16xf32>
    %cst_151 = arith.constant dense<0.000000e+00> : vector<2x16xf32>
    %580 = tpu.matmul %578, %579, %cst_151 {dimension_numbers = #tpu.dot_dimension_numbers<[1], [0], [0], [1], [0, 0, 1, 1], [], []>} : vector<2x128xf32>, vector<128x16xf32>, vector<2x16xf32> -> vector<2x16xf32>
    %c0_152 = arith.constant 0 : index
    %c0_153 = arith.constant 0 : index
    %581 = vector.load %arg14[%c0_152, %c0_153] : memref<1x16xf32, #tpu.memory_space<vmem>>, vector<1x16xf32>
    %582 = vector.broadcast %581 : vector<1x16xf32> to vector<2x16xf32>
    %583 = arith.addf %580, %582 : vector<2x16xf32>
    %c0_154 = arith.constant 0 : index
    %c0_155 = arith.constant 0 : index
    %584 = vector.load %arg15[%c0_154, %c0_155] : memref<2x16xf32, #tpu.memory_space<vmem>>, vector<2x16xf32>
    tpu.vector_store %arg15[%c0_154, %c0_155], %583 {strides = array<i32>} : memref<2x16xf32, #tpu.memory_space<vmem>>, vector<2x16xf32>,
    return
  }
}

</mosaic_0001>

<llo_original>
// kernel: tpu_custom_call.1
$region0: #{tpu_custom_call.1}
  #allocation0 [shape = 'u32[]', space=smem, size = 0x4, offset = 0x4, fixed_abs, tag = 'smem constant byte address 0x4 - core index']
  #allocation1 [shape = 'u32[144,128]{1,0:T(1,128)}', space=vmem, size = 0x12000, scoped, tag = 'internal scratch']
  %s0 = inlined_call_operand.hbm [shape: f32[16,32], index: 0, kind: input, shape index: {}]
  %s1 = inlined_call_operand.vmem [shape: f32[32,128], index: 1, kind: input, shape index: {}]
  %s2 = inlined_call_operand.vmem [shape: f32[32,32], index: 2, kind: input, shape index: {}]
  %s3 = inlined_call_operand.vmem [shape: f32[32,32], index: 3, kind: input, shape index: {}]
  %s4 = inlined_call_operand.vmem [shape: f32[32,32], index: 4, kind: input, shape index: {}]
  %s5 = inlined_call_operand.vmem [shape: f32[32,32], index: 5, kind: input, shape index: {}]
  %s6 = inlined_call_operand.vmem [shape: f32[1,128], index: 6, kind: input, shape index: {}]
  %s7 = inlined_call_operand.hbm [shape: f32[32,128], index: 7, kind: input, shape index: {}]
  %s8 = inlined_call_operand.hbm [shape: f32[32,32], index: 8, kind: input, shape index: {}]
  %s9 = inlined_call_operand.hbm [shape: f32[32,32], index: 9, kind: input, shape index: {}]
  %s10 = inlined_call_operand.hbm [shape: f32[32,32], index: 10, kind: input, shape index: {}]
  %s11 = inlined_call_operand.hbm [shape: f32[32,32], index: 11, kind: input, shape index: {}]
  %s12 = inlined_call_operand.vmem [shape: f32[1,128], index: 12, kind: input, shape index: {}]
  %s13 = inlined_call_operand.vmem [shape: f32[128,16], index: 13, kind: input, shape index: {}]
  %s14 = inlined_call_operand.vmem [shape: f32[1,16], index: 14, kind: input, shape index: {}]
  %s15 = inlined_call_operand.hbm [shape: f32[2,16], index: 15, kind: output, shape index: {}]
  %s16 = sld [smem:[#allocation0]]
  $region94: #{tpu_custom_call.1} parent=0
    _
  %s18 = ssub.s32 1, %s16
  %s19 = scalar_select 0, %s18, %s16
  $region1: #{tpu_custom_call.1} parent=0
    #allocation2 [shape = 'u8[8192]{0}', space=vmem, size = 0x2000, scoped, tag = 'input window, operand 0, single buffered']
    #allocation3 [shape = 's32[1]{0}', space=sflag, size = 0x4, scoped, tag = 'scoped memory for tpu_custom_call.1']
    #allocation4 [shape = 's32[1]{0}', space=sflag, size = 0x4, scoped, tag = 'scoped memory for tpu_custom_call.1']
    #allocation5 [shape = 'u8[16384]{0}', space=vmem, size = 0x4000, scoped, tag = 'input window, operand 7, single buffered']
    #allocation6 [shape = 's32[1]{0}', space=sflag, size = 0x4, scoped, tag = 'scoped memory for tpu_custom_call.1']
    #allocation7 [shape = 'u8[16384]{0}', space=vmem, size = 0x4000, scoped, tag = 'input window, operand 8, single buffered']
    #allocation8 [shape = 'u8[16384]{0}', space=vmem, size = 0x4000, scoped, tag = 'input window, operand 9, single buffered']
    #allocation9 [shape = 's32[1]{0}', space=sflag, size = 0x4, scoped, tag = 'scoped memory for tpu_custom_call.1']
    #allocation10 [shape = 'u8[16384]{0}', space=vmem, size = 0x4000, scoped, tag = 'input window, operand 10, single buffered']
    #allocation11 [shape = 'u8[16384]{0}', space=vmem, size = 0x4000, scoped, tag = 'input window, operand 11, single buffered']
    #allocation12 [shape = 's32[1]{0}', space=sflag, size = 0x4, scoped, tag = 'scoped memory for tpu_custom_call.1']
    #allocation13 [shape = 'u8[1024]{0}', space=vmem, size = 0x400, scoped, tag = 'output window, operand 0, single buffered']
    %20 = vsyncpa [#allocation3], 0
    %21 = vsyncpa [#allocation6], 0
    %22 = vsyncpa [#allocation9], 0
    %23 = vsyncpa [#allocation12], 0
    %24 = vsyncpa [#allocation4], 0
    // Predicated region
    $region2: #{tpu_custom_call.1} parent=1 // pred_check
      _
    $region3: #{tpu_custom_call.1} parent=1 // pred_check_branch
      %26 = sbr.rel (0) target = $region5
    $region4: #{tpu_custom_call.1} parent=1 // pred_region
      %s28 = ssub.s32 256, 256
      %29 = vsyncadd [#allocation3], %s28
      %s30 = sshll.u32 [#allocation2], 4
      %s31 = int_to_ptr.vmem [resolvable:$true] %s30
      %36 = dma.hbm_to_vmem [thread:$0]  %s0, 256, %s31, [#allocation3], 128, 128, 8
    $region5: #{tpu_custom_call.1} parent=1 // pred_fallthru
      _
    // Predicated region
    $region6: #{tpu_custom_call.1} parent=1 // pred_check
      _
    $region7: #{tpu_custom_call.1} parent=1 // pred_check_branch
      %38 = sbr.rel (0) target = $region9
    $region8: #{tpu_custom_call.1} parent=1 // pred_region
      _
    $region9: #{tpu_custom_call.1} parent=1 // pred_fallthru
      _
    // Predicated region
    $region10: #{tpu_custom_call.1} parent=1 // pred_check
      _
    $region11: #{tpu_custom_call.1} parent=1 // pred_check_branch
      %40 = sbr.rel (0) target = $region13
    $region12: #{tpu_custom_call.1} parent=1 // pred_region
      _
    $region13: #{tpu_custom_call.1} parent=1 // pred_fallthru
      _
    // Predicated region
    $region14: #{tpu_custom_call.1} parent=1 // pred_check
      _
    $region15: #{tpu_custom_call.1} parent=1 // pred_check_branch
      %42 = sbr.rel (0) target = $region17
    $region16: #{tpu_custom_call.1} parent=1 // pred_region
      _
    $region17: #{tpu_custom_call.1} parent=1 // pred_fallthru
      _
    // Predicated region
    $region18: #{tpu_custom_call.1} parent=1 // pred_check
      _
    $region19: #{tpu_custom_call.1} parent=1 // pred_check_branch
      %44 = sbr.rel (0) target = $region21
    $region20: #{tpu_custom_call.1} parent=1 // pred_region
      _
    $region21: #{tpu_custom_call.1} parent=1 // pred_fallthru
      _
    // Predicated region
    $region22: #{tpu_custom_call.1} parent=1 // pred_check
      _
    $region23: #{tpu_custom_call.1} parent=1 // pred_check_branch
      %46 = sbr.rel (0) target = $region25
    $region24: #{tpu_custom_call.1} parent=1 // pred_region
      _
    $region25: #{tpu_custom_call.1} parent=1 // pred_fallthru
      _
    // Predicated region
    $region26: #{tpu_custom_call.1} parent=1 // pred_check
      _
    $region27: #{tpu_custom_call.1} parent=1 // pred_check_branch
      %48 = sbr.rel (0) target = $region29
    $region28: #{tpu_custom_call.1} parent=1 // pred_region
      _
    $region29: #{tpu_custom_call.1} parent=1 // pred_fallthru
      _
    // Predicated region
    $region30: #{tpu_custom_call.1} parent=1 // pred_check
      _
    $region31: #{tpu_custom_call.1} parent=1 // pred_check_branch
      %50 = sbr.rel (0) target = $region33
    $region32: #{tpu_custom_call.1} parent=1 // pred_region
      %s52 = ssub.s32 512, 512
      %53 = vsyncadd [#allocation6], %s52
      %s54 = sshll.u32 [#allocation5], 4
      %s55 = int_to_ptr.vmem [resolvable:$true] %s54
      %60 = dma.hbm_to_vmem [thread:$0]  %s7, 512, %s55, [#allocation6], 128, 128, 8
    $region33: #{tpu_custom_call.1} parent=1 // pred_fallthru
      _
    // Predicated region
    $region34: #{tpu_custom_call.1} parent=1 // pred_check
      _
    $region35: #{tpu_custom_call.1} parent=1 // pred_check_branch
      %62 = sbr.rel (0) target = $region37
    $region36: #{tpu_custom_call.1} parent=1 // pred_region
      %s64 = ssub.s32 512, 512
      %65 = vsyncadd [#allocation6], %s64
      %s66 = sshll.u32 [#allocation7], 4
      %s67 = int_to_ptr.vmem [resolvable:$true] %s66
      %72 = dma.hbm_to_vmem [thread:$0]  %s8, 512, %s67, [#allocation6], 128, 128, 8
    $region37: #{tpu_custom_call.1} parent=1 // pred_fallthru
      _
    // Predicated region
    $region38: #{tpu_custom_call.1} parent=1 // pred_check
      _
    $region39: #{tpu_custom_call.1} parent=1 // pred_check_branch
      %74 = sbr.rel (0) target = $region41
    $region40: #{tpu_custom_call.1} parent=1 // pred_region
      %s76 = ssub.s32 512, 512
      %77 = vsyncadd [#allocation9], %s76
      %s78 = sshll.u32 [#allocation8], 4
      %s79 = int_to_ptr.vmem [resolvable:$true] %s78
      %84 = dma.hbm_to_vmem [thread:$0]  %s9, 512, %s79, [#allocation9], 128, 128, 8
    $region41: #{tpu_custom_call.1} parent=1 // pred_fallthru
      _
    // Predicated region
    $region42: #{tpu_custom_call.1} parent=1 // pred_check
      _
    $region43: #{tpu_custom_call.1} parent=1 // pred_check_branch
      %86 = sbr.rel (0) target = $region45
    $region44: #{tpu_custom_call.1} parent=1 // pred_region
      %s88 = ssub.s32 512, 512
      %89 = vsyncadd [#allocation9], %s88
      %s90 = sshll.u32 [#allocation10], 4
      %s91 = int_to_ptr.vmem [resolvable:$true] %s90
      %96 = dma.hbm_to_vmem [thread:$0]  %s10, 512, %s91, [#allocation9], 128, 128, 8
    $region45: #{tpu_custom_call.1} parent=1 // pred_fallthru
      _
    // Predicated region
    $region46: #{tpu_custom_call.1} parent=1 // pred_check
      _
    $region47: #{tpu_custom_call.1} parent=1 // pred_check_branch
      %98 = sbr.rel (0) target = $region49
    $region48: #{tpu_custom_call.1} parent=1 // pred_region
      %s100 = ssub.s32 512, 512
      %101 = vsyncadd [#allocation12], %s100
      %s102 = sshll.u32 [#allocation11], 4
      %s103 = int_to_ptr.vmem [resolvable:$true] %s102
      %108 = dma.hbm_to_vmem [thread:$0]  %s11, 512, %s103, [#allocation12], 128, 128, 8
    $region49: #{tpu_custom_call.1} parent=1 // pred_fallthru
      _
    // Predicated region
    $region50: #{tpu_custom_call.1} parent=1 // pred_check
      _
    $region51: #{tpu_custom_call.1} parent=1 // pred_check_branch
      %110 = sbr.rel (0) target = $region53
    $region52: #{tpu_custom_call.1} parent=1 // pred_region
      _
    $region53: #{tpu_custom_call.1} parent=1 // pred_fallthru
      _
    // Predicated region
    $region54: #{tpu_custom_call.1} parent=1 // pred_check
      _
    $region55: #{tpu_custom_call.1} parent=1 // pred_check_branch
      %112 = sbr.rel (0) target = $region57
    $region56: #{tpu_custom_call.1} parent=1 // pred_region
      _
    $region57: #{tpu_custom_call.1} parent=1 // pred_fallthru
      _
    // Predicated region
    $region58: #{tpu_custom_call.1} parent=1 // pred_check
      _
    $region59: #{tpu_custom_call.1} parent=1 // pred_check_branch
      %114 = sbr.rel (0) target = $region61
    $region60: #{tpu_custom_call.1} parent=1 // pred_region
      _
    $region61: #{tpu_custom_call.1} parent=1 // pred_fallthru
      _
    // Predicated region
    $region62: #{tpu_custom_call.1} parent=1 // pred_check
      _
    $region63: #{tpu_custom_call.1} parent=1 // pred_check_branch
      %116 = sbr.rel (0) target = $region65
    $region64: #{tpu_custom_call.1} parent=1 // pred_region
      %117 = dma.done [#allocation3], 256
    $region65: #{tpu_custom_call.1} parent=1 // pred_fallthru
      _
    // Predicated region
    $region66: #{tpu_custom_call.1} parent=1 // pred_check
      _
    $region67: #{tpu_custom_call.1} parent=1 // pred_check_branch
      %119 = sbr.rel (0) target = $region69
    $region68: #{tpu_custom_call.1} parent=1 // pred_region
      %120 = dma.done [#allocation6], 512
    $region69: #{tpu_custom_call.1} parent=1 // pred_fallthru
      _
    // Predicated region
    $region70: #{tpu_custom_call.1} parent=1 // pred_check
      _
    $region71: #{tpu_custom_call.1} parent=1 // pred_check_branch
      %122 = sbr.rel (0) target = $region73
    $region72: #{tpu_custom_call.1} parent=1 // pred_region
      %123 = dma.done [#allocation6], 512
    $region73: #{tpu_custom_call.1} parent=1 // pred_fallthru
      _
    // Predicated region
    $region74: #{tpu_custom_call.1} parent=1 // pred_check
      _
    $region75: #{tpu_custom_call.1} parent=1 // pred_check_branch
      %125 = sbr.rel (0) target = $region77
    $region76: #{tpu_custom_call.1} parent=1 // pred_region
      %126 = dma.done [#allocation9], 512
    $region77: #{tpu_custom_call.1} parent=1 // pred_fallthru
      _
    // Predicated region
    $region78: #{tpu_custom_call.1} parent=1 // pred_check
      _
    $region79: #{tpu_custom_call.1} parent=1 // pred_check_branch
      %128 = sbr.rel (0) target = $region81
    $region80: #{tpu_custom_call.1} parent=1 // pred_region
      %129 = dma.done [#allocation9], 512
    $region81: #{tpu_custom_call.1} parent=1 // pred_fallthru
      _
    // Predicated region
    $region82: #{tpu_custom_call.1} parent=1 // pred_check
      _
    $region83: #{tpu_custom_call.1} parent=1 // pred_check_branch
      %131 = sbr.rel (0) target = $region85
    $region84: #{tpu_custom_call.1} parent=1 // pred_region
      %132 = dma.done [#allocation12], 512
    $region85: #{tpu_custom_call.1} parent=1 // pred_fallthru
      _
    %v133 = vld [vmem:[#allocation2] sm:$0xff]
    %v134 = vld [vmem:[#allocation2 + $0x8] sm:$0xff]
    %v135 = vtanh.pop %v133
    %v136 = vtanh.pop %v134
    %v137 = vld [vmem:[%s1] sm:$0xff]
    %v138 = vld [vmem:[%s1 + $0x8] sm:$0xff]
    %v139 = vld [vmem:[%s1 + $0x10] sm:$0xff]
    %v140 = vld [vmem:[%s1 + $0x18] sm:$0xff]
    %v141 = vld [vmem:[%s2] sm:$0xff]
    %v142 = vld [vmem:[%s2 + $0x8] sm:$0xff]
    %v143 = vld [vmem:[%s2 + $0x10] sm:$0xff]
    %v144 = vld [vmem:[%s2 + $0x18] sm:$0xff]
    %v145 = vld [vmem:[%s3] sm:$0xff]
    %v146 = vld [vmem:[%s3 + $0x8] sm:$0xff]
    %v147 = vld [vmem:[%s3 + $0x10] sm:$0xff]
    %v148 = vld [vmem:[%s3 + $0x18] sm:$0xff]
    %v149 = vld [vmem:[%s4] sm:$0xff]
    %v150 = vld [vmem:[%s4 + $0x8] sm:$0xff]
    %v151 = vld [vmem:[%s4 + $0x10] sm:$0xff]
    %v152 = vld [vmem:[%s4 + $0x18] sm:$0xff]
    %v153 = vld [vmem:[%s5] sm:$0xff]
    %v154 = vld [vmem:[%s5 + $0x8] sm:$0xff]
    %v155 = vld [vmem:[%s5 + $0x10] sm:$0xff]
    %v156 = vld [vmem:[%s5 + $0x18] sm:$0xff]
    %v157 = vld [vmem:[%s6] sm:$0x1]
    %v159 = vlaneseq
    %v160 = vshrl.u32 %v159, 7
    %v161 = vsub.s32 0, %v160
    %v162 = vrot.slane %v157, %v161
    %vm164 = vcmask 261120
    %v166 = vsel %vm164, %v135, 0
    %v169 = vsel %vm164, %v136, 0
    %171 = vmatprep.subr.mxu0 0.0
    %172 = vmatpush1.msra.mxu0 %v137
    %173 = vmatprep.subr.mxu0 0.0
    %174 = vmatpush1.msra.mxu0 %v138
    %175 = vmatprep.subr.mxu0 0.0
    %176 = vmatpush1.msra.mxu0 %v139
    %177 = vmatprep.subr.mxu0 0.0
    %178 = vmatpush1.msra.mxu0 %v140
    %179 = vmatprep.subr.mxu0 0.0
    %180 = vmatpush1.msra.mxu0 0.0
    %181 = vmatprep.subr.mxu0 0.0
    %182 = vmatpush1.msra.mxu0 0.0
    %183 = vmatprep.subr.mxu0 0.0
    %184 = vmatpush1.msra.mxu0 0.0
    %185 = vmatprep.subr.mxu0 0.0
    %186 = vmatpush1.msra.mxu0 0.0
    %187 = vmatprep.subr.mxu0 0.0
    %188 = vmatpush1.msra.mxu0 0.0
    %189 = vmatprep.subr.mxu0 0.0
    %190 = vmatpush1.msra.mxu0 0.0
    %191 = vmatprep.subr.mxu0 0.0
    %192 = vmatpush1.msra.mxu0 0.0
    %193 = vmatprep.subr.mxu0 0.0
    %194 = vmatpush1.msra.mxu0 0.0
    %195 = vmatprep.subr.mxu0 0.0
    %196 = vmatpush1.msra.mxu0 0.0
    %197 = vmatprep.subr.mxu0 0.0
    %198 = vmatpush1.msra.mxu0 0.0
    %199 = vmatprep.subr.mxu0 0.0
    %200 = vmatpush1.msra.mxu0 0.0
    %201 = vmatprep.subr.mxu0 0.0
    %202 = vmatpush1.msra.mxu0 0.0
    %203 = vmatprep.subr.mxu0 0.0
    %204 = vmatpush1.msra.mxu0 0.0
    %205 = vmatprep.subr.mxu0 0.0
    %206 = vmatpush1.msra.mxu0 0.0
    %207 = vmatprep.subr.mxu0 0.0
    %208 = vmatpush1.msra.mxu0 0.0
    %209 = vmatprep.subr.mxu0 0.0
    %210 = vmatpush1.msra.mxu0 0.0
    %211 = vmatprep.subr.mxu0 0.0
    %212 = vmatpush1.msra.mxu0 0.0
    %213 = vmatprep.subr.mxu0 0.0
    %214 = vmatpush1.msra.mxu0 0.0
    %215 = vmatprep.subr.mxu0 0.0
    %216 = vmatpush1.msra.mxu0 0.0
    %217 = vmatprep.subr.mxu0 0.0
    %218 = vmatpush1.msra.mxu0 0.0
    %219 = vmatprep.subr.mxu0 0.0
    %220 = vmatpush1.msra.mxu0 0.0
    %221 = vmatprep.subr.mxu0 0.0
    %222 = vmatpush1.msra.mxu0 0.0
    %223 = vmatprep.subr.mxu0 0.0
    %224 = vmatpush1.msra.mxu0 0.0
    %225 = vmatprep.subr.mxu0 0.0
    %226 = vmatpush1.msra.mxu0 0.0
    %227 = vmatprep.subr.mxu0 0.0
    %228 = vmatpush1.msra.mxu0 0.0
    %229 = vmatprep.subr.mxu0 0.0
    %230 = vmatpush1.msra.mxu0 0.0
    %231 = vmatprep.subr.mxu0 0.0
    %232 = vmatpush1.msra.mxu0 0.0
    %233 = vmatprep.subr.mxu0 0.0
    %234 = vmatpush1.msra.mxu0 0.0
    %235 = vmatprep.mubr.f32.mxu0 0.0
    %236 = vmatmul.mubr.f32.gmra.mrb[0].mxu0 %v166
    %v237 = vpop.f32.mrb[0].mxu0
    %v238 = vadd.f32 %v162, %v237
    %v239 = vpop.f32.mrb[0].mxu0
    %240 = vmatprep.mubr.f32.mxu0 0.0
    %241 = vmatmul.mubr.f32.gmra.mrb[0].mxu0 %v169
    %v242 = vpop.f32.mrb[0].mxu0
    %v243 = vadd.f32 %v162, %v242
    %v244 = vpop.f32.mrb[0].mxu0
    %245 = vdwg.mxu0
    %v247 = vsel %vm164, 0.0, 0
    %249 = vmatprep.subr.mxu0 0.0
    %250 = vmatpush1.msra.mxu0 %v141
    %251 = vmatprep.subr.mxu0 0.0
    %252 = vmatpush1.msra.mxu0 %v142
    %253 = vmatprep.subr.mxu0 0.0
    %254 = vmatpush1.msra.mxu0 %v143
    %255 = vmatprep.subr.mxu0 0.0
    %256 = vmatpush1.msra.mxu0 %v144
    %257 = vmatprep.subr.mxu0 0.0
    %258 = vmatpush1.msra.mxu0 0.0
    %259 = vmatprep.subr.mxu0 0.0
    %260 = vmatpush1.msra.mxu0 0.0
    %261 = vmatprep.subr.mxu0 0.0
    %262 = vmatpush1.msra.mxu0 0.0
    %263 = vmatprep.subr.mxu0 0.0
    %264 = vmatpush1.msra.mxu0 0.0
    %265 = vmatprep.subr.mxu0 0.0
    %266 = vmatpush1.msra.mxu0 0.0
    %267 = vmatprep.subr.mxu0 0.0
    %268 = vmatpush1.msra.mxu0 0.0
    %269 = vmatprep.subr.mxu0 0.0
    %270 = vmatpush1.msra.mxu0 0.0
    %271 = vmatprep.subr.mxu0 0.0
    %272 = vmatpush1.msra.mxu0 0.0
    %273 = vmatprep.subr.mxu0 0.0
    %274 = vmatpush1.msra.mxu0 0.0
    %275 = vmatprep.subr.mxu0 0.0
    %276 = vmatpush1.msra.mxu0 0.0
    %277 = vmatprep.subr.mxu0 0.0
    %278 = vmatpush1.msra.mxu0 0.0
    %279 = vmatprep.subr.mxu0 0.0
    %280 = vmatpush1.msra.mxu0 0.0
    %281 = vmatprep.subr.mxu0 0.0
    %282 = vmatpush1.msra.mxu0 0.0
    %283 = vmatprep.subr.mxu0 0.0
    %284 = vmatpush1.msra.mxu0 0.0
    %285 = vmatprep.subr.mxu0 0.0
    %286 = vmatpush1.msra.mxu0 0.0
    %287 = vmatprep.subr.mxu0 0.0
    %288 = vmatpush1.msra.mxu0 0.0
    %289 = vmatprep.subr.mxu0 0.0
    %290 = vmatpush1.msra.mxu0 0.0
    %291 = vmatprep.subr.mxu0 0.0
    %292 = vmatpush1.msra.mxu0 0.0
    %293 = vmatprep.subr.mxu0 0.0
    %294 = vmatpush1.msra.mxu0 0.0
    %295 = vmatprep.subr.mxu0 0.0
    %296 = vmatpush1.msra.mxu0 0.0
    %297 = vmatprep.subr.mxu0 0.0
    %298 = vmatpush1.msra.mxu0 0.0
    %299 = vmatprep.subr.mxu0 0.0
    %300 = vmatpush1.msra.mxu0 0.0
    %301 = vmatprep.subr.mxu0 0.0
    %302 = vmatpush1.msra.mxu0 0.0
    %303 = vmatprep.subr.mxu0 0.0
    %304 = vmatpush1.msra.mxu0 0.0
    %305 = vmatprep.subr.mxu0 0.0
    %306 = vmatpush1.msra.mxu0 0.0
    %307 = vmatprep.subr.mxu0 0.0
    %308 = vmatpush1.msra.mxu0 0.0
    %309 = vmatprep.subr.mxu0 0.0
    %310 = vmatpush1.msra.mxu0 0.0
    %311 = vmatprep.subr.mxu0 0.0
    %312 = vmatpush1.msra.mxu0 0.0
    %313 = vmatprep.mubr.f32.mxu0 0.0
    %314 = vmatmul.mubr.f32.gmra.mrb[0].mxu0 %v247
    %v315 = vpop.f32.mrb[0].mxu0
    %v316 = vadd.f32 0.0, %v315
    %v317 = vpop.f32.mrb[0].mxu0
    %318 = vdwg.mxu0
    %v319 = vadd.f32 %v238, %v316
    %v320 = vxor.u32 %v319, 2147483648
    %v321 = vmul.f32 %v320, 1.442695
    %v322 = vpow.pop %v321
    %v323 = vadd.f32 %v322, 1.0
    %v324 = vrcp.pop %v323
    %v325 = vmul.f32 1.0, %v324
    %326 = vmatprep.subr.mxu0 0.0
    %327 = vmatpush1.msra.mxu0 %v145
    %328 = vmatprep.subr.mxu0 0.0
    %329 = vmatpush1.msra.mxu0 %v146
    %330 = vmatprep.subr.mxu0 0.0
    %331 = vmatpush1.msra.mxu0 %v147
    %332 = vmatprep.subr.mxu0 0.0
    %333 = vmatpush1.msra.mxu0 %v148
    %334 = vmatprep.subr.mxu0 0.0
    %335 = vmatpush1.msra.mxu0 0.0
    %336 = vmatprep.subr.mxu0 0.0
    %337 = vmatpush1.msra.mxu0 0.0
    %338 = vmatprep.subr.mxu0 0.0
    %339 = vmatpush1.msra.mxu0 0.0
    %340 = vmatprep.subr.mxu0 0.0
    %341 = vmatpush1.msra.mxu0 0.0
    %342 = vmatprep.subr.mxu0 0.0
    %343 = vmatpush1.msra.mxu0 0.0
    %344 = vmatprep.subr.mxu0 0.0
    %345 = vmatpush1.msra.mxu0 0.0
    %346 = vmatprep.subr.mxu0 0.0
    %347 = vmatpush1.msra.mxu0 0.0
    %348 = vmatprep.subr.mxu0 0.0
    %349 = vmatpush1.msra.mxu0 0.0
    %350 = vmatprep.subr.mxu0 0.0
    %351 = vmatpush1.msra.mxu0 0.0
    %352 = vmatprep.subr.mxu0 0.0
    %353 = vmatpush1.msra.mxu0 0.0
    %354 = vmatprep.subr.mxu0 0.0
    %355 = vmatpush1.msra.mxu0 0.0
    %356 = vmatprep.subr.mxu0 0.0
    %357 = vmatpush1.msra.mxu0 0.0
    %358 = vmatprep.subr.mxu0 0.0
    %359 = vmatpush1.msra.mxu0 0.0
    %360 = vmatprep.subr.mxu0 0.0
    %361 = vmatpush1.msra.mxu0 0.0
    %362 = vmatprep.subr.mxu0 0.0
    %363 = vmatpush1.msra.mxu0 0.0
    %364 = vmatprep.subr.mxu0 0.0
    %365 = vmatpush1.msra.mxu0 0.0
    %366 = vmatprep.subr.mxu0 0.0
    %367 = vmatpush1.msra.mxu0 0.0
    %368 = vmatprep.subr.mxu0 0.0
    %369 = vmatpush1.msra.mxu0 0.0
    %370 = vmatprep.subr.mxu0 0.0
    %371 = vmatpush1.msra.mxu0 0.0
    %372 = vmatprep.subr.mxu0 0.0
    %373 = vmatpush1.msra.mxu0 0.0
    %374 = vmatprep.subr.mxu0 0.0
    %375 = vmatpush1.msra.mxu0 0.0
    %376 = vmatprep.subr.mxu0 0.0
    %377 = vmatpush1.msra.mxu0 0.0
    %378 = vmatprep.subr.mxu0 0.0
    %379 = vmatpush1.msra.mxu0 0.0
    %380 = vmatprep.subr.mxu0 0.0
    %381 = vmatpush1.msra.mxu0 0.0
    %382 = vmatprep.subr.mxu0 0.0
    %383 = vmatpush1.msra.mxu0 0.0
    %384 = vmatprep.subr.mxu0 0.0
    %385 = vmatpush1.msra.mxu0 0.0
    %386 = vmatprep.subr.mxu0 0.0
    %387 = vmatpush1.msra.mxu0 0.0
    %388 = vmatprep.subr.mxu0 0.0
    %389 = vmatpush1.msra.mxu0 0.0
    %390 = vmatprep.mubr.f32.mxu0 0.0
    %391 = vmatmul.mubr.f32.gmra.mrb[0].mxu0 %v247
    %v392 = vpop.f32.mrb[0].mxu0
    %v393 = vadd.f32 0.0, %v392
    %v394 = vpop.f32.mrb[0].mxu0
    %395 = vdwg.mxu0
    %397 = vrot.lane.b32.xlu0 %v393, 32
    %v398 = vpop.permute.xlu0 %397
    %v400 = vadd.f32 %v238, %v398
    %v401 = vxor.u32 %v400, 2147483648
    %v402 = vmul.f32 %v401, 1.442695
    %v403 = vpow.pop %v402
    %v404 = vadd.f32 %v403, 1.0
    %v405 = vrcp.pop %v404
    %v406 = vmul.f32 1.0, %v405
    %407 = vmatprep.subr.mxu0 0.0
    %408 = vmatpush1.msra.mxu0 %v149
    %409 = vmatprep.subr.mxu0 0.0
    %410 = vmatpush1.msra.mxu0 %v150
    %411 = vmatprep.subr.mxu0 0.0
    %412 = vmatpush1.msra.mxu0 %v151
    %413 = vmatprep.subr.mxu0 0.0
    %414 = vmatpush1.msra.mxu0 %v152
    %415 = vmatprep.subr.mxu0 0.0
    %416 = vmatpush1.msra.mxu0 0.0
    %417 = vmatprep.subr.mxu0 0.0
    %418 = vmatpush1.msra.mxu0 0.0
    %419 = vmatprep.subr.mxu0 0.0
    %420 = vmatpush1.msra.mxu0 0.0
    %421 = vmatprep.subr.mxu0 0.0
    %422 = vmatpush1.msra.mxu0 0.0
    %423 = vmatprep.subr.mxu0 0.0
    %424 = vmatpush1.msra.mxu0 0.0
    %425 = vmatprep.subr.mxu0 0.0
    %426 = vmatpush1.msra.mxu0 0.0
    %427 = vmatprep.subr.mxu0 0.0
    %428 = vmatpush1.msra.mxu0 0.0
    %429 = vmatprep.subr.mxu0 0.0
    %430 = vmatpush1.msra.mxu0 0.0
    %431 = vmatprep.subr.mxu0 0.0
    %432 = vmatpush1.msra.mxu0 0.0
    %433 = vmatprep.subr.mxu0 0.0
    %434 = vmatpush1.msra.mxu0 0.0
    %435 = vmatprep.subr.mxu0 0.0
    %436 = vmatpush1.msra.mxu0 0.0
    %437 = vmatprep.subr.mxu0 0.0
    %438 = vmatpush1.msra.mxu0 0.0
    %439 = vmatprep.subr.mxu0 0.0
    %440 = vmatpush1.msra.mxu0 0.0
    %441 = vmatprep.subr.mxu0 0.0
    %442 = vmatpush1.msra.mxu0 0.0
    %443 = vmatprep.subr.mxu0 0.0
    %444 = vmatpush1.msra.mxu0 0.0
    %445 = vmatprep.subr.mxu0 0.0
    %446 = vmatpush1.msra.mxu0 0.0
    %447 = vmatprep.subr.mxu0 0.0
    %448 = vmatpush1.msra.mxu0 0.0
    %449 = vmatprep.subr.mxu0 0.0
    %450 = vmatpush1.msra.mxu0 0.0
    %451 = vmatprep.subr.mxu0 0.0
    %452 = vmatpush1.msra.mxu0 0.0
    %453 = vmatprep.subr.mxu0 0.0
    %454 = vmatpush1.msra.mxu0 0.0
    %455 = vmatprep.subr.mxu0 0.0
    %456 = vmatpush1.msra.mxu0 0.0
    %457 = vmatprep.subr.mxu0 0.0
    %458 = vmatpush1.msra.mxu0 0.0
    %459 = vmatprep.subr.mxu0 0.0
    %460 = vmatpush1.msra.mxu0 0.0
    %461 = vmatprep.subr.mxu0 0.0
    %462 = vmatpush1.msra.mxu0 0.0
    %463 = vmatprep.subr.mxu0 0.0
    %464 = vmatpush1.msra.mxu0 0.0
    %465 = vmatprep.subr.mxu0 0.0
    %466 = vmatpush1.msra.mxu0 0.0
    %467 = vmatprep.subr.mxu0 0.0
    %468 = vmatpush1.msra.mxu0 0.0
    %469 = vmatprep.subr.mxu0 0.0
    %470 = vmatpush1.msra.mxu0 0.0
    %471 = vmatprep.mubr.f32.mxu0 0.0
    %472 = vmatmul.mubr.f32.gmra.mrb[0].mxu0 %v247
    %v473 = vpop.f32.mrb[0].mxu0
    %v474 = vadd.f32 0.0, %v473
    %v475 = vpop.f32.mrb[0].mxu0
    %476 = vdwg.mxu0
    %478 = vrot.lane.b32.xlu0 %v474, 64
    %v479 = vpop.permute.xlu0 %478
    %v481 = vadd.f32 %v238, %v479
    %v482 = vtanh.pop %v481
    %483 = vmatprep.subr.mxu0 0.0
    %484 = vmatpush1.msra.mxu0 %v153
    %485 = vmatprep.subr.mxu0 0.0
    %486 = vmatpush1.msra.mxu0 %v154
    %487 = vmatprep.subr.mxu0 0.0
    %488 = vmatpush1.msra.mxu0 %v155
    %489 = vmatprep.subr.mxu0 0.0
    %490 = vmatpush1.msra.mxu0 %v156
    %491 = vmatprep.subr.mxu0 0.0
    %492 = vmatpush1.msra.mxu0 0.0
    %493 = vmatprep.subr.mxu0 0.0
    %494 = vmatpush1.msra.mxu0 0.0
    %495 = vmatprep.subr.mxu0 0.0
    %496 = vmatpush1.msra.mxu0 0.0
    %497 = vmatprep.subr.mxu0 0.0
    %498 = vmatpush1.msra.mxu0 0.0
    %499 = vmatprep.subr.mxu0 0.0
    %500 = vmatpush1.msra.mxu0 0.0
    %501 = vmatprep.subr.mxu0 0.0
    %502 = vmatpush1.msra.mxu0 0.0
    %503 = vmatprep.subr.mxu0 0.0
    %504 = vmatpush1.msra.mxu0 0.0
    %505 = vmatprep.subr.mxu0 0.0
    %506 = vmatpush1.msra.mxu0 0.0
    %507 = vmatprep.subr.mxu0 0.0
    %508 = vmatpush1.msra.mxu0 0.0
    %509 = vmatprep.subr.mxu0 0.0
    %510 = vmatpush1.msra.mxu0 0.0
    %511 = vmatprep.subr.mxu0 0.0
    %512 = vmatpush1.msra.mxu0 0.0
    %513 = vmatprep.subr.mxu0 0.0
    %514 = vmatpush1.msra.mxu0 0.0
    %515 = vmatprep.subr.mxu0 0.0
    %516 = vmatpush1.msra.mxu0 0.0
    %517 = vmatprep.subr.mxu0 0.0
    %518 = vmatpush1.msra.mxu0 0.0
    %519 = vmatprep.subr.mxu0 0.0
    %520 = vmatpush1.msra.mxu0 0.0
    %521 = vmatprep.subr.mxu0 0.0
    %522 = vmatpush1.msra.mxu0 0.0
    %523 = vmatprep.subr.mxu0 0.0
    %524 = vmatpush1.msra.mxu0 0.0
    %525 = vmatprep.subr.mxu0 0.0
    %526 = vmatpush1.msra.mxu0 0.0
    %527 = vmatprep.subr.mxu0 0.0
    %528 = vmatpush1.msra.mxu0 0.0
    %529 = vmatprep.subr.mxu0 0.0
    %530 = vmatpush1.msra.mxu0 0.0
    %531 = vmatprep.subr.mxu0 0.0
    %532 = vmatpush1.msra.mxu0 0.0
    %533 = vmatprep.subr.mxu0 0.0
    %534 = vmatpush1.msra.mxu0 0.0
    %535 = vmatprep.subr.mxu0 0.0
    %536 = vmatpush1.msra.mxu0 0.0
    %537 = vmatprep.subr.mxu0 0.0
    %538 = vmatpush1.msra.mxu0 0.0
    %539 = vmatprep.subr.mxu0 0.0
    %540 = vmatpush1.msra.mxu0 0.0
    %541 = vmatprep.subr.mxu0 0.0
    %542 = vmatpush1.msra.mxu0 0.0
    %543 = vmatprep.subr.mxu0 0.0
    %544 = vmatpush1.msra.mxu0 0.0
    %545 = vmatprep.subr.mxu0 0.0
    %546 = vmatpush1.msra.mxu0 0.0
    %547 = vmatprep.mubr.f32.mxu0 0.0
    %548 = vmatmul.mubr.f32.gmra.mrb[0].mxu0 %v247
    %v549 = vpop.f32.mrb[0].mxu0
    %v550 = vadd.f32 0.0, %v549
    %v551 = vpop.f32.mrb[0].mxu0
    %552 = vdwg.mxu0
    %554 = vrot.lane.b32.xlu0 %v550, 96
    %v555 = vpop.permute.xlu0 %554
    %v557 = vadd.f32 %v238, %v555
    %v558 = vxor.u32 %v557, 2147483648
    %v559 = vmul.f32 %v558, 1.442695
    %v560 = vpow.pop %v559
    %v561 = vadd.f32 %v560, 1.0
    %v562 = vrcp.pop %v561
    %v563 = vmul.f32 1.0, %v562
    %v564 = vmul.f32 %v406, 0.0
    %566 = vrot.lane.b32.xlu0 %v482, 64
    %v567 = vpop.permute.xlu0 %566
    %v569 = vmul.f32 %v325, %v567
    %571 = vrot.lane.b32.xlu0 %v569, 32
    %v572 = vpop.permute.xlu0 %571
    %v574 = vadd.f32 %v564, %v572
    %v575 = vtanh.pop %v574
    %577 = vrot.lane.b32.xlu0 %v575, 64
    %v578 = vpop.permute.xlu0 %577
    %v580 = vmul.f32 %v563, %v578
    %582 = vrot.lane.b32.xlu0 %v580, 32
    %v583 = vpop.permute.xlu0 %582
    %v584 = vsel %vm164, %v583, 0
    %586 = vmatprep.subr.mxu0 0.0
    %587 = vmatpush1.msra.mxu0 %v141
    %588 = vmatprep.subr.mxu0 0.0
    %589 = vmatpush1.msra.mxu0 %v142
    %590 = vmatprep.subr.mxu0 0.0
    %591 = vmatpush1.msra.mxu0 %v143
    %592 = vmatprep.subr.mxu0 0.0
    %593 = vmatpush1.msra.mxu0 %v144
    %594 = vmatprep.subr.mxu0 0.0
    %595 = vmatpush1.msra.mxu0 0.0
    %596 = vmatprep.subr.mxu0 0.0
    %597 = vmatpush1.msra.mxu0 0.0
    %598 = vmatprep.subr.mxu0 0.0
    %599 = vmatpush1.msra.mxu0 0.0
    %600 = vmatprep.subr.mxu0 0.0
    %601 = vmatpush1.msra.mxu0 0.0
    %602 = vmatprep.subr.mxu0 0.0
    %603 = vmatpush1.msra.mxu0 0.0
    %604 = vmatprep.subr.mxu0 0.0
    %605 = vmatpush1.msra.mxu0 0.0
    %606 = vmatprep.subr.mxu0 0.0
    %607 = vmatpush1.msra.mxu0 0.0
    %608 = vmatprep.subr.mxu0 0.0
    %609 = vmatpush1.msra.mxu0 0.0
    %610 = vmatprep.subr.mxu0 0.0
    %611 = vmatpush1.msra.mxu0 0.0
    %612 = vmatprep.subr.mxu0 0.0
    %613 = vmatpush1.msra.mxu0 0.0
    %614 = vmatprep.subr.mxu0 0.0
    %615 = vmatpush1.msra.mxu0 0.0
    %616 = vmatprep.subr.mxu0 0.0
    %617 = vmatpush1.msra.mxu0 0.0
    %618 = vmatprep.subr.mxu0 0.0
    %619 = vmatpush1.msra.mxu0 0.0
    %620 = vmatprep.subr.mxu0 0.0
    %621 = vmatpush1.msra.mxu0 0.0
    %622 = vmatprep.subr.mxu0 0.0
    %623 = vmatpush1.msra.mxu0 0.0
    %624 = vmatprep.subr.mxu0 0.0
    %625 = vmatpush1.msra.mxu0 0.0
    %626 = vmatprep.subr.mxu0 0.0
    %627 = vmatpush1.msra.mxu0 0.0
    %628 = vmatprep.subr.mxu0 0.0
    %629 = vmatpush1.msra.mxu0 0.0
    %630 = vmatprep.subr.mxu0 0.0
    %631 = vmatpush1.msra.mxu0 0.0
    %632 = vmatprep.subr.mxu0 0.0
    %633 = vmatpush1.msra.mxu0 0.0
    %634 = vmatprep.subr.mxu0 0.0
    %635 = vmatpush1.msra.mxu0 0.0
    %636 = vmatprep.subr.mxu0 0.0
    %637 = vmatpush1.msra.mxu0 0.0
    %638 = vmatprep.subr.mxu0 0.0
    %639 = vmatpush1.msra.mxu0 0.0
    %640 = vmatprep.subr.mxu0 0.0
    %641 = vmatpush1.msra.mxu0 0.0
    %642 = vmatprep.subr.mxu0 0.0
    %643 = vmatpush1.msra.mxu0 0.0
    %644 = vmatprep.subr.mxu0 0.0
    %645 = vmatpush1.msra.mxu0 0.0
    %646 = vmatprep.subr.mxu0 0.0
    %647 = vmatpush1.msra.mxu0 0.0
    %648 = vmatprep.subr.mxu0 0.0
    %649 = vmatpush1.msra.mxu0 0.0
    %650 = vmatprep.mubr.f32.mxu0 0.0
    %651 = vmatmul.mubr.f32.gmra.mrb[0].mxu0 %v584
    %v652 = vpop.f32.mrb[0].mxu0
    %v653 = vadd.f32 0.0, %v652
    %v654 = vpop.f32.mrb[0].mxu0
    %655 = vdwg.mxu0
    %v657 = vrot.slane %v653, 6
    %v659 = vadd.f32 %v238, %v657
    %v660 = vxor.u32 %v659, 2147483648
    %v661 = vmul.f32 %v660, 1.442695
    %v662 = vpow.pop %v661
    %v663 = vadd.f32 %v662, 1.0
    %v664 = vrcp.pop %v663
    %v665 = vmul.f32 1.0, %v664
    %666 = vmatprep.subr.mxu0 0.0
    %667 = vmatpush1.msra.mxu0 %v145
    %668 = vmatprep.subr.mxu0 0.0
    %669 = vmatpush1.msra.mxu0 %v146
    %670 = vmatprep.subr.mxu0 0.0
    %671 = vmatpush1.msra.mxu0 %v147
    %672 = vmatprep.subr.mxu0 0.0
    %673 = vmatpush1.msra.mxu0 %v148
    %674 = vmatprep.subr.mxu0 0.0
    %675 = vmatpush1.msra.mxu0 0.0
    %676 = vmatprep.subr.mxu0 0.0
    %677 = vmatpush1.msra.mxu0 0.0
    %678 = vmatprep.subr.mxu0 0.0
    %679 = vmatpush1.msra.mxu0 0.0
    %680 = vmatprep.subr.mxu0 0.0
    %681 = vmatpush1.msra.mxu0 0.0
    %682 = vmatprep.subr.mxu0 0.0
    %683 = vmatpush1.msra.mxu0 0.0
    %684 = vmatprep.subr.mxu0 0.0
    %685 = vmatpush1.msra.mxu0 0.0
    %686 = vmatprep.subr.mxu0 0.0
    %687 = vmatpush1.msra.mxu0 0.0
    %688 = vmatprep.subr.mxu0 0.0
    %689 = vmatpush1.msra.mxu0 0.0
    %690 = vmatprep.subr.mxu0 0.0
    %691 = vmatpush1.msra.mxu0 0.0
    %692 = vmatprep.subr.mxu0 0.0
    %693 = vmatpush1.msra.mxu0 0.0
    %694 = vmatprep.subr.mxu0 0.0
    %695 = vmatpush1.msra.mxu0 0.0
    %696 = vmatprep.subr.mxu0 0.0
    %697 = vmatpush1.msra.mxu0 0.0
    %698 = vmatprep.subr.mxu0 0.0
    %699 = vmatpush1.msra.mxu0 0.0
    %700 = vmatprep.subr.mxu0 0.0
    %701 = vmatpush1.msra.mxu0 0.0
    %702 = vmatprep.subr.mxu0 0.0
    %703 = vmatpush1.msra.mxu0 0.0
    %704 = vmatprep.subr.mxu0 0.0
    %705 = vmatpush1.msra.mxu0 0.0
    %706 = vmatprep.subr.mxu0 0.0
    %707 = vmatpush1.msra.mxu0 0.0
    %708 = vmatprep.subr.mxu0 0.0
    %709 = vmatpush1.msra.mxu0 0.0
    %710 = vmatprep.subr.mxu0 0.0
    %711 = vmatpush1.msra.mxu0 0.0
    %712 = vmatprep.subr.mxu0 0.0
    %713 = vmatpush1.msra.mxu0 0.0
    %714 = vmatprep.subr.mxu0 0.0
    %715 = vmatpush1.msra.mxu0 0.0
    %716 = vmatprep.subr.mxu0 0.0
    %717 = vmatpush1.msra.mxu0 0.0
    %718 = vmatprep.subr.mxu0 0.0
    %719 = vmatpush1.msra.mxu0 0.0
    %720 = vmatprep.subr.mxu0 0.0
    %721 = vmatpush1.msra.mxu0 0.0
    %722 = vmatprep.subr.mxu0 0.0
    %723 = vmatpush1.msra.mxu0 0.0
    %724 = vmatprep.subr.mxu0 0.0
    %725 = vmatpush1.msra.mxu0 0.0
    %726 = vmatprep.subr.mxu0 0.0
    %727 = vmatpush1.msra.mxu0 0.0
    %728 = vmatprep.subr.mxu0 0.0
    %729 = vmatpush1.msra.mxu0 0.0
    %730 = vmatprep.mubr.f32.mxu0 0.0
    %731 = vmatmul.mubr.f32.gmra.mrb[0].mxu0 %v584
    %v732 = vpop.f32.mrb[0].mxu0
    %v733 = vadd.f32 0.0, %v732
    %v734 = vpop.f32.mrb[0].mxu0
    %735 = vdwg.mxu0
    %v737 = vrot.slane %v733, 6
    %738 = vrot.lane.b32.xlu0 %v737, 32
    %v739 = vpop.permute.xlu0 %738
    %v741 = vadd.f32 %v238, %v739
    %v742 = vxor.u32 %v741, 2147483648
    %v743 = vmul.f32 %v742, 1.442695
    %v744 = vpow.pop %v743
    %v745 = vadd.f32 %v744, 1.0
    %v746 = vrcp.pop %v745
    %v747 = vmul.f32 1.0, %v746
    %748 = vmatprep.subr.mxu0 0.0
    %749 = vmatpush1.msra.mxu0 %v149
    %750 = vmatprep.subr.mxu0 0.0
    %751 = vmatpush1.msra.mxu0 %v150
    %752 = vmatprep.subr.mxu0 0.0
    %753 = vmatpush1.msra.mxu0 %v151
    %754 = vmatprep.subr.mxu0 0.0
    %755 = vmatpush1.msra.mxu0 %v152
    %756 = vmatprep.subr.mxu0 0.0
    %757 = vmatpush1.msra.mxu0 0.0
    %758 = vmatprep.subr.mxu0 0.0
    %759 = vmatpush1.msra.mxu0 0.0
    %760 = vmatprep.subr.mxu0 0.0
    %761 = vmatpush1.msra.mxu0 0.0
    %762 = vmatprep.subr.mxu0 0.0
    %763 = vmatpush1.msra.mxu0 0.0
    %764 = vmatprep.subr.mxu0 0.0
    %765 = vmatpush1.msra.mxu0 0.0
    %766 = vmatprep.subr.mxu0 0.0
    %767 = vmatpush1.msra.mxu0 0.0
    %768 = vmatprep.subr.mxu0 0.0
    %769 = vmatpush1.msra.mxu0 0.0
    %770 = vmatprep.subr.mxu0 0.0
    %771 = vmatpush1.msra.mxu0 0.0
    %772 = vmatprep.subr.mxu0 0.0
    %773 = vmatpush1.msra.mxu0 0.0
    %774 = vmatprep.subr.mxu0 0.0
    %775 = vmatpush1.msra.mxu0 0.0
    %776 = vmatprep.subr.mxu0 0.0
    %777 = vmatpush1.msra.mxu0 0.0
    %778 = vmatprep.subr.mxu0 0.0
    %779 = vmatpush1.msra.mxu0 0.0
    %780 = vmatprep.subr.mxu0 0.0
    %781 = vmatpush1.msra.mxu0 0.0
    %782 = vmatprep.subr.mxu0 0.0
    %783 = vmatpush1.msra.mxu0 0.0
    %784 = vmatprep.subr.mxu0 0.0
    %785 = vmatpush1.msra.mxu0 0.0
    %786 = vmatprep.subr.mxu0 0.0
    %787 = vmatpush1.msra.mxu0 0.0
    %788 = vmatprep.subr.mxu0 0.0
    %789 = vmatpush1.msra.mxu0 0.0
    %790 = vmatprep.subr.mxu0 0.0
    %791 = vmatpush1.msra.mxu0 0.0
    %792 = vmatprep.subr.mxu0 0.0
    %793 = vmatpush1.msra.mxu0 0.0
    %794 = vmatprep.subr.mxu0 0.0
    %795 = vmatpush1.msra.mxu0 0.0
    %796 = vmatprep.subr.mxu0 0.0
    %797 = vmatpush1.msra.mxu0 0.0
    %798 = vmatprep.subr.mxu0 0.0
    %799 = vmatpush1.msra.mxu0 0.0
    %800 = vmatprep.subr.mxu0 0.0
    %801 = vmatpush1.msra.mxu0 0.0
    %802 = vmatprep.subr.mxu0 0.0
    %803 = vmatpush1.msra.mxu0 0.0
    %804 = vmatprep.subr.mxu0 0.0
    %805 = vmatpush1.msra.mxu0 0.0
    %806 = vmatprep.subr.mxu0 0.0
    %807 = vmatpush1.msra.mxu0 0.0
    %808 = vmatprep.subr.mxu0 0.0
    %809 = vmatpush1.msra.mxu0 0.0
    %810 = vmatprep.subr.mxu0 0.0
    %811 = vmatpush1.msra.mxu0 0.0
    %812 = vmatprep.mubr.f32.mxu0 0.0
    %813 = vmatmul.mubr.f32.gmra.mrb[0].mxu0 %v584
    %v814 = vpop.f32.mrb[0].mxu0
    %v815 = vadd.f32 0.0, %v814
    %v816 = vpop.f32.mrb[0].mxu0
    %817 = vdwg.mxu0
    %v819 = vrot.slane %v815, 6
    %820 = vrot.lane.b32.xlu0 %v819, 64
    %v821 = vpop.permute.xlu0 %820
    %v823 = vadd.f32 %v238, %v821
    %v824 = vtanh.pop %v823
    %825 = vmatprep.subr.mxu0 0.0
    %826 = vmatpush1.msra.mxu0 %v153
    %827 = vmatprep.subr.mxu0 0.0
    %828 = vmatpush1.msra.mxu0 %v154
    %829 = vmatprep.subr.mxu0 0.0
    %830 = vmatpush1.msra.mxu0 %v155
    %831 = vmatprep.subr.mxu0 0.0
    %832 = vmatpush1.msra.mxu0 %v156
    %833 = vmatprep.subr.mxu0 0.0
    %834 = vmatpush1.msra.mxu0 0.0
    %835 = vmatprep.subr.mxu0 0.0
    %836 = vmatpush1.msra.mxu0 0.0
    %837 = vmatprep.subr.mxu0 0.0
    %838 = vmatpush1.msra.mxu0 0.0
    %839 = vmatprep.subr.mxu0 0.0
    %840 = vmatpush1.msra.mxu0 0.0
    %841 = vmatprep.subr.mxu0 0.0
    %842 = vmatpush1.msra.mxu0 0.0
    %843 = vmatprep.subr.mxu0 0.0
    %844 = vmatpush1.msra.mxu0 0.0
    %845 = vmatprep.subr.mxu0 0.0
    %846 = vmatpush1.msra.mxu0 0.0
    %847 = vmatprep.subr.mxu0 0.0
    %848 = vmatpush1.msra.mxu0 0.0
    %849 = vmatprep.subr.mxu0 0.0
    %850 = vmatpush1.msra.mxu0 0.0
    %851 = vmatprep.subr.mxu0 0.0
    %852 = vmatpush1.msra.mxu0 0.0
    %853 = vmatprep.subr.mxu0 0.0
    %854 = vmatpush1.msra.mxu0 0.0
    %855 = vmatprep.subr.mxu0 0.0
    %856 = vmatpush1.msra.mxu0 0.0
    %857 = vmatprep.subr.mxu0 0.0
    %858 = vmatpush1.msra.mxu0 0.0
    %859 = vmatprep.subr.mxu0 0.0
    %860 = vmatpush1.msra.mxu0 0.0
    %861 = vmatprep.subr.mxu0 0.0
    %862 = vmatpush1.msra.mxu0 0.0
    %863 = vmatprep.subr.mxu0 0.0
    %864 = vmatpush1.msra.mxu0 0.0
    %865 = vmatprep.subr.mxu0 0.0
    %866 = vmatpush1.msra.mxu0 0.0
    %867 = vmatprep.subr.mxu0 0.0
    %868 = vmatpush1.msra.mxu0 0.0
    %869 = vmatprep.subr.mxu0 0.0
    %870 = vmatpush1.msra.mxu0 0.0
    %871 = vmatprep.subr.mxu0 0.0
    %872 = vmatpush1.msra.mxu0 0.0
    %873 = vmatprep.subr.mxu0 0.0
    %874 = vmatpush1.msra.mxu0 0.0
    %875 = vmatprep.subr.mxu0 0.0
    %876 = vmatpush1.msra.mxu0 0.0
    %877 = vmatprep.subr.mxu0 0.0
    %878 = vmatpush1.msra.mxu0 0.0
    %879 = vmatprep.subr.mxu0 0.0
    %880 = vmatpush1.msra.mxu0 0.0
    %881 = vmatprep.subr.mxu0 0.0
    %882 = vmatpush1.msra.mxu0 0.0
    %883 = vmatprep.subr.mxu0 0.0
    %884 = vmatpush1.msra.mxu0 0.0
    %885 = vmatprep.subr.mxu0 0.0
    %886 = vmatpush1.msra.mxu0 0.0
    %887 = vmatprep.subr.mxu0 0.0
    %888 = vmatpush1.msra.mxu0 0.0
    %889 = vmatprep.mubr.f32.mxu0 0.0
    %890 = vmatmul.mubr.f32.gmra.mrb[0].mxu0 %v584
    %v891 = vpop.f32.mrb[0].mxu0
    %v892 = vadd.f32 0.0, %v891
    %v893 = vpop.f32.mrb[0].mxu0
    %894 = vdwg.mxu0
    %v896 = vrot.slane %v892, 6
    %897 = vrot.lane.b32.xlu0 %v896, 96
    %v898 = vpop.permute.xlu0 %897
    %v900 = vadd.f32 %v238, %v898
    %v901 = vxor.u32 %v900, 2147483648
    %v902 = vmul.f32 %v901, 1.442695
    %v903 = vpow.pop %v902
    %v904 = vadd.f32 %v903, 1.0
    %v905 = vrcp.pop %v904
    %v906 = vmul.f32 1.0, %v905
    %v908 = vrot.slane %v574, 6
    %v910 = vmul.f32 %v747, %v908
    %912 = vrot.lane.b32.xlu0 %v824, 64
    %v913 = vpop.permute.xlu0 %912
    %v915 = vmul.f32 %v665, %v913
    %917 = vrot.lane.b32.xlu0 %v915, 32
    %v918 = vpop.permute.xlu0 %917
    %v920 = vadd.f32 %v910, %v918
    %v921 = vtanh.pop %v920
    %923 = vrot.lane.b32.xlu0 %v921, 64
    %v924 = vpop.permute.xlu0 %923
    %v926 = vmul.f32 %v906, %v924
    %v928 = vrot.slane %v926, 2
    %929 = vrot.lane.b32.xlu0 %v928, 32
    %v930 = vpop.permute.xlu0 %929
    %v931 = vsel %vm164, %v930, 0
    %933 = vmatprep.subr.mxu0 0.0
    %934 = vmatpush1.msra.mxu0 %v141
    %935 = vmatprep.subr.mxu0 0.0
    %936 = vmatpush1.msra.mxu0 %v142
    %937 = vmatprep.subr.mxu0 0.0
    %938 = vmatpush1.msra.mxu0 %v143
    %939 = vmatprep.subr.mxu0 0.0
    %940 = vmatpush1.msra.mxu0 %v144
    %941 = vmatprep.subr.mxu0 0.0
    %942 = vmatpush1.msra.mxu0 0.0
    %943 = vmatprep.subr.mxu0 0.0
    %944 = vmatpush1.msra.mxu0 0.0
    %945 = vmatprep.subr.mxu0 0.0
    %946 = vmatpush1.msra.mxu0 0.0
    %947 = vmatprep.subr.mxu0 0.0
    %948 = vmatpush1.msra.mxu0 0.0
    %949 = vmatprep.subr.mxu0 0.0
    %950 = vmatpush1.msra.mxu0 0.0
    %951 = vmatprep.subr.mxu0 0.0
    %952 = vmatpush1.msra.mxu0 0.0
    %953 = vmatprep.subr.mxu0 0.0
    %954 = vmatpush1.msra.mxu0 0.0
    %955 = vmatprep.subr.mxu0 0.0
    %956 = vmatpush1.msra.mxu0 0.0
    %957 = vmatprep.subr.mxu0 0.0
    %958 = vmatpush1.msra.mxu0 0.0
    %959 = vmatprep.subr.mxu0 0.0
    %960 = vmatpush1.msra.mxu0 0.0
    %961 = vmatprep.subr.mxu0 0.0
    %962 = vmatpush1.msra.mxu0 0.0
    %963 = vmatprep.subr.mxu0 0.0
    %964 = vmatpush1.msra.mxu0 0.0
    %965 = vmatprep.subr.mxu0 0.0
    %966 = vmatpush1.msra.mxu0 0.0
    %967 = vmatprep.subr.mxu0 0.0
    %968 = vmatpush1.msra.mxu0 0.0
    %969 = vmatprep.subr.mxu0 0.0
    %970 = vmatpush1.msra.mxu0 0.0
    %971 = vmatprep.subr.mxu0 0.0
    %972 = vmatpush1.msra.mxu0 0.0
    %973 = vmatprep.subr.mxu0 0.0
    %974 = vmatpush1.msra.mxu0 0.0
    %975 = vmatprep.subr.mxu0 0.0
    %976 = vmatpush1.msra.mxu0 0.0
    %977 = vmatprep.subr.mxu0 0.0
    %978 = vmatpush1.msra.mxu0 0.0
    %979 = vmatprep.subr.mxu0 0.0
    %980 = vmatpush1.msra.mxu0 0.0
    %981 = vmatprep.subr.mxu0 0.0
    %982 = vmatpush1.msra.mxu0 0.0
    %983 = vmatprep.subr.mxu0 0.0
    %984 = vmatpush1.msra.mxu0 0.0
    %985 = vmatprep.subr.mxu0 0.0
    %986 = vmatpush1.msra.mxu0 0.0
    %987 = vmatprep.subr.mxu0 0.0
    %988 = vmatpush1.msra.mxu0 0.0
    %989 = vmatprep.subr.mxu0 0.0
    %990 = vmatpush1.msra.mxu0 0.0
    %991 = vmatprep.subr.mxu0 0.0
    %992 = vmatpush1.msra.mxu0 0.0
    %993 = vmatprep.subr.mxu0 0.0
    %994 = vmatpush1.msra.mxu0 0.0
    %995 = vmatprep.subr.mxu0 0.0
    %996 = vmatpush1.msra.mxu0 0.0
    %997 = vmatprep.mubr.f32.mxu0 0.0
    %998 = vmatmul.mubr.f32.gmra.mrb[0].mxu0 %v931
    %v999 = vpop.f32.mrb[0].mxu0
    %v1000 = vadd.f32 0.0, %v999
    %v1001 = vpop.f32.mrb[0].mxu0
    %1002 = vdwg.mxu0
    %v1004 = vrot.slane %v1000, 4
    %v1006 = vadd.f32 %v238, %v1004
    %v1007 = vxor.u32 %v1006, 2147483648
    %v1008 = vmul.f32 %v1007, 1.442695
    %v1009 = vpow.pop %v1008
    %v1010 = vadd.f32 %v1009, 1.0
    %v1011 = vrcp.pop %v1010
    %v1012 = vmul.f32 1.0, %v1011
    %1013 = vmatprep.subr.mxu0 0.0
    %1014 = vmatpush1.msra.mxu0 %v145
    %1015 = vmatprep.subr.mxu0 0.0
    %1016 = vmatpush1.msra.mxu0 %v146
    %1017 = vmatprep.subr.mxu0 0.0
    %1018 = vmatpush1.msra.mxu0 %v147
    %1019 = vmatprep.subr.mxu0 0.0
    %1020 = vmatpush1.msra.mxu0 %v148
    %1021 = vmatprep.subr.mxu0 0.0
    %1022 = vmatpush1.msra.mxu0 0.0
    %1023 = vmatprep.subr.mxu0 0.0
    %1024 = vmatpush1.msra.mxu0 0.0
    %1025 = vmatprep.subr.mxu0 0.0
    %1026 = vmatpush1.msra.mxu0 0.0
    %1027 = vmatprep.subr.mxu0 0.0
    %1028 = vmatpush1.msra.mxu0 0.0
    %1029 = vmatprep.subr.mxu0 0.0
    %1030 = vmatpush1.msra.mxu0 0.0
    %1031 = vmatprep.subr.mxu0 0.0
    %1032 = vmatpush1.msra.mxu0 0.0
    %1033 = vmatprep.subr.mxu0 0.0
    %1034 = vmatpush1.msra.mxu0 0.0
    %1035 = vmatprep.subr.mxu0 0.0
    %1036 = vmatpush1.msra.mxu0 0.0
    %1037 = vmatprep.subr.mxu0 0.0
    %1038 = vmatpush1.msra.mxu0 0.0
    %1039 = vmatprep.subr.mxu0 0.0
    %1040 = vmatpush1.msra.mxu0 0.0
    %1041 = vmatprep.subr.mxu0 0.0
    %1042 = vmatpush1.msra.mxu0 0.0
    %1043 = vmatprep.subr.mxu0 0.0
    %1044 = vmatpush1.msra.mxu0 0.0
    %1045 = vmatprep.subr.mxu0 0.0
    %1046 = vmatpush1.msra.mxu0 0.0
    %1047 = vmatprep.subr.mxu0 0.0
    %1048 = vmatpush1.msra.mxu0 0.0
    %1049 = vmatprep.subr.mxu0 0.0
    %1050 = vmatpush1.msra.mxu0 0.0
    %1051 = vmatprep.subr.mxu0 0.0
    %1052 = vmatpush1.msra.mxu0 0.0
    %1053 = vmatprep.subr.mxu0 0.0
    %1054 = vmatpush1.msra.mxu0 0.0
    %1055 = vmatprep.subr.mxu0 0.0
    %1056 = vmatpush1.msra.mxu0 0.0
    %1057 = vmatprep.subr.mxu0 0.0
    %1058 = vmatpush1.msra.mxu0 0.0
    %1059 = vmatprep.subr.mxu0 0.0
    %1060 = vmatpush1.msra.mxu0 0.0
    %1061 = vmatprep.subr.mxu0 0.0
    %1062 = vmatpush1.msra.mxu0 0.0
    %1063 = vmatprep.subr.mxu0 0.0
    %1064 = vmatpush1.msra.mxu0 0.0
    %1065 = vmatprep.subr.mxu0 0.0
    %1066 = vmatpush1.msra.mxu0 0.0
    %1067 = vmatprep.subr.mxu0 0.0
    %1068 = vmatpush1.msra.mxu0 0.0
    %1069 = vmatprep.subr.mxu0 0.0
    %1070 = vmatpush1.msra.mxu0 0.0
    %1071 = vmatprep.subr.mxu0 0.0
    %1072 = vmatpush1.msra.mxu0 0.0
    %1073 = vmatprep.subr.mxu0 0.0
    %1074 = vmatpush1.msra.mxu0 0.0
    %1075 = vmatprep.subr.mxu0 0.0
    %1076 = vmatpush1.msra.mxu0 0.0
    %1077 = vmatprep.mubr.f32.mxu0 0.0
    %1078 = vmatmul.mubr.f32.gmra.mrb[0].mxu0 %v931
    %v1079 = vpop.f32.mrb[0].mxu0
    %v1080 = vadd.f32 0.0, %v1079
    %v1081 = vpop.f32.mrb[0].mxu0
    %1082 = vdwg.mxu0
    %v1084 = vrot.slane %v1080, 4
    %1085 = vrot.lane.b32.xlu0 %v1084, 32
    %v1086 = vpop.permute.xlu0 %1085
    %v1088 = vadd.f32 %v238, %v1086
    %v1089 = vxor.u32 %v1088, 2147483648
    %v1090 = vmul.f32 %v1089, 1.442695
    %v1091 = vpow.pop %v1090
    %v1092 = vadd.f32 %v1091, 1.0
    %v1093 = vrcp.pop %v1092
    %v1094 = vmul.f32 1.0, %v1093
    %1095 = vmatprep.subr.mxu0 0.0
    %1096 = vmatpush1.msra.mxu0 %v149
    %1097 = vmatprep.subr.mxu0 0.0
    %1098 = vmatpush1.msra.mxu0 %v150
    %1099 = vmatprep.subr.mxu0 0.0
    %1100 = vmatpush1.msra.mxu0 %v151
    %1101 = vmatprep.subr.mxu0 0.0
    %1102 = vmatpush1.msra.mxu0 %v152
    %1103 = vmatprep.subr.mxu0 0.0
    %1104 = vmatpush1.msra.mxu0 0.0
    %1105 = vmatprep.subr.mxu0 0.0
    %1106 = vmatpush1.msra.mxu0 0.0
    %1107 = vmatprep.subr.mxu0 0.0
    %1108 = vmatpush1.msra.mxu0 0.0
    %1109 = vmatprep.subr.mxu0 0.0
    %1110 = vmatpush1.msra.mxu0 0.0
    %1111 = vmatprep.subr.mxu0 0.0
    %1112 = vmatpush1.msra.mxu0 0.0
    %1113 = vmatprep.subr.mxu0 0.0
    %1114 = vmatpush1.msra.mxu0 0.0
    %1115 = vmatprep.subr.mxu0 0.0
    %1116 = vmatpush1.msra.mxu0 0.0
    %1117 = vmatprep.subr.mxu0 0.0
    %1118 = vmatpush1.msra.mxu0 0.0
    %1119 = vmatprep.subr.mxu0 0.0
    %1120 = vmatpush1.msra.mxu0 0.0
    %1121 = vmatprep.subr.mxu0 0.0
    %1122 = vmatpush1.msra.mxu0 0.0
    %1123 = vmatprep.subr.mxu0 0.0
    %1124 = vmatpush1.msra.mxu0 0.0
    %1125 = vmatprep.subr.mxu0 0.0
    %1126 = vmatpush1.msra.mxu0 0.0
    %1127 = vmatprep.subr.mxu0 0.0
    %1128 = vmatpush1.msra.mxu0 0.0
    %1129 = vmatprep.subr.mxu0 0.0
    %1130 = vmatpush1.msra.mxu0 0.0
    %1131 = vmatprep.subr.mxu0 0.0
    %1132 = vmatpush1.msra.mxu0 0.0
    %1133 = vmatprep.subr.mxu0 0.0
    %1134 = vmatpush1.msra.mxu0 0.0
    %1135 = vmatprep.subr.mxu0 0.0
    %1136 = vmatpush1.msra.mxu0 0.0
    %1137 = vmatprep.subr.mxu0 0.0
    %1138 = vmatpush1.msra.mxu0 0.0
    %1139 = vmatprep.subr.mxu0 0.0
    %1140 = vmatpush1.msra.mxu0 0.0
    %1141 = vmatprep.subr.mxu0 0.0
    %1142 = vmatpush1.msra.mxu0 0.0
    %1143 = vmatprep.subr.mxu0 0.0
    %1144 = vmatpush1.msra.mxu0 0.0
    %1145 = vmatprep.subr.mxu0 0.0
    %1146 = vmatpush1.msra.mxu0 0.0
    %1147 = vmatprep.subr.mxu0 0.0
    %1148 = vmatpush1.msra.mxu0 0.0
    %1149 = vmatprep.subr.mxu0 0.0
    %1150 = vmatpush1.msra.mxu0 0.0
    %1151 = vmatprep.subr.mxu0 0.0
    %1152 = vmatpush1.msra.mxu0 0.0
    %1153 = vmatprep.subr.mxu0 0.0
    %1154 = vmatpush1.msra.mxu0 0.0
    %1155 = vmatprep.subr.mxu0 0.0
    %1156 = vmatpush1.msra.mxu0 0.0
    %1157 = vmatprep.subr.mxu0 0.0
    %1158 = vmatpush1.msra.mxu0 0.0
    %1159 = vmatprep.mubr.f32.mxu0 0.0
    %1160 = vmatmul.mubr.f32.gmra.mrb[0].mxu0 %v931
    %v1161 = vpop.f32.mrb[0].mxu0
    %v1162 = vadd.f32 0.0, %v1161
    %v1163 = vpop.f32.mrb[0].mxu0
    %1164 = vdwg.mxu0
    %v1166 = vrot.slane %v1162, 4
    %1167 = vrot.lane.b32.xlu0 %v1166, 64
    %v1168 = vpop.permute.xlu0 %1167
    %v1170 = vadd.f32 %v238, %v1168
    %v1171 = vtanh.pop %v1170
    %1172 = vmatprep.subr.mxu0 0.0
    %1173 = vmatpush1.msra.mxu0 %v153
    %1174 = vmatprep.subr.mxu0 0.0
    %1175 = vmatpush1.msra.mxu0 %v154
    %1176 = vmatprep.subr.mxu0 0.0
    %1177 = vmatpush1.msra.mxu0 %v155
    %1178 = vmatprep.subr.mxu0 0.0
    %1179 = vmatpush1.msra.mxu0 %v156
    %1180 = vmatprep.subr.mxu0 0.0
    %1181 = vmatpush1.msra.mxu0 0.0
    %1182 = vmatprep.subr.mxu0 0.0
    %1183 = vmatpush1.msra.mxu0 0.0
    %1184 = vmatprep.subr.mxu0 0.0
    %1185 = vmatpush1.msra.mxu0 0.0
    %1186 = vmatprep.subr.mxu0 0.0
    %1187 = vmatpush1.msra.mxu0 0.0
    %1188 = vmatprep.subr.mxu0 0.0
    %1189 = vmatpush1.msra.mxu0 0.0
    %1190 = vmatprep.subr.mxu0 0.0
    %1191 = vmatpush1.msra.mxu0 0.0
    %1192 = vmatprep.subr.mxu0 0.0
    %1193 = vmatpush1.msra.mxu0 0.0
    %1194 = vmatprep.subr.mxu0 0.0
    %1195 = vmatpush1.msra.mxu0 0.0
    %1196 = vmatprep.subr.mxu0 0.0
    %1197 = vmatpush1.msra.mxu0 0.0
    %1198 = vmatprep.subr.mxu0 0.0
    %1199 = vmatpush1.msra.mxu0 0.0
    %1200 = vmatprep.subr.mxu0 0.0
    %1201 = vmatpush1.msra.mxu0 0.0
    %1202 = vmatprep.subr.mxu0 0.0
    %1203 = vmatpush1.msra.mxu0 0.0
    %1204 = vmatprep.subr.mxu0 0.0
    %1205 = vmatpush1.msra.mxu0 0.0
    %1206 = vmatprep.subr.mxu0 0.0
    %1207 = vmatpush1.msra.mxu0 0.0
    %1208 = vmatprep.subr.mxu0 0.0
    %1209 = vmatpush1.msra.mxu0 0.0
    %1210 = vmatprep.subr.mxu0 0.0
    %1211 = vmatpush1.msra.mxu0 0.0
    %1212 = vmatprep.subr.mxu0 0.0
    %1213 = vmatpush1.msra.mxu0 0.0
    %1214 = vmatprep.subr.mxu0 0.0
    %1215 = vmatpush1.msra.mxu0 0.0
    %1216 = vmatprep.subr.mxu0 0.0
    %1217 = vmatpush1.msra.mxu0 0.0
    %1218 = vmatprep.subr.mxu0 0.0
    %1219 = vmatpush1.msra.mxu0 0.0
    %1220 = vmatprep.subr.mxu0 0.0
    %1221 = vmatpush1.msra.mxu0 0.0
    %1222 = vmatprep.subr.mxu0 0.0
    %1223 = vmatpush1.msra.mxu0 0.0
    %1224 = vmatprep.subr.mxu0 0.0
    %1225 = vmatpush1.msra.mxu0 0.0
    %1226 = vmatprep.subr.mxu0 0.0
    %1227 = vmatpush1.msra.mxu0 0.0
    %1228 = vmatprep.subr.mxu0 0.0
    %1229 = vmatpush1.msra.mxu0 0.0
    %1230 = vmatprep.subr.mxu0 0.0
    %1231 = vmatpush1.msra.mxu0 0.0
    %1232 = vmatprep.subr.mxu0 0.0
    %1233 = vmatpush1.msra.mxu0 0.0
    %1234 = vmatprep.subr.mxu0 0.0
    %1235 = vmatpush1.msra.mxu0 0.0
    %1236 = vmatprep.mubr.f32.mxu0 0.0
    %1237 = vmatmul.mubr.f32.gmra.mrb[0].mxu0 %v931
    %v1238 = vpop.f32.mrb[0].mxu0
    %v1239 = vadd.f32 0.0, %v1238
    %v1240 = vpop.f32.mrb[0].mxu0
    %1241 = vdwg.mxu0
    %v1243 = vrot.slane %v1239, 4
    %1244 = vrot.lane.b32.xlu0 %v1243, 96
    %v1245 = vpop.permute.xlu0 %1244
    %v1247 = vadd.f32 %v238, %v1245
    %v1248 = vxor.u32 %v1247, 2147483648
    %v1249 = vmul.f32 %v1248, 1.442695
    %v1250 = vpow.pop %v1249
    %v1251 = vadd.f32 %v1250, 1.0
    %v1252 = vrcp.pop %v1251
    %v1253 = vmul.f32 1.0, %v1252
    %v1255 = vrot.slane %v920, 6
    %v1257 = vmul.f32 %v1094, %v1255
    %1259 = vrot.lane.b32.xlu0 %v1171, 64
    %v1260 = vpop.permute.xlu0 %1259
    %v1262 = vmul.f32 %v1012, %v1260
    %1264 = vrot.lane.b32.xlu0 %v1262, 32
    %v1265 = vpop.permute.xlu0 %1264
    %v1267 = vadd.f32 %v1257, %v1265
    %v1268 = vtanh.pop %v1267
    %1270 = vrot.lane.b32.xlu0 %v1268, 64
    %v1271 = vpop.permute.xlu0 %1270
    %v1273 = vmul.f32 %v1253, %v1271
    %v1275 = vrot.slane %v1273, 4
    %1276 = vrot.lane.b32.xlu0 %v1275, 32
    %v1277 = vpop.permute.xlu0 %1276
    %v1278 = vsel %vm164, %v1277, 0
    %1280 = vmatprep.subr.mxu0 0.0
    %1281 = vmatpush1.msra.mxu0 %v141
    %1282 = vmatprep.subr.mxu0 0.0
    %1283 = vmatpush1.msra.mxu0 %v142
    %1284 = vmatprep.subr.mxu0 0.0
    %1285 = vmatpush1.msra.mxu0 %v143
    %1286 = vmatprep.subr.mxu0 0.0
    %1287 = vmatpush1.msra.mxu0 %v144
    %1288 = vmatprep.subr.mxu0 0.0
    %1289 = vmatpush1.msra.mxu0 0.0
    %1290 = vmatprep.subr.mxu0 0.0
    %1291 = vmatpush1.msra.mxu0 0.0
    %1292 = vmatprep.subr.mxu0 0.0
    %1293 = vmatpush1.msra.mxu0 0.0
    %1294 = vmatprep.subr.mxu0 0.0
    %1295 = vmatpush1.msra.mxu0 0.0
    %1296 = vmatprep.subr.mxu0 0.0
    %1297 = vmatpush1.msra.mxu0 0.0
    %1298 = vmatprep.subr.mxu0 0.0
    %1299 = vmatpush1.msra.mxu0 0.0
    %1300 = vmatprep.subr.mxu0 0.0
    %1301 = vmatpush1.msra.mxu0 0.0
    %1302 = vmatprep.subr.mxu0 0.0
    %1303 = vmatpush1.msra.mxu0 0.0
    %1304 = vmatprep.subr.mxu0 0.0
    %1305 = vmatpush1.msra.mxu0 0.0
    %1306 = vmatprep.subr.mxu0 0.0
    %1307 = vmatpush1.msra.mxu0 0.0
    %1308 = vmatprep.subr.mxu0 0.0
    %1309 = vmatpush1.msra.mxu0 0.0
    %1310 = vmatprep.subr.mxu0 0.0
    %1311 = vmatpush1.msra.mxu0 0.0
    %1312 = vmatprep.subr.mxu0 0.0
    %1313 = vmatpush1.msra.mxu0 0.0
    %1314 = vmatprep.subr.mxu0 0.0
    %1315 = vmatpush1.msra.mxu0 0.0
    %1316 = vmatprep.subr.mxu0 0.0
    %1317 = vmatpush1.msra.mxu0 0.0
    %1318 = vmatprep.subr.mxu0 0.0
    %1319 = vmatpush1.msra.mxu0 0.0
    %1320 = vmatprep.subr.mxu0 0.0
    %1321 = vmatpush1.msra.mxu0 0.0
    %1322 = vmatprep.subr.mxu0 0.0
    %1323 = vmatpush1.msra.mxu0 0.0
    %1324 = vmatprep.subr.mxu0 0.0
    %1325 = vmatpush1.msra.mxu0 0.0
    %1326 = vmatprep.subr.mxu0 0.0
    %1327 = vmatpush1.msra.mxu0 0.0
    %1328 = vmatprep.subr.mxu0 0.0
    %1329 = vmatpush1.msra.mxu0 0.0
    %1330 = vmatprep.subr.mxu0 0.0
    %1331 = vmatpush1.msra.mxu0 0.0
    %1332 = vmatprep.subr.mxu0 0.0
    %1333 = vmatpush1.msra.mxu0 0.0
    %1334 = vmatprep.subr.mxu0 0.0
    %1335 = vmatpush1.msra.mxu0 0.0
    %1336 = vmatprep.subr.mxu0 0.0
    %1337 = vmatpush1.msra.mxu0 0.0
    %1338 = vmatprep.subr.mxu0 0.0
    %1339 = vmatpush1.msra.mxu0 0.0
    %1340 = vmatprep.subr.mxu0 0.0
    %1341 = vmatpush1.msra.mxu0 0.0
    %1342 = vmatprep.subr.mxu0 0.0
    %1343 = vmatpush1.msra.mxu0 0.0
    %1344 = vmatprep.mubr.f32.mxu0 0.0
    %1345 = vmatmul.mubr.f32.gmra.mrb[0].mxu0 %v1278
    %v1346 = vpop.f32.mrb[0].mxu0
    %v1347 = vadd.f32 0.0, %v1346
    %v1348 = vpop.f32.mrb[0].mxu0
    %1349 = vdwg.mxu0
    %v1351 = vrot.slane %v1347, 2
    %v1353 = vadd.f32 %v238, %v1351
    %v1354 = vxor.u32 %v1353, 2147483648
    %v1355 = vmul.f32 %v1354, 1.442695
    %v1356 = vpow.pop %v1355
    %v1357 = vadd.f32 %v1356, 1.0
    %v1358 = vrcp.pop %v1357
    %v1359 = vmul.f32 1.0, %v1358
    %1360 = vmatprep.subr.mxu0 0.0
    %1361 = vmatpush1.msra.mxu0 %v145
    %1362 = vmatprep.subr.mxu0 0.0
    %1363 = vmatpush1.msra.mxu0 %v146
    %1364 = vmatprep.subr.mxu0 0.0
    %1365 = vmatpush1.msra.mxu0 %v147
    %1366 = vmatprep.subr.mxu0 0.0
    %1367 = vmatpush1.msra.mxu0 %v148
    %1368 = vmatprep.subr.mxu0 0.0
    %1369 = vmatpush1.msra.mxu0 0.0
    %1370 = vmatprep.subr.mxu0 0.0
    %1371 = vmatpush1.msra.mxu0 0.0
    %1372 = vmatprep.subr.mxu0 0.0
    %1373 = vmatpush1.msra.mxu0 0.0
    %1374 = vmatprep.subr.mxu0 0.0
    %1375 = vmatpush1.msra.mxu0 0.0
    %1376 = vmatprep.subr.mxu0 0.0
    %1377 = vmatpush1.msra.mxu0 0.0
    %1378 = vmatprep.subr.mxu0 0.0
    %1379 = vmatpush1.msra.mxu0 0.0
    %1380 = vmatprep.subr.mxu0 0.0
    %1381 = vmatpush1.msra.mxu0 0.0
    %1382 = vmatprep.subr.mxu0 0.0
    %1383 = vmatpush1.msra.mxu0 0.0
    %1384 = vmatprep.subr.mxu0 0.0
    %1385 = vmatpush1.msra.mxu0 0.0
    %1386 = vmatprep.subr.mxu0 0.0
    %1387 = vmatpush1.msra.mxu0 0.0
    %1388 = vmatprep.subr.mxu0 0.0
    %1389 = vmatpush1.msra.mxu0 0.0
    %1390 = vmatprep.subr.mxu0 0.0
    %1391 = vmatpush1.msra.mxu0 0.0
    %1392 = vmatprep.subr.mxu0 0.0
    %1393 = vmatpush1.msra.mxu0 0.0
    %1394 = vmatprep.subr.mxu0 0.0
    %1395 = vmatpush1.msra.mxu0 0.0
    %1396 = vmatprep.subr.mxu0 0.0
    %1397 = vmatpush1.msra.mxu0 0.0
    %1398 = vmatprep.subr.mxu0 0.0
    %1399 = vmatpush1.msra.mxu0 0.0
    %1400 = vmatprep.subr.mxu0 0.0
    %1401 = vmatpush1.msra.mxu0 0.0
    %1402 = vmatprep.subr.mxu0 0.0
    %1403 = vmatpush1.msra.mxu0 0.0
    %1404 = vmatprep.subr.mxu0 0.0
    %1405 = vmatpush1.msra.mxu0 0.0
    %1406 = vmatprep.subr.mxu0 0.0
    %1407 = vmatpush1.msra.mxu0 0.0
    %1408 = vmatprep.subr.mxu0 0.0
    %1409 = vmatpush1.msra.mxu0 0.0
    %1410 = vmatprep.subr.mxu0 0.0
    %1411 = vmatpush1.msra.mxu0 0.0
    %1412 = vmatprep.subr.mxu0 0.0
    %1413 = vmatpush1.msra.mxu0 0.0
    %1414 = vmatprep.subr.mxu0 0.0
    %1415 = vmatpush1.msra.mxu0 0.0
    %1416 = vmatprep.subr.mxu0 0.0
    %1417 = vmatpush1.msra.mxu0 0.0
    %1418 = vmatprep.subr.mxu0 0.0
    %1419 = vmatpush1.msra.mxu0 0.0
    %1420 = vmatprep.subr.mxu0 0.0
    %1421 = vmatpush1.msra.mxu0 0.0
    %1422 = vmatprep.subr.mxu0 0.0
    %1423 = vmatpush1.msra.mxu0 0.0
    %1424 = vmatprep.mubr.f32.mxu0 0.0
    %1425 = vmatmul.mubr.f32.gmra.mrb[0].mxu0 %v1278
    %v1426 = vpop.f32.mrb[0].mxu0
    %v1427 = vadd.f32 0.0, %v1426
    %v1428 = vpop.f32.mrb[0].mxu0
    %1429 = vdwg.mxu0
    %v1431 = vrot.slane %v1427, 2
    %1432 = vrot.lane.b32.xlu0 %v1431, 32
    %v1433 = vpop.permute.xlu0 %1432
    %v1435 = vadd.f32 %v238, %v1433
    %v1436 = vxor.u32 %v1435, 2147483648
    %v1437 = vmul.f32 %v1436, 1.442695
    %v1438 = vpow.pop %v1437
    %v1439 = vadd.f32 %v1438, 1.0
    %v1440 = vrcp.pop %v1439
    %v1441 = vmul.f32 1.0, %v1440
    %1442 = vmatprep.subr.mxu0 0.0
    %1443 = vmatpush1.msra.mxu0 %v149
    %1444 = vmatprep.subr.mxu0 0.0
    %1445 = vmatpush1.msra.mxu0 %v150
    %1446 = vmatprep.subr.mxu0 0.0
    %1447 = vmatpush1.msra.mxu0 %v151
    %1448 = vmatprep.subr.mxu0 0.0
    %1449 = vmatpush1.msra.mxu0 %v152
    %1450 = vmatprep.subr.mxu0 0.0
    %1451 = vmatpush1.msra.mxu0 0.0
    %1452 = vmatprep.subr.mxu0 0.0
    %1453 = vmatpush1.msra.mxu0 0.0
    %1454 = vmatprep.subr.mxu0 0.0
    %1455 = vmatpush1.msra.mxu0 0.0
    %1456 = vmatprep.subr.mxu0 0.0
    %1457 = vmatpush1.msra.mxu0 0.0
    %1458 = vmatprep.subr.mxu0 0.0
    %1459 = vmatpush1.msra.mxu0 0.0
    %1460 = vmatprep.subr.mxu0 0.0
    %1461 = vmatpush1.msra.mxu0 0.0
    %1462 = vmatprep.subr.mxu0 0.0
    %1463 = vmatpush1.msra.mxu0 0.0
    %1464 = vmatprep.subr.mxu0 0.0
    %1465 = vmatpush1.msra.mxu0 0.0
    %1466 = vmatprep.subr.mxu0 0.0
    %1467 = vmatpush1.msra.mxu0 0.0
    %1468 = vmatprep.subr.mxu0 0.0
    %1469 = vmatpush1.msra.mxu0 0.0
    %1470 = vmatprep.subr.mxu0 0.0
    %1471 = vmatpush1.msra.mxu0 0.0
    %1472 = vmatprep.subr.mxu0 0.0
    %1473 = vmatpush1.msra.mxu0 0.0
    %1474 = vmatprep.subr.mxu0 0.0
    %1475 = vmatpush1.msra.mxu0 0.0
    %1476 = vmatprep.subr.mxu0 0.0
    %1477 = vmatpush1.msra.mxu0 0.0
    %1478 = vmatprep.subr.mxu0 0.0
    %1479 = vmatpush1.msra.mxu0 0.0
    %1480 = vmatprep.subr.mxu0 0.0
    %1481 = vmatpush1.msra.mxu0 0.0
    %1482 = vmatprep.subr.mxu0 0.0
    %1483 = vmatpush1.msra.mxu0 0.0
    %1484 = vmatprep.subr.mxu0 0.0
    %1485 = vmatpush1.msra.mxu0 0.0
    %1486 = vmatprep.subr.mxu0 0.0
    %1487 = vmatpush1.msra.mxu0 0.0
    %1488 = vmatprep.subr.mxu0 0.0
    %1489 = vmatpush1.msra.mxu0 0.0
    %1490 = vmatprep.subr.mxu0 0.0
    %1491 = vmatpush1.msra.mxu0 0.0
    %1492 = vmatprep.subr.mxu0 0.0
    %1493 = vmatpush1.msra.mxu0 0.0
    %1494 = vmatprep.subr.mxu0 0.0
    %1495 = vmatpush1.msra.mxu0 0.0
    %1496 = vmatprep.subr.mxu0 0.0
    %1497 = vmatpush1.msra.mxu0 0.0
    %1498 = vmatprep.subr.mxu0 0.0
    %1499 = vmatpush1.msra.mxu0 0.0
    %1500 = vmatprep.subr.mxu0 0.0
    %1501 = vmatpush1.msra.mxu0 0.0
    %1502 = vmatprep.subr.mxu0 0.0
    %1503 = vmatpush1.msra.mxu0 0.0
    %1504 = vmatprep.subr.mxu0 0.0
    %1505 = vmatpush1.msra.mxu0 0.0
    %1506 = vmatprep.mubr.f32.mxu0 0.0
    %1507 = vmatmul.mubr.f32.gmra.mrb[0].mxu0 %v1278
    %v1508 = vpop.f32.mrb[0].mxu0
    %v1509 = vadd.f32 0.0, %v1508
    %v1510 = vpop.f32.mrb[0].mxu0
    %1511 = vdwg.mxu0
    %v1513 = vrot.slane %v1509, 2
    %1514 = vrot.lane.b32.xlu0 %v1513, 64
    %v1515 = vpop.permute.xlu0 %1514
    %v1517 = vadd.f32 %v238, %v1515
    %v1518 = vtanh.pop %v1517
    %1519 = vmatprep.subr.mxu0 0.0
    %1520 = vmatpush1.msra.mxu0 %v153
    %1521 = vmatprep.subr.mxu0 0.0
    %1522 = vmatpush1.msra.mxu0 %v154
    %1523 = vmatprep.subr.mxu0 0.0
    %1524 = vmatpush1.msra.mxu0 %v155
    %1525 = vmatprep.subr.mxu0 0.0
    %1526 = vmatpush1.msra.mxu0 %v156
    %1527 = vmatprep.subr.mxu0 0.0
    %1528 = vmatpush1.msra.mxu0 0.0
    %1529 = vmatprep.subr.mxu0 0.0
    %1530 = vmatpush1.msra.mxu0 0.0
    %1531 = vmatprep.subr.mxu0 0.0
    %1532 = vmatpush1.msra.mxu0 0.0
    %1533 = vmatprep.subr.mxu0 0.0
    %1534 = vmatpush1.msra.mxu0 0.0
    %1535 = vmatprep.subr.mxu0 0.0
    %1536 = vmatpush1.msra.mxu0 0.0
    %1537 = vmatprep.subr.mxu0 0.0
    %1538 = vmatpush1.msra.mxu0 0.0
    %1539 = vmatprep.subr.mxu0 0.0
    %1540 = vmatpush1.msra.mxu0 0.0
    %1541 = vmatprep.subr.mxu0 0.0
    %1542 = vmatpush1.msra.mxu0 0.0
    %1543 = vmatprep.subr.mxu0 0.0
    %1544 = vmatpush1.msra.mxu0 0.0
    %1545 = vmatprep.subr.mxu0 0.0
    %1546 = vmatpush1.msra.mxu0 0.0
    %1547 = vmatprep.subr.mxu0 0.0
    %1548 = vmatpush1.msra.mxu0 0.0
    %1549 = vmatprep.subr.mxu0 0.0
    %1550 = vmatpush1.msra.mxu0 0.0
    %1551 = vmatprep.subr.mxu0 0.0
    %1552 = vmatpush1.msra.mxu0 0.0
    %1553 = vmatprep.subr.mxu0 0.0
    %1554 = vmatpush1.msra.mxu0 0.0
    %1555 = vmatprep.subr.mxu0 0.0
    %1556 = vmatpush1.msra.mxu0 0.0
    %1557 = vmatprep.subr.mxu0 0.0
    %1558 = vmatpush1.msra.mxu0 0.0
    %1559 = vmatprep.subr.mxu0 0.0
    %1560 = vmatpush1.msra.mxu0 0.0
    %1561 = vmatprep.subr.mxu0 0.0
    %1562 = vmatpush1.msra.mxu0 0.0
    %1563 = vmatprep.subr.mxu0 0.0
    %1564 = vmatpush1.msra.mxu0 0.0
    %1565 = vmatprep.subr.mxu0 0.0
    %1566 = vmatpush1.msra.mxu0 0.0
    %1567 = vmatprep.subr.mxu0 0.0
    %1568 = vmatpush1.msra.mxu0 0.0
    %1569 = vmatprep.subr.mxu0 0.0
    %1570 = vmatpush1.msra.mxu0 0.0
    %1571 = vmatprep.subr.mxu0 0.0
    %1572 = vmatpush1.msra.mxu0 0.0
    %1573 = vmatprep.subr.mxu0 0.0
    %1574 = vmatpush1.msra.mxu0 0.0
    %1575 = vmatprep.subr.mxu0 0.0
    %1576 = vmatpush1.msra.mxu0 0.0
    %1577 = vmatprep.subr.mxu0 0.0
    %1578 = vmatpush1.msra.mxu0 0.0
    %1579 = vmatprep.subr.mxu0 0.0
    %1580 = vmatpush1.msra.mxu0 0.0
    %1581 = vmatprep.subr.mxu0 0.0
    %1582 = vmatpush1.msra.mxu0 0.0
    %1583 = vmatprep.mubr.f32.mxu0 0.0
    %1584 = vmatmul.mubr.f32.gmra.mrb[0].mxu0 %v1278
    %v1585 = vpop.f32.mrb[0].mxu0
    %v1586 = vadd.f32 0.0, %v1585
    %v1587 = vpop.f32.mrb[0].mxu0
    %1588 = vdwg.mxu0
    %v1590 = vrot.slane %v1586, 2
    %1591 = vrot.lane.b32.xlu0 %v1590, 96
    %v1592 = vpop.permute.xlu0 %1591
    %v1594 = vadd.f32 %v238, %v1592
    %v1595 = vxor.u32 %v1594, 2147483648
    %v1596 = vmul.f32 %v1595, 1.442695
    %v1597 = vpow.pop %v1596
    %v1598 = vadd.f32 %v1597, 1.0
    %v1599 = vrcp.pop %v1598
    %v1600 = vmul.f32 1.0, %v1599
    %v1602 = vrot.slane %v1267, 6
    %v1604 = vmul.f32 %v1441, %v1602
    %1606 = vrot.lane.b32.xlu0 %v1518, 64
    %v1607 = vpop.permute.xlu0 %1606
    %v1609 = vmul.f32 %v1359, %v1607
    %1611 = vrot.lane.b32.xlu0 %v1609, 32
    %v1612 = vpop.permute.xlu0 %1611
    %v1614 = vadd.f32 %v1604, %v1612
    %v1615 = vtanh.pop %v1614
    %1617 = vrot.lane.b32.xlu0 %v1615, 64
    %v1618 = vpop.permute.xlu0 %1617
    %v1620 = vmul.f32 %v1600, %v1618
    %v1622 = vrot.slane %v1620, 6
    %1623 = vrot.lane.b32.xlu0 %v1622, 32
    %v1624 = vpop.permute.xlu0 %1623
    %v1625 = vsel %vm164, %v1624, 0
    %1627 = vmatprep.subr.mxu0 0.0
    %1628 = vmatpush1.msra.mxu0 %v141
    %1629 = vmatprep.subr.mxu0 0.0
    %1630 = vmatpush1.msra.mxu0 %v142
    %1631 = vmatprep.subr.mxu0 0.0
    %1632 = vmatpush1.msra.mxu0 %v143
    %1633 = vmatprep.subr.mxu0 0.0
    %1634 = vmatpush1.msra.mxu0 %v144
    %1635 = vmatprep.subr.mxu0 0.0
    %1636 = vmatpush1.msra.mxu0 0.0
    %1637 = vmatprep.subr.mxu0 0.0
    %1638 = vmatpush1.msra.mxu0 0.0
    %1639 = vmatprep.subr.mxu0 0.0
    %1640 = vmatpush1.msra.mxu0 0.0
    %1641 = vmatprep.subr.mxu0 0.0
    %1642 = vmatpush1.msra.mxu0 0.0
    %1643 = vmatprep.subr.mxu0 0.0
    %1644 = vmatpush1.msra.mxu0 0.0
    %1645 = vmatprep.subr.mxu0 0.0
    %1646 = vmatpush1.msra.mxu0 0.0
    %1647 = vmatprep.subr.mxu0 0.0
    %1648 = vmatpush1.msra.mxu0 0.0
    %1649 = vmatprep.subr.mxu0 0.0
    %1650 = vmatpush1.msra.mxu0 0.0
    %1651 = vmatprep.subr.mxu0 0.0
    %1652 = vmatpush1.msra.mxu0 0.0
    %1653 = vmatprep.subr.mxu0 0.0
    %1654 = vmatpush1.msra.mxu0 0.0
    %1655 = vmatprep.subr.mxu0 0.0
    %1656 = vmatpush1.msra.mxu0 0.0
    %1657 = vmatprep.subr.mxu0 0.0
    %1658 = vmatpush1.msra.mxu0 0.0
    %1659 = vmatprep.subr.mxu0 0.0
    %1660 = vmatpush1.msra.mxu0 0.0
    %1661 = vmatprep.subr.mxu0 0.0
    %1662 = vmatpush1.msra.mxu0 0.0
    %1663 = vmatprep.subr.mxu0 0.0
    %1664 = vmatpush1.msra.mxu0 0.0
    %1665 = vmatprep.subr.mxu0 0.0
    %1666 = vmatpush1.msra.mxu0 0.0
    %1667 = vmatprep.subr.mxu0 0.0
    %1668 = vmatpush1.msra.mxu0 0.0
    %1669 = vmatprep.subr.mxu0 0.0
    %1670 = vmatpush1.msra.mxu0 0.0
    %1671 = vmatprep.subr.mxu0 0.0
    %1672 = vmatpush1.msra.mxu0 0.0
    %1673 = vmatprep.subr.mxu0 0.0
    %1674 = vmatpush1.msra.mxu0 0.0
    %1675 = vmatprep.subr.mxu0 0.0
    %1676 = vmatpush1.msra.mxu0 0.0
    %1677 = vmatprep.subr.mxu0 0.0
    %1678 = vmatpush1.msra.mxu0 0.0
    %1679 = vmatprep.subr.mxu0 0.0
    %1680 = vmatpush1.msra.mxu0 0.0
    %1681 = vmatprep.subr.mxu0 0.0
    %1682 = vmatpush1.msra.mxu0 0.0
    %1683 = vmatprep.subr.mxu0 0.0
    %1684 = vmatpush1.msra.mxu0 0.0
    %1685 = vmatprep.subr.mxu0 0.0
    %1686 = vmatpush1.msra.mxu0 0.0
    %1687 = vmatprep.subr.mxu0 0.0
    %1688 = vmatpush1.msra.mxu0 0.0
    %1689 = vmatprep.subr.mxu0 0.0
    %1690 = vmatpush1.msra.mxu0 0.0
    %1691 = vmatprep.mubr.f32.mxu0 0.0
    %1692 = vmatmul.mubr.f32.gmra.mrb[0].mxu0 %v1625
    %v1693 = vpop.f32.mrb[0].mxu0
    %v1694 = vadd.f32 0.0, %v1693
    %v1695 = vpop.f32.mrb[0].mxu0
    %1696 = vdwg.mxu0
    %v1697 = vadd.f32 %v243, %v1694
    %v1698 = vxor.u32 %v1697, 2147483648
    %v1699 = vmul.f32 %v1698, 1.442695
    %v1700 = vpow.pop %v1699
    %v1701 = vadd.f32 %v1700, 1.0
    %v1702 = vrcp.pop %v1701
    %v1703 = vmul.f32 1.0, %v1702
    %1704 = vmatprep.subr.mxu0 0.0
    %1705 = vmatpush1.msra.mxu0 %v145
    %1706 = vmatprep.subr.mxu0 0.0
    %1707 = vmatpush1.msra.mxu0 %v146
    %1708 = vmatprep.subr.mxu0 0.0
    %1709 = vmatpush1.msra.mxu0 %v147
    %1710 = vmatprep.subr.mxu0 0.0
    %1711 = vmatpush1.msra.mxu0 %v148
    %1712 = vmatprep.subr.mxu0 0.0
    %1713 = vmatpush1.msra.mxu0 0.0
    %1714 = vmatprep.subr.mxu0 0.0
    %1715 = vmatpush1.msra.mxu0 0.0
    %1716 = vmatprep.subr.mxu0 0.0
    %1717 = vmatpush1.msra.mxu0 0.0
    %1718 = vmatprep.subr.mxu0 0.0
    %1719 = vmatpush1.msra.mxu0 0.0
    %1720 = vmatprep.subr.mxu0 0.0
    %1721 = vmatpush1.msra.mxu0 0.0
    %1722 = vmatprep.subr.mxu0 0.0
    %1723 = vmatpush1.msra.mxu0 0.0
    %1724 = vmatprep.subr.mxu0 0.0
    %1725 = vmatpush1.msra.mxu0 0.0
    %1726 = vmatprep.subr.mxu0 0.0
    %1727 = vmatpush1.msra.mxu0 0.0
    %1728 = vmatprep.subr.mxu0 0.0
    %1729 = vmatpush1.msra.mxu0 0.0
    %1730 = vmatprep.subr.mxu0 0.0
    %1731 = vmatpush1.msra.mxu0 0.0
    %1732 = vmatprep.subr.mxu0 0.0
    %1733 = vmatpush1.msra.mxu0 0.0
    %1734 = vmatprep.subr.mxu0 0.0
    %1735 = vmatpush1.msra.mxu0 0.0
    %1736 = vmatprep.subr.mxu0 0.0
    %1737 = vmatpush1.msra.mxu0 0.0
    %1738 = vmatprep.subr.mxu0 0.0
    %1739 = vmatpush1.msra.mxu0 0.0
    %1740 = vmatprep.subr.mxu0 0.0
    %1741 = vmatpush1.msra.mxu0 0.0
    %1742 = vmatprep.subr.mxu0 0.0
    %1743 = vmatpush1.msra.mxu0 0.0
    %1744 = vmatprep.subr.mxu0 0.0
    %1745 = vmatpush1.msra.mxu0 0.0
    %1746 = vmatprep.subr.mxu0 0.0
    %1747 = vmatpush1.msra.mxu0 0.0
    %1748 = vmatprep.subr.mxu0 0.0
    %1749 = vmatpush1.msra.mxu0 0.0
    %1750 = vmatprep.subr.mxu0 0.0
    %1751 = vmatpush1.msra.mxu0 0.0
    %1752 = vmatprep.subr.mxu0 0.0
    %1753 = vmatpush1.msra.mxu0 0.0
    %1754 = vmatprep.subr.mxu0 0.0
    %1755 = vmatpush1.msra.mxu0 0.0
    %1756 = vmatprep.subr.mxu0 0.0
    %1757 = vmatpush1.msra.mxu0 0.0
    %1758 = vmatprep.subr.mxu0 0.0
    %1759 = vmatpush1.msra.mxu0 0.0
    %1760 = vmatprep.subr.mxu0 0.0
    %1761 = vmatpush1.msra.mxu0 0.0
    %1762 = vmatprep.subr.mxu0 0.0
    %1763 = vmatpush1.msra.mxu0 0.0
    %1764 = vmatprep.subr.mxu0 0.0
    %1765 = vmatpush1.msra.mxu0 0.0
    %1766 = vmatprep.subr.mxu0 0.0
    %1767 = vmatpush1.msra.mxu0 0.0
    %1768 = vmatprep.mubr.f32.mxu0 0.0
    %1769 = vmatmul.mubr.f32.gmra.mrb[0].mxu0 %v1625
    %v1770 = vpop.f32.mrb[0].mxu0
    %v1771 = vadd.f32 0.0, %v1770
    %v1772 = vpop.f32.mrb[0].mxu0
    %1773 = vdwg.mxu0
    %1775 = vrot.lane.b32.xlu0 %v1771, 32
    %v1776 = vpop.permute.xlu0 %1775
    %v1778 = vadd.f32 %v243, %v1776
    %v1779 = vxor.u32 %v1778, 2147483648
    %v1780 = vmul.f32 %v1779, 1.442695
    %v1781 = vpow.pop %v1780
    %v1782 = vadd.f32 %v1781, 1.0
    %v1783 = vrcp.pop %v1782
    %v1784 = vmul.f32 1.0, %v1783
    %1785 = vmatprep.subr.mxu0 0.0
    %1786 = vmatpush1.msra.mxu0 %v149
    %1787 = vmatprep.subr.mxu0 0.0
    %1788 = vmatpush1.msra.mxu0 %v150
    %1789 = vmatprep.subr.mxu0 0.0
    %1790 = vmatpush1.msra.mxu0 %v151
    %1791 = vmatprep.subr.mxu0 0.0
    %1792 = vmatpush1.msra.mxu0 %v152
    %1793 = vmatprep.subr.mxu0 0.0
    %1794 = vmatpush1.msra.mxu0 0.0
    %1795 = vmatprep.subr.mxu0 0.0
    %1796 = vmatpush1.msra.mxu0 0.0
    %1797 = vmatprep.subr.mxu0 0.0
    %1798 = vmatpush1.msra.mxu0 0.0
    %1799 = vmatprep.subr.mxu0 0.0
    %1800 = vmatpush1.msra.mxu0 0.0
    %1801 = vmatprep.subr.mxu0 0.0
    %1802 = vmatpush1.msra.mxu0 0.0
    %1803 = vmatprep.subr.mxu0 0.0
    %1804 = vmatpush1.msra.mxu0 0.0
    %1805 = vmatprep.subr.mxu0 0.0
    %1806 = vmatpush1.msra.mxu0 0.0
    %1807 = vmatprep.subr.mxu0 0.0
    %1808 = vmatpush1.msra.mxu0 0.0
    %1809 = vmatprep.subr.mxu0 0.0
    %1810 = vmatpush1.msra.mxu0 0.0
    %1811 = vmatprep.subr.mxu0 0.0
    %1812 = vmatpush1.msra.mxu0 0.0
    %1813 = vmatprep.subr.mxu0 0.0
    %1814 = vmatpush1.msra.mxu0 0.0
    %1815 = vmatprep.subr.mxu0 0.0
    %1816 = vmatpush1.msra.mxu0 0.0
    %1817 = vmatprep.subr.mxu0 0.0
    %1818 = vmatpush1.msra.mxu0 0.0
    %1819 = vmatprep.subr.mxu0 0.0
    %1820 = vmatpush1.msra.mxu0 0.0
    %1821 = vmatprep.subr.mxu0 0.0
    %1822 = vmatpush1.msra.mxu0 0.0
    %1823 = vmatprep.subr.mxu0 0.0
    %1824 = vmatpush1.msra.mxu0 0.0
    %1825 = vmatprep.subr.mxu0 0.0
    %1826 = vmatpush1.msra.mxu0 0.0
    %1827 = vmatprep.subr.mxu0 0.0
    %1828 = vmatpush1.msra.mxu0 0.0
    %1829 = vmatprep.subr.mxu0 0.0
    %1830 = vmatpush1.msra.mxu0 0.0
    %1831 = vmatprep.subr.mxu0 0.0
    %1832 = vmatpush1.msra.mxu0 0.0
    %1833 = vmatprep.subr.mxu0 0.0
    %1834 = vmatpush1.msra.mxu0 0.0
    %1835 = vmatprep.subr.mxu0 0.0
    %1836 = vmatpush1.msra.mxu0 0.0
    %1837 = vmatprep.subr.mxu0 0.0
    %1838 = vmatpush1.msra.mxu0 0.0
    %1839 = vmatprep.subr.mxu0 0.0
    %1840 = vmatpush1.msra.mxu0 0.0
    %1841 = vmatprep.subr.mxu0 0.0
    %1842 = vmatpush1.msra.mxu0 0.0
    %1843 = vmatprep.subr.mxu0 0.0
    %1844 = vmatpush1.msra.mxu0 0.0
    %1845 = vmatprep.subr.mxu0 0.0
    %1846 = vmatpush1.msra.mxu0 0.0
    %1847 = vmatprep.subr.mxu0 0.0
    %1848 = vmatpush1.msra.mxu0 0.0
    %1849 = vmatprep.mubr.f32.mxu0 0.0
    %1850 = vmatmul.mubr.f32.gmra.mrb[0].mxu0 %v1625
    %v1851 = vpop.f32.mrb[0].mxu0
    %v1852 = vadd.f32 0.0, %v1851
    %v1853 = vpop.f32.mrb[0].mxu0
    %1854 = vdwg.mxu0
    %1856 = vrot.lane.b32.xlu0 %v1852, 64
    %v1857 = vpop.permute.xlu0 %1856
    %v1859 = vadd.f32 %v243, %v1857
    %v1860 = vtanh.pop %v1859
    %1861 = vmatprep.subr.mxu0 0.0
    %1862 = vmatpush1.msra.mxu0 %v153
    %1863 = vmatprep.subr.mxu0 0.0
    %1864 = vmatpush1.msra.mxu0 %v154
    %1865 = vmatprep.subr.mxu0 0.0
    %1866 = vmatpush1.msra.mxu0 %v155
    %1867 = vmatprep.subr.mxu0 0.0
    %1868 = vmatpush1.msra.mxu0 %v156
    %1869 = vmatprep.subr.mxu0 0.0
    %1870 = vmatpush1.msra.mxu0 0.0
    %1871 = vmatprep.subr.mxu0 0.0
    %1872 = vmatpush1.msra.mxu0 0.0
    %1873 = vmatprep.subr.mxu0 0.0
    %1874 = vmatpush1.msra.mxu0 0.0
    %1875 = vmatprep.subr.mxu0 0.0
    %1876 = vmatpush1.msra.mxu0 0.0
    %1877 = vmatprep.subr.mxu0 0.0
    %1878 = vmatpush1.msra.mxu0 0.0
    %1879 = vmatprep.subr.mxu0 0.0
    %1880 = vmatpush1.msra.mxu0 0.0
    %1881 = vmatprep.subr.mxu0 0.0
    %1882 = vmatpush1.msra.mxu0 0.0
    %1883 = vmatprep.subr.mxu0 0.0
    %1884 = vmatpush1.msra.mxu0 0.0
    %1885 = vmatprep.subr.mxu0 0.0
    %1886 = vmatpush1.msra.mxu0 0.0
    %1887 = vmatprep.subr.mxu0 0.0
    %1888 = vmatpush1.msra.mxu0 0.0
    %1889 = vmatprep.subr.mxu0 0.0
    %1890 = vmatpush1.msra.mxu0 0.0
    %1891 = vmatprep.subr.mxu0 0.0
    %1892 = vmatpush1.msra.mxu0 0.0
    %1893 = vmatprep.subr.mxu0 0.0
    %1894 = vmatpush1.msra.mxu0 0.0
    %1895 = vmatprep.subr.mxu0 0.0
    %1896 = vmatpush1.msra.mxu0 0.0
    %1897 = vmatprep.subr.mxu0 0.0
    %1898 = vmatpush1.msra.mxu0 0.0
    %1899 = vmatprep.subr.mxu0 0.0
    %1900 = vmatpush1.msra.mxu0 0.0
    %1901 = vmatprep.subr.mxu0 0.0
    %1902 = vmatpush1.msra.mxu0 0.0
    %1903 = vmatprep.subr.mxu0 0.0
    %1904 = vmatpush1.msra.mxu0 0.0
    %1905 = vmatprep.subr.mxu0 0.0
    %1906 = vmatpush1.msra.mxu0 0.0
    %1907 = vmatprep.subr.mxu0 0.0
    %1908 = vmatpush1.msra.mxu0 0.0
    %1909 = vmatprep.subr.mxu0 0.0
    %1910 = vmatpush1.msra.mxu0 0.0
    %1911 = vmatprep.subr.mxu0 0.0
    %1912 = vmatpush1.msra.mxu0 0.0
    %1913 = vmatprep.subr.mxu0 0.0
    %1914 = vmatpush1.msra.mxu0 0.0
    %1915 = vmatprep.subr.mxu0 0.0
    %1916 = vmatpush1.msra.mxu0 0.0
    %1917 = vmatprep.subr.mxu0 0.0
    %1918 = vmatpush1.msra.mxu0 0.0
    %1919 = vmatprep.subr.mxu0 0.0
    %1920 = vmatpush1.msra.mxu0 0.0
    %1921 = vmatprep.subr.mxu0 0.0
    %1922 = vmatpush1.msra.mxu0 0.0
    %1923 = vmatprep.subr.mxu0 0.0
    %1924 = vmatpush1.msra.mxu0 0.0
    %1925 = vmatprep.mubr.f32.mxu0 0.0
    %1926 = vmatmul.mubr.f32.gmra.mrb[0].mxu0 %v1625
    %v1927 = vpop.f32.mrb[0].mxu0
    %v1928 = vadd.f32 0.0, %v1927
    %v1929 = vpop.f32.mrb[0].mxu0
    %1930 = vdwg.mxu0
    %1932 = vrot.lane.b32.xlu0 %v1928, 96
    %v1933 = vpop.permute.xlu0 %1932
    %v1935 = vadd.f32 %v243, %v1933
    %v1936 = vxor.u32 %v1935, 2147483648
    %v1937 = vmul.f32 %v1936, 1.442695
    %v1938 = vpow.pop %v1937
    %v1939 = vadd.f32 %v1938, 1.0
    %v1940 = vrcp.pop %v1939
    %v1941 = vmul.f32 1.0, %v1940
    %v1943 = vrot.slane %v1614, 6
    %v1945 = vmul.f32 %v1784, %v1943
    %1947 = vrot.lane.b32.xlu0 %v1860, 64
    %v1948 = vpop.permute.xlu0 %1947
    %v1950 = vmul.f32 %v1703, %v1948
    %1952 = vrot.lane.b32.xlu0 %v1950, 32
    %v1953 = vpop.permute.xlu0 %1952
    %v1955 = vadd.f32 %v1945, %v1953
    %v1956 = vtanh.pop %v1955
    %1958 = vrot.lane.b32.xlu0 %v1956, 64
    %v1959 = vpop.permute.xlu0 %1958
    %v1961 = vmul.f32 %v1941, %v1959
    %1963 = vrot.lane.b32.xlu0 %v1961, 32
    %v1964 = vpop.permute.xlu0 %1963
    %v1965 = vsel %vm164, %v1964, 0
    %1967 = vmatprep.subr.mxu0 0.0
    %1968 = vmatpush1.msra.mxu0 %v141
    %1969 = vmatprep.subr.mxu0 0.0
    %1970 = vmatpush1.msra.mxu0 %v142
    %1971 = vmatprep.subr.mxu0 0.0
    %1972 = vmatpush1.msra.mxu0 %v143
    %1973 = vmatprep.subr.mxu0 0.0
    %1974 = vmatpush1.msra.mxu0 %v144
    %1975 = vmatprep.subr.mxu0 0.0
    %1976 = vmatpush1.msra.mxu0 0.0
    %1977 = vmatprep.subr.mxu0 0.0
    %1978 = vmatpush1.msra.mxu0 0.0
    %1979 = vmatprep.subr.mxu0 0.0
    %1980 = vmatpush1.msra.mxu0 0.0
    %1981 = vmatprep.subr.mxu0 0.0
    %1982 = vmatpush1.msra.mxu0 0.0
    %1983 = vmatprep.subr.mxu0 0.0
    %1984 = vmatpush1.msra.mxu0 0.0
    %1985 = vmatprep.subr.mxu0 0.0
    %1986 = vmatpush1.msra.mxu0 0.0
    %1987 = vmatprep.subr.mxu0 0.0
    %1988 = vmatpush1.msra.mxu0 0.0
    %1989 = vmatprep.subr.mxu0 0.0
    %1990 = vmatpush1.msra.mxu0 0.0
    %1991 = vmatprep.subr.mxu0 0.0
    %1992 = vmatpush1.msra.mxu0 0.0
    %1993 = vmatprep.subr.mxu0 0.0
    %1994 = vmatpush1.msra.mxu0 0.0
    %1995 = vmatprep.subr.mxu0 0.0
    %1996 = vmatpush1.msra.mxu0 0.0
    %1997 = vmatprep.subr.mxu0 0.0
    %1998 = vmatpush1.msra.mxu0 0.0
    %1999 = vmatprep.subr.mxu0 0.0
    %2000 = vmatpush1.msra.mxu0 0.0
    %2001 = vmatprep.subr.mxu0 0.0
    %2002 = vmatpush1.msra.mxu0 0.0
    %2003 = vmatprep.subr.mxu0 0.0
    %2004 = vmatpush1.msra.mxu0 0.0
    %2005 = vmatprep.subr.mxu0 0.0
    %2006 = vmatpush1.msra.mxu0 0.0
    %2007 = vmatprep.subr.mxu0 0.0
    %2008 = vmatpush1.msra.mxu0 0.0
    %2009 = vmatprep.subr.mxu0 0.0
    %2010 = vmatpush1.msra.mxu0 0.0
    %2011 = vmatprep.subr.mxu0 0.0
    %2012 = vmatpush1.msra.mxu0 0.0
    %2013 = vmatprep.subr.mxu0 0.0
    %2014 = vmatpush1.msra.mxu0 0.0
    %2015 = vmatprep.subr.mxu0 0.0
    %2016 = vmatpush1.msra.mxu0 0.0
    %2017 = vmatprep.subr.mxu0 0.0
    %2018 = vmatpush1.msra.mxu0 0.0
    %2019 = vmatprep.subr.mxu0 0.0
    %2020 = vmatpush1.msra.mxu0 0.0
    %2021 = vmatprep.subr.mxu0 0.0
    %2022 = vmatpush1.msra.mxu0 0.0
    %2023 = vmatprep.subr.mxu0 0.0
    %2024 = vmatpush1.msra.mxu0 0.0
    %2025 = vmatprep.subr.mxu0 0.0
    %2026 = vmatpush1.msra.mxu0 0.0
    %2027 = vmatprep.subr.mxu0 0.0
    %2028 = vmatpush1.msra.mxu0 0.0
    %2029 = vmatprep.subr.mxu0 0.0
    %2030 = vmatpush1.msra.mxu0 0.0
    %2031 = vmatprep.mubr.f32.mxu0 0.0
    %2032 = vmatmul.mubr.f32.gmra.mrb[0].mxu0 %v1965
    %v2033 = vpop.f32.mrb[0].mxu0
    %v2034 = vadd.f32 0.0, %v2033
    %v2035 = vpop.f32.mrb[0].mxu0
    %2036 = vdwg.mxu0
    %v2038 = vrot.slane %v2034, 6
    %v2040 = vadd.f32 %v243, %v2038
    %v2041 = vxor.u32 %v2040, 2147483648
    %v2042 = vmul.f32 %v2041, 1.442695
    %v2043 = vpow.pop %v2042
    %v2044 = vadd.f32 %v2043, 1.0
    %v2045 = vrcp.pop %v2044
    %v2046 = vmul.f32 1.0, %v2045
    %2047 = vmatprep.subr.mxu0 0.0
    %2048 = vmatpush1.msra.mxu0 %v145
    %2049 = vmatprep.subr.mxu0 0.0
    %2050 = vmatpush1.msra.mxu0 %v146
    %2051 = vmatprep.subr.mxu0 0.0
    %2052 = vmatpush1.msra.mxu0 %v147
    %2053 = vmatprep.subr.mxu0 0.0
    %2054 = vmatpush1.msra.mxu0 %v148
    %2055 = vmatprep.subr.mxu0 0.0
    %2056 = vmatpush1.msra.mxu0 0.0
    %2057 = vmatprep.subr.mxu0 0.0
    %2058 = vmatpush1.msra.mxu0 0.0
    %2059 = vmatprep.subr.mxu0 0.0
    %2060 = vmatpush1.msra.mxu0 0.0
    %2061 = vmatprep.subr.mxu0 0.0
    %2062 = vmatpush1.msra.mxu0 0.0
    %2063 = vmatprep.subr.mxu0 0.0
    %2064 = vmatpush1.msra.mxu0 0.0
    %2065 = vmatprep.subr.mxu0 0.0
    %2066 = vmatpush1.msra.mxu0 0.0
    %2067 = vmatprep.subr.mxu0 0.0
    %2068 = vmatpush1.msra.mxu0 0.0
    %2069 = vmatprep.subr.mxu0 0.0
    %2070 = vmatpush1.msra.mxu0 0.0
    %2071 = vmatprep.subr.mxu0 0.0
    %2072 = vmatpush1.msra.mxu0 0.0
    %2073 = vmatprep.subr.mxu0 0.0
    %2074 = vmatpush1.msra.mxu0 0.0
    %2075 = vmatprep.subr.mxu0 0.0
    %2076 = vmatpush1.msra.mxu0 0.0
    %2077 = vmatprep.subr.mxu0 0.0
    %2078 = vmatpush1.msra.mxu0 0.0
    %2079 = vmatprep.subr.mxu0 0.0
    %2080 = vmatpush1.msra.mxu0 0.0
    %2081 = vmatprep.subr.mxu0 0.0
    %2082 = vmatpush1.msra.mxu0 0.0
    %2083 = vmatprep.subr.mxu0 0.0
    %2084 = vmatpush1.msra.mxu0 0.0
    %2085 = vmatprep.subr.mxu0 0.0
    %2086 = vmatpush1.msra.mxu0 0.0
    %2087 = vmatprep.subr.mxu0 0.0
    %2088 = vmatpush1.msra.mxu0 0.0
    %2089 = vmatprep.subr.mxu0 0.0
    %2090 = vmatpush1.msra.mxu0 0.0
    %2091 = vmatprep.subr.mxu0 0.0
    %2092 = vmatpush1.msra.mxu0 0.0
    %2093 = vmatprep.subr.mxu0 0.0
    %2094 = vmatpush1.msra.mxu0 0.0
    %2095 = vmatprep.subr.mxu0 0.0
    %2096 = vmatpush1.msra.mxu0 0.0
    %2097 = vmatprep.subr.mxu0 0.0
    %2098 = vmatpush1.msra.mxu0 0.0
    %2099 = vmatprep.subr.mxu0 0.0
    %2100 = vmatpush1.msra.mxu0 0.0
    %2101 = vmatprep.subr.mxu0 0.0
    %2102 = vmatpush1.msra.mxu0 0.0
    %2103 = vmatprep.subr.mxu0 0.0
    %2104 = vmatpush1.msra.mxu0 0.0
    %2105 = vmatprep.subr.mxu0 0.0
    %2106 = vmatpush1.msra.mxu0 0.0
    %2107 = vmatprep.subr.mxu0 0.0
    %2108 = vmatpush1.msra.mxu0 0.0
    %2109 = vmatprep.subr.mxu0 0.0
    %2110 = vmatpush1.msra.mxu0 0.0
    %2111 = vmatprep.mubr.f32.mxu0 0.0
    %2112 = vmatmul.mubr.f32.gmra.mrb[0].mxu0 %v1965
    %v2113 = vpop.f32.mrb[0].mxu0
    %v2114 = vadd.f32 0.0, %v2113
    %v2115 = vpop.f32.mrb[0].mxu0
    %2116 = vdwg.mxu0
    %v2118 = vrot.slane %v2114, 6
    %2119 = vrot.lane.b32.xlu0 %v2118, 32
    %v2120 = vpop.permute.xlu0 %2119
    %v2122 = vadd.f32 %v243, %v2120
    %v2123 = vxor.u32 %v2122, 2147483648
    %v2124 = vmul.f32 %v2123, 1.442695
    %v2125 = vpow.pop %v2124
    %v2126 = vadd.f32 %v2125, 1.0
    %v2127 = vrcp.pop %v2126
    %v2128 = vmul.f32 1.0, %v2127
    %2129 = vmatprep.subr.mxu0 0.0
    %2130 = vmatpush1.msra.mxu0 %v149
    %2131 = vmatprep.subr.mxu0 0.0
    %2132 = vmatpush1.msra.mxu0 %v150
    %2133 = vmatprep.subr.mxu0 0.0
    %2134 = vmatpush1.msra.mxu0 %v151
    %2135 = vmatprep.subr.mxu0 0.0
    %2136 = vmatpush1.msra.mxu0 %v152
    %2137 = vmatprep.subr.mxu0 0.0
    %2138 = vmatpush1.msra.mxu0 0.0
    %2139 = vmatprep.subr.mxu0 0.0
    %2140 = vmatpush1.msra.mxu0 0.0
    %2141 = vmatprep.subr.mxu0 0.0
    %2142 = vmatpush1.msra.mxu0 0.0
    %2143 = vmatprep.subr.mxu0 0.0
    %2144 = vmatpush1.msra.mxu0 0.0
    %2145 = vmatprep.subr.mxu0 0.0
    %2146 = vmatpush1.msra.mxu0 0.0
    %2147 = vmatprep.subr.mxu0 0.0
    %2148 = vmatpush1.msra.mxu0 0.0
    %2149 = vmatprep.subr.mxu0 0.0
    %2150 = vmatpush1.msra.mxu0 0.0
    %2151 = vmatprep.subr.mxu0 0.0
    %2152 = vmatpush1.msra.mxu0 0.0
    %2153 = vmatprep.subr.mxu0 0.0
    %2154 = vmatpush1.msra.mxu0 0.0
    %2155 = vmatprep.subr.mxu0 0.0
    %2156 = vmatpush1.msra.mxu0 0.0
    %2157 = vmatprep.subr.mxu0 0.0
    %2158 = vmatpush1.msra.mxu0 0.0
    %2159 = vmatprep.subr.mxu0 0.0
    %2160 = vmatpush1.msra.mxu0 0.0
    %2161 = vmatprep.subr.mxu0 0.0
    %2162 = vmatpush1.msra.mxu0 0.0
    %2163 = vmatprep.subr.mxu0 0.0
    %2164 = vmatpush1.msra.mxu0 0.0
    %2165 = vmatprep.subr.mxu0 0.0
    %2166 = vmatpush1.msra.mxu0 0.0
    %2167 = vmatprep.subr.mxu0 0.0
    %2168 = vmatpush1.msra.mxu0 0.0
    %2169 = vmatprep.subr.mxu0 0.0
    %2170 = vmatpush1.msra.mxu0 0.0
    %2171 = vmatprep.subr.mxu0 0.0
    %2172 = vmatpush1.msra.mxu0 0.0
    %2173 = vmatprep.subr.mxu0 0.0
    %2174 = vmatpush1.msra.mxu0 0.0
    %2175 = vmatprep.subr.mxu0 0.0
    %2176 = vmatpush1.msra.mxu0 0.0
    %2177 = vmatprep.subr.mxu0 0.0
    %2178 = vmatpush1.msra.mxu0 0.0
    %2179 = vmatprep.subr.mxu0 0.0
    %2180 = vmatpush1.msra.mxu0 0.0
    %2181 = vmatprep.subr.mxu0 0.0
    %2182 = vmatpush1.msra.mxu0 0.0
    %2183 = vmatprep.subr.mxu0 0.0
    %2184 = vmatpush1.msra.mxu0 0.0
    %2185 = vmatprep.subr.mxu0 0.0
    %2186 = vmatpush1.msra.mxu0 0.0
    %2187 = vmatprep.subr.mxu0 0.0
    %2188 = vmatpush1.msra.mxu0 0.0
    %2189 = vmatprep.subr.mxu0 0.0
    %2190 = vmatpush1.msra.mxu0 0.0
    %2191 = vmatprep.subr.mxu0 0.0
    %2192 = vmatpush1.msra.mxu0 0.0
    %2193 = vmatprep.mubr.f32.mxu0 0.0
    %2194 = vmatmul.mubr.f32.gmra.mrb[0].mxu0 %v1965
    %v2195 = vpop.f32.mrb[0].mxu0
    %v2196 = vadd.f32 0.0, %v2195
    %v2197 = vpop.f32.mrb[0].mxu0
    %2198 = vdwg.mxu0
    %v2200 = vrot.slane %v2196, 6
    %2201 = vrot.lane.b32.xlu0 %v2200, 64
    %v2202 = vpop.permute.xlu0 %2201
    %v2204 = vadd.f32 %v243, %v2202
    %v2205 = vtanh.pop %v2204
    %2206 = vmatprep.subr.mxu0 0.0
    %2207 = vmatpush1.msra.mxu0 %v153
    %2208 = vmatprep.subr.mxu0 0.0
    %2209 = vmatpush1.msra.mxu0 %v154
    %2210 = vmatprep.subr.mxu0 0.0
    %2211 = vmatpush1.msra.mxu0 %v155
    %2212 = vmatprep.subr.mxu0 0.0
    %2213 = vmatpush1.msra.mxu0 %v156
    %2214 = vmatprep.subr.mxu0 0.0
    %2215 = vmatpush1.msra.mxu0 0.0
    %2216 = vmatprep.subr.mxu0 0.0
    %2217 = vmatpush1.msra.mxu0 0.0
    %2218 = vmatprep.subr.mxu0 0.0
    %2219 = vmatpush1.msra.mxu0 0.0
    %2220 = vmatprep.subr.mxu0 0.0
    %2221 = vmatpush1.msra.mxu0 0.0
    %2222 = vmatprep.subr.mxu0 0.0
    %2223 = vmatpush1.msra.mxu0 0.0
    %2224 = vmatprep.subr.mxu0 0.0
    %2225 = vmatpush1.msra.mxu0 0.0
    %2226 = vmatprep.subr.mxu0 0.0
    %2227 = vmatpush1.msra.mxu0 0.0
    %2228 = vmatprep.subr.mxu0 0.0
    %2229 = vmatpush1.msra.mxu0 0.0
    %2230 = vmatprep.subr.mxu0 0.0
    %2231 = vmatpush1.msra.mxu0 0.0
    %2232 = vmatprep.subr.mxu0 0.0
    %2233 = vmatpush1.msra.mxu0 0.0
    %2234 = vmatprep.subr.mxu0 0.0
    %2235 = vmatpush1.msra.mxu0 0.0
    %2236 = vmatprep.subr.mxu0 0.0
    %2237 = vmatpush1.msra.mxu0 0.0
    %2238 = vmatprep.subr.mxu0 0.0
    %2239 = vmatpush1.msra.mxu0 0.0
    %2240 = vmatprep.subr.mxu0 0.0
    %2241 = vmatpush1.msra.mxu0 0.0
    %2242 = vmatprep.subr.mxu0 0.0
    %2243 = vmatpush1.msra.mxu0 0.0
    %2244 = vmatprep.subr.mxu0 0.0
    %2245 = vmatpush1.msra.mxu0 0.0
    %2246 = vmatprep.subr.mxu0 0.0
    %2247 = vmatpush1.msra.mxu0 0.0
    %2248 = vmatprep.subr.mxu0 0.0
    %2249 = vmatpush1.msra.mxu0 0.0
    %2250 = vmatprep.subr.mxu0 0.0
    %2251 = vmatpush1.msra.mxu0 0.0
    %2252 = vmatprep.subr.mxu0 0.0
    %2253 = vmatpush1.msra.mxu0 0.0
    %2254 = vmatprep.subr.mxu0 0.0
    %2255 = vmatpush1.msra.mxu0 0.0
    %2256 = vmatprep.subr.mxu0 0.0
    %2257 = vmatpush1.msra.mxu0 0.0
    %2258 = vmatprep.subr.mxu0 0.0
    %2259 = vmatpush1.msra.mxu0 0.0
    %2260 = vmatprep.subr.mxu0 0.0
    %2261 = vmatpush1.msra.mxu0 0.0
    %2262 = vmatprep.subr.mxu0 0.0
    %2263 = vmatpush1.msra.mxu0 0.0
    %2264 = vmatprep.subr.mxu0 0.0
    %2265 = vmatpush1.msra.mxu0 0.0
    %2266 = vmatprep.subr.mxu0 0.0
    %2267 = vmatpush1.msra.mxu0 0.0
    %2268 = vmatprep.subr.mxu0 0.0
    %2269 = vmatpush1.msra.mxu0 0.0
    %2270 = vmatprep.mubr.f32.mxu0 0.0
    %2271 = vmatmul.mubr.f32.gmra.mrb[0].mxu0 %v1965
    %v2272 = vpop.f32.mrb[0].mxu0
    %v2273 = vadd.f32 0.0, %v2272
    %v2274 = vpop.f32.mrb[0].mxu0
    %2275 = vdwg.mxu0
    %v2277 = vrot.slane %v2273, 6
    %2278 = vrot.lane.b32.xlu0 %v2277, 96
    %v2279 = vpop.permute.xlu0 %2278
    %v2281 = vadd.f32 %v243, %v2279
    %v2282 = vxor.u32 %v2281, 2147483648
    %v2283 = vmul.f32 %v2282, 1.442695
    %v2284 = vpow.pop %v2283
    %v2285 = vadd.f32 %v2284, 1.0
    %v2286 = vrcp.pop %v2285
    %v2287 = vmul.f32 1.0, %v2286
    %v2289 = vrot.slane %v1955, 6
    %v2291 = vmul.f32 %v2128, %v2289
    %2293 = vrot.lane.b32.xlu0 %v2205, 64
    %v2294 = vpop.permute.xlu0 %2293
    %v2296 = vmul.f32 %v2046, %v2294
    %2298 = vrot.lane.b32.xlu0 %v2296, 32
    %v2299 = vpop.permute.xlu0 %2298
    %v2301 = vadd.f32 %v2291, %v2299
    %v2302 = vtanh.pop %v2301
    %2304 = vrot.lane.b32.xlu0 %v2302, 64
    %v2305 = vpop.permute.xlu0 %2304
    %v2307 = vmul.f32 %v2287, %v2305
    %v2309 = vrot.slane %v2307, 2
    %2310 = vrot.lane.b32.xlu0 %v2309, 32
    %v2311 = vpop.permute.xlu0 %2310
    %v2312 = vsel %vm164, %v2311, 0
    %2314 = vmatprep.subr.mxu0 0.0
    %2315 = vmatpush1.msra.mxu0 %v141
    %2316 = vmatprep.subr.mxu0 0.0
    %2317 = vmatpush1.msra.mxu0 %v142
    %2318 = vmatprep.subr.mxu0 0.0
    %2319 = vmatpush1.msra.mxu0 %v143
    %2320 = vmatprep.subr.mxu0 0.0
    %2321 = vmatpush1.msra.mxu0 %v144
    %2322 = vmatprep.subr.mxu0 0.0
    %2323 = vmatpush1.msra.mxu0 0.0
    %2324 = vmatprep.subr.mxu0 0.0
    %2325 = vmatpush1.msra.mxu0 0.0
    %2326 = vmatprep.subr.mxu0 0.0
    %2327 = vmatpush1.msra.mxu0 0.0
    %2328 = vmatprep.subr.mxu0 0.0
    %2329 = vmatpush1.msra.mxu0 0.0
    %2330 = vmatprep.subr.mxu0 0.0
    %2331 = vmatpush1.msra.mxu0 0.0
    %2332 = vmatprep.subr.mxu0 0.0
    %2333 = vmatpush1.msra.mxu0 0.0
    %2334 = vmatprep.subr.mxu0 0.0
    %2335 = vmatpush1.msra.mxu0 0.0
    %2336 = vmatprep.subr.mxu0 0.0
    %2337 = vmatpush1.msra.mxu0 0.0
    %2338 = vmatprep.subr.mxu0 0.0
    %2339 = vmatpush1.msra.mxu0 0.0
    %2340 = vmatprep.subr.mxu0 0.0
    %2341 = vmatpush1.msra.mxu0 0.0
    %2342 = vmatprep.subr.mxu0 0.0
    %2343 = vmatpush1.msra.mxu0 0.0
    %2344 = vmatprep.subr.mxu0 0.0
    %2345 = vmatpush1.msra.mxu0 0.0
    %2346 = vmatprep.subr.mxu0 0.0
    %2347 = vmatpush1.msra.mxu0 0.0
    %2348 = vmatprep.subr.mxu0 0.0
    %2349 = vmatpush1.msra.mxu0 0.0
    %2350 = vmatprep.subr.mxu0 0.0
    %2351 = vmatpush1.msra.mxu0 0.0
    %2352 = vmatprep.subr.mxu0 0.0
    %2353 = vmatpush1.msra.mxu0 0.0
    %2354 = vmatprep.subr.mxu0 0.0
    %2355 = vmatpush1.msra.mxu0 0.0
    %2356 = vmatprep.subr.mxu0 0.0
    %2357 = vmatpush1.msra.mxu0 0.0
    %2358 = vmatprep.subr.mxu0 0.0
    %2359 = vmatpush1.msra.mxu0 0.0
    %2360 = vmatprep.subr.mxu0 0.0
    %2361 = vmatpush1.msra.mxu0 0.0
    %2362 = vmatprep.subr.mxu0 0.0
    %2363 = vmatpush1.msra.mxu0 0.0
    %2364 = vmatprep.subr.mxu0 0.0
    %2365 = vmatpush1.msra.mxu0 0.0
    %2366 = vmatprep.subr.mxu0 0.0
    %2367 = vmatpush1.msra.mxu0 0.0
    %2368 = vmatprep.subr.mxu0 0.0
    %2369 = vmatpush1.msra.mxu0 0.0
    %2370 = vmatprep.subr.mxu0 0.0
    %2371 = vmatpush1.msra.mxu0 0.0
    %2372 = vmatprep.subr.mxu0 0.0
    %2373 = vmatpush1.msra.mxu0 0.0
    %2374 = vmatprep.subr.mxu0 0.0
    %2375 = vmatpush1.msra.mxu0 0.0
    %2376 = vmatprep.subr.mxu0 0.0
    %2377 = vmatpush1.msra.mxu0 0.0
    %2378 = vmatprep.mubr.f32.mxu0 0.0
    %2379 = vmatmul.mubr.f32.gmra.mrb[0].mxu0 %v2312
    %v2380 = vpop.f32.mrb[0].mxu0
    %v2381 = vadd.f32 0.0, %v2380
    %v2382 = vpop.f32.mrb[0].mxu0
    %2383 = vdwg.mxu0
    %v2385 = vrot.slane %v2381, 4
    %v2387 = vadd.f32 %v243, %v2385
    %v2388 = vxor.u32 %v2387, 2147483648
    %v2389 = vmul.f32 %v2388, 1.442695
    %v2390 = vpow.pop %v2389
    %v2391 = vadd.f32 %v2390, 1.0
    %v2392 = vrcp.pop %v2391
    %v2393 = vmul.f32 1.0, %v2392
    %2394 = vmatprep.subr.mxu0 0.0
    %2395 = vmatpush1.msra.mxu0 %v145
    %2396 = vmatprep.subr.mxu0 0.0
    %2397 = vmatpush1.msra.mxu0 %v146
    %2398 = vmatprep.subr.mxu0 0.0
    %2399 = vmatpush1.msra.mxu0 %v147
    %2400 = vmatprep.subr.mxu0 0.0
    %2401 = vmatpush1.msra.mxu0 %v148
    %2402 = vmatprep.subr.mxu0 0.0
    %2403 = vmatpush1.msra.mxu0 0.0
    %2404 = vmatprep.subr.mxu0 0.0
    %2405 = vmatpush1.msra.mxu0 0.0
    %2406 = vmatprep.subr.mxu0 0.0
    %2407 = vmatpush1.msra.mxu0 0.0
    %2408 = vmatprep.subr.mxu0 0.0
    %2409 = vmatpush1.msra.mxu0 0.0
    %2410 = vmatprep.subr.mxu0 0.0
    %2411 = vmatpush1.msra.mxu0 0.0
    %2412 = vmatprep.subr.mxu0 0.0
    %2413 = vmatpush1.msra.mxu0 0.0
    %2414 = vmatprep.subr.mxu0 0.0
    %2415 = vmatpush1.msra.mxu0 0.0
    %2416 = vmatprep.subr.mxu0 0.0
    %2417 = vmatpush1.msra.mxu0 0.0
    %2418 = vmatprep.subr.mxu0 0.0
    %2419 = vmatpush1.msra.mxu0 0.0
    %2420 = vmatprep.subr.mxu0 0.0
    %2421 = vmatpush1.msra.mxu0 0.0
    %2422 = vmatprep.subr.mxu0 0.0
    %2423 = vmatpush1.msra.mxu0 0.0
    %2424 = vmatprep.subr.mxu0 0.0
    %2425 = vmatpush1.msra.mxu0 0.0
    %2426 = vmatprep.subr.mxu0 0.0
    %2427 = vmatpush1.msra.mxu0 0.0
    %2428 = vmatprep.subr.mxu0 0.0
    %2429 = vmatpush1.msra.mxu0 0.0
    %2430 = vmatprep.subr.mxu0 0.0
    %2431 = vmatpush1.msra.mxu0 0.0
    %2432 = vmatprep.subr.mxu0 0.0
    %2433 = vmatpush1.msra.mxu0 0.0
    %2434 = vmatprep.subr.mxu0 0.0
    %2435 = vmatpush1.msra.mxu0 0.0
    %2436 = vmatprep.subr.mxu0 0.0
    %2437 = vmatpush1.msra.mxu0 0.0
    %2438 = vmatprep.subr.mxu0 0.0
    %2439 = vmatpush1.msra.mxu0 0.0
    %2440 = vmatprep.subr.mxu0 0.0
    %2441 = vmatpush1.msra.mxu0 0.0
    %2442 = vmatprep.subr.mxu0 0.0
    %2443 = vmatpush1.msra.mxu0 0.0
    %2444 = vmatprep.subr.mxu0 0.0
    %2445 = vmatpush1.msra.mxu0 0.0
    %2446 = vmatprep.subr.mxu0 0.0
    %2447 = vmatpush1.msra.mxu0 0.0
    %2448 = vmatprep.subr.mxu0 0.0
    %2449 = vmatpush1.msra.mxu0 0.0
    %2450 = vmatprep.subr.mxu0 0.0
    %2451 = vmatpush1.msra.mxu0 0.0
    %2452 = vmatprep.subr.mxu0 0.0
    %2453 = vmatpush1.msra.mxu0 0.0
    %2454 = vmatprep.subr.mxu0 0.0
    %2455 = vmatpush1.msra.mxu0 0.0
    %2456 = vmatprep.subr.mxu0 0.0
    %2457 = vmatpush1.msra.mxu0 0.0
    %2458 = vmatprep.mubr.f32.mxu0 0.0
    %2459 = vmatmul.mubr.f32.gmra.mrb[0].mxu0 %v2312
    %v2460 = vpop.f32.mrb[0].mxu0
    %v2461 = vadd.f32 0.0, %v2460
    %v2462 = vpop.f32.mrb[0].mxu0
    %2463 = vdwg.mxu0
    %v2465 = vrot.slane %v2461, 4
    %2466 = vrot.lane.b32.xlu0 %v2465, 32
    %v2467 = vpop.permute.xlu0 %2466
    %v2469 = vadd.f32 %v243, %v2467
    %v2470 = vxor.u32 %v2469, 2147483648
    %v2471 = vmul.f32 %v2470, 1.442695
    %v2472 = vpow.pop %v2471
    %v2473 = vadd.f32 %v2472, 1.0
    %v2474 = vrcp.pop %v2473
    %v2475 = vmul.f32 1.0, %v2474
    %2476 = vmatprep.subr.mxu0 0.0
    %2477 = vmatpush1.msra.mxu0 %v149
    %2478 = vmatprep.subr.mxu0 0.0
    %2479 = vmatpush1.msra.mxu0 %v150
    %2480 = vmatprep.subr.mxu0 0.0
    %2481 = vmatpush1.msra.mxu0 %v151
    %2482 = vmatprep.subr.mxu0 0.0
    %2483 = vmatpush1.msra.mxu0 %v152
    %2484 = vmatprep.subr.mxu0 0.0
    %2485 = vmatpush1.msra.mxu0 0.0
    %2486 = vmatprep.subr.mxu0 0.0
    %2487 = vmatpush1.msra.mxu0 0.0
    %2488 = vmatprep.subr.mxu0 0.0
    %2489 = vmatpush1.msra.mxu0 0.0
    %2490 = vmatprep.subr.mxu0 0.0
    %2491 = vmatpush1.msra.mxu0 0.0
    %2492 = vmatprep.subr.mxu0 0.0
    %2493 = vmatpush1.msra.mxu0 0.0
    %2494 = vmatprep.subr.mxu0 0.0
    %2495 = vmatpush1.msra.mxu0 0.0
    %2496 = vmatprep.subr.mxu0 0.0
    %2497 = vmatpush1.msra.mxu0 0.0
    %2498 = vmatprep.subr.mxu0 0.0
    %2499 = vmatpush1.msra.mxu0 0.0
    %2500 = vmatprep.subr.mxu0 0.0
    %2501 = vmatpush1.msra.mxu0 0.0
    %2502 = vmatprep.subr.mxu0 0.0
    %2503 = vmatpush1.msra.mxu0 0.0
    %2504 = vmatprep.subr.mxu0 0.0
    %2505 = vmatpush1.msra.mxu0 0.0
    %2506 = vmatprep.subr.mxu0 0.0
    %2507 = vmatpush1.msra.mxu0 0.0
    %2508 = vmatprep.subr.mxu0 0.0
    %2509 = vmatpush1.msra.mxu0 0.0
    %2510 = vmatprep.subr.mxu0 0.0
    %2511 = vmatpush1.msra.mxu0 0.0
    %2512 = vmatprep.subr.mxu0 0.0
    %2513 = vmatpush1.msra.mxu0 0.0
    %2514 = vmatprep.subr.mxu0 0.0
    %2515 = vmatpush1.msra.mxu0 0.0
    %2516 = vmatprep.subr.mxu0 0.0
    %2517 = vmatpush1.msra.mxu0 0.0
    %2518 = vmatprep.subr.mxu0 0.0
    %2519 = vmatpush1.msra.mxu0 0.0
    %2520 = vmatprep.subr.mxu0 0.0
    %2521 = vmatpush1.msra.mxu0 0.0
    %2522 = vmatprep.subr.mxu0 0.0
    %2523 = vmatpush1.msra.mxu0 0.0
    %2524 = vmatprep.subr.mxu0 0.0
    %2525 = vmatpush1.msra.mxu0 0.0
    %2526 = vmatprep.subr.mxu0 0.0
    %2527 = vmatpush1.msra.mxu0 0.0
    %2528 = vmatprep.subr.mxu0 0.0
    %2529 = vmatpush1.msra.mxu0 0.0
    %2530 = vmatprep.subr.mxu0 0.0
    %2531 = vmatpush1.msra.mxu0 0.0
    %2532 = vmatprep.subr.mxu0 0.0
    %2533 = vmatpush1.msra.mxu0 0.0
    %2534 = vmatprep.subr.mxu0 0.0
    %2535 = vmatpush1.msra.mxu0 0.0
    %2536 = vmatprep.subr.mxu0 0.0
    %2537 = vmatpush1.msra.mxu0 0.0
    %2538 = vmatprep.subr.mxu0 0.0
    %2539 = vmatpush1.msra.mxu0 0.0
    %2540 = vmatprep.mubr.f32.mxu0 0.0
    %2541 = vmatmul.mubr.f32.gmra.mrb[0].mxu0 %v2312
    %v2542 = vpop.f32.mrb[0].mxu0
    %v2543 = vadd.f32 0.0, %v2542
    %v2544 = vpop.f32.mrb[0].mxu0
    %2545 = vdwg.mxu0
    %v2547 = vrot.slane %v2543, 4
    %2548 = vrot.lane.b32.xlu0 %v2547, 64
    %v2549 = vpop.permute.xlu0 %2548
    %v2551 = vadd.f32 %v243, %v2549
    %v2552 = vtanh.pop %v2551
    %2553 = vmatprep.subr.mxu0 0.0
    %2554 = vmatpush1.msra.mxu0 %v153
    %2555 = vmatprep.subr.mxu0 0.0
    %2556 = vmatpush1.msra.mxu0 %v154
    %2557 = vmatprep.subr.mxu0 0.0
    %2558 = vmatpush1.msra.mxu0 %v155
    %2559 = vmatprep.subr.mxu0 0.0
    %2560 = vmatpush1.msra.mxu0 %v156
    %2561 = vmatprep.subr.mxu0 0.0
    %2562 = vmatpush1.msra.mxu0 0.0
    %2563 = vmatprep.subr.mxu0 0.0
    %2564 = vmatpush1.msra.mxu0 0.0
    %2565 = vmatprep.subr.mxu0 0.0
    %2566 = vmatpush1.msra.mxu0 0.0
    %2567 = vmatprep.subr.mxu0 0.0
    %2568 = vmatpush1.msra.mxu0 0.0
    %2569 = vmatprep.subr.mxu0 0.0
    %2570 = vmatpush1.msra.mxu0 0.0
    %2571 = vmatprep.subr.mxu0 0.0
    %2572 = vmatpush1.msra.mxu0 0.0
    %2573 = vmatprep.subr.mxu0 0.0
    %2574 = vmatpush1.msra.mxu0 0.0
    %2575 = vmatprep.subr.mxu0 0.0
    %2576 = vmatpush1.msra.mxu0 0.0
    %2577 = vmatprep.subr.mxu0 0.0
    %2578 = vmatpush1.msra.mxu0 0.0
    %2579 = vmatprep.subr.mxu0 0.0
    %2580 = vmatpush1.msra.mxu0 0.0
    %2581 = vmatprep.subr.mxu0 0.0
    %2582 = vmatpush1.msra.mxu0 0.0
    %2583 = vmatprep.subr.mxu0 0.0
    %2584 = vmatpush1.msra.mxu0 0.0
    %2585 = vmatprep.subr.mxu0 0.0
    %2586 = vmatpush1.msra.mxu0 0.0
    %2587 = vmatprep.subr.mxu0 0.0
    %2588 = vmatpush1.msra.mxu0 0.0
    %2589 = vmatprep.subr.mxu0 0.0
    %2590 = vmatpush1.msra.mxu0 0.0
    %2591 = vmatprep.subr.mxu0 0.0
    %2592 = vmatpush1.msra.mxu0 0.0
    %2593 = vmatprep.subr.mxu0 0.0
    %2594 = vmatpush1.msra.mxu0 0.0
    %2595 = vmatprep.subr.mxu0 0.0
    %2596 = vmatpush1.msra.mxu0 0.0
    %2597 = vmatprep.subr.mxu0 0.0
    %2598 = vmatpush1.msra.mxu0 0.0
    %2599 = vmatprep.subr.mxu0 0.0
    %2600 = vmatpush1.msra.mxu0 0.0
    %2601 = vmatprep.subr.mxu0 0.0
    %2602 = vmatpush1.msra.mxu0 0.0
    %2603 = vmatprep.subr.mxu0 0.0
    %2604 = vmatpush1.msra.mxu0 0.0
    %2605 = vmatprep.subr.mxu0 0.0
    %2606 = vmatpush1.msra.mxu0 0.0
    %2607 = vmatprep.subr.mxu0 0.0
    %2608 = vmatpush1.msra.mxu0 0.0
    %2609 = vmatprep.subr.mxu0 0.0
    %2610 = vmatpush1.msra.mxu0 0.0
    %2611 = vmatprep.subr.mxu0 0.0
    %2612 = vmatpush1.msra.mxu0 0.0
    %2613 = vmatprep.subr.mxu0 0.0
    %2614 = vmatpush1.msra.mxu0 0.0
    %2615 = vmatprep.subr.mxu0 0.0
    %2616 = vmatpush1.msra.mxu0 0.0
    %2617 = vmatprep.mubr.f32.mxu0 0.0
    %2618 = vmatmul.mubr.f32.gmra.mrb[0].mxu0 %v2312
    %v2619 = vpop.f32.mrb[0].mxu0
    %v2620 = vadd.f32 0.0, %v2619
    %v2621 = vpop.f32.mrb[0].mxu0
    %2622 = vdwg.mxu0
    %v2624 = vrot.slane %v2620, 4
    %2625 = vrot.lane.b32.xlu0 %v2624, 96
    %v2626 = vpop.permute.xlu0 %2625
    %v2628 = vadd.f32 %v243, %v2626
    %v2629 = vxor.u32 %v2628, 2147483648
    %v2630 = vmul.f32 %v2629, 1.442695
    %v2631 = vpow.pop %v2630
    %v2632 = vadd.f32 %v2631, 1.0
    %v2633 = vrcp.pop %v2632
    %v2634 = vmul.f32 1.0, %v2633
    %v2636 = vrot.slane %v2301, 6
    %v2638 = vmul.f32 %v2475, %v2636
    %2640 = vrot.lane.b32.xlu0 %v2552, 64
    %v2641 = vpop.permute.xlu0 %2640
    %v2643 = vmul.f32 %v2393, %v2641
    %2645 = vrot.lane.b32.xlu0 %v2643, 32
    %v2646 = vpop.permute.xlu0 %2645
    %v2648 = vadd.f32 %v2638, %v2646
    %v2649 = vtanh.pop %v2648
    %2651 = vrot.lane.b32.xlu0 %v2649, 64
    %v2652 = vpop.permute.xlu0 %2651
    %v2654 = vmul.f32 %v2634, %v2652
    %v2656 = vrot.slane %v2654, 4
    %2657 = vrot.lane.b32.xlu0 %v2656, 32
    %v2658 = vpop.permute.xlu0 %2657
    %v2659 = vsel %vm164, %v2658, 0
    %2661 = vmatprep.subr.mxu0 0.0
    %2662 = vmatpush1.msra.mxu0 %v141
    %2663 = vmatprep.subr.mxu0 0.0
    %2664 = vmatpush1.msra.mxu0 %v142
    %2665 = vmatprep.subr.mxu0 0.0
    %2666 = vmatpush1.msra.mxu0 %v143
    %2667 = vmatprep.subr.mxu0 0.0
    %2668 = vmatpush1.msra.mxu0 %v144
    %2669 = vmatprep.subr.mxu0 0.0
    %2670 = vmatpush1.msra.mxu0 0.0
    %2671 = vmatprep.subr.mxu0 0.0
    %2672 = vmatpush1.msra.mxu0 0.0
    %2673 = vmatprep.subr.mxu0 0.0
    %2674 = vmatpush1.msra.mxu0 0.0
    %2675 = vmatprep.subr.mxu0 0.0
    %2676 = vmatpush1.msra.mxu0 0.0
    %2677 = vmatprep.subr.mxu0 0.0
    %2678 = vmatpush1.msra.mxu0 0.0
    %2679 = vmatprep.subr.mxu0 0.0
    %2680 = vmatpush1.msra.mxu0 0.0
    %2681 = vmatprep.subr.mxu0 0.0
    %2682 = vmatpush1.msra.mxu0 0.0
    %2683 = vmatprep.subr.mxu0 0.0
    %2684 = vmatpush1.msra.mxu0 0.0
    %2685 = vmatprep.subr.mxu0 0.0
    %2686 = vmatpush1.msra.mxu0 0.0
    %2687 = vmatprep.subr.mxu0 0.0
    %2688 = vmatpush1.msra.mxu0 0.0
    %2689 = vmatprep.subr.mxu0 0.0
    %2690 = vmatpush1.msra.mxu0 0.0
    %2691 = vmatprep.subr.mxu0 0.0
    %2692 = vmatpush1.msra.mxu0 0.0
    %2693 = vmatprep.subr.mxu0 0.0
    %2694 = vmatpush1.msra.mxu0 0.0
    %2695 = vmatprep.subr.mxu0 0.0
    %2696 = vmatpush1.msra.mxu0 0.0
    %2697 = vmatprep.subr.mxu0 0.0
    %2698 = vmatpush1.msra.mxu0 0.0
    %2699 = vmatprep.subr.mxu0 0.0
    %2700 = vmatpush1.msra.mxu0 0.0
    %2701 = vmatprep.subr.mxu0 0.0
    %2702 = vmatpush1.msra.mxu0 0.0
    %2703 = vmatprep.subr.mxu0 0.0
    %2704 = vmatpush1.msra.mxu0 0.0
    %2705 = vmatprep.subr.mxu0 0.0
    %2706 = vmatpush1.msra.mxu0 0.0
    %2707 = vmatprep.subr.mxu0 0.0
    %2708 = vmatpush1.msra.mxu0 0.0
    %2709 = vmatprep.subr.mxu0 0.0
    %2710 = vmatpush1.msra.mxu0 0.0
    %2711 = vmatprep.subr.mxu0 0.0
    %2712 = vmatpush1.msra.mxu0 0.0
    %2713 = vmatprep.subr.mxu0 0.0
    %2714 = vmatpush1.msra.mxu0 0.0
    %2715 = vmatprep.subr.mxu0 0.0
    %2716 = vmatpush1.msra.mxu0 0.0
    %2717 = vmatprep.subr.mxu0 0.0
    %2718 = vmatpush1.msra.mxu0 0.0
    %2719 = vmatprep.subr.mxu0 0.0
    %2720 = vmatpush1.msra.mxu0 0.0
    %2721 = vmatprep.subr.mxu0 0.0
    %2722 = vmatpush1.msra.mxu0 0.0
    %2723 = vmatprep.subr.mxu0 0.0
    %2724 = vmatpush1.msra.mxu0 0.0
    %2725 = vmatprep.mubr.f32.mxu0 0.0
    %2726 = vmatmul.mubr.f32.gmra.mrb[0].mxu0 %v2659
    %v2727 = vpop.f32.mrb[0].mxu0
    %v2728 = vadd.f32 0.0, %v2727
    %v2729 = vpop.f32.mrb[0].mxu0
    %2730 = vdwg.mxu0
    %v2732 = vrot.slane %v2728, 2
    %v2734 = vadd.f32 %v243, %v2732
    %v2735 = vxor.u32 %v2734, 2147483648
    %v2736 = vmul.f32 %v2735, 1.442695
    %v2737 = vpow.pop %v2736
    %v2738 = vadd.f32 %v2737, 1.0
    %v2739 = vrcp.pop %v2738
    %v2740 = vmul.f32 1.0, %v2739
    %2741 = vmatprep.subr.mxu0 0.0
    %2742 = vmatpush1.msra.mxu0 %v145
    %2743 = vmatprep.subr.mxu0 0.0
    %2744 = vmatpush1.msra.mxu0 %v146
    %2745 = vmatprep.subr.mxu0 0.0
    %2746 = vmatpush1.msra.mxu0 %v147
    %2747 = vmatprep.subr.mxu0 0.0
    %2748 = vmatpush1.msra.mxu0 %v148
    %2749 = vmatprep.subr.mxu0 0.0
    %2750 = vmatpush1.msra.mxu0 0.0
    %2751 = vmatprep.subr.mxu0 0.0
    %2752 = vmatpush1.msra.mxu0 0.0
    %2753 = vmatprep.subr.mxu0 0.0
    %2754 = vmatpush1.msra.mxu0 0.0
    %2755 = vmatprep.subr.mxu0 0.0
    %2756 = vmatpush1.msra.mxu0 0.0
    %2757 = vmatprep.subr.mxu0 0.0
    %2758 = vmatpush1.msra.mxu0 0.0
    %2759 = vmatprep.subr.mxu0 0.0
    %2760 = vmatpush1.msra.mxu0 0.0
    %2761 = vmatprep.subr.mxu0 0.0
    %2762 = vmatpush1.msra.mxu0 0.0
    %2763 = vmatprep.subr.mxu0 0.0
    %2764 = vmatpush1.msra.mxu0 0.0
    %2765 = vmatprep.subr.mxu0 0.0
    %2766 = vmatpush1.msra.mxu0 0.0
    %2767 = vmatprep.subr.mxu0 0.0
    %2768 = vmatpush1.msra.mxu0 0.0
    %2769 = vmatprep.subr.mxu0 0.0
    %2770 = vmatpush1.msra.mxu0 0.0
    %2771 = vmatprep.subr.mxu0 0.0
    %2772 = vmatpush1.msra.mxu0 0.0
    %2773 = vmatprep.subr.mxu0 0.0
    %2774 = vmatpush1.msra.mxu0 0.0
    %2775 = vmatprep.subr.mxu0 0.0
    %2776 = vmatpush1.msra.mxu0 0.0
    %2777 = vmatprep.subr.mxu0 0.0
    %2778 = vmatpush1.msra.mxu0 0.0
    %2779 = vmatprep.subr.mxu0 0.0
    %2780 = vmatpush1.msra.mxu0 0.0
    %2781 = vmatprep.subr.mxu0 0.0
    %2782 = vmatpush1.msra.mxu0 0.0
    %2783 = vmatprep.subr.mxu0 0.0
    %2784 = vmatpush1.msra.mxu0 0.0
    %2785 = vmatprep.subr.mxu0 0.0
    %2786 = vmatpush1.msra.mxu0 0.0
    %2787 = vmatprep.subr.mxu0 0.0
    %2788 = vmatpush1.msra.mxu0 0.0
    %2789 = vmatprep.subr.mxu0 0.0
    %2790 = vmatpush1.msra.mxu0 0.0
    %2791 = vmatprep.subr.mxu0 0.0
    %2792 = vmatpush1.msra.mxu0 0.0
    %2793 = vmatprep.subr.mxu0 0.0
    %2794 = vmatpush1.msra.mxu0 0.0
    %2795 = vmatprep.subr.mxu0 0.0
    %2796 = vmatpush1.msra.mxu0 0.0
    %2797 = vmatprep.subr.mxu0 0.0
    %2798 = vmatpush1.msra.mxu0 0.0
    %2799 = vmatprep.subr.mxu0 0.0
    %2800 = vmatpush1.msra.mxu0 0.0
    %2801 = vmatprep.subr.mxu0 0.0
    %2802 = vmatpush1.msra.mxu0 0.0
    %2803 = vmatprep.subr.mxu0 0.0
    %2804 = vmatpush1.msra.mxu0 0.0
    %2805 = vmatprep.mubr.f32.mxu0 0.0
    %2806 = vmatmul.mubr.f32.gmra.mrb[0].mxu0 %v2659
    %v2807 = vpop.f32.mrb[0].mxu0
    %v2808 = vadd.f32 0.0, %v2807
    %v2809 = vpop.f32.mrb[0].mxu0
    %2810 = vdwg.mxu0
    %v2812 = vrot.slane %v2808, 2
    %2813 = vrot.lane.b32.xlu0 %v2812, 32
    %v2814 = vpop.permute.xlu0 %2813
    %v2816 = vadd.f32 %v243, %v2814
    %v2817 = vxor.u32 %v2816, 2147483648
    %v2818 = vmul.f32 %v2817, 1.442695
    %v2819 = vpow.pop %v2818
    %v2820 = vadd.f32 %v2819, 1.0
    %v2821 = vrcp.pop %v2820
    %v2822 = vmul.f32 1.0, %v2821
    %2823 = vmatprep.subr.mxu0 0.0
    %2824 = vmatpush1.msra.mxu0 %v149
    %2825 = vmatprep.subr.mxu0 0.0
    %2826 = vmatpush1.msra.mxu0 %v150
    %2827 = vmatprep.subr.mxu0 0.0
    %2828 = vmatpush1.msra.mxu0 %v151
    %2829 = vmatprep.subr.mxu0 0.0
    %2830 = vmatpush1.msra.mxu0 %v152
    %2831 = vmatprep.subr.mxu0 0.0
    %2832 = vmatpush1.msra.mxu0 0.0
    %2833 = vmatprep.subr.mxu0 0.0
    %2834 = vmatpush1.msra.mxu0 0.0
    %2835 = vmatprep.subr.mxu0 0.0
    %2836 = vmatpush1.msra.mxu0 0.0
    %2837 = vmatprep.subr.mxu0 0.0
    %2838 = vmatpush1.msra.mxu0 0.0
    %2839 = vmatprep.subr.mxu0 0.0
    %2840 = vmatpush1.msra.mxu0 0.0
    %2841 = vmatprep.subr.mxu0 0.0
    %2842 = vmatpush1.msra.mxu0 0.0
    %2843 = vmatprep.subr.mxu0 0.0
    %2844 = vmatpush1.msra.mxu0 0.0
    %2845 = vmatprep.subr.mxu0 0.0
    %2846 = vmatpush1.msra.mxu0 0.0
    %2847 = vmatprep.subr.mxu0 0.0
    %2848 = vmatpush1.msra.mxu0 0.0
    %2849 = vmatprep.subr.mxu0 0.0
    %2850 = vmatpush1.msra.mxu0 0.0
    %2851 = vmatprep.subr.mxu0 0.0
    %2852 = vmatpush1.msra.mxu0 0.0
    %2853 = vmatprep.subr.mxu0 0.0
    %2854 = vmatpush1.msra.mxu0 0.0
    %2855 = vmatprep.subr.mxu0 0.0
    %2856 = vmatpush1.msra.mxu0 0.0
    %2857 = vmatprep.subr.mxu0 0.0
    %2858 = vmatpush1.msra.mxu0 0.0
    %2859 = vmatprep.subr.mxu0 0.0
    %2860 = vmatpush1.msra.mxu0 0.0
    %2861 = vmatprep.subr.mxu0 0.0
    %2862 = vmatpush1.msra.mxu0 0.0
    %2863 = vmatprep.subr.mxu0 0.0
    %2864 = vmatpush1.msra.mxu0 0.0
    %2865 = vmatprep.subr.mxu0 0.0
    %2866 = vmatpush1.msra.mxu0 0.0
    %2867 = vmatprep.subr.mxu0 0.0
    %2868 = vmatpush1.msra.mxu0 0.0
    %2869 = vmatprep.subr.mxu0 0.0
    %2870 = vmatpush1.msra.mxu0 0.0
    %2871 = vmatprep.subr.mxu0 0.0
    %2872 = vmatpush1.msra.mxu0 0.0
    %2873 = vmatprep.subr.mxu0 0.0
    %2874 = vmatpush1.msra.mxu0 0.0
    %2875 = vmatprep.subr.mxu0 0.0
    %2876 = vmatpush1.msra.mxu0 0.0
    %2877 = vmatprep.subr.mxu0 0.0
    %2878 = vmatpush1.msra.mxu0 0.0
    %2879 = vmatprep.subr.mxu0 0.0
    %2880 = vmatpush1.msra.mxu0 0.0
    %2881 = vmatprep.subr.mxu0 0.0
    %2882 = vmatpush1.msra.mxu0 0.0
    %2883 = vmatprep.subr.mxu0 0.0
    %2884 = vmatpush1.msra.mxu0 0.0
    %2885 = vmatprep.subr.mxu0 0.0
    %2886 = vmatpush1.msra.mxu0 0.0
    %2887 = vmatprep.mubr.f32.mxu0 0.0
    %2888 = vmatmul.mubr.f32.gmra.mrb[0].mxu0 %v2659
    %v2889 = vpop.f32.mrb[0].mxu0
    %v2890 = vadd.f32 0.0, %v2889
    %v2891 = vpop.f32.mrb[0].mxu0
    %2892 = vdwg.mxu0
    %v2894 = vrot.slane %v2890, 2
    %2895 = vrot.lane.b32.xlu0 %v2894, 64
    %v2896 = vpop.permute.xlu0 %2895
    %v2898 = vadd.f32 %v243, %v2896
    %v2899 = vtanh.pop %v2898
    %2900 = vmatprep.subr.mxu0 0.0
    %2901 = vmatpush1.msra.mxu0 %v153
    %2902 = vmatprep.subr.mxu0 0.0
    %2903 = vmatpush1.msra.mxu0 %v154
    %2904 = vmatprep.subr.mxu0 0.0
    %2905 = vmatpush1.msra.mxu0 %v155
    %2906 = vmatprep.subr.mxu0 0.0
    %2907 = vmatpush1.msra.mxu0 %v156
    %2908 = vmatprep.subr.mxu0 0.0
    %2909 = vmatpush1.msra.mxu0 0.0
    %2910 = vmatprep.subr.mxu0 0.0
    %2911 = vmatpush1.msra.mxu0 0.0
    %2912 = vmatprep.subr.mxu0 0.0
    %2913 = vmatpush1.msra.mxu0 0.0
    %2914 = vmatprep.subr.mxu0 0.0
    %2915 = vmatpush1.msra.mxu0 0.0
    %2916 = vmatprep.subr.mxu0 0.0
    %2917 = vmatpush1.msra.mxu0 0.0
    %2918 = vmatprep.subr.mxu0 0.0
    %2919 = vmatpush1.msra.mxu0 0.0
    %2920 = vmatprep.subr.mxu0 0.0
    %2921 = vmatpush1.msra.mxu0 0.0
    %2922 = vmatprep.subr.mxu0 0.0
    %2923 = vmatpush1.msra.mxu0 0.0
    %2924 = vmatprep.subr.mxu0 0.0
    %2925 = vmatpush1.msra.mxu0 0.0
    %2926 = vmatprep.subr.mxu0 0.0
    %2927 = vmatpush1.msra.mxu0 0.0
    %2928 = vmatprep.subr.mxu0 0.0
    %2929 = vmatpush1.msra.mxu0 0.0
    %2930 = vmatprep.subr.mxu0 0.0
    %2931 = vmatpush1.msra.mxu0 0.0
    %2932 = vmatprep.subr.mxu0 0.0
    %2933 = vmatpush1.msra.mxu0 0.0
    %2934 = vmatprep.subr.mxu0 0.0
    %2935 = vmatpush1.msra.mxu0 0.0
    %2936 = vmatprep.subr.mxu0 0.0
    %2937 = vmatpush1.msra.mxu0 0.0
    %2938 = vmatprep.subr.mxu0 0.0
    %2939 = vmatpush1.msra.mxu0 0.0
    %2940 = vmatprep.subr.mxu0 0.0
    %2941 = vmatpush1.msra.mxu0 0.0
    %2942 = vmatprep.subr.mxu0 0.0
    %2943 = vmatpush1.msra.mxu0 0.0
    %2944 = vmatprep.subr.mxu0 0.0
    %2945 = vmatpush1.msra.mxu0 0.0
    %2946 = vmatprep.subr.mxu0 0.0
    %2947 = vmatpush1.msra.mxu0 0.0
    %2948 = vmatprep.subr.mxu0 0.0
    %2949 = vmatpush1.msra.mxu0 0.0
    %2950 = vmatprep.subr.mxu0 0.0
    %2951 = vmatpush1.msra.mxu0 0.0
    %2952 = vmatprep.subr.mxu0 0.0
    %2953 = vmatpush1.msra.mxu0 0.0
    %2954 = vmatprep.subr.mxu0 0.0
    %2955 = vmatpush1.msra.mxu0 0.0
    %2956 = vmatprep.subr.mxu0 0.0
    %2957 = vmatpush1.msra.mxu0 0.0
    %2958 = vmatprep.subr.mxu0 0.0
    %2959 = vmatpush1.msra.mxu0 0.0
    %2960 = vmatprep.subr.mxu0 0.0
    %2961 = vmatpush1.msra.mxu0 0.0
    %2962 = vmatprep.subr.mxu0 0.0
    %2963 = vmatpush1.msra.mxu0 0.0
    %2964 = vmatprep.mubr.f32.mxu0 0.0
    %2965 = vmatmul.mubr.f32.gmra.mrb[0].mxu0 %v2659
    %v2966 = vpop.f32.mrb[0].mxu0
    %v2967 = vadd.f32 0.0, %v2966
    %v2968 = vpop.f32.mrb[0].mxu0
    %2969 = vdwg.mxu0
    %v2971 = vrot.slane %v2967, 2
    %2972 = vrot.lane.b32.xlu0 %v2971, 96
    %v2973 = vpop.permute.xlu0 %2972
    %v2975 = vadd.f32 %v243, %v2973
    %v2976 = vxor.u32 %v2975, 2147483648
    %v2977 = vmul.f32 %v2976, 1.442695
    %v2978 = vpow.pop %v2977
    %v2979 = vadd.f32 %v2978, 1.0
    %v2980 = vrcp.pop %v2979
    %v2981 = vmul.f32 1.0, %v2980
    %v2983 = vrot.slane %v2648, 6
    %v2985 = vmul.f32 %v2822, %v2983
    %2987 = vrot.lane.b32.xlu0 %v2899, 64
    %v2988 = vpop.permute.xlu0 %2987
    %v2990 = vmul.f32 %v2740, %v2988
    %2992 = vrot.lane.b32.xlu0 %v2990, 32
    %v2993 = vpop.permute.xlu0 %2992
    %v2995 = vadd.f32 %v2985, %v2993
    %v2996 = vtanh.pop %v2995
    %2998 = vrot.lane.b32.xlu0 %v2996, 64
    %v2999 = vpop.permute.xlu0 %2998
    %v3001 = vmul.f32 %v2981, %v2999
    %v3002 = vld [vmem:[#allocation5] sm:$0xff]
    %v3003 = vld [vmem:[#allocation5 + $0x8] sm:$0xff]
    %v3004 = vld [vmem:[#allocation5 + $0x10] sm:$0xff]
    %v3005 = vld [vmem:[#allocation5 + $0x18] sm:$0xff]
    %v3006 = vld [vmem:[#allocation7] sm:$0xff]
    %v3007 = vld [vmem:[#allocation7 + $0x8] sm:$0xff]
    %v3008 = vld [vmem:[#allocation7 + $0x10] sm:$0xff]
    %v3009 = vld [vmem:[#allocation7 + $0x18] sm:$0xff]
    %v3010 = vld [vmem:[#allocation8] sm:$0xff]
    %v3011 = vld [vmem:[#allocation8 + $0x8] sm:$0xff]
    %v3012 = vld [vmem:[#allocation8 + $0x10] sm:$0xff]
    %v3013 = vld [vmem:[#allocation8 + $0x18] sm:$0xff]
    %v3014 = vld [vmem:[#allocation10] sm:$0xff]
    %v3015 = vld [vmem:[#allocation10 + $0x8] sm:$0xff]
    %v3016 = vld [vmem:[#allocation10 + $0x10] sm:$0xff]
    %v3017 = vld [vmem:[#allocation10 + $0x18] sm:$0xff]
    %v3018 = vld [vmem:[#allocation11] sm:$0xff]
    %v3019 = vld [vmem:[#allocation11 + $0x8] sm:$0xff]
    %v3020 = vld [vmem:[#allocation11 + $0x10] sm:$0xff]
    %v3021 = vld [vmem:[#allocation11 + $0x18] sm:$0xff]
    %v3022 = vld [vmem:[%s12] sm:$0x1]
    %v3024 = vlaneseq
    %v3025 = vshrl.u32 %v3024, 7
    %v3026 = vsub.s32 0, %v3025
    %v3027 = vrot.slane %v3022, %v3026
    %3029 = vmatprep.subr.mxu0 0.0
    %3030 = vmatpush1.msra.mxu0 %v3002
    %3031 = vmatprep.subr.mxu0 0.0
    %3032 = vmatpush1.msra.mxu0 %v3003
    %3033 = vmatprep.subr.mxu0 0.0
    %3034 = vmatpush1.msra.mxu0 %v3004
    %3035 = vmatprep.subr.mxu0 0.0
    %3036 = vmatpush1.msra.mxu0 %v3005
    %3037 = vmatprep.subr.mxu0 0.0
    %3038 = vmatpush1.msra.mxu0 0.0
    %3039 = vmatprep.subr.mxu0 0.0
    %3040 = vmatpush1.msra.mxu0 0.0
    %3041 = vmatprep.subr.mxu0 0.0
    %3042 = vmatpush1.msra.mxu0 0.0
    %3043 = vmatprep.subr.mxu0 0.0
    %3044 = vmatpush1.msra.mxu0 0.0
    %3045 = vmatprep.subr.mxu0 0.0
    %3046 = vmatpush1.msra.mxu0 0.0
    %3047 = vmatprep.subr.mxu0 0.0
    %3048 = vmatpush1.msra.mxu0 0.0
    %3049 = vmatprep.subr.mxu0 0.0
    %3050 = vmatpush1.msra.mxu0 0.0
    %3051 = vmatprep.subr.mxu0 0.0
    %3052 = vmatpush1.msra.mxu0 0.0
    %3053 = vmatprep.subr.mxu0 0.0
    %3054 = vmatpush1.msra.mxu0 0.0
    %3055 = vmatprep.subr.mxu0 0.0
    %3056 = vmatpush1.msra.mxu0 0.0
    %3057 = vmatprep.subr.mxu0 0.0
    %3058 = vmatpush1.msra.mxu0 0.0
    %3059 = vmatprep.subr.mxu0 0.0
    %3060 = vmatpush1.msra.mxu0 0.0
    %3061 = vmatprep.subr.mxu0 0.0
    %3062 = vmatpush1.msra.mxu0 0.0
    %3063 = vmatprep.subr.mxu0 0.0
    %3064 = vmatpush1.msra.mxu0 0.0
    %3065 = vmatprep.subr.mxu0 0.0
    %3066 = vmatpush1.msra.mxu0 0.0
    %3067 = vmatprep.subr.mxu0 0.0
    %3068 = vmatpush1.msra.mxu0 0.0
    %3069 = vmatprep.subr.mxu0 0.0
    %3070 = vmatpush1.msra.mxu0 0.0
    %3071 = vmatprep.subr.mxu0 0.0
    %3072 = vmatpush1.msra.mxu0 0.0
    %3073 = vmatprep.subr.mxu0 0.0
    %3074 = vmatpush1.msra.mxu0 0.0
    %3075 = vmatprep.subr.mxu0 0.0
    %3076 = vmatpush1.msra.mxu0 0.0
    %3077 = vmatprep.subr.mxu0 0.0
    %3078 = vmatpush1.msra.mxu0 0.0
    %3079 = vmatprep.subr.mxu0 0.0
    %3080 = vmatpush1.msra.mxu0 0.0
    %3081 = vmatprep.subr.mxu0 0.0
    %3082 = vmatpush1.msra.mxu0 0.0
    %3083 = vmatprep.subr.mxu0 0.0
    %3084 = vmatpush1.msra.mxu0 0.0
    %3085 = vmatprep.subr.mxu0 0.0
    %3086 = vmatpush1.msra.mxu0 0.0
    %3087 = vmatprep.subr.mxu0 0.0
    %3088 = vmatpush1.msra.mxu0 0.0
    %3089 = vmatprep.subr.mxu0 0.0
    %3090 = vmatpush1.msra.mxu0 0.0
    %3091 = vmatprep.subr.mxu0 0.0
    %3092 = vmatpush1.msra.mxu0 0.0
    %3093 = vmatprep.mubr.f32.mxu0 0.0
    %3094 = vmatmul.mubr.f32.gmra.mrb[0].mxu0 %v584
    %v3095 = vpop.f32.mrb[0].mxu0
    %v3096 = vadd.f32 %v3027, %v3095
    %v3097 = vpop.f32.mrb[0].mxu0
    %3098 = vdwg.mxu0
    %3099 = vmatprep.subr.mxu0 0.0
    %3100 = vmatpush1.msra.mxu0 %v3002
    %3101 = vmatprep.subr.mxu0 0.0
    %3102 = vmatpush1.msra.mxu0 %v3003
    %3103 = vmatprep.subr.mxu0 0.0
    %3104 = vmatpush1.msra.mxu0 %v3004
    %3105 = vmatprep.subr.mxu0 0.0
    %3106 = vmatpush1.msra.mxu0 %v3005
    %3107 = vmatprep.subr.mxu0 0.0
    %3108 = vmatpush1.msra.mxu0 0.0
    %3109 = vmatprep.subr.mxu0 0.0
    %3110 = vmatpush1.msra.mxu0 0.0
    %3111 = vmatprep.subr.mxu0 0.0
    %3112 = vmatpush1.msra.mxu0 0.0
    %3113 = vmatprep.subr.mxu0 0.0
    %3114 = vmatpush1.msra.mxu0 0.0
    %3115 = vmatprep.subr.mxu0 0.0
    %3116 = vmatpush1.msra.mxu0 0.0
    %3117 = vmatprep.subr.mxu0 0.0
    %3118 = vmatpush1.msra.mxu0 0.0
    %3119 = vmatprep.subr.mxu0 0.0
    %3120 = vmatpush1.msra.mxu0 0.0
    %3121 = vmatprep.subr.mxu0 0.0
    %3122 = vmatpush1.msra.mxu0 0.0
    %3123 = vmatprep.subr.mxu0 0.0
    %3124 = vmatpush1.msra.mxu0 0.0
    %3125 = vmatprep.subr.mxu0 0.0
    %3126 = vmatpush1.msra.mxu0 0.0
    %3127 = vmatprep.subr.mxu0 0.0
    %3128 = vmatpush1.msra.mxu0 0.0
    %3129 = vmatprep.subr.mxu0 0.0
    %3130 = vmatpush1.msra.mxu0 0.0
    %3131 = vmatprep.subr.mxu0 0.0
    %3132 = vmatpush1.msra.mxu0 0.0
    %3133 = vmatprep.subr.mxu0 0.0
    %3134 = vmatpush1.msra.mxu0 0.0
    %3135 = vmatprep.subr.mxu0 0.0
    %3136 = vmatpush1.msra.mxu0 0.0
    %3137 = vmatprep.subr.mxu0 0.0
    %3138 = vmatpush1.msra.mxu0 0.0
    %3139 = vmatprep.subr.mxu0 0.0
    %3140 = vmatpush1.msra.mxu0 0.0
    %3141 = vmatprep.subr.mxu0 0.0
    %3142 = vmatpush1.msra.mxu0 0.0
    %3143 = vmatprep.subr.mxu0 0.0
    %3144 = vmatpush1.msra.mxu0 0.0
    %3145 = vmatprep.subr.mxu0 0.0
    %3146 = vmatpush1.msra.mxu0 0.0
    %3147 = vmatprep.subr.mxu0 0.0
    %3148 = vmatpush1.msra.mxu0 0.0
    %3149 = vmatprep.subr.mxu0 0.0
    %3150 = vmatpush1.msra.mxu0 0.0
    %3151 = vmatprep.subr.mxu0 0.0
    %3152 = vmatpush1.msra.mxu0 0.0
    %3153 = vmatprep.subr.mxu0 0.0
    %3154 = vmatpush1.msra.mxu0 0.0
    %3155 = vmatprep.subr.mxu0 0.0
    %3156 = vmatpush1.msra.mxu0 0.0
    %3157 = vmatprep.subr.mxu0 0.0
    %3158 = vmatpush1.msra.mxu0 0.0
    %3159 = vmatprep.subr.mxu0 0.0
    %3160 = vmatpush1.msra.mxu0 0.0
    %3161 = vmatprep.subr.mxu0 0.0
    %3162 = vmatpush1.msra.mxu0 0.0
    %3163 = vmatprep.mubr.f32.mxu0 0.0
    %3164 = vmatmul.mubr.f32.gmra.mrb[0].mxu0 %v931
    %v3165 = vpop.f32.mrb[0].mxu0
    %v3166 = vadd.f32 %v3027, %v3165
    %v3167 = vpop.f32.mrb[0].mxu0
    %3168 = vdwg.mxu0
    %3169 = vmatprep.subr.mxu0 0.0
    %3170 = vmatpush1.msra.mxu0 %v3002
    %3171 = vmatprep.subr.mxu0 0.0
    %3172 = vmatpush1.msra.mxu0 %v3003
    %3173 = vmatprep.subr.mxu0 0.0
    %3174 = vmatpush1.msra.mxu0 %v3004
    %3175 = vmatprep.subr.mxu0 0.0
    %3176 = vmatpush1.msra.mxu0 %v3005
    %3177 = vmatprep.subr.mxu0 0.0
    %3178 = vmatpush1.msra.mxu0 0.0
    %3179 = vmatprep.subr.mxu0 0.0
    %3180 = vmatpush1.msra.mxu0 0.0
    %3181 = vmatprep.subr.mxu0 0.0
    %3182 = vmatpush1.msra.mxu0 0.0
    %3183 = vmatprep.subr.mxu0 0.0
    %3184 = vmatpush1.msra.mxu0 0.0
    %3185 = vmatprep.subr.mxu0 0.0
    %3186 = vmatpush1.msra.mxu0 0.0
    %3187 = vmatprep.subr.mxu0 0.0
    %3188 = vmatpush1.msra.mxu0 0.0
    %3189 = vmatprep.subr.mxu0 0.0
    %3190 = vmatpush1.msra.mxu0 0.0
    %3191 = vmatprep.subr.mxu0 0.0
    %3192 = vmatpush1.msra.mxu0 0.0
    %3193 = vmatprep.subr.mxu0 0.0
    %3194 = vmatpush1.msra.mxu0 0.0
    %3195 = vmatprep.subr.mxu0 0.0
    %3196 = vmatpush1.msra.mxu0 0.0
    %3197 = vmatprep.subr.mxu0 0.0
    %3198 = vmatpush1.msra.mxu0 0.0
    %3199 = vmatprep.subr.mxu0 0.0
    %3200 = vmatpush1.msra.mxu0 0.0
    %3201 = vmatprep.subr.mxu0 0.0
    %3202 = vmatpush1.msra.mxu0 0.0
    %3203 = vmatprep.subr.mxu0 0.0
    %3204 = vmatpush1.msra.mxu0 0.0
    %3205 = vmatprep.subr.mxu0 0.0
    %3206 = vmatpush1.msra.mxu0 0.0
    %3207 = vmatprep.subr.mxu0 0.0
    %3208 = vmatpush1.msra.mxu0 0.0
    %3209 = vmatprep.subr.mxu0 0.0
    %3210 = vmatpush1.msra.mxu0 0.0
    %3211 = vmatprep.subr.mxu0 0.0
    %3212 = vmatpush1.msra.mxu0 0.0
    %3213 = vmatprep.subr.mxu0 0.0
    %3214 = vmatpush1.msra.mxu0 0.0
    %3215 = vmatprep.subr.mxu0 0.0
    %3216 = vmatpush1.msra.mxu0 0.0
    %3217 = vmatprep.subr.mxu0 0.0
    %3218 = vmatpush1.msra.mxu0 0.0
    %3219 = vmatprep.subr.mxu0 0.0
    %3220 = vmatpush1.msra.mxu0 0.0
    %3221 = vmatprep.subr.mxu0 0.0
    %3222 = vmatpush1.msra.mxu0 0.0
    %3223 = vmatprep.subr.mxu0 0.0
    %3224 = vmatpush1.msra.mxu0 0.0
    %3225 = vmatprep.subr.mxu0 0.0
    %3226 = vmatpush1.msra.mxu0 0.0
    %3227 = vmatprep.subr.mxu0 0.0
    %3228 = vmatpush1.msra.mxu0 0.0
    %3229 = vmatprep.subr.mxu0 0.0
    %3230 = vmatpush1.msra.mxu0 0.0
    %3231 = vmatprep.subr.mxu0 0.0
    %3232 = vmatpush1.msra.mxu0 0.0
    %3233 = vmatprep.mubr.f32.mxu0 0.0
    %3234 = vmatmul.mubr.f32.gmra.mrb[0].mxu0 %v1278
    %v3235 = vpop.f32.mrb[0].mxu0
    %v3236 = vadd.f32 %v3027, %v3235
    %v3237 = vpop.f32.mrb[0].mxu0
    %3238 = vdwg.mxu0
    %3239 = vmatprep.subr.mxu0 0.0
    %3240 = vmatpush1.msra.mxu0 %v3002
    %3241 = vmatprep.subr.mxu0 0.0
    %3242 = vmatpush1.msra.mxu0 %v3003
    %3243 = vmatprep.subr.mxu0 0.0
    %3244 = vmatpush1.msra.mxu0 %v3004
    %3245 = vmatprep.subr.mxu0 0.0
    %3246 = vmatpush1.msra.mxu0 %v3005
    %3247 = vmatprep.subr.mxu0 0.0
    %3248 = vmatpush1.msra.mxu0 0.0
    %3249 = vmatprep.subr.mxu0 0.0
    %3250 = vmatpush1.msra.mxu0 0.0
    %3251 = vmatprep.subr.mxu0 0.0
    %3252 = vmatpush1.msra.mxu0 0.0
    %3253 = vmatprep.subr.mxu0 0.0
    %3254 = vmatpush1.msra.mxu0 0.0
    %3255 = vmatprep.subr.mxu0 0.0
    %3256 = vmatpush1.msra.mxu0 0.0
    %3257 = vmatprep.subr.mxu0 0.0
    %3258 = vmatpush1.msra.mxu0 0.0
    %3259 = vmatprep.subr.mxu0 0.0
    %3260 = vmatpush1.msra.mxu0 0.0
    %3261 = vmatprep.subr.mxu0 0.0
    %3262 = vmatpush1.msra.mxu0 0.0
    %3263 = vmatprep.subr.mxu0 0.0
    %3264 = vmatpush1.msra.mxu0 0.0
    %3265 = vmatprep.subr.mxu0 0.0
    %3266 = vmatpush1.msra.mxu0 0.0
    %3267 = vmatprep.subr.mxu0 0.0
    %3268 = vmatpush1.msra.mxu0 0.0
    %3269 = vmatprep.subr.mxu0 0.0
    %3270 = vmatpush1.msra.mxu0 0.0
    %3271 = vmatprep.subr.mxu0 0.0
    %3272 = vmatpush1.msra.mxu0 0.0
    %3273 = vmatprep.subr.mxu0 0.0
    %3274 = vmatpush1.msra.mxu0 0.0
    %3275 = vmatprep.subr.mxu0 0.0
    %3276 = vmatpush1.msra.mxu0 0.0
    %3277 = vmatprep.subr.mxu0 0.0
    %3278 = vmatpush1.msra.mxu0 0.0
    %3279 = vmatprep.subr.mxu0 0.0
    %3280 = vmatpush1.msra.mxu0 0.0
    %3281 = vmatprep.subr.mxu0 0.0
    %3282 = vmatpush1.msra.mxu0 0.0
    %3283 = vmatprep.subr.mxu0 0.0
    %3284 = vmatpush1.msra.mxu0 0.0
    %3285 = vmatprep.subr.mxu0 0.0
    %3286 = vmatpush1.msra.mxu0 0.0
    %3287 = vmatprep.subr.mxu0 0.0
    %3288 = vmatpush1.msra.mxu0 0.0
    %3289 = vmatprep.subr.mxu0 0.0
    %3290 = vmatpush1.msra.mxu0 0.0
    %3291 = vmatprep.subr.mxu0 0.0
    %3292 = vmatpush1.msra.mxu0 0.0
    %3293 = vmatprep.subr.mxu0 0.0
    %3294 = vmatpush1.msra.mxu0 0.0
    %3295 = vmatprep.subr.mxu0 0.0
    %3296 = vmatpush1.msra.mxu0 0.0
    %3297 = vmatprep.subr.mxu0 0.0
    %3298 = vmatpush1.msra.mxu0 0.0
    %3299 = vmatprep.subr.mxu0 0.0
    %3300 = vmatpush1.msra.mxu0 0.0
    %3301 = vmatprep.subr.mxu0 0.0
    %3302 = vmatpush1.msra.mxu0 0.0
    %3303 = vmatprep.mubr.f32.mxu0 0.0
    %3304 = vmatmul.mubr.f32.gmra.mrb[0].mxu0 %v1625
    %v3305 = vpop.f32.mrb[0].mxu0
    %v3306 = vadd.f32 %v3027, %v3305
    %v3307 = vpop.f32.mrb[0].mxu0
    %3308 = vdwg.mxu0
    %3309 = vmatprep.subr.mxu0 0.0
    %3310 = vmatpush1.msra.mxu0 %v3002
    %3311 = vmatprep.subr.mxu0 0.0
    %3312 = vmatpush1.msra.mxu0 %v3003
    %3313 = vmatprep.subr.mxu0 0.0
    %3314 = vmatpush1.msra.mxu0 %v3004
    %3315 = vmatprep.subr.mxu0 0.0
    %3316 = vmatpush1.msra.mxu0 %v3005
    %3317 = vmatprep.subr.mxu0 0.0
    %3318 = vmatpush1.msra.mxu0 0.0
    %3319 = vmatprep.subr.mxu0 0.0
    %3320 = vmatpush1.msra.mxu0 0.0
    %3321 = vmatprep.subr.mxu0 0.0
    %3322 = vmatpush1.msra.mxu0 0.0
    %3323 = vmatprep.subr.mxu0 0.0
    %3324 = vmatpush1.msra.mxu0 0.0
    %3325 = vmatprep.subr.mxu0 0.0
    %3326 = vmatpush1.msra.mxu0 0.0
    %3327 = vmatprep.subr.mxu0 0.0
    %3328 = vmatpush1.msra.mxu0 0.0
    %3329 = vmatprep.subr.mxu0 0.0
    %3330 = vmatpush1.msra.mxu0 0.0
    %3331 = vmatprep.subr.mxu0 0.0
    %3332 = vmatpush1.msra.mxu0 0.0
    %3333 = vmatprep.subr.mxu0 0.0
    %3334 = vmatpush1.msra.mxu0 0.0
    %3335 = vmatprep.subr.mxu0 0.0
    %3336 = vmatpush1.msra.mxu0 0.0
    %3337 = vmatprep.subr.mxu0 0.0
    %3338 = vmatpush1.msra.mxu0 0.0
    %3339 = vmatprep.subr.mxu0 0.0
    %3340 = vmatpush1.msra.mxu0 0.0
    %3341 = vmatprep.subr.mxu0 0.0
    %3342 = vmatpush1.msra.mxu0 0.0
    %3343 = vmatprep.subr.mxu0 0.0
    %3344 = vmatpush1.msra.mxu0 0.0
    %3345 = vmatprep.subr.mxu0 0.0
    %3346 = vmatpush1.msra.mxu0 0.0
    %3347 = vmatprep.subr.mxu0 0.0
    %3348 = vmatpush1.msra.mxu0 0.0
    %3349 = vmatprep.subr.mxu0 0.0
    %3350 = vmatpush1.msra.mxu0 0.0
    %3351 = vmatprep.subr.mxu0 0.0
    %3352 = vmatpush1.msra.mxu0 0.0
    %3353 = vmatprep.subr.mxu0 0.0
    %3354 = vmatpush1.msra.mxu0 0.0
    %3355 = vmatprep.subr.mxu0 0.0
    %3356 = vmatpush1.msra.mxu0 0.0
    %3357 = vmatprep.subr.mxu0 0.0
    %3358 = vmatpush1.msra.mxu0 0.0
    %3359 = vmatprep.subr.mxu0 0.0
    %3360 = vmatpush1.msra.mxu0 0.0
    %3361 = vmatprep.subr.mxu0 0.0
    %3362 = vmatpush1.msra.mxu0 0.0
    %3363 = vmatprep.subr.mxu0 0.0
    %3364 = vmatpush1.msra.mxu0 0.0
    %3365 = vmatprep.subr.mxu0 0.0
    %3366 = vmatpush1.msra.mxu0 0.0
    %3367 = vmatprep.subr.mxu0 0.0
    %3368 = vmatpush1.msra.mxu0 0.0
    %3369 = vmatprep.subr.mxu0 0.0
    %3370 = vmatpush1.msra.mxu0 0.0
    %3371 = vmatprep.subr.mxu0 0.0
    %3372 = vmatpush1.msra.mxu0 0.0
    %3373 = vmatprep.mubr.f32.mxu0 0.0
    %3374 = vmatmul.mubr.f32.gmra.mrb[0].mxu0 %v1965
    %v3375 = vpop.f32.mrb[0].mxu0
    %v3376 = vadd.f32 %v3027, %v3375
    %v3377 = vpop.f32.mrb[0].mxu0
    %3378 = vdwg.mxu0
    %3379 = vmatprep.subr.mxu0 0.0
    %3380 = vmatpush1.msra.mxu0 %v3002
    %3381 = vmatprep.subr.mxu0 0.0
    %3382 = vmatpush1.msra.mxu0 %v3003
    %3383 = vmatprep.subr.mxu0 0.0
    %3384 = vmatpush1.msra.mxu0 %v3004
    %3385 = vmatprep.subr.mxu0 0.0
    %3386 = vmatpush1.msra.mxu0 %v3005
    %3387 = vmatprep.subr.mxu0 0.0
    %3388 = vmatpush1.msra.mxu0 0.0
    %3389 = vmatprep.subr.mxu0 0.0
    %3390 = vmatpush1.msra.mxu0 0.0
    %3391 = vmatprep.subr.mxu0 0.0
    %3392 = vmatpush1.msra.mxu0 0.0
    %3393 = vmatprep.subr.mxu0 0.0
    %3394 = vmatpush1.msra.mxu0 0.0
    %3395 = vmatprep.subr.mxu0 0.0
    %3396 = vmatpush1.msra.mxu0 0.0
    %3397 = vmatprep.subr.mxu0 0.0
    %3398 = vmatpush1.msra.mxu0 0.0
    %3399 = vmatprep.subr.mxu0 0.0
    %3400 = vmatpush1.msra.mxu0 0.0
    %3401 = vmatprep.subr.mxu0 0.0
    %3402 = vmatpush1.msra.mxu0 0.0
    %3403 = vmatprep.subr.mxu0 0.0
    %3404 = vmatpush1.msra.mxu0 0.0
    %3405 = vmatprep.subr.mxu0 0.0
    %3406 = vmatpush1.msra.mxu0 0.0
    %3407 = vmatprep.subr.mxu0 0.0
    %3408 = vmatpush1.msra.mxu0 0.0
    %3409 = vmatprep.subr.mxu0 0.0
    %3410 = vmatpush1.msra.mxu0 0.0
    %3411 = vmatprep.subr.mxu0 0.0
    %3412 = vmatpush1.msra.mxu0 0.0
    %3413 = vmatprep.subr.mxu0 0.0
    %3414 = vmatpush1.msra.mxu0 0.0
    %3415 = vmatprep.subr.mxu0 0.0
    %3416 = vmatpush1.msra.mxu0 0.0
    %3417 = vmatprep.subr.mxu0 0.0
    %3418 = vmatpush1.msra.mxu0 0.0
    %3419 = vmatprep.subr.mxu0 0.0
    %3420 = vmatpush1.msra.mxu0 0.0
    %3421 = vmatprep.subr.mxu0 0.0
    %3422 = vmatpush1.msra.mxu0 0.0
    %3423 = vmatprep.subr.mxu0 0.0
    %3424 = vmatpush1.msra.mxu0 0.0
    %3425 = vmatprep.subr.mxu0 0.0
    %3426 = vmatpush1.msra.mxu0 0.0
    %3427 = vmatprep.subr.mxu0 0.0
    %3428 = vmatpush1.msra.mxu0 0.0
    %3429 = vmatprep.subr.mxu0 0.0
    %3430 = vmatpush1.msra.mxu0 0.0
    %3431 = vmatprep.subr.mxu0 0.0
    %3432 = vmatpush1.msra.mxu0 0.0
    %3433 = vmatprep.subr.mxu0 0.0
    %3434 = vmatpush1.msra.mxu0 0.0
    %3435 = vmatprep.subr.mxu0 0.0
    %3436 = vmatpush1.msra.mxu0 0.0
    %3437 = vmatprep.subr.mxu0 0.0
    %3438 = vmatpush1.msra.mxu0 0.0
    %3439 = vmatprep.subr.mxu0 0.0
    %3440 = vmatpush1.msra.mxu0 0.0
    %3441 = vmatprep.subr.mxu0 0.0
    %3442 = vmatpush1.msra.mxu0 0.0
    %3443 = vmatprep.mubr.f32.mxu0 0.0
    %3444 = vmatmul.mubr.f32.gmra.mrb[0].mxu0 %v2312
    %v3445 = vpop.f32.mrb[0].mxu0
    %v3446 = vadd.f32 %v3027, %v3445
    %v3447 = vpop.f32.mrb[0].mxu0
    %3448 = vdwg.mxu0
    %3449 = vmatprep.subr.mxu0 0.0
    %3450 = vmatpush1.msra.mxu0 %v3002
    %3451 = vmatprep.subr.mxu0 0.0
    %3452 = vmatpush1.msra.mxu0 %v3003
    %3453 = vmatprep.subr.mxu0 0.0
    %3454 = vmatpush1.msra.mxu0 %v3004
    %3455 = vmatprep.subr.mxu0 0.0
    %3456 = vmatpush1.msra.mxu0 %v3005
    %3457 = vmatprep.subr.mxu0 0.0
    %3458 = vmatpush1.msra.mxu0 0.0
    %3459 = vmatprep.subr.mxu0 0.0
    %3460 = vmatpush1.msra.mxu0 0.0
    %3461 = vmatprep.subr.mxu0 0.0
    %3462 = vmatpush1.msra.mxu0 0.0
    %3463 = vmatprep.subr.mxu0 0.0
    %3464 = vmatpush1.msra.mxu0 0.0
    %3465 = vmatprep.subr.mxu0 0.0
    %3466 = vmatpush1.msra.mxu0 0.0
    %3467 = vmatprep.subr.mxu0 0.0
    %3468 = vmatpush1.msra.mxu0 0.0
    %3469 = vmatprep.subr.mxu0 0.0
    %3470 = vmatpush1.msra.mxu0 0.0
    %3471 = vmatprep.subr.mxu0 0.0
    %3472 = vmatpush1.msra.mxu0 0.0
    %3473 = vmatprep.subr.mxu0 0.0
    %3474 = vmatpush1.msra.mxu0 0.0
    %3475 = vmatprep.subr.mxu0 0.0
    %3476 = vmatpush1.msra.mxu0 0.0
    %3477 = vmatprep.subr.mxu0 0.0
    %3478 = vmatpush1.msra.mxu0 0.0
    %3479 = vmatprep.subr.mxu0 0.0
    %3480 = vmatpush1.msra.mxu0 0.0
    %3481 = vmatprep.subr.mxu0 0.0
    %3482 = vmatpush1.msra.mxu0 0.0
    %3483 = vmatprep.subr.mxu0 0.0
    %3484 = vmatpush1.msra.mxu0 0.0
    %3485 = vmatprep.subr.mxu0 0.0
    %3486 = vmatpush1.msra.mxu0 0.0
    %3487 = vmatprep.subr.mxu0 0.0
    %3488 = vmatpush1.msra.mxu0 0.0
    %3489 = vmatprep.subr.mxu0 0.0
    %3490 = vmatpush1.msra.mxu0 0.0
    %3491 = vmatprep.subr.mxu0 0.0
    %3492 = vmatpush1.msra.mxu0 0.0
    %3493 = vmatprep.subr.mxu0 0.0
    %3494 = vmatpush1.msra.mxu0 0.0
    %3495 = vmatprep.subr.mxu0 0.0
    %3496 = vmatpush1.msra.mxu0 0.0
    %3497 = vmatprep.subr.mxu0 0.0
    %3498 = vmatpush1.msra.mxu0 0.0
    %3499 = vmatprep.subr.mxu0 0.0
    %3500 = vmatpush1.msra.mxu0 0.0
    %3501 = vmatprep.subr.mxu0 0.0
    %3502 = vmatpush1.msra.mxu0 0.0
    %3503 = vmatprep.subr.mxu0 0.0
    %3504 = vmatpush1.msra.mxu0 0.0
    %3505 = vmatprep.subr.mxu0 0.0
    %3506 = vmatpush1.msra.mxu0 0.0
    %3507 = vmatprep.subr.mxu0 0.0
    %3508 = vmatpush1.msra.mxu0 0.0
    %3509 = vmatprep.subr.mxu0 0.0
    %3510 = vmatpush1.msra.mxu0 0.0
    %3511 = vmatprep.subr.mxu0 0.0
    %3512 = vmatpush1.msra.mxu0 0.0
    %3513 = vmatprep.mubr.f32.mxu0 0.0
    %3514 = vmatmul.mubr.f32.gmra.mrb[0].mxu0 %v2659
    %v3515 = vpop.f32.mrb[0].mxu0
    %v3516 = vadd.f32 %v3027, %v3515
    %v3517 = vpop.f32.mrb[0].mxu0
    %3518 = vdwg.mxu0
    %v3520 = vrot.slane %v3001, 6
    %3521 = vrot.lane.b32.xlu0 %v3520, 32
    %v3522 = vpop.permute.xlu0 %3521
    %v3523 = vsel %vm164, %v3522, 0
    %3525 = vmatprep.subr.mxu0 0.0
    %3526 = vmatpush1.msra.mxu0 %v3002
    %3527 = vmatprep.subr.mxu0 0.0
    %3528 = vmatpush1.msra.mxu0 %v3003
    %3529 = vmatprep.subr.mxu0 0.0
    %3530 = vmatpush1.msra.mxu0 %v3004
    %3531 = vmatprep.subr.mxu0 0.0
    %3532 = vmatpush1.msra.mxu0 %v3005
    %3533 = vmatprep.subr.mxu0 0.0
    %3534 = vmatpush1.msra.mxu0 0.0
    %3535 = vmatprep.subr.mxu0 0.0
    %3536 = vmatpush1.msra.mxu0 0.0
    %3537 = vmatprep.subr.mxu0 0.0
    %3538 = vmatpush1.msra.mxu0 0.0
    %3539 = vmatprep.subr.mxu0 0.0
    %3540 = vmatpush1.msra.mxu0 0.0
    %3541 = vmatprep.subr.mxu0 0.0
    %3542 = vmatpush1.msra.mxu0 0.0
    %3543 = vmatprep.subr.mxu0 0.0
    %3544 = vmatpush1.msra.mxu0 0.0
    %3545 = vmatprep.subr.mxu0 0.0
    %3546 = vmatpush1.msra.mxu0 0.0
    %3547 = vmatprep.subr.mxu0 0.0
    %3548 = vmatpush1.msra.mxu0 0.0
    %3549 = vmatprep.subr.mxu0 0.0
    %3550 = vmatpush1.msra.mxu0 0.0
    %3551 = vmatprep.subr.mxu0 0.0
    %3552 = vmatpush1.msra.mxu0 0.0
    %3553 = vmatprep.subr.mxu0 0.0
    %3554 = vmatpush1.msra.mxu0 0.0
    %3555 = vmatprep.subr.mxu0 0.0
    %3556 = vmatpush1.msra.mxu0 0.0
    %3557 = vmatprep.subr.mxu0 0.0
    %3558 = vmatpush1.msra.mxu0 0.0
    %3559 = vmatprep.subr.mxu0 0.0
    %3560 = vmatpush1.msra.mxu0 0.0
    %3561 = vmatprep.subr.mxu0 0.0
    %3562 = vmatpush1.msra.mxu0 0.0
    %3563 = vmatprep.subr.mxu0 0.0
    %3564 = vmatpush1.msra.mxu0 0.0
    %3565 = vmatprep.subr.mxu0 0.0
    %3566 = vmatpush1.msra.mxu0 0.0
    %3567 = vmatprep.subr.mxu0 0.0
    %3568 = vmatpush1.msra.mxu0 0.0
    %3569 = vmatprep.subr.mxu0 0.0
    %3570 = vmatpush1.msra.mxu0 0.0
    %3571 = vmatprep.subr.mxu0 0.0
    %3572 = vmatpush1.msra.mxu0 0.0
    %3573 = vmatprep.subr.mxu0 0.0
    %3574 = vmatpush1.msra.mxu0 0.0
    %3575 = vmatprep.subr.mxu0 0.0
    %3576 = vmatpush1.msra.mxu0 0.0
    %3577 = vmatprep.subr.mxu0 0.0
    %3578 = vmatpush1.msra.mxu0 0.0
    %3579 = vmatprep.subr.mxu0 0.0
    %3580 = vmatpush1.msra.mxu0 0.0
    %3581 = vmatprep.subr.mxu0 0.0
    %3582 = vmatpush1.msra.mxu0 0.0
    %3583 = vmatprep.subr.mxu0 0.0
    %3584 = vmatpush1.msra.mxu0 0.0
    %3585 = vmatprep.subr.mxu0 0.0
    %3586 = vmatpush1.msra.mxu0 0.0
    %3587 = vmatprep.subr.mxu0 0.0
    %3588 = vmatpush1.msra.mxu0 0.0
    %3589 = vmatprep.mubr.f32.mxu0 0.0
    %3590 = vmatmul.mubr.f32.gmra.mrb[0].mxu0 %v3523
    %v3591 = vpop.f32.mrb[0].mxu0
    %v3592 = vadd.f32 %v3027, %v3591
    %v3593 = vpop.f32.mrb[0].mxu0
    %3594 = vdwg.mxu0
    %3595 = vmatprep.subr.mxu0 0.0
    %3596 = vmatpush1.msra.mxu0 %v3006
    %3597 = vmatprep.subr.mxu0 0.0
    %3598 = vmatpush1.msra.mxu0 %v3007
    %3599 = vmatprep.subr.mxu0 0.0
    %3600 = vmatpush1.msra.mxu0 %v3008
    %3601 = vmatprep.subr.mxu0 0.0
    %3602 = vmatpush1.msra.mxu0 %v3009
    %3603 = vmatprep.subr.mxu0 0.0
    %3604 = vmatpush1.msra.mxu0 0.0
    %3605 = vmatprep.subr.mxu0 0.0
    %3606 = vmatpush1.msra.mxu0 0.0
    %3607 = vmatprep.subr.mxu0 0.0
    %3608 = vmatpush1.msra.mxu0 0.0
    %3609 = vmatprep.subr.mxu0 0.0
    %3610 = vmatpush1.msra.mxu0 0.0
    %3611 = vmatprep.subr.mxu0 0.0
    %3612 = vmatpush1.msra.mxu0 0.0
    %3613 = vmatprep.subr.mxu0 0.0
    %3614 = vmatpush1.msra.mxu0 0.0
    %3615 = vmatprep.subr.mxu0 0.0
    %3616 = vmatpush1.msra.mxu0 0.0
    %3617 = vmatprep.subr.mxu0 0.0
    %3618 = vmatpush1.msra.mxu0 0.0
    %3619 = vmatprep.subr.mxu0 0.0
    %3620 = vmatpush1.msra.mxu0 0.0
    %3621 = vmatprep.subr.mxu0 0.0
    %3622 = vmatpush1.msra.mxu0 0.0
    %3623 = vmatprep.subr.mxu0 0.0
    %3624 = vmatpush1.msra.mxu0 0.0
    %3625 = vmatprep.subr.mxu0 0.0
    %3626 = vmatpush1.msra.mxu0 0.0
    %3627 = vmatprep.subr.mxu0 0.0
    %3628 = vmatpush1.msra.mxu0 0.0
    %3629 = vmatprep.subr.mxu0 0.0
    %3630 = vmatpush1.msra.mxu0 0.0
    %3631 = vmatprep.subr.mxu0 0.0
    %3632 = vmatpush1.msra.mxu0 0.0
    %3633 = vmatprep.subr.mxu0 0.0
    %3634 = vmatpush1.msra.mxu0 0.0
    %3635 = vmatprep.subr.mxu0 0.0
    %3636 = vmatpush1.msra.mxu0 0.0
    %3637 = vmatprep.subr.mxu0 0.0
    %3638 = vmatpush1.msra.mxu0 0.0
    %3639 = vmatprep.subr.mxu0 0.0
    %3640 = vmatpush1.msra.mxu0 0.0
    %3641 = vmatprep.subr.mxu0 0.0
    %3642 = vmatpush1.msra.mxu0 0.0
    %3643 = vmatprep.subr.mxu0 0.0
    %3644 = vmatpush1.msra.mxu0 0.0
    %3645 = vmatprep.subr.mxu0 0.0
    %3646 = vmatpush1.msra.mxu0 0.0
    %3647 = vmatprep.subr.mxu0 0.0
    %3648 = vmatpush1.msra.mxu0 0.0
    %3649 = vmatprep.subr.mxu0 0.0
    %3650 = vmatpush1.msra.mxu0 0.0
    %3651 = vmatprep.subr.mxu0 0.0
    %3652 = vmatpush1.msra.mxu0 0.0
    %3653 = vmatprep.subr.mxu0 0.0
    %3654 = vmatpush1.msra.mxu0 0.0
    %3655 = vmatprep.subr.mxu0 0.0
    %3656 = vmatpush1.msra.mxu0 0.0
    %3657 = vmatprep.subr.mxu0 0.0
    %3658 = vmatpush1.msra.mxu0 0.0
    %3659 = vmatprep.mubr.f32.mxu0 0.0
    %3660 = vmatmul.mubr.f32.gmra.mrb[0].mxu0 %v247
    %v3661 = vpop.f32.mrb[0].mxu0
    %v3662 = vadd.f32 0.0, %v3661
    %v3663 = vpop.f32.mrb[0].mxu0
    %3664 = vdwg.mxu0
    %v3665 = vadd.f32 %v3096, %v3662
    %v3666 = vxor.u32 %v3665, 2147483648
    %v3667 = vmul.f32 %v3666, 1.442695
    %v3668 = vpow.pop %v3667
    %v3669 = vadd.f32 %v3668, 1.0
    %v3670 = vrcp.pop %v3669
    %v3671 = vmul.f32 1.0, %v3670
    %3672 = vmatprep.subr.mxu0 0.0
    %3673 = vmatpush1.msra.mxu0 %v3010
    %3674 = vmatprep.subr.mxu0 0.0
    %3675 = vmatpush1.msra.mxu0 %v3011
    %3676 = vmatprep.subr.mxu0 0.0
    %3677 = vmatpush1.msra.mxu0 %v3012
    %3678 = vmatprep.subr.mxu0 0.0
    %3679 = vmatpush1.msra.mxu0 %v3013
    %3680 = vmatprep.subr.mxu0 0.0
    %3681 = vmatpush1.msra.mxu0 0.0
    %3682 = vmatprep.subr.mxu0 0.0
    %3683 = vmatpush1.msra.mxu0 0.0
    %3684 = vmatprep.subr.mxu0 0.0
    %3685 = vmatpush1.msra.mxu0 0.0
    %3686 = vmatprep.subr.mxu0 0.0
    %3687 = vmatpush1.msra.mxu0 0.0
    %3688 = vmatprep.subr.mxu0 0.0
    %3689 = vmatpush1.msra.mxu0 0.0
    %3690 = vmatprep.subr.mxu0 0.0
    %3691 = vmatpush1.msra.mxu0 0.0
    %3692 = vmatprep.subr.mxu0 0.0
    %3693 = vmatpush1.msra.mxu0 0.0
    %3694 = vmatprep.subr.mxu0 0.0
    %3695 = vmatpush1.msra.mxu0 0.0
    %3696 = vmatprep.subr.mxu0 0.0
    %3697 = vmatpush1.msra.mxu0 0.0
    %3698 = vmatprep.subr.mxu0 0.0
    %3699 = vmatpush1.msra.mxu0 0.0
    %3700 = vmatprep.subr.mxu0 0.0
    %3701 = vmatpush1.msra.mxu0 0.0
    %3702 = vmatprep.subr.mxu0 0.0
    %3703 = vmatpush1.msra.mxu0 0.0
    %3704 = vmatprep.subr.mxu0 0.0
    %3705 = vmatpush1.msra.mxu0 0.0
    %3706 = vmatprep.subr.mxu0 0.0
    %3707 = vmatpush1.msra.mxu0 0.0
    %3708 = vmatprep.subr.mxu0 0.0
    %3709 = vmatpush1.msra.mxu0 0.0
    %3710 = vmatprep.subr.mxu0 0.0
    %3711 = vmatpush1.msra.mxu0 0.0
    %3712 = vmatprep.subr.mxu0 0.0
    %3713 = vmatpush1.msra.mxu0 0.0
    %3714 = vmatprep.subr.mxu0 0.0
    %3715 = vmatpush1.msra.mxu0 0.0
    %3716 = vmatprep.subr.mxu0 0.0
    %3717 = vmatpush1.msra.mxu0 0.0
    %3718 = vmatprep.subr.mxu0 0.0
    %3719 = vmatpush1.msra.mxu0 0.0
    %3720 = vmatprep.subr.mxu0 0.0
    %3721 = vmatpush1.msra.mxu0 0.0
    %3722 = vmatprep.subr.mxu0 0.0
    %3723 = vmatpush1.msra.mxu0 0.0
    %3724 = vmatprep.subr.mxu0 0.0
    %3725 = vmatpush1.msra.mxu0 0.0
    %3726 = vmatprep.subr.mxu0 0.0
    %3727 = vmatpush1.msra.mxu0 0.0
    %3728 = vmatprep.subr.mxu0 0.0
    %3729 = vmatpush1.msra.mxu0 0.0
    %3730 = vmatprep.subr.mxu0 0.0
    %3731 = vmatpush1.msra.mxu0 0.0
    %3732 = vmatprep.subr.mxu0 0.0
    %3733 = vmatpush1.msra.mxu0 0.0
    %3734 = vmatprep.subr.mxu0 0.0
    %3735 = vmatpush1.msra.mxu0 0.0
    %3736 = vmatprep.mubr.f32.mxu0 0.0
    %3737 = vmatmul.mubr.f32.gmra.mrb[0].mxu0 %v247
    %v3738 = vpop.f32.mrb[0].mxu0
    %v3739 = vadd.f32 0.0, %v3738
    %v3740 = vpop.f32.mrb[0].mxu0
    %3741 = vdwg.mxu0
    %3743 = vrot.lane.b32.xlu0 %v3739, 32
    %v3744 = vpop.permute.xlu0 %3743
    %v3746 = vadd.f32 %v3096, %v3744
    %v3747 = vxor.u32 %v3746, 2147483648
    %v3748 = vmul.f32 %v3747, 1.442695
    %v3749 = vpow.pop %v3748
    %v3750 = vadd.f32 %v3749, 1.0
    %v3751 = vrcp.pop %v3750
    %v3752 = vmul.f32 1.0, %v3751
    %3753 = vmatprep.subr.mxu0 0.0
    %3754 = vmatpush1.msra.mxu0 %v3014
    %3755 = vmatprep.subr.mxu0 0.0
    %3756 = vmatpush1.msra.mxu0 %v3015
    %3757 = vmatprep.subr.mxu0 0.0
    %3758 = vmatpush1.msra.mxu0 %v3016
    %3759 = vmatprep.subr.mxu0 0.0
    %3760 = vmatpush1.msra.mxu0 %v3017
    %3761 = vmatprep.subr.mxu0 0.0
    %3762 = vmatpush1.msra.mxu0 0.0
    %3763 = vmatprep.subr.mxu0 0.0
    %3764 = vmatpush1.msra.mxu0 0.0
    %3765 = vmatprep.subr.mxu0 0.0
    %3766 = vmatpush1.msra.mxu0 0.0
    %3767 = vmatprep.subr.mxu0 0.0
    %3768 = vmatpush1.msra.mxu0 0.0
    %3769 = vmatprep.subr.mxu0 0.0
    %3770 = vmatpush1.msra.mxu0 0.0
    %3771 = vmatprep.subr.mxu0 0.0
    %3772 = vmatpush1.msra.mxu0 0.0
    %3773 = vmatprep.subr.mxu0 0.0
    %3774 = vmatpush1.msra.mxu0 0.0
    %3775 = vmatprep.subr.mxu0 0.0
    %3776 = vmatpush1.msra.mxu0 0.0
    %3777 = vmatprep.subr.mxu0 0.0
    %3778 = vmatpush1.msra.mxu0 0.0
    %3779 = vmatprep.subr.mxu0 0.0
    %3780 = vmatpush1.msra.mxu0 0.0
    %3781 = vmatprep.subr.mxu0 0.0
    %3782 = vmatpush1.msra.mxu0 0.0
    %3783 = vmatprep.subr.mxu0 0.0
    %3784 = vmatpush1.msra.mxu0 0.0
    %3785 = vmatprep.subr.mxu0 0.0
    %3786 = vmatpush1.msra.mxu0 0.0
    %3787 = vmatprep.subr.mxu0 0.0
    %3788 = vmatpush1.msra.mxu0 0.0
    %3789 = vmatprep.subr.mxu0 0.0
    %3790 = vmatpush1.msra.mxu0 0.0
    %3791 = vmatprep.subr.mxu0 0.0
    %3792 = vmatpush1.msra.mxu0 0.0
    %3793 = vmatprep.subr.mxu0 0.0
    %3794 = vmatpush1.msra.mxu0 0.0
    %3795 = vmatprep.subr.mxu0 0.0
    %3796 = vmatpush1.msra.mxu0 0.0
    %3797 = vmatprep.subr.mxu0 0.0
    %3798 = vmatpush1.msra.mxu0 0.0
    %3799 = vmatprep.subr.mxu0 0.0
    %3800 = vmatpush1.msra.mxu0 0.0
    %3801 = vmatprep.subr.mxu0 0.0
    %3802 = vmatpush1.msra.mxu0 0.0
    %3803 = vmatprep.subr.mxu0 0.0
    %3804 = vmatpush1.msra.mxu0 0.0
    %3805 = vmatprep.subr.mxu0 0.0
    %3806 = vmatpush1.msra.mxu0 0.0
    %3807 = vmatprep.subr.mxu0 0.0
    %3808 = vmatpush1.msra.mxu0 0.0
    %3809 = vmatprep.subr.mxu0 0.0
    %3810 = vmatpush1.msra.mxu0 0.0
    %3811 = vmatprep.subr.mxu0 0.0
    %3812 = vmatpush1.msra.mxu0 0.0
    %3813 = vmatprep.subr.mxu0 0.0
    %3814 = vmatpush1.msra.mxu0 0.0
    %3815 = vmatprep.subr.mxu0 0.0
    %3816 = vmatpush1.msra.mxu0 0.0
    %3817 = vmatprep.mubr.f32.mxu0 0.0
    %3818 = vmatmul.mubr.f32.gmra.mrb[0].mxu0 %v247
    %v3819 = vpop.f32.mrb[0].mxu0
    %v3820 = vadd.f32 0.0, %v3819
    %v3821 = vpop.f32.mrb[0].mxu0
    %3822 = vdwg.mxu0
    %3824 = vrot.lane.b32.xlu0 %v3820, 64
    %v3825 = vpop.permute.xlu0 %3824
    %v3827 = vadd.f32 %v3096, %v3825
    %v3828 = vtanh.pop %v3827
    %3829 = vmatprep.subr.mxu0 0.0
    %3830 = vmatpush1.msra.mxu0 %v3018
    %3831 = vmatprep.subr.mxu0 0.0
    %3832 = vmatpush1.msra.mxu0 %v3019
    %3833 = vmatprep.subr.mxu0 0.0
    %3834 = vmatpush1.msra.mxu0 %v3020
    %3835 = vmatprep.subr.mxu0 0.0
    %3836 = vmatpush1.msra.mxu0 %v3021
    %3837 = vmatprep.subr.mxu0 0.0
    %3838 = vmatpush1.msra.mxu0 0.0
    %3839 = vmatprep.subr.mxu0 0.0
    %3840 = vmatpush1.msra.mxu0 0.0
    %3841 = vmatprep.subr.mxu0 0.0
    %3842 = vmatpush1.msra.mxu0 0.0
    %3843 = vmatprep.subr.mxu0 0.0
    %3844 = vmatpush1.msra.mxu0 0.0
    %3845 = vmatprep.subr.mxu0 0.0
    %3846 = vmatpush1.msra.mxu0 0.0
    %3847 = vmatprep.subr.mxu0 0.0
    %3848 = vmatpush1.msra.mxu0 0.0
    %3849 = vmatprep.subr.mxu0 0.0
    %3850 = vmatpush1.msra.mxu0 0.0
    %3851 = vmatprep.subr.mxu0 0.0
    %3852 = vmatpush1.msra.mxu0 0.0
    %3853 = vmatprep.subr.mxu0 0.0
    %3854 = vmatpush1.msra.mxu0 0.0
    %3855 = vmatprep.subr.mxu0 0.0
    %3856 = vmatpush1.msra.mxu0 0.0
    %3857 = vmatprep.subr.mxu0 0.0
    %3858 = vmatpush1.msra.mxu0 0.0
    %3859 = vmatprep.subr.mxu0 0.0
    %3860 = vmatpush1.msra.mxu0 0.0
    %3861 = vmatprep.subr.mxu0 0.0
    %3862 = vmatpush1.msra.mxu0 0.0
    %3863 = vmatprep.subr.mxu0 0.0
    %3864 = vmatpush1.msra.mxu0 0.0
    %3865 = vmatprep.subr.mxu0 0.0
    %3866 = vmatpush1.msra.mxu0 0.0
    %3867 = vmatprep.subr.mxu0 0.0
    %3868 = vmatpush1.msra.mxu0 0.0
    %3869 = vmatprep.subr.mxu0 0.0
    %3870 = vmatpush1.msra.mxu0 0.0
    %3871 = vmatprep.subr.mxu0 0.0
    %3872 = vmatpush1.msra.mxu0 0.0
    %3873 = vmatprep.subr.mxu0 0.0
    %3874 = vmatpush1.msra.mxu0 0.0
    %3875 = vmatprep.subr.mxu0 0.0
    %3876 = vmatpush1.msra.mxu0 0.0
    %3877 = vmatprep.subr.mxu0 0.0
    %3878 = vmatpush1.msra.mxu0 0.0
    %3879 = vmatprep.subr.mxu0 0.0
    %3880 = vmatpush1.msra.mxu0 0.0
    %3881 = vmatprep.subr.mxu0 0.0
    %3882 = vmatpush1.msra.mxu0 0.0
    %3883 = vmatprep.subr.mxu0 0.0
    %3884 = vmatpush1.msra.mxu0 0.0
    %3885 = vmatprep.subr.mxu0 0.0
    %3886 = vmatpush1.msra.mxu0 0.0
    %3887 = vmatprep.subr.mxu0 0.0
    %3888 = vmatpush1.msra.mxu0 0.0
    %3889 = vmatprep.subr.mxu0 0.0
    %3890 = vmatpush1.msra.mxu0 0.0
    %3891 = vmatprep.subr.mxu0 0.0
    %3892 = vmatpush1.msra.mxu0 0.0
    %3893 = vmatprep.mubr.f32.mxu0 0.0
    %3894 = vmatmul.mubr.f32.gmra.mrb[0].mxu0 %v247
    %v3895 = vpop.f32.mrb[0].mxu0
    %v3896 = vadd.f32 0.0, %v3895
    %v3897 = vpop.f32.mrb[0].mxu0
    %3898 = vdwg.mxu0
    %3900 = vrot.lane.b32.xlu0 %v3896, 96
    %v3901 = vpop.permute.xlu0 %3900
    %v3903 = vadd.f32 %v3096, %v3901
    %v3904 = vxor.u32 %v3903, 2147483648
    %v3905 = vmul.f32 %v3904, 1.442695
    %v3906 = vpow.pop %v3905
    %v3907 = vadd.f32 %v3906, 1.0
    %v3908 = vrcp.pop %v3907
    %v3909 = vmul.f32 1.0, %v3908
    %v3910 = vmul.f32 %v3752, 0.0
    %3912 = vrot.lane.b32.xlu0 %v3828, 64
    %v3913 = vpop.permute.xlu0 %3912
    %v3915 = vmul.f32 %v3671, %v3913
    %3917 = vrot.lane.b32.xlu0 %v3915, 32
    %v3918 = vpop.permute.xlu0 %3917
    %v3920 = vadd.f32 %v3910, %v3918
    %v3921 = vtanh.pop %v3920
    %3923 = vrot.lane.b32.xlu0 %v3921, 64
    %v3924 = vpop.permute.xlu0 %3923
    %v3926 = vmul.f32 %v3909, %v3924
    %3928 = vrot.lane.b32.xlu0 %v3926, 32
    %v3929 = vpop.permute.xlu0 %3928
    %v3930 = vsel %vm164, %v3929, 0
    %3932 = vmatprep.subr.mxu0 0.0
    %3933 = vmatpush1.msra.mxu0 %v3006
    %3934 = vmatprep.subr.mxu0 0.0
    %3935 = vmatpush1.msra.mxu0 %v3007
    %3936 = vmatprep.subr.mxu0 0.0
    %3937 = vmatpush1.msra.mxu0 %v3008
    %3938 = vmatprep.subr.mxu0 0.0
    %3939 = vmatpush1.msra.mxu0 %v3009
    %3940 = vmatprep.subr.mxu0 0.0
    %3941 = vmatpush1.msra.mxu0 0.0
    %3942 = vmatprep.subr.mxu0 0.0
    %3943 = vmatpush1.msra.mxu0 0.0
    %3944 = vmatprep.subr.mxu0 0.0
    %3945 = vmatpush1.msra.mxu0 0.0
    %3946 = vmatprep.subr.mxu0 0.0
    %3947 = vmatpush1.msra.mxu0 0.0
    %3948 = vmatprep.subr.mxu0 0.0
    %3949 = vmatpush1.msra.mxu0 0.0
    %3950 = vmatprep.subr.mxu0 0.0
    %3951 = vmatpush1.msra.mxu0 0.0
    %3952 = vmatprep.subr.mxu0 0.0
    %3953 = vmatpush1.msra.mxu0 0.0
    %3954 = vmatprep.subr.mxu0 0.0
    %3955 = vmatpush1.msra.mxu0 0.0
    %3956 = vmatprep.subr.mxu0 0.0
    %3957 = vmatpush1.msra.mxu0 0.0
    %3958 = vmatprep.subr.mxu0 0.0
    %3959 = vmatpush1.msra.mxu0 0.0
    %3960 = vmatprep.subr.mxu0 0.0
    %3961 = vmatpush1.msra.mxu0 0.0
    %3962 = vmatprep.subr.mxu0 0.0
    %3963 = vmatpush1.msra.mxu0 0.0
    %3964 = vmatprep.subr.mxu0 0.0
    %3965 = vmatpush1.msra.mxu0 0.0
    %3966 = vmatprep.subr.mxu0 0.0
    %3967 = vmatpush1.msra.mxu0 0.0
    %3968 = vmatprep.subr.mxu0 0.0
    %3969 = vmatpush1.msra.mxu0 0.0
    %3970 = vmatprep.subr.mxu0 0.0
    %3971 = vmatpush1.msra.mxu0 0.0
    %3972 = vmatprep.subr.mxu0 0.0
    %3973 = vmatpush1.msra.mxu0 0.0
    %3974 = vmatprep.subr.mxu0 0.0
    %3975 = vmatpush1.msra.mxu0 0.0
    %3976 = vmatprep.subr.mxu0 0.0
    %3977 = vmatpush1.msra.mxu0 0.0
    %3978 = vmatprep.subr.mxu0 0.0
    %3979 = vmatpush1.msra.mxu0 0.0
    %3980 = vmatprep.subr.mxu0 0.0
    %3981 = vmatpush1.msra.mxu0 0.0
    %3982 = vmatprep.subr.mxu0 0.0
    %3983 = vmatpush1.msra.mxu0 0.0
    %3984 = vmatprep.subr.mxu0 0.0
    %3985 = vmatpush1.msra.mxu0 0.0
    %3986 = vmatprep.subr.mxu0 0.0
    %3987 = vmatpush1.msra.mxu0 0.0
    %3988 = vmatprep.subr.mxu0 0.0
    %3989 = vmatpush1.msra.mxu0 0.0
    %3990 = vmatprep.subr.mxu0 0.0
    %3991 = vmatpush1.msra.mxu0 0.0
    %3992 = vmatprep.subr.mxu0 0.0
    %3993 = vmatpush1.msra.mxu0 0.0
    %3994 = vmatprep.subr.mxu0 0.0
    %3995 = vmatpush1.msra.mxu0 0.0
    %3996 = vmatprep.mubr.f32.mxu0 0.0
    %3997 = vmatmul.mubr.f32.gmra.mrb[0].mxu0 %v3930
    %v3998 = vpop.f32.mrb[0].mxu0
    %v3999 = vadd.f32 0.0, %v3998
    %v4000 = vpop.f32.mrb[0].mxu0
    %4001 = vdwg.mxu0
    %v4002 = vadd.f32 %v3166, %v3999
    %v4003 = vxor.u32 %v4002, 2147483648
    %v4004 = vmul.f32 %v4003, 1.442695
    %v4005 = vpow.pop %v4004
    %v4006 = vadd.f32 %v4005, 1.0
    %v4007 = vrcp.pop %v4006
    %v4008 = vmul.f32 1.0, %v4007
    %4009 = vmatprep.subr.mxu0 0.0
    %4010 = vmatpush1.msra.mxu0 %v3010
    %4011 = vmatprep.subr.mxu0 0.0
    %4012 = vmatpush1.msra.mxu0 %v3011
    %4013 = vmatprep.subr.mxu0 0.0
    %4014 = vmatpush1.msra.mxu0 %v3012
    %4015 = vmatprep.subr.mxu0 0.0
    %4016 = vmatpush1.msra.mxu0 %v3013
    %4017 = vmatprep.subr.mxu0 0.0
    %4018 = vmatpush1.msra.mxu0 0.0
    %4019 = vmatprep.subr.mxu0 0.0
    %4020 = vmatpush1.msra.mxu0 0.0
    %4021 = vmatprep.subr.mxu0 0.0
    %4022 = vmatpush1.msra.mxu0 0.0
    %4023 = vmatprep.subr.mxu0 0.0
    %4024 = vmatpush1.msra.mxu0 0.0
    %4025 = vmatprep.subr.mxu0 0.0
    %4026 = vmatpush1.msra.mxu0 0.0
    %4027 = vmatprep.subr.mxu0 0.0
    %4028 = vmatpush1.msra.mxu0 0.0
    %4029 = vmatprep.subr.mxu0 0.0
    %4030 = vmatpush1.msra.mxu0 0.0
    %4031 = vmatprep.subr.mxu0 0.0
    %4032 = vmatpush1.msra.mxu0 0.0
    %4033 = vmatprep.subr.mxu0 0.0
    %4034 = vmatpush1.msra.mxu0 0.0
    %4035 = vmatprep.subr.mxu0 0.0
    %4036 = vmatpush1.msra.mxu0 0.0
    %4037 = vmatprep.subr.mxu0 0.0
    %4038 = vmatpush1.msra.mxu0 0.0
    %4039 = vmatprep.subr.mxu0 0.0
    %4040 = vmatpush1.msra.mxu0 0.0
    %4041 = vmatprep.subr.mxu0 0.0
    %4042 = vmatpush1.msra.mxu0 0.0
    %4043 = vmatprep.subr.mxu0 0.0
    %4044 = vmatpush1.msra.mxu0 0.0
    %4045 = vmatprep.subr.mxu0 0.0
    %4046 = vmatpush1.msra.mxu0 0.0
    %4047 = vmatprep.subr.mxu0 0.0
    %4048 = vmatpush1.msra.mxu0 0.0
    %4049 = vmatprep.subr.mxu0 0.0
    %4050 = vmatpush1.msra.mxu0 0.0
    %4051 = vmatprep.subr.mxu0 0.0
    %4052 = vmatpush1.msra.mxu0 0.0
    %4053 = vmatprep.subr.mxu0 0.0
    %4054 = vmatpush1.msra.mxu0 0.0
    %4055 = vmatprep.subr.mxu0 0.0
    %4056 = vmatpush1.msra.mxu0 0.0
    %4057 = vmatprep.subr.mxu0 0.0
    %4058 = vmatpush1.msra.mxu0 0.0
    %4059 = vmatprep.subr.mxu0 0.0
    %4060 = vmatpush1.msra.mxu0 0.0
    %4061 = vmatprep.subr.mxu0 0.0
    %4062 = vmatpush1.msra.mxu0 0.0
    %4063 = vmatprep.subr.mxu0 0.0
    %4064 = vmatpush1.msra.mxu0 0.0
    %4065 = vmatprep.subr.mxu0 0.0
    %4066 = vmatpush1.msra.mxu0 0.0
    %4067 = vmatprep.subr.mxu0 0.0
    %4068 = vmatpush1.msra.mxu0 0.0
    %4069 = vmatprep.subr.mxu0 0.0
    %4070 = vmatpush1.msra.mxu0 0.0
    %4071 = vmatprep.subr.mxu0 0.0
    %4072 = vmatpush1.msra.mxu0 0.0
    %4073 = vmatprep.mubr.f32.mxu0 0.0
    %4074 = vmatmul.mubr.f32.gmra.mrb[0].mxu0 %v3930
    %v4075 = vpop.f32.mrb[0].mxu0
    %v4076 = vadd.f32 0.0, %v4075
    %v4077 = vpop.f32.mrb[0].mxu0
    %4078 = vdwg.mxu0
    %4080 = vrot.lane.b32.xlu0 %v4076, 32
    %v4081 = vpop.permute.xlu0 %4080
    %v4083 = vadd.f32 %v3166, %v4081
    %v4084 = vxor.u32 %v4083, 2147483648
    %v4085 = vmul.f32 %v4084, 1.442695
    %v4086 = vpow.pop %v4085
    %v4087 = vadd.f32 %v4086, 1.0
    %v4088 = vrcp.pop %v4087
    %v4089 = vmul.f32 1.0, %v4088
    %4090 = vmatprep.subr.mxu0 0.0
    %4091 = vmatpush1.msra.mxu0 %v3014
    %4092 = vmatprep.subr.mxu0 0.0
    %4093 = vmatpush1.msra.mxu0 %v3015
    %4094 = vmatprep.subr.mxu0 0.0
    %4095 = vmatpush1.msra.mxu0 %v3016
    %4096 = vmatprep.subr.mxu0 0.0
    %4097 = vmatpush1.msra.mxu0 %v3017
    %4098 = vmatprep.subr.mxu0 0.0
    %4099 = vmatpush1.msra.mxu0 0.0
    %4100 = vmatprep.subr.mxu0 0.0
    %4101 = vmatpush1.msra.mxu0 0.0
    %4102 = vmatprep.subr.mxu0 0.0
    %4103 = vmatpush1.msra.mxu0 0.0
    %4104 = vmatprep.subr.mxu0 0.0
    %4105 = vmatpush1.msra.mxu0 0.0
    %4106 = vmatprep.subr.mxu0 0.0
    %4107 = vmatpush1.msra.mxu0 0.0
    %4108 = vmatprep.subr.mxu0 0.0
    %4109 = vmatpush1.msra.mxu0 0.0
    %4110 = vmatprep.subr.mxu0 0.0
    %4111 = vmatpush1.msra.mxu0 0.0
    %4112 = vmatprep.subr.mxu0 0.0
    %4113 = vmatpush1.msra.mxu0 0.0
    %4114 = vmatprep.subr.mxu0 0.0
    %4115 = vmatpush1.msra.mxu0 0.0
    %4116 = vmatprep.subr.mxu0 0.0
    %4117 = vmatpush1.msra.mxu0 0.0
    %4118 = vmatprep.subr.mxu0 0.0
    %4119 = vmatpush1.msra.mxu0 0.0
    %4120 = vmatprep.subr.mxu0 0.0
    %4121 = vmatpush1.msra.mxu0 0.0
    %4122 = vmatprep.subr.mxu0 0.0
    %4123 = vmatpush1.msra.mxu0 0.0
    %4124 = vmatprep.subr.mxu0 0.0
    %4125 = vmatpush1.msra.mxu0 0.0
    %4126 = vmatprep.subr.mxu0 0.0
    %4127 = vmatpush1.msra.mxu0 0.0
    %4128 = vmatprep.subr.mxu0 0.0
    %4129 = vmatpush1.msra.mxu0 0.0
    %4130 = vmatprep.subr.mxu0 0.0
    %4131 = vmatpush1.msra.mxu0 0.0
    %4132 = vmatprep.subr.mxu0 0.0
    %4133 = vmatpush1.msra.mxu0 0.0
    %4134 = vmatprep.subr.mxu0 0.0
    %4135 = vmatpush1.msra.mxu0 0.0
    %4136 = vmatprep.subr.mxu0 0.0
    %4137 = vmatpush1.msra.mxu0 0.0
    %4138 = vmatprep.subr.mxu0 0.0
    %4139 = vmatpush1.msra.mxu0 0.0
    %4140 = vmatprep.subr.mxu0 0.0
    %4141 = vmatpush1.msra.mxu0 0.0
    %4142 = vmatprep.subr.mxu0 0.0
    %4143 = vmatpush1.msra.mxu0 0.0
    %4144 = vmatprep.subr.mxu0 0.0
    %4145 = vmatpush1.msra.mxu0 0.0
    %4146 = vmatprep.subr.mxu0 0.0
    %4147 = vmatpush1.msra.mxu0 0.0
    %4148 = vmatprep.subr.mxu0 0.0
    %4149 = vmatpush1.msra.mxu0 0.0
    %4150 = vmatprep.subr.mxu0 0.0
    %4151 = vmatpush1.msra.mxu0 0.0
    %4152 = vmatprep.subr.mxu0 0.0
    %4153 = vmatpush1.msra.mxu0 0.0
    %4154 = vmatprep.mubr.f32.mxu0 0.0
    %4155 = vmatmul.mubr.f32.gmra.mrb[0].mxu0 %v3930
    %v4156 = vpop.f32.mrb[0].mxu0
    %v4157 = vadd.f32 0.0, %v4156
    %v4158 = vpop.f32.mrb[0].mxu0
    %4159 = vdwg.mxu0
    %4161 = vrot.lane.b32.xlu0 %v4157, 64
    %v4162 = vpop.permute.xlu0 %4161
    %v4164 = vadd.f32 %v3166, %v4162
    %v4165 = vtanh.pop %v4164
    %4166 = vmatprep.subr.mxu0 0.0
    %4167 = vmatpush1.msra.mxu0 %v3018
    %4168 = vmatprep.subr.mxu0 0.0
    %4169 = vmatpush1.msra.mxu0 %v3019
    %4170 = vmatprep.subr.mxu0 0.0
    %4171 = vmatpush1.msra.mxu0 %v3020
    %4172 = vmatprep.subr.mxu0 0.0
    %4173 = vmatpush1.msra.mxu0 %v3021
    %4174 = vmatprep.subr.mxu0 0.0
    %4175 = vmatpush1.msra.mxu0 0.0
    %4176 = vmatprep.subr.mxu0 0.0
    %4177 = vmatpush1.msra.mxu0 0.0
    %4178 = vmatprep.subr.mxu0 0.0
    %4179 = vmatpush1.msra.mxu0 0.0
    %4180 = vmatprep.subr.mxu0 0.0
    %4181 = vmatpush1.msra.mxu0 0.0
    %4182 = vmatprep.subr.mxu0 0.0
    %4183 = vmatpush1.msra.mxu0 0.0
    %4184 = vmatprep.subr.mxu0 0.0
    %4185 = vmatpush1.msra.mxu0 0.0
    %4186 = vmatprep.subr.mxu0 0.0
    %4187 = vmatpush1.msra.mxu0 0.0
    %4188 = vmatprep.subr.mxu0 0.0
    %4189 = vmatpush1.msra.mxu0 0.0
    %4190 = vmatprep.subr.mxu0 0.0
    %4191 = vmatpush1.msra.mxu0 0.0
    %4192 = vmatprep.subr.mxu0 0.0
    %4193 = vmatpush1.msra.mxu0 0.0
    %4194 = vmatprep.subr.mxu0 0.0
    %4195 = vmatpush1.msra.mxu0 0.0
    %4196 = vmatprep.subr.mxu0 0.0
    %4197 = vmatpush1.msra.mxu0 0.0
    %4198 = vmatprep.subr.mxu0 0.0
    %4199 = vmatpush1.msra.mxu0 0.0
    %4200 = vmatprep.subr.mxu0 0.0
    %4201 = vmatpush1.msra.mxu0 0.0
    %4202 = vmatprep.subr.mxu0 0.0
    %4203 = vmatpush1.msra.mxu0 0.0
    %4204 = vmatprep.subr.mxu0 0.0
    %4205 = vmatpush1.msra.mxu0 0.0
    %4206 = vmatprep.subr.mxu0 0.0
    %4207 = vmatpush1.msra.mxu0 0.0
    %4208 = vmatprep.subr.mxu0 0.0
    %4209 = vmatpush1.msra.mxu0 0.0
    %4210 = vmatprep.subr.mxu0 0.0
    %4211 = vmatpush1.msra.mxu0 0.0
    %4212 = vmatprep.subr.mxu0 0.0
    %4213 = vmatpush1.msra.mxu0 0.0
    %4214 = vmatprep.subr.mxu0 0.0
    %4215 = vmatpush1.msra.mxu0 0.0
    %4216 = vmatprep.subr.mxu0 0.0
    %4217 = vmatpush1.msra.mxu0 0.0
    %4218 = vmatprep.subr.mxu0 0.0
    %4219 = vmatpush1.msra.mxu0 0.0
    %4220 = vmatprep.subr.mxu0 0.0
    %4221 = vmatpush1.msra.mxu0 0.0
    %4222 = vmatprep.subr.mxu0 0.0
    %4223 = vmatpush1.msra.mxu0 0.0
    %4224 = vmatprep.subr.mxu0 0.0
    %4225 = vmatpush1.msra.mxu0 0.0
    %4226 = vmatprep.subr.mxu0 0.0
    %4227 = vmatpush1.msra.mxu0 0.0
    %4228 = vmatprep.subr.mxu0 0.0
    %4229 = vmatpush1.msra.mxu0 0.0
    %4230 = vmatprep.mubr.f32.mxu0 0.0
    %4231 = vmatmul.mubr.f32.gmra.mrb[0].mxu0 %v3930
    %v4232 = vpop.f32.mrb[0].mxu0
    %v4233 = vadd.f32 0.0, %v4232
    %v4234 = vpop.f32.mrb[0].mxu0
    %4235 = vdwg.mxu0
    %4237 = vrot.lane.b32.xlu0 %v4233, 96
    %v4238 = vpop.permute.xlu0 %4237
    %v4240 = vadd.f32 %v3166, %v4238
    %v4241 = vxor.u32 %v4240, 2147483648
    %v4242 = vmul.f32 %v4241, 1.442695
    %v4243 = vpow.pop %v4242
    %v4244 = vadd.f32 %v4243, 1.0
    %v4245 = vrcp.pop %v4244
    %v4246 = vmul.f32 1.0, %v4245
    %v4247 = vmul.f32 %v4089, %v3920
    %4249 = vrot.lane.b32.xlu0 %v4165, 64
    %v4250 = vpop.permute.xlu0 %4249
    %v4252 = vmul.f32 %v4008, %v4250
    %4254 = vrot.lane.b32.xlu0 %v4252, 32
    %v4255 = vpop.permute.xlu0 %4254
    %v4257 = vadd.f32 %v4247, %v4255
    %v4258 = vtanh.pop %v4257
    %4260 = vrot.lane.b32.xlu0 %v4258, 64
    %v4261 = vpop.permute.xlu0 %4260
    %v4263 = vmul.f32 %v4246, %v4261
    %4265 = vrot.lane.b32.xlu0 %v4263, 32
    %v4266 = vpop.permute.xlu0 %4265
    %v4267 = vsel %vm164, %v4266, 0
    %4269 = vmatprep.subr.mxu0 0.0
    %4270 = vmatpush1.msra.mxu0 %v3006
    %4271 = vmatprep.subr.mxu0 0.0
    %4272 = vmatpush1.msra.mxu0 %v3007
    %4273 = vmatprep.subr.mxu0 0.0
    %4274 = vmatpush1.msra.mxu0 %v3008
    %4275 = vmatprep.subr.mxu0 0.0
    %4276 = vmatpush1.msra.mxu0 %v3009
    %4277 = vmatprep.subr.mxu0 0.0
    %4278 = vmatpush1.msra.mxu0 0.0
    %4279 = vmatprep.subr.mxu0 0.0
    %4280 = vmatpush1.msra.mxu0 0.0
    %4281 = vmatprep.subr.mxu0 0.0
    %4282 = vmatpush1.msra.mxu0 0.0
    %4283 = vmatprep.subr.mxu0 0.0
    %4284 = vmatpush1.msra.mxu0 0.0
    %4285 = vmatprep.subr.mxu0 0.0
    %4286 = vmatpush1.msra.mxu0 0.0
    %4287 = vmatprep.subr.mxu0 0.0
    %4288 = vmatpush1.msra.mxu0 0.0
    %4289 = vmatprep.subr.mxu0 0.0
    %4290 = vmatpush1.msra.mxu0 0.0
    %4291 = vmatprep.subr.mxu0 0.0
    %4292 = vmatpush1.msra.mxu0 0.0
    %4293 = vmatprep.subr.mxu0 0.0
    %4294 = vmatpush1.msra.mxu0 0.0
    %4295 = vmatprep.subr.mxu0 0.0
    %4296 = vmatpush1.msra.mxu0 0.0
    %4297 = vmatprep.subr.mxu0 0.0
    %4298 = vmatpush1.msra.mxu0 0.0
    %4299 = vmatprep.subr.mxu0 0.0
    %4300 = vmatpush1.msra.mxu0 0.0
    %4301 = vmatprep.subr.mxu0 0.0
    %4302 = vmatpush1.msra.mxu0 0.0
    %4303 = vmatprep.subr.mxu0 0.0
    %4304 = vmatpush1.msra.mxu0 0.0
    %4305 = vmatprep.subr.mxu0 0.0
    %4306 = vmatpush1.msra.mxu0 0.0
    %4307 = vmatprep.subr.mxu0 0.0
    %4308 = vmatpush1.msra.mxu0 0.0
    %4309 = vmatprep.subr.mxu0 0.0
    %4310 = vmatpush1.msra.mxu0 0.0
    %4311 = vmatprep.subr.mxu0 0.0
    %4312 = vmatpush1.msra.mxu0 0.0
    %4313 = vmatprep.subr.mxu0 0.0
    %4314 = vmatpush1.msra.mxu0 0.0
    %4315 = vmatprep.subr.mxu0 0.0
    %4316 = vmatpush1.msra.mxu0 0.0
    %4317 = vmatprep.subr.mxu0 0.0
    %4318 = vmatpush1.msra.mxu0 0.0
    %4319 = vmatprep.subr.mxu0 0.0
    %4320 = vmatpush1.msra.mxu0 0.0
    %4321 = vmatprep.subr.mxu0 0.0
    %4322 = vmatpush1.msra.mxu0 0.0
    %4323 = vmatprep.subr.mxu0 0.0
    %4324 = vmatpush1.msra.mxu0 0.0
    %4325 = vmatprep.subr.mxu0 0.0
    %4326 = vmatpush1.msra.mxu0 0.0
    %4327 = vmatprep.subr.mxu0 0.0
    %4328 = vmatpush1.msra.mxu0 0.0
    %4329 = vmatprep.subr.mxu0 0.0
    %4330 = vmatpush1.msra.mxu0 0.0
    %4331 = vmatprep.subr.mxu0 0.0
    %4332 = vmatpush1.msra.mxu0 0.0
    %4333 = vmatprep.mubr.f32.mxu0 0.0
    %4334 = vmatmul.mubr.f32.gmra.mrb[0].mxu0 %v4267
    %v4335 = vpop.f32.mrb[0].mxu0
    %v4336 = vadd.f32 0.0, %v4335
    %v4337 = vpop.f32.mrb[0].mxu0
    %4338 = vdwg.mxu0
    %v4339 = vadd.f32 %v3236, %v4336
    %v4340 = vxor.u32 %v4339, 2147483648
    %v4341 = vmul.f32 %v4340, 1.442695
    %v4342 = vpow.pop %v4341
    %v4343 = vadd.f32 %v4342, 1.0
    %v4344 = vrcp.pop %v4343
    %v4345 = vmul.f32 1.0, %v4344
    %4346 = vmatprep.subr.mxu0 0.0
    %4347 = vmatpush1.msra.mxu0 %v3010
    %4348 = vmatprep.subr.mxu0 0.0
    %4349 = vmatpush1.msra.mxu0 %v3011
    %4350 = vmatprep.subr.mxu0 0.0
    %4351 = vmatpush1.msra.mxu0 %v3012
    %4352 = vmatprep.subr.mxu0 0.0
    %4353 = vmatpush1.msra.mxu0 %v3013
    %4354 = vmatprep.subr.mxu0 0.0
    %4355 = vmatpush1.msra.mxu0 0.0
    %4356 = vmatprep.subr.mxu0 0.0
    %4357 = vmatpush1.msra.mxu0 0.0
    %4358 = vmatprep.subr.mxu0 0.0
    %4359 = vmatpush1.msra.mxu0 0.0
    %4360 = vmatprep.subr.mxu0 0.0
    %4361 = vmatpush1.msra.mxu0 0.0
    %4362 = vmatprep.subr.mxu0 0.0
    %4363 = vmatpush1.msra.mxu0 0.0
    %4364 = vmatprep.subr.mxu0 0.0
    %4365 = vmatpush1.msra.mxu0 0.0
    %4366 = vmatprep.subr.mxu0 0.0
    %4367 = vmatpush1.msra.mxu0 0.0
    %4368 = vmatprep.subr.mxu0 0.0
    %4369 = vmatpush1.msra.mxu0 0.0
    %4370 = vmatprep.subr.mxu0 0.0
    %4371 = vmatpush1.msra.mxu0 0.0
    %4372 = vmatprep.subr.mxu0 0.0
    %4373 = vmatpush1.msra.mxu0 0.0
    %4374 = vmatprep.subr.mxu0 0.0
    %4375 = vmatpush1.msra.mxu0 0.0
    %4376 = vmatprep.subr.mxu0 0.0
    %4377 = vmatpush1.msra.mxu0 0.0
    %4378 = vmatprep.subr.mxu0 0.0
    %4379 = vmatpush1.msra.mxu0 0.0
    %4380 = vmatprep.subr.mxu0 0.0
    %4381 = vmatpush1.msra.mxu0 0.0
    %4382 = vmatprep.subr.mxu0 0.0
    %4383 = vmatpush1.msra.mxu0 0.0
    %4384 = vmatprep.subr.mxu0 0.0
    %4385 = vmatpush1.msra.mxu0 0.0
    %4386 = vmatprep.subr.mxu0 0.0
    %4387 = vmatpush1.msra.mxu0 0.0
    %4388 = vmatprep.subr.mxu0 0.0
    %4389 = vmatpush1.msra.mxu0 0.0
    %4390 = vmatprep.subr.mxu0 0.0
    %4391 = vmatpush1.msra.mxu0 0.0
    %4392 = vmatprep.subr.mxu0 0.0
    %4393 = vmatpush1.msra.mxu0 0.0
    %4394 = vmatprep.subr.mxu0 0.0
    %4395 = vmatpush1.msra.mxu0 0.0
    %4396 = vmatprep.subr.mxu0 0.0
    %4397 = vmatpush1.msra.mxu0 0.0
    %4398 = vmatprep.subr.mxu0 0.0
    %4399 = vmatpush1.msra.mxu0 0.0
    %4400 = vmatprep.subr.mxu0 0.0
    %4401 = vmatpush1.msra.mxu0 0.0
    %4402 = vmatprep.subr.mxu0 0.0
    %4403 = vmatpush1.msra.mxu0 0.0
    %4404 = vmatprep.subr.mxu0 0.0
    %4405 = vmatpush1.msra.mxu0 0.0
    %4406 = vmatprep.subr.mxu0 0.0
    %4407 = vmatpush1.msra.mxu0 0.0
    %4408 = vmatprep.subr.mxu0 0.0
    %4409 = vmatpush1.msra.mxu0 0.0
    %4410 = vmatprep.mubr.f32.mxu0 0.0
    %4411 = vmatmul.mubr.f32.gmra.mrb[0].mxu0 %v4267
    %v4412 = vpop.f32.mrb[0].mxu0
    %v4413 = vadd.f32 0.0, %v4412
    %v4414 = vpop.f32.mrb[0].mxu0
    %4415 = vdwg.mxu0
    %4417 = vrot.lane.b32.xlu0 %v4413, 32
    %v4418 = vpop.permute.xlu0 %4417
    %v4420 = vadd.f32 %v3236, %v4418
    %v4421 = vxor.u32 %v4420, 2147483648
    %v4422 = vmul.f32 %v4421, 1.442695
    %v4423 = vpow.pop %v4422
    %v4424 = vadd.f32 %v4423, 1.0
    %v4425 = vrcp.pop %v4424
    %v4426 = vmul.f32 1.0, %v4425
    %4427 = vmatprep.subr.mxu0 0.0
    %4428 = vmatpush1.msra.mxu0 %v3014
    %4429 = vmatprep.subr.mxu0 0.0
    %4430 = vmatpush1.msra.mxu0 %v3015
    %4431 = vmatprep.subr.mxu0 0.0
    %4432 = vmatpush1.msra.mxu0 %v3016
    %4433 = vmatprep.subr.mxu0 0.0
    %4434 = vmatpush1.msra.mxu0 %v3017
    %4435 = vmatprep.subr.mxu0 0.0
    %4436 = vmatpush1.msra.mxu0 0.0
    %4437 = vmatprep.subr.mxu0 0.0
    %4438 = vmatpush1.msra.mxu0 0.0
    %4439 = vmatprep.subr.mxu0 0.0
    %4440 = vmatpush1.msra.mxu0 0.0
    %4441 = vmatprep.subr.mxu0 0.0
    %4442 = vmatpush1.msra.mxu0 0.0
    %4443 = vmatprep.subr.mxu0 0.0
    %4444 = vmatpush1.msra.mxu0 0.0
    %4445 = vmatprep.subr.mxu0 0.0
    %4446 = vmatpush1.msra.mxu0 0.0
    %4447 = vmatprep.subr.mxu0 0.0
    %4448 = vmatpush1.msra.mxu0 0.0
    %4449 = vmatprep.subr.mxu0 0.0
    %4450 = vmatpush1.msra.mxu0 0.0
    %4451 = vmatprep.subr.mxu0 0.0
    %4452 = vmatpush1.msra.mxu0 0.0
    %4453 = vmatprep.subr.mxu0 0.0
    %4454 = vmatpush1.msra.mxu0 0.0
    %4455 = vmatprep.subr.mxu0 0.0
    %4456 = vmatpush1.msra.mxu0 0.0
    %4457 = vmatprep.subr.mxu0 0.0
    %4458 = vmatpush1.msra.mxu0 0.0
    %4459 = vmatprep.subr.mxu0 0.0
    %4460 = vmatpush1.msra.mxu0 0.0
    %4461 = vmatprep.subr.mxu0 0.0
    %4462 = vmatpush1.msra.mxu0 0.0
    %4463 = vmatprep.subr.mxu0 0.0
    %4464 = vmatpush1.msra.mxu0 0.0
    %4465 = vmatprep.subr.mxu0 0.0
    %4466 = vmatpush1.msra.mxu0 0.0
    %4467 = vmatprep.subr.mxu0 0.0
    %4468 = vmatpush1.msra.mxu0 0.0
    %4469 = vmatprep.subr.mxu0 0.0
    %4470 = vmatpush1.msra.mxu0 0.0
    %4471 = vmatprep.subr.mxu0 0.0
    %4472 = vmatpush1.msra.mxu0 0.0
    %4473 = vmatprep.subr.mxu0 0.0
    %4474 = vmatpush1.msra.mxu0 0.0
    %4475 = vmatprep.subr.mxu0 0.0
    %4476 = vmatpush1.msra.mxu0 0.0
    %4477 = vmatprep.subr.mxu0 0.0
    %4478 = vmatpush1.msra.mxu0 0.0
    %4479 = vmatprep.subr.mxu0 0.0
    %4480 = vmatpush1.msra.mxu0 0.0
    %4481 = vmatprep.subr.mxu0 0.0
    %4482 = vmatpush1.msra.mxu0 0.0
    %4483 = vmatprep.subr.mxu0 0.0
    %4484 = vmatpush1.msra.mxu0 0.0
    %4485 = vmatprep.subr.mxu0 0.0
    %4486 = vmatpush1.msra.mxu0 0.0
    %4487 = vmatprep.subr.mxu0 0.0
    %4488 = vmatpush1.msra.mxu0 0.0
    %4489 = vmatprep.subr.mxu0 0.0
    %4490 = vmatpush1.msra.mxu0 0.0
    %4491 = vmatprep.mubr.f32.mxu0 0.0
    %4492 = vmatmul.mubr.f32.gmra.mrb[0].mxu0 %v4267
    %v4493 = vpop.f32.mrb[0].mxu0
    %v4494 = vadd.f32 0.0, %v4493
    %v4495 = vpop.f32.mrb[0].mxu0
    %4496 = vdwg.mxu0
    %4498 = vrot.lane.b32.xlu0 %v4494, 64
    %v4499 = vpop.permute.xlu0 %4498
    %v4501 = vadd.f32 %v3236, %v4499
    %v4502 = vtanh.pop %v4501
    %4503 = vmatprep.subr.mxu0 0.0
    %4504 = vmatpush1.msra.mxu0 %v3018
    %4505 = vmatprep.subr.mxu0 0.0
    %4506 = vmatpush1.msra.mxu0 %v3019
    %4507 = vmatprep.subr.mxu0 0.0
    %4508 = vmatpush1.msra.mxu0 %v3020
    %4509 = vmatprep.subr.mxu0 0.0
    %4510 = vmatpush1.msra.mxu0 %v3021
    %4511 = vmatprep.subr.mxu0 0.0
    %4512 = vmatpush1.msra.mxu0 0.0
    %4513 = vmatprep.subr.mxu0 0.0
    %4514 = vmatpush1.msra.mxu0 0.0
    %4515 = vmatprep.subr.mxu0 0.0
    %4516 = vmatpush1.msra.mxu0 0.0
    %4517 = vmatprep.subr.mxu0 0.0
    %4518 = vmatpush1.msra.mxu0 0.0
    %4519 = vmatprep.subr.mxu0 0.0
    %4520 = vmatpush1.msra.mxu0 0.0
    %4521 = vmatprep.subr.mxu0 0.0
    %4522 = vmatpush1.msra.mxu0 0.0
    %4523 = vmatprep.subr.mxu0 0.0
    %4524 = vmatpush1.msra.mxu0 0.0
    %4525 = vmatprep.subr.mxu0 0.0
    %4526 = vmatpush1.msra.mxu0 0.0
    %4527 = vmatprep.subr.mxu0 0.0
    %4528 = vmatpush1.msra.mxu0 0.0
    %4529 = vmatprep.subr.mxu0 0.0
    %4530 = vmatpush1.msra.mxu0 0.0
    %4531 = vmatprep.subr.mxu0 0.0
    %4532 = vmatpush1.msra.mxu0 0.0
    %4533 = vmatprep.subr.mxu0 0.0
    %4534 = vmatpush1.msra.mxu0 0.0
    %4535 = vmatprep.subr.mxu0 0.0
    %4536 = vmatpush1.msra.mxu0 0.0
    %4537 = vmatprep.subr.mxu0 0.0
    %4538 = vmatpush1.msra.mxu0 0.0
    %4539 = vmatprep.subr.mxu0 0.0
    %4540 = vmatpush1.msra.mxu0 0.0
    %4541 = vmatprep.subr.mxu0 0.0
    %4542 = vmatpush1.msra.mxu0 0.0
    %4543 = vmatprep.subr.mxu0 0.0
    %4544 = vmatpush1.msra.mxu0 0.0
    %4545 = vmatprep.subr.mxu0 0.0
    %4546 = vmatpush1.msra.mxu0 0.0
    %4547 = vmatprep.subr.mxu0 0.0
    %4548 = vmatpush1.msra.mxu0 0.0
    %4549 = vmatprep.subr.mxu0 0.0
    %4550 = vmatpush1.msra.mxu0 0.0
    %4551 = vmatprep.subr.mxu0 0.0
    %4552 = vmatpush1.msra.mxu0 0.0
    %4553 = vmatprep.subr.mxu0 0.0
    %4554 = vmatpush1.msra.mxu0 0.0
    %4555 = vmatprep.subr.mxu0 0.0
    %4556 = vmatpush1.msra.mxu0 0.0
    %4557 = vmatprep.subr.mxu0 0.0
    %4558 = vmatpush1.msra.mxu0 0.0
    %4559 = vmatprep.subr.mxu0 0.0
    %4560 = vmatpush1.msra.mxu0 0.0
    %4561 = vmatprep.subr.mxu0 0.0
    %4562 = vmatpush1.msra.mxu0 0.0
    %4563 = vmatprep.subr.mxu0 0.0
    %4564 = vmatpush1.msra.mxu0 0.0
    %4565 = vmatprep.subr.mxu0 0.0
    %4566 = vmatpush1.msra.mxu0 0.0
    %4567 = vmatprep.mubr.f32.mxu0 0.0
    %4568 = vmatmul.mubr.f32.gmra.mrb[0].mxu0 %v4267
    %v4569 = vpop.f32.mrb[0].mxu0
    %v4570 = vadd.f32 0.0, %v4569
    %v4571 = vpop.f32.mrb[0].mxu0
    %4572 = vdwg.mxu0
    %4574 = vrot.lane.b32.xlu0 %v4570, 96
    %v4575 = vpop.permute.xlu0 %4574
    %v4577 = vadd.f32 %v3236, %v4575
    %v4578 = vxor.u32 %v4577, 2147483648
    %v4579 = vmul.f32 %v4578, 1.442695
    %v4580 = vpow.pop %v4579
    %v4581 = vadd.f32 %v4580, 1.0
    %v4582 = vrcp.pop %v4581
    %v4583 = vmul.f32 1.0, %v4582
    %v4584 = vmul.f32 %v4426, %v4257
    %4586 = vrot.lane.b32.xlu0 %v4502, 64
    %v4587 = vpop.permute.xlu0 %4586
    %v4589 = vmul.f32 %v4345, %v4587
    %4591 = vrot.lane.b32.xlu0 %v4589, 32
    %v4592 = vpop.permute.xlu0 %4591
    %v4594 = vadd.f32 %v4584, %v4592
    %v4595 = vtanh.pop %v4594
    %4597 = vrot.lane.b32.xlu0 %v4595, 64
    %v4598 = vpop.permute.xlu0 %4597
    %v4600 = vmul.f32 %v4583, %v4598
    %4602 = vrot.lane.b32.xlu0 %v4600, 32
    %v4603 = vpop.permute.xlu0 %4602
    %v4604 = vsel %vm164, %v4603, 0
    %4606 = vmatprep.subr.mxu0 0.0
    %4607 = vmatpush1.msra.mxu0 %v3006
    %4608 = vmatprep.subr.mxu0 0.0
    %4609 = vmatpush1.msra.mxu0 %v3007
    %4610 = vmatprep.subr.mxu0 0.0
    %4611 = vmatpush1.msra.mxu0 %v3008
    %4612 = vmatprep.subr.mxu0 0.0
    %4613 = vmatpush1.msra.mxu0 %v3009
    %4614 = vmatprep.subr.mxu0 0.0
    %4615 = vmatpush1.msra.mxu0 0.0
    %4616 = vmatprep.subr.mxu0 0.0
    %4617 = vmatpush1.msra.mxu0 0.0
    %4618 = vmatprep.subr.mxu0 0.0
    %4619 = vmatpush1.msra.mxu0 0.0
    %4620 = vmatprep.subr.mxu0 0.0
    %4621 = vmatpush1.msra.mxu0 0.0
    %4622 = vmatprep.subr.mxu0 0.0
    %4623 = vmatpush1.msra.mxu0 0.0
    %4624 = vmatprep.subr.mxu0 0.0
    %4625 = vmatpush1.msra.mxu0 0.0
    %4626 = vmatprep.subr.mxu0 0.0
    %4627 = vmatpush1.msra.mxu0 0.0
    %4628 = vmatprep.subr.mxu0 0.0
    %4629 = vmatpush1.msra.mxu0 0.0
    %4630 = vmatprep.subr.mxu0 0.0
    %4631 = vmatpush1.msra.mxu0 0.0
    %4632 = vmatprep.subr.mxu0 0.0
    %4633 = vmatpush1.msra.mxu0 0.0
    %4634 = vmatprep.subr.mxu0 0.0
    %4635 = vmatpush1.msra.mxu0 0.0
    %4636 = vmatprep.subr.mxu0 0.0
    %4637 = vmatpush1.msra.mxu0 0.0
    %4638 = vmatprep.subr.mxu0 0.0
    %4639 = vmatpush1.msra.mxu0 0.0
    %4640 = vmatprep.subr.mxu0 0.0
    %4641 = vmatpush1.msra.mxu0 0.0
    %4642 = vmatprep.subr.mxu0 0.0
    %4643 = vmatpush1.msra.mxu0 0.0
    %4644 = vmatprep.subr.mxu0 0.0
    %4645 = vmatpush1.msra.mxu0 0.0
    %4646 = vmatprep.subr.mxu0 0.0
    %4647 = vmatpush1.msra.mxu0 0.0
    %4648 = vmatprep.subr.mxu0 0.0
    %4649 = vmatpush1.msra.mxu0 0.0
    %4650 = vmatprep.subr.mxu0 0.0
    %4651 = vmatpush1.msra.mxu0 0.0
    %4652 = vmatprep.subr.mxu0 0.0
    %4653 = vmatpush1.msra.mxu0 0.0
    %4654 = vmatprep.subr.mxu0 0.0
    %4655 = vmatpush1.msra.mxu0 0.0
    %4656 = vmatprep.subr.mxu0 0.0
    %4657 = vmatpush1.msra.mxu0 0.0
    %4658 = vmatprep.subr.mxu0 0.0
    %4659 = vmatpush1.msra.mxu0 0.0
    %4660 = vmatprep.subr.mxu0 0.0
    %4661 = vmatpush1.msra.mxu0 0.0
    %4662 = vmatprep.subr.mxu0 0.0
    %4663 = vmatpush1.msra.mxu0 0.0
    %4664 = vmatprep.subr.mxu0 0.0
    %4665 = vmatpush1.msra.mxu0 0.0
    %4666 = vmatprep.subr.mxu0 0.0
    %4667 = vmatpush1.msra.mxu0 0.0
    %4668 = vmatprep.subr.mxu0 0.0
    %4669 = vmatpush1.msra.mxu0 0.0
    %4670 = vmatprep.mubr.f32.mxu0 0.0
    %4671 = vmatmul.mubr.f32.gmra.mrb[0].mxu0 %v4604
    %v4672 = vpop.f32.mrb[0].mxu0
    %v4673 = vadd.f32 0.0, %v4672
    %v4674 = vpop.f32.mrb[0].mxu0
    %4675 = vdwg.mxu0
    %v4676 = vadd.f32 %v3306, %v4673
    %v4677 = vxor.u32 %v4676, 2147483648
    %v4678 = vmul.f32 %v4677, 1.442695
    %v4679 = vpow.pop %v4678
    %v4680 = vadd.f32 %v4679, 1.0
    %v4681 = vrcp.pop %v4680
    %v4682 = vmul.f32 1.0, %v4681
    %4683 = vmatprep.subr.mxu0 0.0
    %4684 = vmatpush1.msra.mxu0 %v3010
    %4685 = vmatprep.subr.mxu0 0.0
    %4686 = vmatpush1.msra.mxu0 %v3011
    %4687 = vmatprep.subr.mxu0 0.0
    %4688 = vmatpush1.msra.mxu0 %v3012
    %4689 = vmatprep.subr.mxu0 0.0
    %4690 = vmatpush1.msra.mxu0 %v3013
    %4691 = vmatprep.subr.mxu0 0.0
    %4692 = vmatpush1.msra.mxu0 0.0
    %4693 = vmatprep.subr.mxu0 0.0
    %4694 = vmatpush1.msra.mxu0 0.0
    %4695 = vmatprep.subr.mxu0 0.0
    %4696 = vmatpush1.msra.mxu0 0.0
    %4697 = vmatprep.subr.mxu0 0.0
    %4698 = vmatpush1.msra.mxu0 0.0
    %4699 = vmatprep.subr.mxu0 0.0
    %4700 = vmatpush1.msra.mxu0 0.0
    %4701 = vmatprep.subr.mxu0 0.0
    %4702 = vmatpush1.msra.mxu0 0.0
    %4703 = vmatprep.subr.mxu0 0.0
    %4704 = vmatpush1.msra.mxu0 0.0
    %4705 = vmatprep.subr.mxu0 0.0
    %4706 = vmatpush1.msra.mxu0 0.0
    %4707 = vmatprep.subr.mxu0 0.0
    %4708 = vmatpush1.msra.mxu0 0.0
    %4709 = vmatprep.subr.mxu0 0.0
    %4710 = vmatpush1.msra.mxu0 0.0
    %4711 = vmatprep.subr.mxu0 0.0
    %4712 = vmatpush1.msra.mxu0 0.0
    %4713 = vmatprep.subr.mxu0 0.0
    %4714 = vmatpush1.msra.mxu0 0.0
    %4715 = vmatprep.subr.mxu0 0.0
    %4716 = vmatpush1.msra.mxu0 0.0
    %4717 = vmatprep.subr.mxu0 0.0
    %4718 = vmatpush1.msra.mxu0 0.0
    %4719 = vmatprep.subr.mxu0 0.0
    %4720 = vmatpush1.msra.mxu0 0.0
    %4721 = vmatprep.subr.mxu0 0.0
    %4722 = vmatpush1.msra.mxu0 0.0
    %4723 = vmatprep.subr.mxu0 0.0
    %4724 = vmatpush1.msra.mxu0 0.0
    %4725 = vmatprep.subr.mxu0 0.0
    %4726 = vmatpush1.msra.mxu0 0.0
    %4727 = vmatprep.subr.mxu0 0.0
    %4728 = vmatpush1.msra.mxu0 0.0
    %4729 = vmatprep.subr.mxu0 0.0
    %4730 = vmatpush1.msra.mxu0 0.0
    %4731 = vmatprep.subr.mxu0 0.0
    %4732 = vmatpush1.msra.mxu0 0.0
    %4733 = vmatprep.subr.mxu0 0.0
    %4734 = vmatpush1.msra.mxu0 0.0
    %4735 = vmatprep.subr.mxu0 0.0
    %4736 = vmatpush1.msra.mxu0 0.0
    %4737 = vmatprep.subr.mxu0 0.0
    %4738 = vmatpush1.msra.mxu0 0.0
    %4739 = vmatprep.subr.mxu0 0.0
    %4740 = vmatpush1.msra.mxu0 0.0
    %4741 = vmatprep.subr.mxu0 0.0
    %4742 = vmatpush1.msra.mxu0 0.0
    %4743 = vmatprep.subr.mxu0 0.0
    %4744 = vmatpush1.msra.mxu0 0.0
    %4745 = vmatprep.subr.mxu0 0.0
    %4746 = vmatpush1.msra.mxu0 0.0
    %4747 = vmatprep.mubr.f32.mxu0 0.0
    %4748 = vmatmul.mubr.f32.gmra.mrb[0].mxu0 %v4604
    %v4749 = vpop.f32.mrb[0].mxu0
    %v4750 = vadd.f32 0.0, %v4749
    %v4751 = vpop.f32.mrb[0].mxu0
    %4752 = vdwg.mxu0
    %4754 = vrot.lane.b32.xlu0 %v4750, 32
    %v4755 = vpop.permute.xlu0 %4754
    %v4757 = vadd.f32 %v3306, %v4755
    %v4758 = vxor.u32 %v4757, 2147483648
    %v4759 = vmul.f32 %v4758, 1.442695
    %v4760 = vpow.pop %v4759
    %v4761 = vadd.f32 %v4760, 1.0
    %v4762 = vrcp.pop %v4761
    %v4763 = vmul.f32 1.0, %v4762
    %4764 = vmatprep.subr.mxu0 0.0
    %4765 = vmatpush1.msra.mxu0 %v3014
    %4766 = vmatprep.subr.mxu0 0.0
    %4767 = vmatpush1.msra.mxu0 %v3015
    %4768 = vmatprep.subr.mxu0 0.0
    %4769 = vmatpush1.msra.mxu0 %v3016
    %4770 = vmatprep.subr.mxu0 0.0
    %4771 = vmatpush1.msra.mxu0 %v3017
    %4772 = vmatprep.subr.mxu0 0.0
    %4773 = vmatpush1.msra.mxu0 0.0
    %4774 = vmatprep.subr.mxu0 0.0
    %4775 = vmatpush1.msra.mxu0 0.0
    %4776 = vmatprep.subr.mxu0 0.0
    %4777 = vmatpush1.msra.mxu0 0.0
    %4778 = vmatprep.subr.mxu0 0.0
    %4779 = vmatpush1.msra.mxu0 0.0
    %4780 = vmatprep.subr.mxu0 0.0
    %4781 = vmatpush1.msra.mxu0 0.0
    %4782 = vmatprep.subr.mxu0 0.0
    %4783 = vmatpush1.msra.mxu0 0.0
    %4784 = vmatprep.subr.mxu0 0.0
    %4785 = vmatpush1.msra.mxu0 0.0
    %4786 = vmatprep.subr.mxu0 0.0
    %4787 = vmatpush1.msra.mxu0 0.0
    %4788 = vmatprep.subr.mxu0 0.0
    %4789 = vmatpush1.msra.mxu0 0.0
    %4790 = vmatprep.subr.mxu0 0.0
    %4791 = vmatpush1.msra.mxu0 0.0
    %4792 = vmatprep.subr.mxu0 0.0
    %4793 = vmatpush1.msra.mxu0 0.0
    %4794 = vmatprep.subr.mxu0 0.0
    %4795 = vmatpush1.msra.mxu0 0.0
    %4796 = vmatprep.subr.mxu0 0.0
    %4797 = vmatpush1.msra.mxu0 0.0
    %4798 = vmatprep.subr.mxu0 0.0
    %4799 = vmatpush1.msra.mxu0 0.0
    %4800 = vmatprep.subr.mxu0 0.0
    %4801 = vmatpush1.msra.mxu0 0.0
    %4802 = vmatprep.subr.mxu0 0.0
    %4803 = vmatpush1.msra.mxu0 0.0
    %4804 = vmatprep.subr.mxu0 0.0
    %4805 = vmatpush1.msra.mxu0 0.0
    %4806 = vmatprep.subr.mxu0 0.0
    %4807 = vmatpush1.msra.mxu0 0.0
    %4808 = vmatprep.subr.mxu0 0.0
    %4809 = vmatpush1.msra.mxu0 0.0
    %4810 = vmatprep.subr.mxu0 0.0
    %4811 = vmatpush1.msra.mxu0 0.0
    %4812 = vmatprep.subr.mxu0 0.0
    %4813 = vmatpush1.msra.mxu0 0.0
    %4814 = vmatprep.subr.mxu0 0.0
    %4815 = vmatpush1.msra.mxu0 0.0
    %4816 = vmatprep.subr.mxu0 0.0
    %4817 = vmatpush1.msra.mxu0 0.0
    %4818 = vmatprep.subr.mxu0 0.0
    %4819 = vmatpush1.msra.mxu0 0.0
    %4820 = vmatprep.subr.mxu0 0.0
    %4821 = vmatpush1.msra.mxu0 0.0
    %4822 = vmatprep.subr.mxu0 0.0
    %4823 = vmatpush1.msra.mxu0 0.0
    %4824 = vmatprep.subr.mxu0 0.0
    %4825 = vmatpush1.msra.mxu0 0.0
    %4826 = vmatprep.subr.mxu0 0.0
    %4827 = vmatpush1.msra.mxu0 0.0
    %4828 = vmatprep.mubr.f32.mxu0 0.0
    %4829 = vmatmul.mubr.f32.gmra.mrb[0].mxu0 %v4604
    %v4830 = vpop.f32.mrb[0].mxu0
    %v4831 = vadd.f32 0.0, %v4830
    %v4832 = vpop.f32.mrb[0].mxu0
    %4833 = vdwg.mxu0
    %4835 = vrot.lane.b32.xlu0 %v4831, 64
    %v4836 = vpop.permute.xlu0 %4835
    %v4838 = vadd.f32 %v3306, %v4836
    %v4839 = vtanh.pop %v4838
    %4840 = vmatprep.subr.mxu0 0.0
    %4841 = vmatpush1.msra.mxu0 %v3018
    %4842 = vmatprep.subr.mxu0 0.0
    %4843 = vmatpush1.msra.mxu0 %v3019
    %4844 = vmatprep.subr.mxu0 0.0
    %4845 = vmatpush1.msra.mxu0 %v3020
    %4846 = vmatprep.subr.mxu0 0.0
    %4847 = vmatpush1.msra.mxu0 %v3021
    %4848 = vmatprep.subr.mxu0 0.0
    %4849 = vmatpush1.msra.mxu0 0.0
    %4850 = vmatprep.subr.mxu0 0.0
    %4851 = vmatpush1.msra.mxu0 0.0
    %4852 = vmatprep.subr.mxu0 0.0
    %4853 = vmatpush1.msra.mxu0 0.0
    %4854 = vmatprep.subr.mxu0 0.0
    %4855 = vmatpush1.msra.mxu0 0.0
    %4856 = vmatprep.subr.mxu0 0.0
    %4857 = vmatpush1.msra.mxu0 0.0
    %4858 = vmatprep.subr.mxu0 0.0
    %4859 = vmatpush1.msra.mxu0 0.0
    %4860 = vmatprep.subr.mxu0 0.0
    %4861 = vmatpush1.msra.mxu0 0.0
    %4862 = vmatprep.subr.mxu0 0.0
    %4863 = vmatpush1.msra.mxu0 0.0
    %4864 = vmatprep.subr.mxu0 0.0
    %4865 = vmatpush1.msra.mxu0 0.0
    %4866 = vmatprep.subr.mxu0 0.0
    %4867 = vmatpush1.msra.mxu0 0.0
    %4868 = vmatprep.subr.mxu0 0.0
    %4869 = vmatpush1.msra.mxu0 0.0
    %4870 = vmatprep.subr.mxu0 0.0
    %4871 = vmatpush1.msra.mxu0 0.0
    %4872 = vmatprep.subr.mxu0 0.0
    %4873 = vmatpush1.msra.mxu0 0.0
    %4874 = vmatprep.subr.mxu0 0.0
    %4875 = vmatpush1.msra.mxu0 0.0
    %4876 = vmatprep.subr.mxu0 0.0
    %4877 = vmatpush1.msra.mxu0 0.0
    %4878 = vmatprep.subr.mxu0 0.0
    %4879 = vmatpush1.msra.mxu0 0.0
    %4880 = vmatprep.subr.mxu0 0.0
    %4881 = vmatpush1.msra.mxu0 0.0
    %4882 = vmatprep.subr.mxu0 0.0
    %4883 = vmatpush1.msra.mxu0 0.0
    %4884 = vmatprep.subr.mxu0 0.0
    %4885 = vmatpush1.msra.mxu0 0.0
    %4886 = vmatprep.subr.mxu0 0.0
    %4887 = vmatpush1.msra.mxu0 0.0
    %4888 = vmatprep.subr.mxu0 0.0
    %4889 = vmatpush1.msra.mxu0 0.0
    %4890 = vmatprep.subr.mxu0 0.0
    %4891 = vmatpush1.msra.mxu0 0.0
    %4892 = vmatprep.subr.mxu0 0.0
    %4893 = vmatpush1.msra.mxu0 0.0
    %4894 = vmatprep.subr.mxu0 0.0
    %4895 = vmatpush1.msra.mxu0 0.0
    %4896 = vmatprep.subr.mxu0 0.0
    %4897 = vmatpush1.msra.mxu0 0.0
    %4898 = vmatprep.subr.mxu0 0.0
    %4899 = vmatpush1.msra.mxu0 0.0
    %4900 = vmatprep.subr.mxu0 0.0
    %4901 = vmatpush1.msra.mxu0 0.0
    %4902 = vmatprep.subr.mxu0 0.0
    %4903 = vmatpush1.msra.mxu0 0.0
    %4904 = vmatprep.mubr.f32.mxu0 0.0
    %4905 = vmatmul.mubr.f32.gmra.mrb[0].mxu0 %v4604
    %v4906 = vpop.f32.mrb[0].mxu0
    %v4907 = vadd.f32 0.0, %v4906
    %v4908 = vpop.f32.mrb[0].mxu0
    %4909 = vdwg.mxu0
    %4911 = vrot.lane.b32.xlu0 %v4907, 96
    %v4912 = vpop.permute.xlu0 %4911
    %v4914 = vadd.f32 %v3306, %v4912
    %v4915 = vxor.u32 %v4914, 2147483648
    %v4916 = vmul.f32 %v4915, 1.442695
    %v4917 = vpow.pop %v4916
    %v4918 = vadd.f32 %v4917, 1.0
    %v4919 = vrcp.pop %v4918
    %v4920 = vmul.f32 1.0, %v4919
    %v4921 = vmul.f32 %v4763, %v4594
    %4923 = vrot.lane.b32.xlu0 %v4839, 64
    %v4924 = vpop.permute.xlu0 %4923
    %v4926 = vmul.f32 %v4682, %v4924
    %4928 = vrot.lane.b32.xlu0 %v4926, 32
    %v4929 = vpop.permute.xlu0 %4928
    %v4931 = vadd.f32 %v4921, %v4929
    %v4932 = vtanh.pop %v4931
    %4934 = vrot.lane.b32.xlu0 %v4932, 64
    %v4935 = vpop.permute.xlu0 %4934
    %v4937 = vmul.f32 %v4920, %v4935
    %4939 = vrot.lane.b32.xlu0 %v4937, 32
    %v4940 = vpop.permute.xlu0 %4939
    %v4941 = vsel %vm164, %v4940, 0
    %4943 = vmatprep.subr.mxu0 0.0
    %4944 = vmatpush1.msra.mxu0 %v3006
    %4945 = vmatprep.subr.mxu0 0.0
    %4946 = vmatpush1.msra.mxu0 %v3007
    %4947 = vmatprep.subr.mxu0 0.0
    %4948 = vmatpush1.msra.mxu0 %v3008
    %4949 = vmatprep.subr.mxu0 0.0
    %4950 = vmatpush1.msra.mxu0 %v3009
    %4951 = vmatprep.subr.mxu0 0.0
    %4952 = vmatpush1.msra.mxu0 0.0
    %4953 = vmatprep.subr.mxu0 0.0
    %4954 = vmatpush1.msra.mxu0 0.0
    %4955 = vmatprep.subr.mxu0 0.0
    %4956 = vmatpush1.msra.mxu0 0.0
    %4957 = vmatprep.subr.mxu0 0.0
    %4958 = vmatpush1.msra.mxu0 0.0
    %4959 = vmatprep.subr.mxu0 0.0
    %4960 = vmatpush1.msra.mxu0 0.0
    %4961 = vmatprep.subr.mxu0 0.0
    %4962 = vmatpush1.msra.mxu0 0.0
    %4963 = vmatprep.subr.mxu0 0.0
    %4964 = vmatpush1.msra.mxu0 0.0
    %4965 = vmatprep.subr.mxu0 0.0
    %4966 = vmatpush1.msra.mxu0 0.0
    %4967 = vmatprep.subr.mxu0 0.0
    %4968 = vmatpush1.msra.mxu0 0.0
    %4969 = vmatprep.subr.mxu0 0.0
    %4970 = vmatpush1.msra.mxu0 0.0
    %4971 = vmatprep.subr.mxu0 0.0
    %4972 = vmatpush1.msra.mxu0 0.0
    %4973 = vmatprep.subr.mxu0 0.0
    %4974 = vmatpush1.msra.mxu0 0.0
    %4975 = vmatprep.subr.mxu0 0.0
    %4976 = vmatpush1.msra.mxu0 0.0
    %4977 = vmatprep.subr.mxu0 0.0
    %4978 = vmatpush1.msra.mxu0 0.0
    %4979 = vmatprep.subr.mxu0 0.0
    %4980 = vmatpush1.msra.mxu0 0.0
    %4981 = vmatprep.subr.mxu0 0.0
    %4982 = vmatpush1.msra.mxu0 0.0
    %4983 = vmatprep.subr.mxu0 0.0
    %4984 = vmatpush1.msra.mxu0 0.0
    %4985 = vmatprep.subr.mxu0 0.0
    %4986 = vmatpush1.msra.mxu0 0.0
    %4987 = vmatprep.subr.mxu0 0.0
    %4988 = vmatpush1.msra.mxu0 0.0
    %4989 = vmatprep.subr.mxu0 0.0
    %4990 = vmatpush1.msra.mxu0 0.0
    %4991 = vmatprep.subr.mxu0 0.0
    %4992 = vmatpush1.msra.mxu0 0.0
    %4993 = vmatprep.subr.mxu0 0.0
    %4994 = vmatpush1.msra.mxu0 0.0
    %4995 = vmatprep.subr.mxu0 0.0
    %4996 = vmatpush1.msra.mxu0 0.0
    %4997 = vmatprep.subr.mxu0 0.0
    %4998 = vmatpush1.msra.mxu0 0.0
    %4999 = vmatprep.subr.mxu0 0.0
    %5000 = vmatpush1.msra.mxu0 0.0
    %5001 = vmatprep.subr.mxu0 0.0
    %5002 = vmatpush1.msra.mxu0 0.0
    %5003 = vmatprep.subr.mxu0 0.0
    %5004 = vmatpush1.msra.mxu0 0.0
    %5005 = vmatprep.subr.mxu0 0.0
    %5006 = vmatpush1.msra.mxu0 0.0
    %5007 = vmatprep.mubr.f32.mxu0 0.0
    %5008 = vmatmul.mubr.f32.gmra.mrb[0].mxu0 %v4941
    %v5009 = vpop.f32.mrb[0].mxu0
    %v5010 = vadd.f32 0.0, %v5009
    %v5011 = vpop.f32.mrb[0].mxu0
    %5012 = vdwg.mxu0
    %v5013 = vadd.f32 %v3376, %v5010
    %v5014 = vxor.u32 %v5013, 2147483648
    %v5015 = vmul.f32 %v5014, 1.442695
    %v5016 = vpow.pop %v5015
    %v5017 = vadd.f32 %v5016, 1.0
    %v5018 = vrcp.pop %v5017
    %v5019 = vmul.f32 1.0, %v5018
    %5020 = vmatprep.subr.mxu0 0.0
    %5021 = vmatpush1.msra.mxu0 %v3010
    %5022 = vmatprep.subr.mxu0 0.0
    %5023 = vmatpush1.msra.mxu0 %v3011
    %5024 = vmatprep.subr.mxu0 0.0
    %5025 = vmatpush1.msra.mxu0 %v3012
    %5026 = vmatprep.subr.mxu0 0.0
    %5027 = vmatpush1.msra.mxu0 %v3013
    %5028 = vmatprep.subr.mxu0 0.0
    %5029 = vmatpush1.msra.mxu0 0.0
    %5030 = vmatprep.subr.mxu0 0.0
    %5031 = vmatpush1.msra.mxu0 0.0
    %5032 = vmatprep.subr.mxu0 0.0
    %5033 = vmatpush1.msra.mxu0 0.0
    %5034 = vmatprep.subr.mxu0 0.0
    %5035 = vmatpush1.msra.mxu0 0.0
    %5036 = vmatprep.subr.mxu0 0.0
    %5037 = vmatpush1.msra.mxu0 0.0
    %5038 = vmatprep.subr.mxu0 0.0
    %5039 = vmatpush1.msra.mxu0 0.0
    %5040 = vmatprep.subr.mxu0 0.0
    %5041 = vmatpush1.msra.mxu0 0.0
    %5042 = vmatprep.subr.mxu0 0.0
    %5043 = vmatpush1.msra.mxu0 0.0
    %5044 = vmatprep.subr.mxu0 0.0
    %5045 = vmatpush1.msra.mxu0 0.0
    %5046 = vmatprep.subr.mxu0 0.0
    %5047 = vmatpush1.msra.mxu0 0.0
    %5048 = vmatprep.subr.mxu0 0.0
    %5049 = vmatpush1.msra.mxu0 0.0
    %5050 = vmatprep.subr.mxu0 0.0
    %5051 = vmatpush1.msra.mxu0 0.0
    %5052 = vmatprep.subr.mxu0 0.0
    %5053 = vmatpush1.msra.mxu0 0.0
    %5054 = vmatprep.subr.mxu0 0.0
    %5055 = vmatpush1.msra.mxu0 0.0
    %5056 = vmatprep.subr.mxu0 0.0
    %5057 = vmatpush1.msra.mxu0 0.0
    %5058 = vmatprep.subr.mxu0 0.0
    %5059 = vmatpush1.msra.mxu0 0.0
    %5060 = vmatprep.subr.mxu0 0.0
    %5061 = vmatpush1.msra.mxu0 0.0
    %5062 = vmatprep.subr.mxu0 0.0
    %5063 = vmatpush1.msra.mxu0 0.0
    %5064 = vmatprep.subr.mxu0 0.0
    %5065 = vmatpush1.msra.mxu0 0.0
    %5066 = vmatprep.subr.mxu0 0.0
    %5067 = vmatpush1.msra.mxu0 0.0
    %5068 = vmatprep.subr.mxu0 0.0
    %5069 = vmatpush1.msra.mxu0 0.0
    %5070 = vmatprep.subr.mxu0 0.0
    %5071 = vmatpush1.msra.mxu0 0.0
    %5072 = vmatprep.subr.mxu0 0.0
    %5073 = vmatpush1.msra.mxu0 0.0
    %5074 = vmatprep.subr.mxu0 0.0
    %5075 = vmatpush1.msra.mxu0 0.0
    %5076 = vmatprep.subr.mxu0 0.0
    %5077 = vmatpush1.msra.mxu0 0.0
    %5078 = vmatprep.subr.mxu0 0.0
    %5079 = vmatpush1.msra.mxu0 0.0
    %5080 = vmatprep.subr.mxu0 0.0
    %5081 = vmatpush1.msra.mxu0 0.0
    %5082 = vmatprep.subr.mxu0 0.0
    %5083 = vmatpush1.msra.mxu0 0.0
    %5084 = vmatprep.mubr.f32.mxu0 0.0
    %5085 = vmatmul.mubr.f32.gmra.mrb[0].mxu0 %v4941
    %v5086 = vpop.f32.mrb[0].mxu0
    %v5087 = vadd.f32 0.0, %v5086
    %v5088 = vpop.f32.mrb[0].mxu0
    %5089 = vdwg.mxu0
    %5091 = vrot.lane.b32.xlu0 %v5087, 32
    %v5092 = vpop.permute.xlu0 %5091
    %v5094 = vadd.f32 %v3376, %v5092
    %v5095 = vxor.u32 %v5094, 2147483648
    %v5096 = vmul.f32 %v5095, 1.442695
    %v5097 = vpow.pop %v5096
    %v5098 = vadd.f32 %v5097, 1.0
    %v5099 = vrcp.pop %v5098
    %v5100 = vmul.f32 1.0, %v5099
    %5101 = vmatprep.subr.mxu0 0.0
    %5102 = vmatpush1.msra.mxu0 %v3014
    %5103 = vmatprep.subr.mxu0 0.0
    %5104 = vmatpush1.msra.mxu0 %v3015
    %5105 = vmatprep.subr.mxu0 0.0
    %5106 = vmatpush1.msra.mxu0 %v3016
    %5107 = vmatprep.subr.mxu0 0.0
    %5108 = vmatpush1.msra.mxu0 %v3017
    %5109 = vmatprep.subr.mxu0 0.0
    %5110 = vmatpush1.msra.mxu0 0.0
    %5111 = vmatprep.subr.mxu0 0.0
    %5112 = vmatpush1.msra.mxu0 0.0
    %5113 = vmatprep.subr.mxu0 0.0
    %5114 = vmatpush1.msra.mxu0 0.0
    %5115 = vmatprep.subr.mxu0 0.0
    %5116 = vmatpush1.msra.mxu0 0.0
    %5117 = vmatprep.subr.mxu0 0.0
    %5118 = vmatpush1.msra.mxu0 0.0
    %5119 = vmatprep.subr.mxu0 0.0
    %5120 = vmatpush1.msra.mxu0 0.0
    %5121 = vmatprep.subr.mxu0 0.0
    %5122 = vmatpush1.msra.mxu0 0.0
    %5123 = vmatprep.subr.mxu0 0.0
    %5124 = vmatpush1.msra.mxu0 0.0
    %5125 = vmatprep.subr.mxu0 0.0
    %5126 = vmatpush1.msra.mxu0 0.0
    %5127 = vmatprep.subr.mxu0 0.0
    %5128 = vmatpush1.msra.mxu0 0.0
    %5129 = vmatprep.subr.mxu0 0.0
    %5130 = vmatpush1.msra.mxu0 0.0
    %5131 = vmatprep.subr.mxu0 0.0
    %5132 = vmatpush1.msra.mxu0 0.0
    %5133 = vmatprep.subr.mxu0 0.0
    %5134 = vmatpush1.msra.mxu0 0.0
    %5135 = vmatprep.subr.mxu0 0.0
    %5136 = vmatpush1.msra.mxu0 0.0
    %5137 = vmatprep.subr.mxu0 0.0
    %5138 = vmatpush1.msra.mxu0 0.0
    %5139 = vmatprep.subr.mxu0 0.0
    %5140 = vmatpush1.msra.mxu0 0.0
    %5141 = vmatprep.subr.mxu0 0.0
    %5142 = vmatpush1.msra.mxu0 0.0
    %5143 = vmatprep.subr.mxu0 0.0
    %5144 = vmatpush1.msra.mxu0 0.0
    %5145 = vmatprep.subr.mxu0 0.0
    %5146 = vmatpush1.msra.mxu0 0.0
    %5147 = vmatprep.subr.mxu0 0.0
    %5148 = vmatpush1.msra.mxu0 0.0
    %5149 = vmatprep.subr.mxu0 0.0
    %5150 = vmatpush1.msra.mxu0 0.0
    %5151 = vmatprep.subr.mxu0 0.0
    %5152 = vmatpush1.msra.mxu0 0.0
    %5153 = vmatprep.subr.mxu0 0.0
    %5154 = vmatpush1.msra.mxu0 0.0
    %5155 = vmatprep.subr.mxu0 0.0
    %5156 = vmatpush1.msra.mxu0 0.0
    %5157 = vmatprep.subr.mxu0 0.0
    %5158 = vmatpush1.msra.mxu0 0.0
    %5159 = vmatprep.subr.mxu0 0.0
    %5160 = vmatpush1.msra.mxu0 0.0
    %5161 = vmatprep.subr.mxu0 0.0
    %5162 = vmatpush1.msra.mxu0 0.0
    %5163 = vmatprep.subr.mxu0 0.0
    %5164 = vmatpush1.msra.mxu0 0.0
    %5165 = vmatprep.mubr.f32.mxu0 0.0
    %5166 = vmatmul.mubr.f32.gmra.mrb[0].mxu0 %v4941
    %v5167 = vpop.f32.mrb[0].mxu0
    %v5168 = vadd.f32 0.0, %v5167
    %v5169 = vpop.f32.mrb[0].mxu0
    %5170 = vdwg.mxu0
    %5172 = vrot.lane.b32.xlu0 %v5168, 64
    %v5173 = vpop.permute.xlu0 %5172
    %v5175 = vadd.f32 %v3376, %v5173
    %v5176 = vtanh.pop %v5175
    %5177 = vmatprep.subr.mxu0 0.0
    %5178 = vmatpush1.msra.mxu0 %v3018
    %5179 = vmatprep.subr.mxu0 0.0
    %5180 = vmatpush1.msra.mxu0 %v3019
    %5181 = vmatprep.subr.mxu0 0.0
    %5182 = vmatpush1.msra.mxu0 %v3020
    %5183 = vmatprep.subr.mxu0 0.0
    %5184 = vmatpush1.msra.mxu0 %v3021
    %5185 = vmatprep.subr.mxu0 0.0
    %5186 = vmatpush1.msra.mxu0 0.0
    %5187 = vmatprep.subr.mxu0 0.0
    %5188 = vmatpush1.msra.mxu0 0.0
    %5189 = vmatprep.subr.mxu0 0.0
    %5190 = vmatpush1.msra.mxu0 0.0
    %5191 = vmatprep.subr.mxu0 0.0
    %5192 = vmatpush1.msra.mxu0 0.0
    %5193 = vmatprep.subr.mxu0 0.0
    %5194 = vmatpush1.msra.mxu0 0.0
    %5195 = vmatprep.subr.mxu0 0.0
    %5196 = vmatpush1.msra.mxu0 0.0
    %5197 = vmatprep.subr.mxu0 0.0
    %5198 = vmatpush1.msra.mxu0 0.0
    %5199 = vmatprep.subr.mxu0 0.0
    %5200 = vmatpush1.msra.mxu0 0.0
    %5201 = vmatprep.subr.mxu0 0.0
    %5202 = vmatpush1.msra.mxu0 0.0
    %5203 = vmatprep.subr.mxu0 0.0
    %5204 = vmatpush1.msra.mxu0 0.0
    %5205 = vmatprep.subr.mxu0 0.0
    %5206 = vmatpush1.msra.mxu0 0.0
    %5207 = vmatprep.subr.mxu0 0.0
    %5208 = vmatpush1.msra.mxu0 0.0
    %5209 = vmatprep.subr.mxu0 0.0
    %5210 = vmatpush1.msra.mxu0 0.0
    %5211 = vmatprep.subr.mxu0 0.0
    %5212 = vmatpush1.msra.mxu0 0.0
    %5213 = vmatprep.subr.mxu0 0.0
    %5214 = vmatpush1.msra.mxu0 0.0
    %5215 = vmatprep.subr.mxu0 0.0
    %5216 = vmatpush1.msra.mxu0 0.0
    %5217 = vmatprep.subr.mxu0 0.0
    %5218 = vmatpush1.msra.mxu0 0.0
    %5219 = vmatprep.subr.mxu0 0.0
    %5220 = vmatpush1.msra.mxu0 0.0
    %5221 = vmatprep.subr.mxu0 0.0
    %5222 = vmatpush1.msra.mxu0 0.0
    %5223 = vmatprep.subr.mxu0 0.0
    %5224 = vmatpush1.msra.mxu0 0.0
    %5225 = vmatprep.subr.mxu0 0.0
    %5226 = vmatpush1.msra.mxu0 0.0
    %5227 = vmatprep.subr.mxu0 0.0
    %5228 = vmatpush1.msra.mxu0 0.0
    %5229 = vmatprep.subr.mxu0 0.0
    %5230 = vmatpush1.msra.mxu0 0.0
    %5231 = vmatprep.subr.mxu0 0.0
    %5232 = vmatpush1.msra.mxu0 0.0
    %5233 = vmatprep.subr.mxu0 0.0
    %5234 = vmatpush1.msra.mxu0 0.0
    %5235 = vmatprep.subr.mxu0 0.0
    %5236 = vmatpush1.msra.mxu0 0.0
    %5237 = vmatprep.subr.mxu0 0.0
    %5238 = vmatpush1.msra.mxu0 0.0
    %5239 = vmatprep.subr.mxu0 0.0
    %5240 = vmatpush1.msra.mxu0 0.0
    %5241 = vmatprep.mubr.f32.mxu0 0.0
    %5242 = vmatmul.mubr.f32.gmra.mrb[0].mxu0 %v4941
    %v5243 = vpop.f32.mrb[0].mxu0
    %v5244 = vadd.f32 0.0, %v5243
    %v5245 = vpop.f32.mrb[0].mxu0
    %5246 = vdwg.mxu0
    %5248 = vrot.lane.b32.xlu0 %v5244, 96
    %v5249 = vpop.permute.xlu0 %5248
    %v5251 = vadd.f32 %v3376, %v5249
    %v5252 = vxor.u32 %v5251, 2147483648
    %v5253 = vmul.f32 %v5252, 1.442695
    %v5254 = vpow.pop %v5253
    %v5255 = vadd.f32 %v5254, 1.0
    %v5256 = vrcp.pop %v5255
    %v5257 = vmul.f32 1.0, %v5256
    %v5258 = vmul.f32 %v5100, %v4931
    %5260 = vrot.lane.b32.xlu0 %v5176, 64
    %v5261 = vpop.permute.xlu0 %5260
    %v5263 = vmul.f32 %v5019, %v5261
    %5265 = vrot.lane.b32.xlu0 %v5263, 32
    %v5266 = vpop.permute.xlu0 %5265
    %v5268 = vadd.f32 %v5258, %v5266
    %v5269 = vtanh.pop %v5268
    %5271 = vrot.lane.b32.xlu0 %v5269, 64
    %v5272 = vpop.permute.xlu0 %5271
    %v5274 = vmul.f32 %v5257, %v5272
    %5276 = vrot.lane.b32.xlu0 %v5274, 32
    %v5277 = vpop.permute.xlu0 %5276
    %v5278 = vsel %vm164, %v5277, 0
    %5280 = vmatprep.subr.mxu0 0.0
    %5281 = vmatpush1.msra.mxu0 %v3006
    %5282 = vmatprep.subr.mxu0 0.0
    %5283 = vmatpush1.msra.mxu0 %v3007
    %5284 = vmatprep.subr.mxu0 0.0
    %5285 = vmatpush1.msra.mxu0 %v3008
    %5286 = vmatprep.subr.mxu0 0.0
    %5287 = vmatpush1.msra.mxu0 %v3009
    %5288 = vmatprep.subr.mxu0 0.0
    %5289 = vmatpush1.msra.mxu0 0.0
    %5290 = vmatprep.subr.mxu0 0.0
    %5291 = vmatpush1.msra.mxu0 0.0
    %5292 = vmatprep.subr.mxu0 0.0
    %5293 = vmatpush1.msra.mxu0 0.0
    %5294 = vmatprep.subr.mxu0 0.0
    %5295 = vmatpush1.msra.mxu0 0.0
    %5296 = vmatprep.subr.mxu0 0.0
    %5297 = vmatpush1.msra.mxu0 0.0
    %5298 = vmatprep.subr.mxu0 0.0
    %5299 = vmatpush1.msra.mxu0 0.0
    %5300 = vmatprep.subr.mxu0 0.0
    %5301 = vmatpush1.msra.mxu0 0.0
    %5302 = vmatprep.subr.mxu0 0.0
    %5303 = vmatpush1.msra.mxu0 0.0
    %5304 = vmatprep.subr.mxu0 0.0
    %5305 = vmatpush1.msra.mxu0 0.0
    %5306 = vmatprep.subr.mxu0 0.0
    %5307 = vmatpush1.msra.mxu0 0.0
    %5308 = vmatprep.subr.mxu0 0.0
    %5309 = vmatpush1.msra.mxu0 0.0
    %5310 = vmatprep.subr.mxu0 0.0
    %5311 = vmatpush1.msra.mxu0 0.0
    %5312 = vmatprep.subr.mxu0 0.0
    %5313 = vmatpush1.msra.mxu0 0.0
    %5314 = vmatprep.subr.mxu0 0.0
    %5315 = vmatpush1.msra.mxu0 0.0
    %5316 = vmatprep.subr.mxu0 0.0
    %5317 = vmatpush1.msra.mxu0 0.0
    %5318 = vmatprep.subr.mxu0 0.0
    %5319 = vmatpush1.msra.mxu0 0.0
    %5320 = vmatprep.subr.mxu0 0.0
    %5321 = vmatpush1.msra.mxu0 0.0
    %5322 = vmatprep.subr.mxu0 0.0
    %5323 = vmatpush1.msra.mxu0 0.0
    %5324 = vmatprep.subr.mxu0 0.0
    %5325 = vmatpush1.msra.mxu0 0.0
    %5326 = vmatprep.subr.mxu0 0.0
    %5327 = vmatpush1.msra.mxu0 0.0
    %5328 = vmatprep.subr.mxu0 0.0
    %5329 = vmatpush1.msra.mxu0 0.0
    %5330 = vmatprep.subr.mxu0 0.0
    %5331 = vmatpush1.msra.mxu0 0.0
    %5332 = vmatprep.subr.mxu0 0.0
    %5333 = vmatpush1.msra.mxu0 0.0
    %5334 = vmatprep.subr.mxu0 0.0
    %5335 = vmatpush1.msra.mxu0 0.0
    %5336 = vmatprep.subr.mxu0 0.0
    %5337 = vmatpush1.msra.mxu0 0.0
    %5338 = vmatprep.subr.mxu0 0.0
    %5339 = vmatpush1.msra.mxu0 0.0
    %5340 = vmatprep.subr.mxu0 0.0
    %5341 = vmatpush1.msra.mxu0 0.0
    %5342 = vmatprep.subr.mxu0 0.0
    %5343 = vmatpush1.msra.mxu0 0.0
    %5344 = vmatprep.mubr.f32.mxu0 0.0
    %5345 = vmatmul.mubr.f32.gmra.mrb[0].mxu0 %v5278
    %v5346 = vpop.f32.mrb[0].mxu0
    %v5347 = vadd.f32 0.0, %v5346
    %v5348 = vpop.f32.mrb[0].mxu0
    %5349 = vdwg.mxu0
    %v5350 = vadd.f32 %v3446, %v5347
    %v5351 = vxor.u32 %v5350, 2147483648
    %v5352 = vmul.f32 %v5351, 1.442695
    %v5353 = vpow.pop %v5352
    %v5354 = vadd.f32 %v5353, 1.0
    %v5355 = vrcp.pop %v5354
    %v5356 = vmul.f32 1.0, %v5355
    %5357 = vmatprep.subr.mxu0 0.0
    %5358 = vmatpush1.msra.mxu0 %v3010
    %5359 = vmatprep.subr.mxu0 0.0
    %5360 = vmatpush1.msra.mxu0 %v3011
    %5361 = vmatprep.subr.mxu0 0.0
    %5362 = vmatpush1.msra.mxu0 %v3012
    %5363 = vmatprep.subr.mxu0 0.0
    %5364 = vmatpush1.msra.mxu0 %v3013
    %5365 = vmatprep.subr.mxu0 0.0
    %5366 = vmatpush1.msra.mxu0 0.0
    %5367 = vmatprep.subr.mxu0 0.0
    %5368 = vmatpush1.msra.mxu0 0.0
    %5369 = vmatprep.subr.mxu0 0.0
    %5370 = vmatpush1.msra.mxu0 0.0
    %5371 = vmatprep.subr.mxu0 0.0
    %5372 = vmatpush1.msra.mxu0 0.0
    %5373 = vmatprep.subr.mxu0 0.0
    %5374 = vmatpush1.msra.mxu0 0.0
    %5375 = vmatprep.subr.mxu0 0.0
    %5376 = vmatpush1.msra.mxu0 0.0
    %5377 = vmatprep.subr.mxu0 0.0
    %5378 = vmatpush1.msra.mxu0 0.0
    %5379 = vmatprep.subr.mxu0 0.0
    %5380 = vmatpush1.msra.mxu0 0.0
    %5381 = vmatprep.subr.mxu0 0.0
    %5382 = vmatpush1.msra.mxu0 0.0
    %5383 = vmatprep.subr.mxu0 0.0
    %5384 = vmatpush1.msra.mxu0 0.0
    %5385 = vmatprep.subr.mxu0 0.0
    %5386 = vmatpush1.msra.mxu0 0.0
    %5387 = vmatprep.subr.mxu0 0.0
    %5388 = vmatpush1.msra.mxu0 0.0
    %5389 = vmatprep.subr.mxu0 0.0
    %5390 = vmatpush1.msra.mxu0 0.0
    %5391 = vmatprep.subr.mxu0 0.0
    %5392 = vmatpush1.msra.mxu0 0.0
    %5393 = vmatprep.subr.mxu0 0.0
    %5394 = vmatpush1.msra.mxu0 0.0
    %5395 = vmatprep.subr.mxu0 0.0
    %5396 = vmatpush1.msra.mxu0 0.0
    %5397 = vmatprep.subr.mxu0 0.0
    %5398 = vmatpush1.msra.mxu0 0.0
    %5399 = vmatprep.subr.mxu0 0.0
    %5400 = vmatpush1.msra.mxu0 0.0
    %5401 = vmatprep.subr.mxu0 0.0
    %5402 = vmatpush1.msra.mxu0 0.0
    %5403 = vmatprep.subr.mxu0 0.0
    %5404 = vmatpush1.msra.mxu0 0.0
    %5405 = vmatprep.subr.mxu0 0.0
    %5406 = vmatpush1.msra.mxu0 0.0
    %5407 = vmatprep.subr.mxu0 0.0
    %5408 = vmatpush1.msra.mxu0 0.0
    %5409 = vmatprep.subr.mxu0 0.0
    %5410 = vmatpush1.msra.mxu0 0.0
    %5411 = vmatprep.subr.mxu0 0.0
    %5412 = vmatpush1.msra.mxu0 0.0
    %5413 = vmatprep.subr.mxu0 0.0
    %5414 = vmatpush1.msra.mxu0 0.0
    %5415 = vmatprep.subr.mxu0 0.0
    %5416 = vmatpush1.msra.mxu0 0.0
    %5417 = vmatprep.subr.mxu0 0.0
    %5418 = vmatpush1.msra.mxu0 0.0
    %5419 = vmatprep.subr.mxu0 0.0
    %5420 = vmatpush1.msra.mxu0 0.0
    %5421 = vmatprep.mubr.f32.mxu0 0.0
    %5422 = vmatmul.mubr.f32.gmra.mrb[0].mxu0 %v5278
    %v5423 = vpop.f32.mrb[0].mxu0
    %v5424 = vadd.f32 0.0, %v5423
    %v5425 = vpop.f32.mrb[0].mxu0
    %5426 = vdwg.mxu0
    %5428 = vrot.lane.b32.xlu0 %v5424, 32
    %v5429 = vpop.permute.xlu0 %5428
    %v5431 = vadd.f32 %v3446, %v5429
    %v5432 = vxor.u32 %v5431, 2147483648
    %v5433 = vmul.f32 %v5432, 1.442695
    %v5434 = vpow.pop %v5433
    %v5435 = vadd.f32 %v5434, 1.0
    %v5436 = vrcp.pop %v5435
    %v5437 = vmul.f32 1.0, %v5436
    %5438 = vmatprep.subr.mxu0 0.0
    %5439 = vmatpush1.msra.mxu0 %v3014
    %5440 = vmatprep.subr.mxu0 0.0
    %5441 = vmatpush1.msra.mxu0 %v3015
    %5442 = vmatprep.subr.mxu0 0.0
    %5443 = vmatpush1.msra.mxu0 %v3016
    %5444 = vmatprep.subr.mxu0 0.0
    %5445 = vmatpush1.msra.mxu0 %v3017
    %5446 = vmatprep.subr.mxu0 0.0
    %5447 = vmatpush1.msra.mxu0 0.0
    %5448 = vmatprep.subr.mxu0 0.0
    %5449 = vmatpush1.msra.mxu0 0.0
    %5450 = vmatprep.subr.mxu0 0.0
    %5451 = vmatpush1.msra.mxu0 0.0
    %5452 = vmatprep.subr.mxu0 0.0
    %5453 = vmatpush1.msra.mxu0 0.0
    %5454 = vmatprep.subr.mxu0 0.0
    %5455 = vmatpush1.msra.mxu0 0.0
    %5456 = vmatprep.subr.mxu0 0.0
    %5457 = vmatpush1.msra.mxu0 0.0
    %5458 = vmatprep.subr.mxu0 0.0
    %5459 = vmatpush1.msra.mxu0 0.0
    %5460 = vmatprep.subr.mxu0 0.0
    %5461 = vmatpush1.msra.mxu0 0.0
    %5462 = vmatprep.subr.mxu0 0.0
    %5463 = vmatpush1.msra.mxu0 0.0
    %5464 = vmatprep.subr.mxu0 0.0
    %5465 = vmatpush1.msra.mxu0 0.0
    %5466 = vmatprep.subr.mxu0 0.0
    %5467 = vmatpush1.msra.mxu0 0.0
    %5468 = vmatprep.subr.mxu0 0.0
    %5469 = vmatpush1.msra.mxu0 0.0
    %5470 = vmatprep.subr.mxu0 0.0
    %5471 = vmatpush1.msra.mxu0 0.0
    %5472 = vmatprep.subr.mxu0 0.0
    %5473 = vmatpush1.msra.mxu0 0.0
    %5474 = vmatprep.subr.mxu0 0.0
    %5475 = vmatpush1.msra.mxu0 0.0
    %5476 = vmatprep.subr.mxu0 0.0
    %5477 = vmatpush1.msra.mxu0 0.0
    %5478 = vmatprep.subr.mxu0 0.0
    %5479 = vmatpush1.msra.mxu0 0.0
    %5480 = vmatprep.subr.mxu0 0.0
    %5481 = vmatpush1.msra.mxu0 0.0
    %5482 = vmatprep.subr.mxu0 0.0
    %5483 = vmatpush1.msra.mxu0 0.0
    %5484 = vmatprep.subr.mxu0 0.0
    %5485 = vmatpush1.msra.mxu0 0.0
    %5486 = vmatprep.subr.mxu0 0.0
    %5487 = vmatpush1.msra.mxu0 0.0
    %5488 = vmatprep.subr.mxu0 0.0
    %5489 = vmatpush1.msra.mxu0 0.0
    %5490 = vmatprep.subr.mxu0 0.0
    %5491 = vmatpush1.msra.mxu0 0.0
    %5492 = vmatprep.subr.mxu0 0.0
    %5493 = vmatpush1.msra.mxu0 0.0
    %5494 = vmatprep.subr.mxu0 0.0
    %5495 = vmatpush1.msra.mxu0 0.0
    %5496 = vmatprep.subr.mxu0 0.0
    %5497 = vmatpush1.msra.mxu0 0.0
    %5498 = vmatprep.subr.mxu0 0.0
    %5499 = vmatpush1.msra.mxu0 0.0
    %5500 = vmatprep.subr.mxu0 0.0
    %5501 = vmatpush1.msra.mxu0 0.0
    %5502 = vmatprep.mubr.f32.mxu0 0.0
    %5503 = vmatmul.mubr.f32.gmra.mrb[0].mxu0 %v5278
    %v5504 = vpop.f32.mrb[0].mxu0
    %v5505 = vadd.f32 0.0, %v5504
    %v5506 = vpop.f32.mrb[0].mxu0
    %5507 = vdwg.mxu0
    %5509 = vrot.lane.b32.xlu0 %v5505, 64
    %v5510 = vpop.permute.xlu0 %5509
    %v5512 = vadd.f32 %v3446, %v5510
    %v5513 = vtanh.pop %v5512
    %5514 = vmatprep.subr.mxu0 0.0
    %5515 = vmatpush1.msra.mxu0 %v3018
    %5516 = vmatprep.subr.mxu0 0.0
    %5517 = vmatpush1.msra.mxu0 %v3019
    %5518 = vmatprep.subr.mxu0 0.0
    %5519 = vmatpush1.msra.mxu0 %v3020
    %5520 = vmatprep.subr.mxu0 0.0
    %5521 = vmatpush1.msra.mxu0 %v3021
    %5522 = vmatprep.subr.mxu0 0.0
    %5523 = vmatpush1.msra.mxu0 0.0
    %5524 = vmatprep.subr.mxu0 0.0
    %5525 = vmatpush1.msra.mxu0 0.0
    %5526 = vmatprep.subr.mxu0 0.0
    %5527 = vmatpush1.msra.mxu0 0.0
    %5528 = vmatprep.subr.mxu0 0.0
    %5529 = vmatpush1.msra.mxu0 0.0
    %5530 = vmatprep.subr.mxu0 0.0
    %5531 = vmatpush1.msra.mxu0 0.0
    %5532 = vmatprep.subr.mxu0 0.0
    %5533 = vmatpush1.msra.mxu0 0.0
    %5534 = vmatprep.subr.mxu0 0.0
    %5535 = vmatpush1.msra.mxu0 0.0
    %5536 = vmatprep.subr.mxu0 0.0
    %5537 = vmatpush1.msra.mxu0 0.0
    %5538 = vmatprep.subr.mxu0 0.0
    %5539 = vmatpush1.msra.mxu0 0.0
    %5540 = vmatprep.subr.mxu0 0.0
    %5541 = vmatpush1.msra.mxu0 0.0
    %5542 = vmatprep.subr.mxu0 0.0
    %5543 = vmatpush1.msra.mxu0 0.0
    %5544 = vmatprep.subr.mxu0 0.0
    %5545 = vmatpush1.msra.mxu0 0.0
    %5546 = vmatprep.subr.mxu0 0.0
    %5547 = vmatpush1.msra.mxu0 0.0
    %5548 = vmatprep.subr.mxu0 0.0
    %5549 = vmatpush1.msra.mxu0 0.0
    %5550 = vmatprep.subr.mxu0 0.0
    %5551 = vmatpush1.msra.mxu0 0.0
    %5552 = vmatprep.subr.mxu0 0.0
    %5553 = vmatpush1.msra.mxu0 0.0
    %5554 = vmatprep.subr.mxu0 0.0
    %5555 = vmatpush1.msra.mxu0 0.0
    %5556 = vmatprep.subr.mxu0 0.0
    %5557 = vmatpush1.msra.mxu0 0.0
    %5558 = vmatprep.subr.mxu0 0.0
    %5559 = vmatpush1.msra.mxu0 0.0
    %5560 = vmatprep.subr.mxu0 0.0
    %5561 = vmatpush1.msra.mxu0 0.0
    %5562 = vmatprep.subr.mxu0 0.0
    %5563 = vmatpush1.msra.mxu0 0.0
    %5564 = vmatprep.subr.mxu0 0.0
    %5565 = vmatpush1.msra.mxu0 0.0
    %5566 = vmatprep.subr.mxu0 0.0
    %5567 = vmatpush1.msra.mxu0 0.0
    %5568 = vmatprep.subr.mxu0 0.0
    %5569 = vmatpush1.msra.mxu0 0.0
    %5570 = vmatprep.subr.mxu0 0.0
    %5571 = vmatpush1.msra.mxu0 0.0
    %5572 = vmatprep.subr.mxu0 0.0
    %5573 = vmatpush1.msra.mxu0 0.0
    %5574 = vmatprep.subr.mxu0 0.0
    %5575 = vmatpush1.msra.mxu0 0.0
    %5576 = vmatprep.subr.mxu0 0.0
    %5577 = vmatpush1.msra.mxu0 0.0
    %5578 = vmatprep.mubr.f32.mxu0 0.0
    %5579 = vmatmul.mubr.f32.gmra.mrb[0].mxu0 %v5278
    %v5580 = vpop.f32.mrb[0].mxu0
    %v5581 = vadd.f32 0.0, %v5580
    %v5582 = vpop.f32.mrb[0].mxu0
    %5583 = vdwg.mxu0
    %5585 = vrot.lane.b32.xlu0 %v5581, 96
    %v5586 = vpop.permute.xlu0 %5585
    %v5588 = vadd.f32 %v3446, %v5586
    %v5589 = vxor.u32 %v5588, 2147483648
    %v5590 = vmul.f32 %v5589, 1.442695
    %v5591 = vpow.pop %v5590
    %v5592 = vadd.f32 %v5591, 1.0
    %v5593 = vrcp.pop %v5592
    %v5594 = vmul.f32 1.0, %v5593
    %v5595 = vmul.f32 %v5437, %v5268
    %5597 = vrot.lane.b32.xlu0 %v5513, 64
    %v5598 = vpop.permute.xlu0 %5597
    %v5600 = vmul.f32 %v5356, %v5598
    %5602 = vrot.lane.b32.xlu0 %v5600, 32
    %v5603 = vpop.permute.xlu0 %5602
    %v5605 = vadd.f32 %v5595, %v5603
    %v5606 = vtanh.pop %v5605
    %5608 = vrot.lane.b32.xlu0 %v5606, 64
    %v5609 = vpop.permute.xlu0 %5608
    %v5611 = vmul.f32 %v5594, %v5609
    %5613 = vrot.lane.b32.xlu0 %v5611, 32
    %v5614 = vpop.permute.xlu0 %5613
    %v5615 = vsel %vm164, %v5614, 0
    %5617 = vmatprep.subr.mxu0 0.0
    %5618 = vmatpush1.msra.mxu0 %v3006
    %5619 = vmatprep.subr.mxu0 0.0
    %5620 = vmatpush1.msra.mxu0 %v3007
    %5621 = vmatprep.subr.mxu0 0.0
    %5622 = vmatpush1.msra.mxu0 %v3008
    %5623 = vmatprep.subr.mxu0 0.0
    %5624 = vmatpush1.msra.mxu0 %v3009
    %5625 = vmatprep.subr.mxu0 0.0
    %5626 = vmatpush1.msra.mxu0 0.0
    %5627 = vmatprep.subr.mxu0 0.0
    %5628 = vmatpush1.msra.mxu0 0.0
    %5629 = vmatprep.subr.mxu0 0.0
    %5630 = vmatpush1.msra.mxu0 0.0
    %5631 = vmatprep.subr.mxu0 0.0
    %5632 = vmatpush1.msra.mxu0 0.0
    %5633 = vmatprep.subr.mxu0 0.0
    %5634 = vmatpush1.msra.mxu0 0.0
    %5635 = vmatprep.subr.mxu0 0.0
    %5636 = vmatpush1.msra.mxu0 0.0
    %5637 = vmatprep.subr.mxu0 0.0
    %5638 = vmatpush1.msra.mxu0 0.0
    %5639 = vmatprep.subr.mxu0 0.0
    %5640 = vmatpush1.msra.mxu0 0.0
    %5641 = vmatprep.subr.mxu0 0.0
    %5642 = vmatpush1.msra.mxu0 0.0
    %5643 = vmatprep.subr.mxu0 0.0
    %5644 = vmatpush1.msra.mxu0 0.0
    %5645 = vmatprep.subr.mxu0 0.0
    %5646 = vmatpush1.msra.mxu0 0.0
    %5647 = vmatprep.subr.mxu0 0.0
    %5648 = vmatpush1.msra.mxu0 0.0
    %5649 = vmatprep.subr.mxu0 0.0
    %5650 = vmatpush1.msra.mxu0 0.0
    %5651 = vmatprep.subr.mxu0 0.0
    %5652 = vmatpush1.msra.mxu0 0.0
    %5653 = vmatprep.subr.mxu0 0.0
    %5654 = vmatpush1.msra.mxu0 0.0
    %5655 = vmatprep.subr.mxu0 0.0
    %5656 = vmatpush1.msra.mxu0 0.0
    %5657 = vmatprep.subr.mxu0 0.0
    %5658 = vmatpush1.msra.mxu0 0.0
    %5659 = vmatprep.subr.mxu0 0.0
    %5660 = vmatpush1.msra.mxu0 0.0
    %5661 = vmatprep.subr.mxu0 0.0
    %5662 = vmatpush1.msra.mxu0 0.0
    %5663 = vmatprep.subr.mxu0 0.0
    %5664 = vmatpush1.msra.mxu0 0.0
    %5665 = vmatprep.subr.mxu0 0.0
    %5666 = vmatpush1.msra.mxu0 0.0
    %5667 = vmatprep.subr.mxu0 0.0
    %5668 = vmatpush1.msra.mxu0 0.0
    %5669 = vmatprep.subr.mxu0 0.0
    %5670 = vmatpush1.msra.mxu0 0.0
    %5671 = vmatprep.subr.mxu0 0.0
    %5672 = vmatpush1.msra.mxu0 0.0
    %5673 = vmatprep.subr.mxu0 0.0
    %5674 = vmatpush1.msra.mxu0 0.0
    %5675 = vmatprep.subr.mxu0 0.0
    %5676 = vmatpush1.msra.mxu0 0.0
    %5677 = vmatprep.subr.mxu0 0.0
    %5678 = vmatpush1.msra.mxu0 0.0
    %5679 = vmatprep.subr.mxu0 0.0
    %5680 = vmatpush1.msra.mxu0 0.0
    %5681 = vmatprep.mubr.f32.mxu0 0.0
    %5682 = vmatmul.mubr.f32.gmra.mrb[0].mxu0 %v5615
    %v5683 = vpop.f32.mrb[0].mxu0
    %v5684 = vadd.f32 0.0, %v5683
    %v5685 = vpop.f32.mrb[0].mxu0
    %5686 = vdwg.mxu0
    %v5687 = vadd.f32 %v3516, %v5684
    %v5688 = vxor.u32 %v5687, 2147483648
    %v5689 = vmul.f32 %v5688, 1.442695
    %v5690 = vpow.pop %v5689
    %v5691 = vadd.f32 %v5690, 1.0
    %v5692 = vrcp.pop %v5691
    %v5693 = vmul.f32 1.0, %v5692
    %5694 = vmatprep.subr.mxu0 0.0
    %5695 = vmatpush1.msra.mxu0 %v3010
    %5696 = vmatprep.subr.mxu0 0.0
    %5697 = vmatpush1.msra.mxu0 %v3011
    %5698 = vmatprep.subr.mxu0 0.0
    %5699 = vmatpush1.msra.mxu0 %v3012
    %5700 = vmatprep.subr.mxu0 0.0
    %5701 = vmatpush1.msra.mxu0 %v3013
    %5702 = vmatprep.subr.mxu0 0.0
    %5703 = vmatpush1.msra.mxu0 0.0
    %5704 = vmatprep.subr.mxu0 0.0
    %5705 = vmatpush1.msra.mxu0 0.0
    %5706 = vmatprep.subr.mxu0 0.0
    %5707 = vmatpush1.msra.mxu0 0.0
    %5708 = vmatprep.subr.mxu0 0.0
    %5709 = vmatpush1.msra.mxu0 0.0
    %5710 = vmatprep.subr.mxu0 0.0
    %5711 = vmatpush1.msra.mxu0 0.0
    %5712 = vmatprep.subr.mxu0 0.0
    %5713 = vmatpush1.msra.mxu0 0.0
    %5714 = vmatprep.subr.mxu0 0.0
    %5715 = vmatpush1.msra.mxu0 0.0
    %5716 = vmatprep.subr.mxu0 0.0
    %5717 = vmatpush1.msra.mxu0 0.0
    %5718 = vmatprep.subr.mxu0 0.0
    %5719 = vmatpush1.msra.mxu0 0.0
    %5720 = vmatprep.subr.mxu0 0.0
    %5721 = vmatpush1.msra.mxu0 0.0
    %5722 = vmatprep.subr.mxu0 0.0
    %5723 = vmatpush1.msra.mxu0 0.0
    %5724 = vmatprep.subr.mxu0 0.0
    %5725 = vmatpush1.msra.mxu0 0.0
    %5726 = vmatprep.subr.mxu0 0.0
    %5727 = vmatpush1.msra.mxu0 0.0
    %5728 = vmatprep.subr.mxu0 0.0
    %5729 = vmatpush1.msra.mxu0 0.0
    %5730 = vmatprep.subr.mxu0 0.0
    %5731 = vmatpush1.msra.mxu0 0.0
    %5732 = vmatprep.subr.mxu0 0.0
    %5733 = vmatpush1.msra.mxu0 0.0
    %5734 = vmatprep.subr.mxu0 0.0
    %5735 = vmatpush1.msra.mxu0 0.0
    %5736 = vmatprep.subr.mxu0 0.0
    %5737 = vmatpush1.msra.mxu0 0.0
    %5738 = vmatprep.subr.mxu0 0.0
    %5739 = vmatpush1.msra.mxu0 0.0
    %5740 = vmatprep.subr.mxu0 0.0
    %5741 = vmatpush1.msra.mxu0 0.0
    %5742 = vmatprep.subr.mxu0 0.0
    %5743 = vmatpush1.msra.mxu0 0.0
    %5744 = vmatprep.subr.mxu0 0.0
    %5745 = vmatpush1.msra.mxu0 0.0
    %5746 = vmatprep.subr.mxu0 0.0
    %5747 = vmatpush1.msra.mxu0 0.0
    %5748 = vmatprep.subr.mxu0 0.0
    %5749 = vmatpush1.msra.mxu0 0.0
    %5750 = vmatprep.subr.mxu0 0.0
    %5751 = vmatpush1.msra.mxu0 0.0
    %5752 = vmatprep.subr.mxu0 0.0
    %5753 = vmatpush1.msra.mxu0 0.0
    %5754 = vmatprep.subr.mxu0 0.0
    %5755 = vmatpush1.msra.mxu0 0.0
    %5756 = vmatprep.subr.mxu0 0.0
    %5757 = vmatpush1.msra.mxu0 0.0
    %5758 = vmatprep.mubr.f32.mxu0 0.0
    %5759 = vmatmul.mubr.f32.gmra.mrb[0].mxu0 %v5615
    %v5760 = vpop.f32.mrb[0].mxu0
    %v5761 = vadd.f32 0.0, %v5760
    %v5762 = vpop.f32.mrb[0].mxu0
    %5763 = vdwg.mxu0
    %5765 = vrot.lane.b32.xlu0 %v5761, 32
    %v5766 = vpop.permute.xlu0 %5765
    %v5768 = vadd.f32 %v3516, %v5766
    %v5769 = vxor.u32 %v5768, 2147483648
    %v5770 = vmul.f32 %v5769, 1.442695
    %v5771 = vpow.pop %v5770
    %v5772 = vadd.f32 %v5771, 1.0
    %v5773 = vrcp.pop %v5772
    %v5774 = vmul.f32 1.0, %v5773
    %5775 = vmatprep.subr.mxu0 0.0
    %5776 = vmatpush1.msra.mxu0 %v3014
    %5777 = vmatprep.subr.mxu0 0.0
    %5778 = vmatpush1.msra.mxu0 %v3015
    %5779 = vmatprep.subr.mxu0 0.0
    %5780 = vmatpush1.msra.mxu0 %v3016
    %5781 = vmatprep.subr.mxu0 0.0
    %5782 = vmatpush1.msra.mxu0 %v3017
    %5783 = vmatprep.subr.mxu0 0.0
    %5784 = vmatpush1.msra.mxu0 0.0
    %5785 = vmatprep.subr.mxu0 0.0
    %5786 = vmatpush1.msra.mxu0 0.0
    %5787 = vmatprep.subr.mxu0 0.0
    %5788 = vmatpush1.msra.mxu0 0.0
    %5789 = vmatprep.subr.mxu0 0.0
    %5790 = vmatpush1.msra.mxu0 0.0
    %5791 = vmatprep.subr.mxu0 0.0
    %5792 = vmatpush1.msra.mxu0 0.0
    %5793 = vmatprep.subr.mxu0 0.0
    %5794 = vmatpush1.msra.mxu0 0.0
    %5795 = vmatprep.subr.mxu0 0.0
    %5796 = vmatpush1.msra.mxu0 0.0
    %5797 = vmatprep.subr.mxu0 0.0
    %5798 = vmatpush1.msra.mxu0 0.0
    %5799 = vmatprep.subr.mxu0 0.0
    %5800 = vmatpush1.msra.mxu0 0.0
    %5801 = vmatprep.subr.mxu0 0.0
    %5802 = vmatpush1.msra.mxu0 0.0
    %5803 = vmatprep.subr.mxu0 0.0
    %5804 = vmatpush1.msra.mxu0 0.0
    %5805 = vmatprep.subr.mxu0 0.0
    %5806 = vmatpush1.msra.mxu0 0.0
    %5807 = vmatprep.subr.mxu0 0.0
    %5808 = vmatpush1.msra.mxu0 0.0
    %5809 = vmatprep.subr.mxu0 0.0
    %5810 = vmatpush1.msra.mxu0 0.0
    %5811 = vmatprep.subr.mxu0 0.0
    %5812 = vmatpush1.msra.mxu0 0.0
    %5813 = vmatprep.subr.mxu0 0.0
    %5814 = vmatpush1.msra.mxu0 0.0
    %5815 = vmatprep.subr.mxu0 0.0
    %5816 = vmatpush1.msra.mxu0 0.0
    %5817 = vmatprep.subr.mxu0 0.0
    %5818 = vmatpush1.msra.mxu0 0.0
    %5819 = vmatprep.subr.mxu0 0.0
    %5820 = vmatpush1.msra.mxu0 0.0
    %5821 = vmatprep.subr.mxu0 0.0
    %5822 = vmatpush1.msra.mxu0 0.0
    %5823 = vmatprep.subr.mxu0 0.0
    %5824 = vmatpush1.msra.mxu0 0.0
    %5825 = vmatprep.subr.mxu0 0.0
    %5826 = vmatpush1.msra.mxu0 0.0
    %5827 = vmatprep.subr.mxu0 0.0
    %5828 = vmatpush1.msra.mxu0 0.0
    %5829 = vmatprep.subr.mxu0 0.0
    %5830 = vmatpush1.msra.mxu0 0.0
    %5831 = vmatprep.subr.mxu0 0.0
    %5832 = vmatpush1.msra.mxu0 0.0
    %5833 = vmatprep.subr.mxu0 0.0
    %5834 = vmatpush1.msra.mxu0 0.0
    %5835 = vmatprep.subr.mxu0 0.0
    %5836 = vmatpush1.msra.mxu0 0.0
    %5837 = vmatprep.subr.mxu0 0.0
    %5838 = vmatpush1.msra.mxu0 0.0
    %5839 = vmatprep.mubr.f32.mxu0 0.0
    %5840 = vmatmul.mubr.f32.gmra.mrb[0].mxu0 %v5615
    %v5841 = vpop.f32.mrb[0].mxu0
    %v5842 = vadd.f32 0.0, %v5841
    %v5843 = vpop.f32.mrb[0].mxu0
    %5844 = vdwg.mxu0
    %5846 = vrot.lane.b32.xlu0 %v5842, 64
    %v5847 = vpop.permute.xlu0 %5846
    %v5849 = vadd.f32 %v3516, %v5847
    %v5850 = vtanh.pop %v5849
    %5851 = vmatprep.subr.mxu0 0.0
    %5852 = vmatpush1.msra.mxu0 %v3018
    %5853 = vmatprep.subr.mxu0 0.0
    %5854 = vmatpush1.msra.mxu0 %v3019
    %5855 = vmatprep.subr.mxu0 0.0
    %5856 = vmatpush1.msra.mxu0 %v3020
    %5857 = vmatprep.subr.mxu0 0.0
    %5858 = vmatpush1.msra.mxu0 %v3021
    %5859 = vmatprep.subr.mxu0 0.0
    %5860 = vmatpush1.msra.mxu0 0.0
    %5861 = vmatprep.subr.mxu0 0.0
    %5862 = vmatpush1.msra.mxu0 0.0
    %5863 = vmatprep.subr.mxu0 0.0
    %5864 = vmatpush1.msra.mxu0 0.0
    %5865 = vmatprep.subr.mxu0 0.0
    %5866 = vmatpush1.msra.mxu0 0.0
    %5867 = vmatprep.subr.mxu0 0.0
    %5868 = vmatpush1.msra.mxu0 0.0
    %5869 = vmatprep.subr.mxu0 0.0
    %5870 = vmatpush1.msra.mxu0 0.0
    %5871 = vmatprep.subr.mxu0 0.0
    %5872 = vmatpush1.msra.mxu0 0.0
    %5873 = vmatprep.subr.mxu0 0.0
    %5874 = vmatpush1.msra.mxu0 0.0
    %5875 = vmatprep.subr.mxu0 0.0
    %5876 = vmatpush1.msra.mxu0 0.0
    %5877 = vmatprep.subr.mxu0 0.0
    %5878 = vmatpush1.msra.mxu0 0.0
    %5879 = vmatprep.subr.mxu0 0.0
    %5880 = vmatpush1.msra.mxu0 0.0
    %5881 = vmatprep.subr.mxu0 0.0
    %5882 = vmatpush1.msra.mxu0 0.0
    %5883 = vmatprep.subr.mxu0 0.0
    %5884 = vmatpush1.msra.mxu0 0.0
    %5885 = vmatprep.subr.mxu0 0.0
    %5886 = vmatpush1.msra.mxu0 0.0
    %5887 = vmatprep.subr.mxu0 0.0
    %5888 = vmatpush1.msra.mxu0 0.0
    %5889 = vmatprep.subr.mxu0 0.0
    %5890 = vmatpush1.msra.mxu0 0.0
    %5891 = vmatprep.subr.mxu0 0.0
    %5892 = vmatpush1.msra.mxu0 0.0
    %5893 = vmatprep.subr.mxu0 0.0
    %5894 = vmatpush1.msra.mxu0 0.0
    %5895 = vmatprep.subr.mxu0 0.0
    %5896 = vmatpush1.msra.mxu0 0.0
    %5897 = vmatprep.subr.mxu0 0.0
    %5898 = vmatpush1.msra.mxu0 0.0
    %5899 = vmatprep.subr.mxu0 0.0
    %5900 = vmatpush1.msra.mxu0 0.0
    %5901 = vmatprep.subr.mxu0 0.0
    %5902 = vmatpush1.msra.mxu0 0.0
    %5903 = vmatprep.subr.mxu0 0.0
    %5904 = vmatpush1.msra.mxu0 0.0
    %5905 = vmatprep.subr.mxu0 0.0
    %5906 = vmatpush1.msra.mxu0 0.0
    %5907 = vmatprep.subr.mxu0 0.0
    %5908 = vmatpush1.msra.mxu0 0.0
    %5909 = vmatprep.subr.mxu0 0.0
    %5910 = vmatpush1.msra.mxu0 0.0
    %5911 = vmatprep.subr.mxu0 0.0
    %5912 = vmatpush1.msra.mxu0 0.0
    %5913 = vmatprep.subr.mxu0 0.0
    %5914 = vmatpush1.msra.mxu0 0.0
    %5915 = vmatprep.mubr.f32.mxu0 0.0
    %5916 = vmatmul.mubr.f32.gmra.mrb[0].mxu0 %v5615
    %v5917 = vpop.f32.mrb[0].mxu0
    %v5918 = vadd.f32 0.0, %v5917
    %v5919 = vpop.f32.mrb[0].mxu0
    %5920 = vdwg.mxu0
    %5922 = vrot.lane.b32.xlu0 %v5918, 96
    %v5923 = vpop.permute.xlu0 %5922
    %v5925 = vadd.f32 %v3516, %v5923
    %v5926 = vxor.u32 %v5925, 2147483648
    %v5927 = vmul.f32 %v5926, 1.442695
    %v5928 = vpow.pop %v5927
    %v5929 = vadd.f32 %v5928, 1.0
    %v5930 = vrcp.pop %v5929
    %v5931 = vmul.f32 1.0, %v5930
    %v5932 = vmul.f32 %v5774, %v5605
    %5934 = vrot.lane.b32.xlu0 %v5850, 64
    %v5935 = vpop.permute.xlu0 %5934
    %v5937 = vmul.f32 %v5693, %v5935
    %5939 = vrot.lane.b32.xlu0 %v5937, 32
    %v5940 = vpop.permute.xlu0 %5939
    %v5942 = vadd.f32 %v5932, %v5940
    %v5943 = vtanh.pop %v5942
    %5945 = vrot.lane.b32.xlu0 %v5943, 64
    %v5946 = vpop.permute.xlu0 %5945
    %v5948 = vmul.f32 %v5931, %v5946
    %5950 = vrot.lane.b32.xlu0 %v5948, 32
    %v5951 = vpop.permute.xlu0 %5950
    %v5952 = vsel %vm164, %v5951, 0
    %5954 = vmatprep.subr.mxu0 0.0
    %5955 = vmatpush1.msra.mxu0 %v3006
    %5956 = vmatprep.subr.mxu0 0.0
    %5957 = vmatpush1.msra.mxu0 %v3007
    %5958 = vmatprep.subr.mxu0 0.0
    %5959 = vmatpush1.msra.mxu0 %v3008
    %5960 = vmatprep.subr.mxu0 0.0
    %5961 = vmatpush1.msra.mxu0 %v3009
    %5962 = vmatprep.subr.mxu0 0.0
    %5963 = vmatpush1.msra.mxu0 0.0
    %5964 = vmatprep.subr.mxu0 0.0
    %5965 = vmatpush1.msra.mxu0 0.0
    %5966 = vmatprep.subr.mxu0 0.0
    %5967 = vmatpush1.msra.mxu0 0.0
    %5968 = vmatprep.subr.mxu0 0.0
    %5969 = vmatpush1.msra.mxu0 0.0
    %5970 = vmatprep.subr.mxu0 0.0
    %5971 = vmatpush1.msra.mxu0 0.0
    %5972 = vmatprep.subr.mxu0 0.0
    %5973 = vmatpush1.msra.mxu0 0.0
    %5974 = vmatprep.subr.mxu0 0.0
    %5975 = vmatpush1.msra.mxu0 0.0
    %5976 = vmatprep.subr.mxu0 0.0
    %5977 = vmatpush1.msra.mxu0 0.0
    %5978 = vmatprep.subr.mxu0 0.0
    %5979 = vmatpush1.msra.mxu0 0.0
    %5980 = vmatprep.subr.mxu0 0.0
    %5981 = vmatpush1.msra.mxu0 0.0
    %5982 = vmatprep.subr.mxu0 0.0
    %5983 = vmatpush1.msra.mxu0 0.0
    %5984 = vmatprep.subr.mxu0 0.0
    %5985 = vmatpush1.msra.mxu0 0.0
    %5986 = vmatprep.subr.mxu0 0.0
    %5987 = vmatpush1.msra.mxu0 0.0
    %5988 = vmatprep.subr.mxu0 0.0
    %5989 = vmatpush1.msra.mxu0 0.0
    %5990 = vmatprep.subr.mxu0 0.0
    %5991 = vmatpush1.msra.mxu0 0.0
    %5992 = vmatprep.subr.mxu0 0.0
    %5993 = vmatpush1.msra.mxu0 0.0
    %5994 = vmatprep.subr.mxu0 0.0
    %5995 = vmatpush1.msra.mxu0 0.0
    %5996 = vmatprep.subr.mxu0 0.0
    %5997 = vmatpush1.msra.mxu0 0.0
    %5998 = vmatprep.subr.mxu0 0.0
    %5999 = vmatpush1.msra.mxu0 0.0
    %6000 = vmatprep.subr.mxu0 0.0
    %6001 = vmatpush1.msra.mxu0 0.0
    %6002 = vmatprep.subr.mxu0 0.0
    %6003 = vmatpush1.msra.mxu0 0.0
    %6004 = vmatprep.subr.mxu0 0.0
    %6005 = vmatpush1.msra.mxu0 0.0
    %6006 = vmatprep.subr.mxu0 0.0
    %6007 = vmatpush1.msra.mxu0 0.0
    %6008 = vmatprep.subr.mxu0 0.0
    %6009 = vmatpush1.msra.mxu0 0.0
    %6010 = vmatprep.subr.mxu0 0.0
    %6011 = vmatpush1.msra.mxu0 0.0
    %6012 = vmatprep.subr.mxu0 0.0
    %6013 = vmatpush1.msra.mxu0 0.0
    %6014 = vmatprep.subr.mxu0 0.0
    %6015 = vmatpush1.msra.mxu0 0.0
    %6016 = vmatprep.subr.mxu0 0.0
    %6017 = vmatpush1.msra.mxu0 0.0
    %6018 = vmatprep.mubr.f32.mxu0 0.0
    %6019 = vmatmul.mubr.f32.gmra.mrb[0].mxu0 %v5952
    %v6020 = vpop.f32.mrb[0].mxu0
    %v6021 = vadd.f32 0.0, %v6020
    %v6022 = vpop.f32.mrb[0].mxu0
    %6023 = vdwg.mxu0
    %v6024 = vadd.f32 %v3592, %v6021
    %v6025 = vxor.u32 %v6024, 2147483648
    %v6026 = vmul.f32 %v6025, 1.442695
    %v6027 = vpow.pop %v6026
    %v6028 = vadd.f32 %v6027, 1.0
    %v6029 = vrcp.pop %v6028
    %v6030 = vmul.f32 1.0, %v6029
    %6031 = vmatprep.subr.mxu0 0.0
    %6032 = vmatpush1.msra.mxu0 %v3010
    %6033 = vmatprep.subr.mxu0 0.0
    %6034 = vmatpush1.msra.mxu0 %v3011
    %6035 = vmatprep.subr.mxu0 0.0
    %6036 = vmatpush1.msra.mxu0 %v3012
    %6037 = vmatprep.subr.mxu0 0.0
    %6038 = vmatpush1.msra.mxu0 %v3013
    %6039 = vmatprep.subr.mxu0 0.0
    %6040 = vmatpush1.msra.mxu0 0.0
    %6041 = vmatprep.subr.mxu0 0.0
    %6042 = vmatpush1.msra.mxu0 0.0
    %6043 = vmatprep.subr.mxu0 0.0
    %6044 = vmatpush1.msra.mxu0 0.0
    %6045 = vmatprep.subr.mxu0 0.0
    %6046 = vmatpush1.msra.mxu0 0.0
    %6047 = vmatprep.subr.mxu0 0.0
    %6048 = vmatpush1.msra.mxu0 0.0
    %6049 = vmatprep.subr.mxu0 0.0
    %6050 = vmatpush1.msra.mxu0 0.0
    %6051 = vmatprep.subr.mxu0 0.0
    %6052 = vmatpush1.msra.mxu0 0.0
    %6053 = vmatprep.subr.mxu0 0.0
    %6054 = vmatpush1.msra.mxu0 0.0
    %6055 = vmatprep.subr.mxu0 0.0
    %6056 = vmatpush1.msra.mxu0 0.0
    %6057 = vmatprep.subr.mxu0 0.0
    %6058 = vmatpush1.msra.mxu0 0.0
    %6059 = vmatprep.subr.mxu0 0.0
    %6060 = vmatpush1.msra.mxu0 0.0
    %6061 = vmatprep.subr.mxu0 0.0
    %6062 = vmatpush1.msra.mxu0 0.0
    %6063 = vmatprep.subr.mxu0 0.0
    %6064 = vmatpush1.msra.mxu0 0.0
    %6065 = vmatprep.subr.mxu0 0.0
    %6066 = vmatpush1.msra.mxu0 0.0
    %6067 = vmatprep.subr.mxu0 0.0
    %6068 = vmatpush1.msra.mxu0 0.0
    %6069 = vmatprep.subr.mxu0 0.0
    %6070 = vmatpush1.msra.mxu0 0.0
    %6071 = vmatprep.subr.mxu0 0.0
    %6072 = vmatpush1.msra.mxu0 0.0
    %6073 = vmatprep.subr.mxu0 0.0
    %6074 = vmatpush1.msra.mxu0 0.0
    %6075 = vmatprep.subr.mxu0 0.0
    %6076 = vmatpush1.msra.mxu0 0.0
    %6077 = vmatprep.subr.mxu0 0.0
    %6078 = vmatpush1.msra.mxu0 0.0
    %6079 = vmatprep.subr.mxu0 0.0
    %6080 = vmatpush1.msra.mxu0 0.0
    %6081 = vmatprep.subr.mxu0 0.0
    %6082 = vmatpush1.msra.mxu0 0.0
    %6083 = vmatprep.subr.mxu0 0.0
    %6084 = vmatpush1.msra.mxu0 0.0
    %6085 = vmatprep.subr.mxu0 0.0
    %6086 = vmatpush1.msra.mxu0 0.0
    %6087 = vmatprep.subr.mxu0 0.0
    %6088 = vmatpush1.msra.mxu0 0.0
    %6089 = vmatprep.subr.mxu0 0.0
    %6090 = vmatpush1.msra.mxu0 0.0
    %6091 = vmatprep.subr.mxu0 0.0
    %6092 = vmatpush1.msra.mxu0 0.0
    %6093 = vmatprep.subr.mxu0 0.0
    %6094 = vmatpush1.msra.mxu0 0.0
    %6095 = vmatprep.mubr.f32.mxu0 0.0
    %6096 = vmatmul.mubr.f32.gmra.mrb[0].mxu0 %v5952
    %v6097 = vpop.f32.mrb[0].mxu0
    %v6098 = vadd.f32 0.0, %v6097
    %v6099 = vpop.f32.mrb[0].mxu0
    %6100 = vdwg.mxu0
    %6102 = vrot.lane.b32.xlu0 %v6098, 32
    %v6103 = vpop.permute.xlu0 %6102
    %v6105 = vadd.f32 %v3592, %v6103
    %v6106 = vxor.u32 %v6105, 2147483648
    %v6107 = vmul.f32 %v6106, 1.442695
    %v6108 = vpow.pop %v6107
    %v6109 = vadd.f32 %v6108, 1.0
    %v6110 = vrcp.pop %v6109
    %v6111 = vmul.f32 1.0, %v6110
    %6112 = vmatprep.subr.mxu0 0.0
    %6113 = vmatpush1.msra.mxu0 %v3014
    %6114 = vmatprep.subr.mxu0 0.0
    %6115 = vmatpush1.msra.mxu0 %v3015
    %6116 = vmatprep.subr.mxu0 0.0
    %6117 = vmatpush1.msra.mxu0 %v3016
    %6118 = vmatprep.subr.mxu0 0.0
    %6119 = vmatpush1.msra.mxu0 %v3017
    %6120 = vmatprep.subr.mxu0 0.0
    %6121 = vmatpush1.msra.mxu0 0.0
    %6122 = vmatprep.subr.mxu0 0.0
    %6123 = vmatpush1.msra.mxu0 0.0
    %6124 = vmatprep.subr.mxu0 0.0
    %6125 = vmatpush1.msra.mxu0 0.0
    %6126 = vmatprep.subr.mxu0 0.0
    %6127 = vmatpush1.msra.mxu0 0.0
    %6128 = vmatprep.subr.mxu0 0.0
    %6129 = vmatpush1.msra.mxu0 0.0
    %6130 = vmatprep.subr.mxu0 0.0
    %6131 = vmatpush1.msra.mxu0 0.0
    %6132 = vmatprep.subr.mxu0 0.0
    %6133 = vmatpush1.msra.mxu0 0.0
    %6134 = vmatprep.subr.mxu0 0.0
    %6135 = vmatpush1.msra.mxu0 0.0
    %6136 = vmatprep.subr.mxu0 0.0
    %6137 = vmatpush1.msra.mxu0 0.0
    %6138 = vmatprep.subr.mxu0 0.0
    %6139 = vmatpush1.msra.mxu0 0.0
    %6140 = vmatprep.subr.mxu0 0.0
    %6141 = vmatpush1.msra.mxu0 0.0
    %6142 = vmatprep.subr.mxu0 0.0
    %6143 = vmatpush1.msra.mxu0 0.0
    %6144 = vmatprep.subr.mxu0 0.0
    %6145 = vmatpush1.msra.mxu0 0.0
    %6146 = vmatprep.subr.mxu0 0.0
    %6147 = vmatpush1.msra.mxu0 0.0
    %6148 = vmatprep.subr.mxu0 0.0
    %6149 = vmatpush1.msra.mxu0 0.0
    %6150 = vmatprep.subr.mxu0 0.0
    %6151 = vmatpush1.msra.mxu0 0.0
    %6152 = vmatprep.subr.mxu0 0.0
    %6153 = vmatpush1.msra.mxu0 0.0
    %6154 = vmatprep.subr.mxu0 0.0
    %6155 = vmatpush1.msra.mxu0 0.0
    %6156 = vmatprep.subr.mxu0 0.0
    %6157 = vmatpush1.msra.mxu0 0.0
    %6158 = vmatprep.subr.mxu0 0.0
    %6159 = vmatpush1.msra.mxu0 0.0
    %6160 = vmatprep.subr.mxu0 0.0
    %6161 = vmatpush1.msra.mxu0 0.0
    %6162 = vmatprep.subr.mxu0 0.0
    %6163 = vmatpush1.msra.mxu0 0.0
    %6164 = vmatprep.subr.mxu0 0.0
    %6165 = vmatpush1.msra.mxu0 0.0
    %6166 = vmatprep.subr.mxu0 0.0
    %6167 = vmatpush1.msra.mxu0 0.0
    %6168 = vmatprep.subr.mxu0 0.0
    %6169 = vmatpush1.msra.mxu0 0.0
    %6170 = vmatprep.subr.mxu0 0.0
    %6171 = vmatpush1.msra.mxu0 0.0
    %6172 = vmatprep.subr.mxu0 0.0
    %6173 = vmatpush1.msra.mxu0 0.0
    %6174 = vmatprep.subr.mxu0 0.0
    %6175 = vmatpush1.msra.mxu0 0.0
    %6176 = vmatprep.mubr.f32.mxu0 0.0
    %6177 = vmatmul.mubr.f32.gmra.mrb[0].mxu0 %v5952
    %v6178 = vpop.f32.mrb[0].mxu0
    %v6179 = vadd.f32 0.0, %v6178
    %v6180 = vpop.f32.mrb[0].mxu0
    %6181 = vdwg.mxu0
    %6183 = vrot.lane.b32.xlu0 %v6179, 64
    %v6184 = vpop.permute.xlu0 %6183
    %v6186 = vadd.f32 %v3592, %v6184
    %v6187 = vtanh.pop %v6186
    %6188 = vmatprep.subr.mxu0 0.0
    %6189 = vmatpush1.msra.mxu0 %v3018
    %6190 = vmatprep.subr.mxu0 0.0
    %6191 = vmatpush1.msra.mxu0 %v3019
    %6192 = vmatprep.subr.mxu0 0.0
    %6193 = vmatpush1.msra.mxu0 %v3020
    %6194 = vmatprep.subr.mxu0 0.0
    %6195 = vmatpush1.msra.mxu0 %v3021
    %6196 = vmatprep.subr.mxu0 0.0
    %6197 = vmatpush1.msra.mxu0 0.0
    %6198 = vmatprep.subr.mxu0 0.0
    %6199 = vmatpush1.msra.mxu0 0.0
    %6200 = vmatprep.subr.mxu0 0.0
    %6201 = vmatpush1.msra.mxu0 0.0
    %6202 = vmatprep.subr.mxu0 0.0
    %6203 = vmatpush1.msra.mxu0 0.0
    %6204 = vmatprep.subr.mxu0 0.0
    %6205 = vmatpush1.msra.mxu0 0.0
    %6206 = vmatprep.subr.mxu0 0.0
    %6207 = vmatpush1.msra.mxu0 0.0
    %6208 = vmatprep.subr.mxu0 0.0
    %6209 = vmatpush1.msra.mxu0 0.0
    %6210 = vmatprep.subr.mxu0 0.0
    %6211 = vmatpush1.msra.mxu0 0.0
    %6212 = vmatprep.subr.mxu0 0.0
    %6213 = vmatpush1.msra.mxu0 0.0
    %6214 = vmatprep.subr.mxu0 0.0
    %6215 = vmatpush1.msra.mxu0 0.0
    %6216 = vmatprep.subr.mxu0 0.0
    %6217 = vmatpush1.msra.mxu0 0.0
    %6218 = vmatprep.subr.mxu0 0.0
    %6219 = vmatpush1.msra.mxu0 0.0
    %6220 = vmatprep.subr.mxu0 0.0
    %6221 = vmatpush1.msra.mxu0 0.0
    %6222 = vmatprep.subr.mxu0 0.0
    %6223 = vmatpush1.msra.mxu0 0.0
    %6224 = vmatprep.subr.mxu0 0.0
    %6225 = vmatpush1.msra.mxu0 0.0
    %6226 = vmatprep.subr.mxu0 0.0
    %6227 = vmatpush1.msra.mxu0 0.0
    %6228 = vmatprep.subr.mxu0 0.0
    %6229 = vmatpush1.msra.mxu0 0.0
    %6230 = vmatprep.subr.mxu0 0.0
    %6231 = vmatpush1.msra.mxu0 0.0
    %6232 = vmatprep.subr.mxu0 0.0
    %6233 = vmatpush1.msra.mxu0 0.0
    %6234 = vmatprep.subr.mxu0 0.0
    %6235 = vmatpush1.msra.mxu0 0.0
    %6236 = vmatprep.subr.mxu0 0.0
    %6237 = vmatpush1.msra.mxu0 0.0
    %6238 = vmatprep.subr.mxu0 0.0
    %6239 = vmatpush1.msra.mxu0 0.0
    %6240 = vmatprep.subr.mxu0 0.0
    %6241 = vmatpush1.msra.mxu0 0.0
    %6242 = vmatprep.subr.mxu0 0.0
    %6243 = vmatpush1.msra.mxu0 0.0
    %6244 = vmatprep.subr.mxu0 0.0
    %6245 = vmatpush1.msra.mxu0 0.0
    %6246 = vmatprep.subr.mxu0 0.0
    %6247 = vmatpush1.msra.mxu0 0.0
    %6248 = vmatprep.subr.mxu0 0.0
    %6249 = vmatpush1.msra.mxu0 0.0
    %6250 = vmatprep.subr.mxu0 0.0
    %6251 = vmatpush1.msra.mxu0 0.0
    %6252 = vmatprep.mubr.f32.mxu0 0.0
    %6253 = vmatmul.mubr.f32.gmra.mrb[0].mxu0 %v5952
    %v6254 = vpop.f32.mrb[0].mxu0
    %v6255 = vadd.f32 0.0, %v6254
    %v6256 = vpop.f32.mrb[0].mxu0
    %6257 = vdwg.mxu0
    %6259 = vrot.lane.b32.xlu0 %v6255, 96
    %v6260 = vpop.permute.xlu0 %6259
    %v6262 = vadd.f32 %v3592, %v6260
    %v6263 = vxor.u32 %v6262, 2147483648
    %v6264 = vmul.f32 %v6263, 1.442695
    %v6265 = vpow.pop %v6264
    %v6266 = vadd.f32 %v6265, 1.0
    %v6267 = vrcp.pop %v6266
    %v6268 = vmul.f32 1.0, %v6267
    %v6269 = vmul.f32 %v6111, %v5942
    %6271 = vrot.lane.b32.xlu0 %v6187, 64
    %v6272 = vpop.permute.xlu0 %6271
    %v6274 = vmul.f32 %v6030, %v6272
    %6276 = vrot.lane.b32.xlu0 %v6274, 32
    %v6277 = vpop.permute.xlu0 %6276
    %v6279 = vadd.f32 %v6269, %v6277
    %v6280 = vtanh.pop %v6279
    %6282 = vrot.lane.b32.xlu0 %v6280, 64
    %v6283 = vpop.permute.xlu0 %6282
    %v6285 = vmul.f32 %v6268, %v6283
    %6286 = vrot.lane.b32.xlu0 %v3001, 32
    %v6287 = vpop.permute.xlu0 %6286
    %v6290 = vrot.slane %v6285, 2
    %6291 = vrot.lane.b32.xlu0 %v6290, 96
    %v6292 = vpop.permute.xlu0 %6291
    %v6295 = vrot.slane %v6279, 2
    %6296 = vrot.lane.b32.xlu0 %v6295, 64
    %v6297 = vpop.permute.xlu0 %6296
    %v6299 = vsel %vm164, %v6287, %v2995
    %vm6300 = vcmask 523264
    %v6301 = vsel %vm6300, %v6299, %v6292
    %vm6302 = vcmask 785408
    %v6303 = vsel %vm6302, %v6301, %v6297
    %v6304 = vtanh.pop %v6303
    %v6305 = vld [vmem:[%s13] sm:$0xff]
    %v6306 = vld [vmem:[%s13 + $0x8] sm:$0xff]
    %v6307 = vld [vmem:[%s13 + $0x10] sm:$0xff]
    %v6308 = vld [vmem:[%s13 + $0x18] sm:$0xff]
    %v6309 = vld [vmem:[%s13 + $0x20] sm:$0xff]
    %v6310 = vld [vmem:[%s13 + $0x28] sm:$0xff]
    %v6311 = vld [vmem:[%s13 + $0x30] sm:$0xff]
    %v6312 = vld [vmem:[%s13 + $0x38] sm:$0xff]
    %v6313 = vld [vmem:[%s13 + $0x40] sm:$0xff]
    %v6314 = vld [vmem:[%s13 + $0x48] sm:$0xff]
    %v6315 = vld [vmem:[%s13 + $0x50] sm:$0xff]
    %v6316 = vld [vmem:[%s13 + $0x58] sm:$0xff]
    %v6317 = vld [vmem:[%s13 + $0x60] sm:$0xff]
    %v6318 = vld [vmem:[%s13 + $0x68] sm:$0xff]
    %v6319 = vld [vmem:[%s13 + $0x70] sm:$0xff]
    %v6320 = vld [vmem:[%s13 + $0x78] sm:$0xff]
    %v6321 = vld [vmem:[%s14] sm:$0x1]
    %v6323 = vlaneseq
    %v6324 = vshrl.u32 %v6323, 7
    %v6325 = vsub.s32 0, %v6324
    %v6326 = vrot.slane %v6321, %v6325
    %v6329 = vrot.slane %v6304, 6
    %6331 = vmatprep.subr.mxu0 0.0
    %6332 = vmatpush1.msra.mxu0 %v6305
    %6333 = vmatprep.subr.mxu0 0.0
    %6334 = vmatpush1.msra.mxu0 %v6306
    %6335 = vmatprep.subr.mxu0 0.0
    %6336 = vmatpush1.msra.mxu0 %v6307
    %6337 = vmatprep.subr.mxu0 0.0
    %6338 = vmatpush1.msra.mxu0 %v6308
    %6339 = vmatprep.subr.mxu0 0.0
    %6340 = vmatpush1.msra.mxu0 %v6309
    %6341 = vmatprep.subr.mxu0 0.0
    %6342 = vmatpush1.msra.mxu0 %v6310
    %6343 = vmatprep.subr.mxu0 0.0
    %6344 = vmatpush1.msra.mxu0 %v6311
    %6345 = vmatprep.subr.mxu0 0.0
    %6346 = vmatpush1.msra.mxu0 %v6312
    %6347 = vmatprep.subr.mxu0 0.0
    %6348 = vmatpush1.msra.mxu0 %v6313
    %6349 = vmatprep.subr.mxu0 0.0
    %6350 = vmatpush1.msra.mxu0 %v6314
    %6351 = vmatprep.subr.mxu0 0.0
    %6352 = vmatpush1.msra.mxu0 %v6315
    %6353 = vmatprep.subr.mxu0 0.0
    %6354 = vmatpush1.msra.mxu0 %v6316
    %6355 = vmatprep.subr.mxu0 0.0
    %6356 = vmatpush1.msra.mxu0 %v6317
    %6357 = vmatprep.subr.mxu0 0.0
    %6358 = vmatpush1.msra.mxu0 %v6318
    %6359 = vmatprep.subr.mxu0 0.0
    %6360 = vmatpush1.msra.mxu0 %v6319
    %6361 = vmatprep.subr.mxu0 0.0
    %6362 = vmatpush1.msra.mxu0 %v6320
    %6363 = vmatprep.subr.mxu0 0.0
    %6364 = vmatpush1.msra.mxu0 0.0
    %6365 = vmatprep.subr.mxu0 0.0
    %6366 = vmatpush1.msra.mxu0 0.0
    %6367 = vmatprep.subr.mxu0 0.0
    %6368 = vmatpush1.msra.mxu0 0.0
    %6369 = vmatprep.subr.mxu0 0.0
    %6370 = vmatpush1.msra.mxu0 0.0
    %6371 = vmatprep.subr.mxu0 0.0
    %6372 = vmatpush1.msra.mxu0 0.0
    %6373 = vmatprep.subr.mxu0 0.0
    %6374 = vmatpush1.msra.mxu0 0.0
    %6375 = vmatprep.subr.mxu0 0.0
    %6376 = vmatpush1.msra.mxu0 0.0
    %6377 = vmatprep.subr.mxu0 0.0
    %6378 = vmatpush1.msra.mxu0 0.0
    %6379 = vmatprep.subr.mxu0 0.0
    %6380 = vmatpush1.msra.mxu0 0.0
    %6381 = vmatprep.subr.mxu0 0.0
    %6382 = vmatpush1.msra.mxu0 0.0
    %6383 = vmatprep.subr.mxu0 0.0
    %6384 = vmatpush1.msra.mxu0 0.0
    %6385 = vmatprep.subr.mxu0 0.0
    %6386 = vmatpush1.msra.mxu0 0.0
    %6387 = vmatprep.subr.mxu0 0.0
    %6388 = vmatpush1.msra.mxu0 0.0
    %6389 = vmatprep.subr.mxu0 0.0
    %6390 = vmatpush1.msra.mxu0 0.0
    %6391 = vmatprep.subr.mxu0 0.0
    %6392 = vmatpush1.msra.mxu0 0.0
    %6393 = vmatprep.subr.mxu0 0.0
    %6394 = vmatpush1.msra.mxu0 0.0
    %6395 = vmatprep.mubr.f32.mxu0 0.0
    %6396 = vmatmul.mubr.f32.gmra.mrb[0].mxu0 %v6329
    %v6397 = vpop.f32.mrb[0].mxu0
    %v6398 = vadd.f32 %v6326, %v6397
    %v6399 = vpop.f32.mrb[0].mxu0
    %6400 = vdwg.mxu0
    %vm6401 = vcmask 123904
    %6402 = vst.msk [vmem:[#allocation13] sm:$0x3] %vm6401, %v6398
    // Predicated region
    $region86: #{tpu_custom_call.1} parent=1 // pred_check
      _
    $region87: #{tpu_custom_call.1} parent=1 // pred_check_branch
      %6404 = sbr.rel (0) target = $region89
    $region88: #{tpu_custom_call.1} parent=1 // pred_region
      %s6406 = ssub.s32 32, 32
      %6407 = vsyncadd [#allocation4], %s6406
      %s6409 = sshll.u32 [#allocation13], 4
      %s6410 = int_to_ptr.vmem [resolvable:$true] %s6409
      %6412 = dma.vmem_to_hbm [thread:$0]  %s6410, 32, %s15, [#allocation4]
    $region89: #{tpu_custom_call.1} parent=1 // pred_fallthru
      _
    // Predicated region
    $region90: #{tpu_custom_call.1} parent=1 // pred_check
      _
    $region91: #{tpu_custom_call.1} parent=1 // pred_check_branch
      %6414 = sbr.rel (0) target = $region93
    $region92: #{tpu_custom_call.1} parent=1 // pred_region
      %6415 = dma.done [#allocation4], 32
    $region93: #{tpu_custom_call.1} parent=1 // pred_fallthru
      _
    %6416 = vsyncpa [#allocation3], 1
    %6417 = vsyncpa [#allocation6], 1
    %6418 = vsyncpa [#allocation9], 1
    %6419 = vsyncpa [#allocation12], 1
    %6420 = vsyncpa [#allocation4], 1

</llo_original>
